<compile_context>
chip_gen: v7x
topology: tpu7x:2x2x1
jax: 0.10.0
libtpu: 0.0.40
codegen_flags: <defaults>
</compile_context>

<pallas_src>
import jax
import jax.numpy as jnp
from jax.experimental import pallas as pl
from jax.experimental.pallas import tpu as pltpu

EPS = 1e-5  # torch.nn.BatchNorm2d default


def bottleneck_kernel(x_ref, w1_ref, w2_ref, w3_ref,
                      g1_ref, b1_ref, g2_ref, b2_ref, g3_ref, b3_ref,
                      out_ref, ypad_ref):
    """Whole Bottleneck forward, NHWC, resident in VMEM.

    x_ref   : (N, H, W, Cin)        input (also the identity residual)
    w1_ref  : (Cin, Cmid)   bf16    1x1 conv1
    w2_ref  : (9*Cmid, Cmid) bf16   3x3 conv2, tap-major rows (ky*3+kx)*Cmid+c
    w3_ref  : (Cmid, Cout)  bf16    1x1 conv3
    g*/b*   : (1, C)        f32     BN affine params
    out_ref : (N, H, W, Cout)
    ypad_ref: (N, H+2, W+2, Cmid)   VMEM scratch: zero-halo staging for conv2
    """
    N, H, W, Cin = x_ref.shape
    Cmid = w1_ref.shape[1]
    Cout = out_ref.shape[3]
    M = N * H * W
    inv_m = 1.0 / float(M)

    def bn(t, g_ref, b_ref):
        # fused single-pass batch statistics (training-mode BN, biased var)
        mean = jnp.sum(t, axis=0, keepdims=True) * inv_m
        var = jnp.sum(t * t, axis=0, keepdims=True) * inv_m - mean * mean
        scale = g_ref[...] * jax.lax.rsqrt(var + EPS)
        return (t - mean) * scale + b_ref[...]

    # ---- conv1: 1x1 -> single MXU dot (bf16 operands, f32 accumulation) ----
    x2d = x_ref[...].reshape(M, Cin)                               # f32, reused as residual
    t1 = jnp.dot(x2d.astype(jnp.bfloat16), w1_ref[...],
                 preferred_element_type=jnp.float32)               # (M, Cmid)
    y1 = jnp.maximum(bn(t1, g1_ref, b1_ref), 0.0)

    # ---- stage relu(bn1) into the padded scratch; zero ONLY the 1-px halo ----
    zrow = jnp.zeros((N, 1, W + 2, Cmid), ypad_ref.dtype)
    zcol = jnp.zeros((N, H, 1, Cmid), ypad_ref.dtype)
    ypad_ref[:, 0:1, :, :] = zrow
    ypad_ref[:, H + 1:H + 2, :, :] = zrow
    ypad_ref[:, 1:H + 1, 0:1, :] = zcol
    ypad_ref[:, 1:H + 1, W + 1:W + 2, :] = zcol
    ypad_ref[:, 1:H + 1, 1:W + 1, :] = y1.reshape(N, H, W, Cmid)

    # ---- conv2: 3x3, stride 1, pad 1 -> im2col, taps folded into K ----
    patches = []
    for k in range(9):
        dy, dx = k // 3, k % 3
        patches.append(ypad_ref[:, dy:dy + H, dx:dx + W, :].reshape(M, Cmid))
    p = jnp.concatenate(patches, axis=-1)                          # (M, 9*Cmid)
    t2 = jnp.dot(p.astype(jnp.bfloat16), w2_ref[...],
                 preferred_element_type=jnp.float32)               # (M, Cmid)
    y2 = jnp.maximum(bn(t2, g2_ref, b2_ref), 0.0)

    # ---- conv3: 1x1 -> single dot back up to Cout = 4*Cmid ----
    t3 = jnp.dot(y2.astype(jnp.bfloat16), w3_ref[...],
                 preferred_element_type=jnp.float32)               # (M, Cout)
    z = bn(t3, g3_ref, b3_ref)

    # ---- identity residual (straight from the unpadded input) + final relu ----
    out = jnp.maximum(z + x2d, 0.0)
    out_ref[...] = out.reshape(N, H, W, Cout).astype(out_ref.dtype)


def bottleneck(x_nchw, w1, w2, w3, g1, b1, g2, b2, g3, b3):
    """NCHW in / NCHW out (PyTorch convention); channels-on-lanes NHWC inside."""
    N, Cin, H, W = x_nchw.shape
    Cmid = w1.shape[0]
    Cout = w3.shape[0]
    assert Cout == Cin, "identity residual requires inplanes == planes * expansion"

    x = jnp.transpose(x_nchw, (0, 2, 3, 1)).astype(jnp.float32)    # NCHW -> NHWC

    # torch OIHW -> matmul-ready layouts, bf16 for the MXU (accumulation stays f32)
    w1k = jnp.transpose(w1[:, :, 0, 0], (1, 0)).astype(jnp.bfloat16)          # (Cin, Cmid)
    w2k = jnp.transpose(w2, (2, 3, 1, 0)).reshape(9 * Cmid, Cmid).astype(jnp.bfloat16)
    w3k = jnp.transpose(w3[:, :, 0, 0], (1, 0)).astype(jnp.bfloat16)          # (Cmid, Cout)

    def c2(v):  # BN affine params as (1, C) rows
        return v.reshape(1, -1).astype(jnp.float32)

    # Everything is VMEM-resident for the single invocation.  Rough budget:
    # x + out (0.5 MiB each) + ypad scratch (~0.2 MiB) + im2col patches
    # (~1.7 MiB f32+bf16) + f32 accumulators (<1 MiB)  ->  well under 8 MiB;
    # request 32 MiB scoped VMEM for headroom (fits v5e/v6e/v7x).
    vmem_limit = 32 * 1024 * 1024

    out_nhwc = pl.pallas_call(
        bottleneck_kernel,
        out_shape=jax.ShapeDtypeStruct((N, H, W, Cout), jnp.float32),
        in_specs=[pl.BlockSpec(memory_space=pltpu.MemorySpace.VMEM)] * 10,
        out_specs=pl.BlockSpec(memory_space=pltpu.MemorySpace.VMEM),
        scratch_shapes=[pltpu.VMEM((N, H + 2, W + 2, Cmid), jnp.float32)],
        compiler_params=pltpu.CompilerParams(vmem_limit_bytes=vmem_limit),
    )(x, w1k, w2k, w3k, c2(g1), c2(b1), c2(g2), c2(b2), c2(g3), c2(b3))

    return jnp.transpose(out_nhwc, (0, 3, 1, 2))                   # NHWC -> NCHW


def bottleneck_ref(x, w1, w2, w3, g1, b1, g2, b2, g3, b3):
    """Pure-JAX f32 reference (NCHW) mirroring the PyTorch Bottleneck forward."""
    def conv(x, w, pad):
        return jax.lax.conv_general_dilated(
            x, w, window_strides=(1, 1), padding=((pad, pad), (pad, pad)),
            dimension_numbers=("NCHW", "OIHW", "NCHW"))

    def bn(x, g, b):
        m = x.mean(axis=(0, 2, 3), keepdims=True)
        v = ((x - m) ** 2).mean(axis=(0, 2, 3), keepdims=True)
        return (x - m) * jax.lax.rsqrt(v + EPS) * g.reshape(1, -1, 1, 1) \
            + b.reshape(1, -1, 1, 1)

    out = jax.nn.relu(bn(conv(x, w1, 0), g1, b1))
    out = jax.nn.relu(bn(conv(out, w2, 1), g2, b2))
    out = bn(conv(out, w3, 0), g3, b3)
    return jax.nn.relu(out + x)


if __name__ == "__main__":
    # Bottleneck(inplanes=256, planes=64, stride=1, dilation=1, downsample=None)
    # -> small batch/spatial, lane-dense channels (Cin = Cout = 256, Cmid = 64).
    N, H, W = 2, 16, 16
    planes = 64
    inplanes = planes * 4

    key = jax.random.PRNGKey(0)
    ks = jax.random.split(key, 10)
    x = jax.random.normal(ks[0], (N, inplanes, H, W), jnp.float32)
    w1 = jax.random.normal(ks[1], (planes, inplanes, 1, 1), jnp.float32) * 0.1
    w2 = jax.random.normal(ks[2], (planes, planes, 3, 3), jnp.float32) * 0.1
    w3 = jax.random.normal(ks[3], (inplanes, planes, 1, 1), jnp.float32) * 0.1
    g1 = 1.0 + 0.1 * jax.random.normal(ks[4], (planes,), jnp.float32)
    b1 = 0.1 * jax.random.normal(ks[5], (planes,), jnp.float32)
    g2 = 1.0 + 0.1 * jax.random.normal(ks[6], (planes,), jnp.float32)
    b2 = 0.1 * jax.random.normal(ks[7], (planes,), jnp.float32)
    g3 = 1.0 + 0.1 * jax.random.normal(ks[8], (inplanes,), jnp.float32)
    b3 = 0.1 * jax.random.normal(ks[9], (inplanes,), jnp.float32)

    out = jax.block_until_ready(bottleneck(x, w1, w2, w3, g1, b1, g2, b2, g3, b3))
    ref = jax.block_until_ready(bottleneck_ref(x, w1, w2, w3, g1, b1, g2, b2, g3, b3))

    assert out.shape == (N, inplanes, H, W)
    # bf16 MXU operands (f32 accumulation) vs. an all-f32 reference -> slightly
    # looser tolerance than a pure-f32 kernel would need.
    err = float(jnp.max(jnp.abs(out - ref)))
    assert jnp.allclose(out, ref, atol=5e-2, rtol=5e-2), f"max abs err {err}"
    print("KERNEL_OK")
</pallas_src>

<mosaic_0001>
module attributes {stable_mosaic.version = 11 : i64} {
  func.func @bottleneck_kernel(%arg0: memref<2x16x16x256xf32, #tpu.memory_space<vmem>>, %arg1: memref<256x64xbf16, #tpu.memory_space<vmem>>, %arg2: memref<576x64xbf16, #tpu.memory_space<vmem>>, %arg3: memref<64x256xbf16, #tpu.memory_space<vmem>>, %arg4: memref<1x64xf32, #tpu.memory_space<vmem>>, %arg5: memref<1x64xf32, #tpu.memory_space<vmem>>, %arg6: memref<1x64xf32, #tpu.memory_space<vmem>>, %arg7: memref<1x64xf32, #tpu.memory_space<vmem>>, %arg8: memref<1x256xf32, #tpu.memory_space<vmem>>, %arg9: memref<1x256xf32, #tpu.memory_space<vmem>>, %arg10: memref<2x16x16x256xf32, #tpu.memory_space<vmem>>, %arg11: memref<2x18x18x64xf32, #tpu.memory_space<vmem>>) attributes {dimension_semantics = [], scalar_prefetch = 0 : i64, scratch_operands = 1 : i64, tpu.core_type = #tpu.core_type<tc>} {
    %c0 = arith.constant 0 : index
    %c0_0 = arith.constant 0 : index
    %c0_1 = arith.constant 0 : index
    %c0_2 = arith.constant 0 : index
    %0 = vector.load %arg0[%c0, %c0_0, %c0_1, %c0_2] : memref<2x16x16x256xf32, #tpu.memory_space<vmem>>, vector<2x16x16x256xf32>
    %1 = vector.shape_cast %0 : vector<2x16x16x256xf32> to vector<512x256xf32>
    %2 = arith.truncf %1 : vector<512x256xf32> to vector<512x256xbf16>
    %c0_3 = arith.constant 0 : index
    %c0_4 = arith.constant 0 : index
    %3 = vector.load %arg1[%c0_3, %c0_4] : memref<256x64xbf16, #tpu.memory_space<vmem>>, vector<256x64xbf16>
    %cst = arith.constant dense<0.000000e+00> : vector<512x64xf32>
    %4 = tpu.matmul %2, %3, %cst {dimension_numbers = #tpu.dot_dimension_numbers<[1], [0], [0], [1], [0, 0, 1, 1], [], []>} : vector<512x256xbf16>, vector<256x64xbf16>, vector<512x64xf32> -> vector<512x64xf32>
    %cst_5 = arith.constant dense<0.000000e+00> : vector<64xf32>
    %5 = vector.multi_reduction <add>, %4, %cst_5 [0] : vector<512x64xf32> to vector<64xf32>
    %6 = vector.shape_cast %5 : vector<64xf32> to vector<1x64xf32>
    %cst_6 = arith.constant 0.001953125 : f32
    %7 = vector.broadcast %cst_6 : f32 to vector<1x64xf32>
    %8 = arith.mulf %6, %7 : vector<1x64xf32>
    %9 = arith.mulf %4, %4 : vector<512x64xf32>
    %cst_7 = arith.constant dense<0.000000e+00> : vector<64xf32>
    %10 = vector.multi_reduction <add>, %9, %cst_7 [0] : vector<512x64xf32> to vector<64xf32>
    %11 = vector.shape_cast %10 : vector<64xf32> to vector<1x64xf32>
    %cst_8 = arith.constant 0.001953125 : f32
    %12 = vector.broadcast %cst_8 : f32 to vector<1x64xf32>
    %13 = arith.mulf %11, %12 : vector<1x64xf32>
    %14 = arith.mulf %8, %8 : vector<1x64xf32>
    %15 = arith.subf %13, %14 : vector<1x64xf32>
    %c0_9 = arith.constant 0 : index
    %c0_10 = arith.constant 0 : index
    %16 = vector.load %arg4[%c0_9, %c0_10] : memref<1x64xf32, #tpu.memory_space<vmem>>, vector<1x64xf32>
    %cst_11 = arith.constant 9.99999974E-6 : f32
    %17 = vector.broadcast %cst_11 : f32 to vector<1x64xf32>
    %18 = arith.addf %15, %17 : vector<1x64xf32>
    %19 = math.rsqrt %18 : vector<1x64xf32>
    %20 = arith.mulf %16, %19 : vector<1x64xf32>
    %21 = vector.broadcast %8 : vector<1x64xf32> to vector<512x64xf32>
    %22 = arith.subf %4, %21 : vector<512x64xf32>
    %23 = vector.broadcast %20 : vector<1x64xf32> to vector<512x64xf32>
    %24 = arith.mulf %22, %23 : vector<512x64xf32>
    %c0_12 = arith.constant 0 : index
    %c0_13 = arith.constant 0 : index
    %25 = vector.load %arg5[%c0_12, %c0_13] : memref<1x64xf32, #tpu.memory_space<vmem>>, vector<1x64xf32>
    %26 = vector.broadcast %25 : vector<1x64xf32> to vector<512x64xf32>
    %27 = arith.addf %24, %26 : vector<512x64xf32>
    %cst_14 = arith.constant 0.000000e+00 : f32
    %28 = vector.broadcast %cst_14 : f32 to vector<512x64xf32>
    %29 = arith.maximumf %27, %28 : vector<512x64xf32>
    %cst_15 = arith.constant 0.000000e+00 : f32
    %30 = vector.broadcast %cst_15 : f32 to vector<2x1x18x64xf32>
    %cst_16 = arith.constant 0.000000e+00 : f32
    %31 = vector.broadcast %cst_16 : f32 to vector<2x16x1x64xf32>
    %c0_17 = arith.constant 0 : index
    %c0_18 = arith.constant 0 : index
    %c0_19 = arith.constant 0 : index
    %c0_20 = arith.constant 0 : index
    %32 = vector.load %arg11[%c0_17, %c0_18, %c0_19, %c0_20] : memref<2x18x18x64xf32, #tpu.memory_space<vmem>>, vector<2x1x18x64xf32>
    tpu.vector_store %arg11[%c0_17, %c0_18, %c0_19, %c0_20], %30 {strides = array<i32>} : memref<2x18x18x64xf32, #tpu.memory_space<vmem>>, vector<2x1x18x64xf32>,
    %c0_21 = arith.constant 0 : index
    %c17 = arith.constant 17 : index
    %c0_22 = arith.constant 0 : index
    %c0_23 = arith.constant 0 : index
    %33 = vector.load %arg11[%c0_21, %c17, %c0_22, %c0_23] : memref<2x18x18x64xf32, #tpu.memory_space<vmem>>, vector<2x1x18x64xf32>
    tpu.vector_store %arg11[%c0_21, %c17, %c0_22, %c0_23], %30 {strides = array<i32>} : memref<2x18x18x64xf32, #tpu.memory_space<vmem>>, vector<2x1x18x64xf32>,
    %c0_24 = arith.constant 0 : index
    %c1 = arith.constant 1 : index
    %c0_25 = arith.constant 0 : index
    %c0_26 = arith.constant 0 : index
    %34 = vector.load %arg11[%c0_24, %c1, %c0_25, %c0_26] : memref<2x18x18x64xf32, #tpu.memory_space<vmem>>, vector<2x16x1x64xf32>
    tpu.vector_store %arg11[%c0_24, %c1, %c0_25, %c0_26], %31 {strides = array<i32>} : memref<2x18x18x64xf32, #tpu.memory_space<vmem>>, vector<2x16x1x64xf32>,
    %c0_27 = arith.constant 0 : index
    %c1_28 = arith.constant 1 : index
    %c17_29 = arith.constant 17 : index
    %c0_30 = arith.constant 0 : index
    %35 = vector.load %arg11[%c0_27, %c1_28, %c17_29, %c0_30] : memref<2x18x18x64xf32, #tpu.memory_space<vmem>>, vector<2x16x1x64xf32>
    tpu.vector_store %arg11[%c0_27, %c1_28, %c17_29, %c0_30], %31 {strides = array<i32>} : memref<2x18x18x64xf32, #tpu.memory_space<vmem>>, vector<2x16x1x64xf32>,
    %36 = vector.shape_cast %29 : vector<512x64xf32> to vector<2x16x16x64xf32>
    %c0_31 = arith.constant 0 : index
    %c1_32 = arith.constant 1 : index
    %c1_33 = arith.constant 1 : index
    %c0_34 = arith.constant 0 : index
    %37 = vector.load %arg11[%c0_31, %c1_32, %c1_33, %c0_34] : memref<2x18x18x64xf32, #tpu.memory_space<vmem>>, vector<2x16x16x64xf32>
    tpu.vector_store %arg11[%c0_31, %c1_32, %c1_33, %c0_34], %36 {strides = array<i32>} : memref<2x18x18x64xf32, #tpu.memory_space<vmem>>, vector<2x16x16x64xf32>,
    %c0_35 = arith.constant 0 : index
    %c0_36 = arith.constant 0 : index
    %c0_37 = arith.constant 0 : index
    %c0_38 = arith.constant 0 : index
    %38 = vector.load %arg11[%c0_35, %c0_36, %c0_37, %c0_38] : memref<2x18x18x64xf32, #tpu.memory_space<vmem>>, vector<2x16x16x64xf32>
    %39 = vector.shape_cast %38 : vector<2x16x16x64xf32> to vector<512x64xf32>
    %c0_39 = arith.constant 0 : index
    %c0_40 = arith.constant 0 : index
    %c1_41 = arith.constant 1 : index
    %c0_42 = arith.constant 0 : index
    %40 = vector.load %arg11[%c0_39, %c0_40, %c1_41, %c0_42] : memref<2x18x18x64xf32, #tpu.memory_space<vmem>>, vector<2x16x16x64xf32>
    %41 = vector.shape_cast %40 : vector<2x16x16x64xf32> to vector<512x64xf32>
    %c0_43 = arith.constant 0 : index
    %c0_44 = arith.constant 0 : index
    %c2 = arith.constant 2 : index
    %c0_45 = arith.constant 0 : index
    %42 = vector.load %arg11[%c0_43, %c0_44, %c2, %c0_45] : memref<2x18x18x64xf32, #tpu.memory_space<vmem>>, vector<2x16x16x64xf32>
    %43 = vector.shape_cast %42 : vector<2x16x16x64xf32> to vector<512x64xf32>
    %c0_46 = arith.constant 0 : index
    %c1_47 = arith.constant 1 : index
    %c0_48 = arith.constant 0 : index
    %c0_49 = arith.constant 0 : index
    %44 = vector.load %arg11[%c0_46, %c1_47, %c0_48, %c0_49] : memref<2x18x18x64xf32, #tpu.memory_space<vmem>>, vector<2x16x16x64xf32>
    %45 = vector.shape_cast %44 : vector<2x16x16x64xf32> to vector<512x64xf32>
    %c0_50 = arith.constant 0 : index
    %c1_51 = arith.constant 1 : index
    %c1_52 = arith.constant 1 : index
    %c0_53 = arith.constant 0 : index
    %46 = vector.load %arg11[%c0_50, %c1_51, %c1_52, %c0_53] : memref<2x18x18x64xf32, #tpu.memory_space<vmem>>, vector<2x16x16x64xf32>
    %47 = vector.shape_cast %46 : vector<2x16x16x64xf32> to vector<512x64xf32>
    %c0_54 = arith.constant 0 : index
    %c1_55 = arith.constant 1 : index
    %c2_56 = arith.constant 2 : index
    %c0_57 = arith.constant 0 : index
    %48 = vector.load %arg11[%c0_54, %c1_55, %c2_56, %c0_57] : memref<2x18x18x64xf32, #tpu.memory_space<vmem>>, vector<2x16x16x64xf32>
    %49 = vector.shape_cast %48 : vector<2x16x16x64xf32> to vector<512x64xf32>
    %c0_58 = arith.constant 0 : index
    %c2_59 = arith.constant 2 : index
    %c0_60 = arith.constant 0 : index
    %c0_61 = arith.constant 0 : index
    %50 = vector.load %arg11[%c0_58, %c2_59, %c0_60, %c0_61] : memref<2x18x18x64xf32, #tpu.memory_space<vmem>>, vector<2x16x16x64xf32>
    %51 = vector.shape_cast %50 : vector<2x16x16x64xf32> to vector<512x64xf32>
    %c0_62 = arith.constant 0 : index
    %c2_63 = arith.constant 2 : index
    %c1_64 = arith.constant 1 : index
    %c0_65 = arith.constant 0 : index
    %52 = vector.load %arg11[%c0_62, %c2_63, %c1_64, %c0_65] : memref<2x18x18x64xf32, #tpu.memory_space<vmem>>, vector<2x16x16x64xf32>
    %53 = vector.shape_cast %52 : vector<2x16x16x64xf32> to vector<512x64xf32>
    %c0_66 = arith.constant 0 : index
    %c2_67 = arith.constant 2 : index
    %c2_68 = arith.constant 2 : index
    %c0_69 = arith.constant 0 : index
    %54 = vector.load %arg11[%c0_66, %c2_67, %c2_68, %c0_69] : memref<2x18x18x64xf32, #tpu.memory_space<vmem>>, vector<2x16x16x64xf32>
    %55 = vector.shape_cast %54 : vector<2x16x16x64xf32> to vector<512x64xf32>
    %56 = tpu.concatenate %39, %41, %43, %45, %47, %49, %51, %53, %55 in 1 : vector<512x64xf32>, vector<512x64xf32>, vector<512x64xf32>, vector<512x64xf32>, vector<512x64xf32>, vector<512x64xf32>, vector<512x64xf32>, vector<512x64xf32>, vector<512x64xf32> -> vector<512x576xf32>
    %57 = arith.truncf %56 : vector<512x576xf32> to vector<512x576xbf16>
    %c0_70 = arith.constant 0 : index
    %c0_71 = arith.constant 0 : index
    %58 = vector.load %arg2[%c0_70, %c0_71] : memref<576x64xbf16, #tpu.memory_space<vmem>>, vector<576x64xbf16>
    %cst_72 = arith.constant dense<0.000000e+00> : vector<512x64xf32>
    %59 = tpu.matmul %57, %58, %cst_72 {dimension_numbers = #tpu.dot_dimension_numbers<[1], [0], [0], [1], [0, 0, 1, 1], [], []>} : vector<512x576xbf16>, vector<576x64xbf16>, vector<512x64xf32> -> vector<512x64xf32>
    %cst_73 = arith.constant dense<0.000000e+00> : vector<64xf32>
    %60 = vector.multi_reduction <add>, %59, %cst_73 [0] : vector<512x64xf32> to vector<64xf32>
    %61 = vector.shape_cast %60 : vector<64xf32> to vector<1x64xf32>
    %cst_74 = arith.constant 0.001953125 : f32
    %62 = vector.broadcast %cst_74 : f32 to vector<1x64xf32>
    %63 = arith.mulf %61, %62 : vector<1x64xf32>
    %64 = arith.mulf %59, %59 : vector<512x64xf32>
    %cst_75 = arith.constant dense<0.000000e+00> : vector<64xf32>
    %65 = vector.multi_reduction <add>, %64, %cst_75 [0] : vector<512x64xf32> to vector<64xf32>
    %66 = vector.shape_cast %65 : vector<64xf32> to vector<1x64xf32>
    %cst_76 = arith.constant 0.001953125 : f32
    %67 = vector.broadcast %cst_76 : f32 to vector<1x64xf32>
    %68 = arith.mulf %66, %67 : vector<1x64xf32>
    %69 = arith.mulf %63, %63 : vector<1x64xf32>
    %70 = arith.subf %68, %69 : vector<1x64xf32>
    %c0_77 = arith.constant 0 : index
    %c0_78 = arith.constant 0 : index
    %71 = vector.load %arg6[%c0_77, %c0_78] : memref<1x64xf32, #tpu.memory_space<vmem>>, vector<1x64xf32>
    %cst_79 = arith.constant 9.99999974E-6 : f32
    %72 = vector.broadcast %cst_79 : f32 to vector<1x64xf32>
    %73 = arith.addf %70, %72 : vector<1x64xf32>
    %74 = math.rsqrt %73 : vector<1x64xf32>
    %75 = arith.mulf %71, %74 : vector<1x64xf32>
    %76 = vector.broadcast %63 : vector<1x64xf32> to vector<512x64xf32>
    %77 = arith.subf %59, %76 : vector<512x64xf32>
    %78 = vector.broadcast %75 : vector<1x64xf32> to vector<512x64xf32>
    %79 = arith.mulf %77, %78 : vector<512x64xf32>
    %c0_80 = arith.constant 0 : index
    %c0_81 = arith.constant 0 : index
    %80 = vector.load %arg7[%c0_80, %c0_81] : memref<1x64xf32, #tpu.memory_space<vmem>>, vector<1x64xf32>
    %81 = vector.broadcast %80 : vector<1x64xf32> to vector<512x64xf32>
    %82 = arith.addf %79, %81 : vector<512x64xf32>
    %cst_82 = arith.constant 0.000000e+00 : f32
    %83 = vector.broadcast %cst_82 : f32 to vector<512x64xf32>
    %84 = arith.maximumf %82, %83 : vector<512x64xf32>
    %85 = arith.truncf %84 : vector<512x64xf32> to vector<512x64xbf16>
    %c0_83 = arith.constant 0 : index
    %c0_84 = arith.constant 0 : index
    %86 = vector.load %arg3[%c0_83, %c0_84] : memref<64x256xbf16, #tpu.memory_space<vmem>>, vector<64x256xbf16>
    %cst_85 = arith.constant dense<0.000000e+00> : vector<512x256xf32>
    %87 = tpu.matmul %85, %86, %cst_85 {dimension_numbers = #tpu.dot_dimension_numbers<[1], [0], [0], [1], [0, 0, 1, 1], [], []>} : vector<512x64xbf16>, vector<64x256xbf16>, vector<512x256xf32> -> vector<512x256xf32>
    %cst_86 = arith.constant dense<0.000000e+00> : vector<256xf32>
    %88 = vector.multi_reduction <add>, %87, %cst_86 [0] : vector<512x256xf32> to vector<256xf32>
    %89 = vector.shape_cast %88 : vector<256xf32> to vector<1x256xf32>
    %cst_87 = arith.constant 0.001953125 : f32
    %90 = vector.broadcast %cst_87 : f32 to vector<1x256xf32>
    %91 = arith.mulf %89, %90 : vector<1x256xf32>
    %92 = arith.mulf %87, %87 : vector<512x256xf32>
    %cst_88 = arith.constant dense<0.000000e+00> : vector<256xf32>
    %93 = vector.multi_reduction <add>, %92, %cst_88 [0] : vector<512x256xf32> to vector<256xf32>
    %94 = vector.shape_cast %93 : vector<256xf32> to vector<1x256xf32>
    %cst_89 = arith.constant 0.001953125 : f32
    %95 = vector.broadcast %cst_89 : f32 to vector<1x256xf32>
    %96 = arith.mulf %94, %95 : vector<1x256xf32>
    %97 = arith.mulf %91, %91 : vector<1x256xf32>
    %98 = arith.subf %96, %97 : vector<1x256xf32>
    %c0_90 = arith.constant 0 : index
    %c0_91 = arith.constant 0 : index
    %99 = vector.load %arg8[%c0_90, %c0_91] : memref<1x256xf32, #tpu.memory_space<vmem>>, vector<1x256xf32>
    %cst_92 = arith.constant 9.99999974E-6 : f32
    %100 = vector.broadcast %cst_92 : f32 to vector<1x256xf32>
    %101 = arith.addf %98, %100 : vector<1x256xf32>
    %102 = math.rsqrt %101 : vector<1x256xf32>
    %103 = arith.mulf %99, %102 : vector<1x256xf32>
    %104 = vector.broadcast %91 : vector<1x256xf32> to vector<512x256xf32>
    %105 = arith.subf %87, %104 : vector<512x256xf32>
    %106 = vector.broadcast %103 : vector<1x256xf32> to vector<512x256xf32>
    %107 = arith.mulf %105, %106 : vector<512x256xf32>
    %c0_93 = arith.constant 0 : index
    %c0_94 = arith.constant 0 : index
    %108 = vector.load %arg9[%c0_93, %c0_94] : memref<1x256xf32, #tpu.memory_space<vmem>>, vector<1x256xf32>
    %109 = vector.broadcast %108 : vector<1x256xf32> to vector<512x256xf32>
    %110 = arith.addf %107, %109 : vector<512x256xf32>
    %111 = arith.addf %110, %1 : vector<512x256xf32>
    %cst_95 = arith.constant 0.000000e+00 : f32
    %112 = vector.broadcast %cst_95 : f32 to vector<512x256xf32>
    %113 = arith.maximumf %111, %112 : vector<512x256xf32>
    %114 = vector.shape_cast %113 : vector<512x256xf32> to vector<2x16x16x256xf32>
    %c0_96 = arith.constant 0 : index
    %c0_97 = arith.constant 0 : index
    %c0_98 = arith.constant 0 : index
    %c0_99 = arith.constant 0 : index
    %115 = vector.load %arg10[%c0_96, %c0_97, %c0_98, %c0_99] : memref<2x16x16x256xf32, #tpu.memory_space<vmem>>, vector<2x16x16x256xf32>
    tpu.vector_store %arg10[%c0_96, %c0_97, %c0_98, %c0_99], %114 {strides = array<i32>} : memref<2x16x16x256xf32, #tpu.memory_space<vmem>>, vector<2x16x16x256xf32>,
    return
  }
}

</mosaic_0001>

<llo_original>
// kernel: tpu_custom_call.1
$region0: #{tpu_custom_call.1}
  #allocation0 [shape = 'u32[]', space=smem, size = 0x4, offset = 0x4, fixed_abs, tag = 'smem constant byte address 0x4 - core index']
  #allocation1 [shape = 'u32[144,128]{1,0:T(1,128)}', space=vmem, size = 0x12000, scoped, tag = 'internal scratch']
  #allocation2 [shape = 'f32[2,18,18,64]{3,2,1,0:T(8,128)}', space=vmem, size = 0x6c000, scoped, tag = 'scratch operand']
  %s0 = inlined_call_operand.hbm [shape: f32[2,16,16,256], index: 0, kind: input, shape index: {}]
  %s1 = inlined_call_operand.vmem [shape: bf16[256,64], index: 1, kind: input, shape index: {}]
  %s2 = inlined_call_operand.vmem [shape: bf16[576,64], index: 2, kind: input, shape index: {}]
  %s3 = inlined_call_operand.vmem [shape: bf16[64,256], index: 3, kind: input, shape index: {}]
  %s4 = inlined_call_operand.vmem [shape: f32[1,64], index: 4, kind: input, shape index: {}]
  %s5 = inlined_call_operand.vmem [shape: f32[1,64], index: 5, kind: input, shape index: {}]
  %s6 = inlined_call_operand.vmem [shape: f32[1,64], index: 6, kind: input, shape index: {}]
  %s7 = inlined_call_operand.vmem [shape: f32[1,64], index: 7, kind: input, shape index: {}]
  %s8 = inlined_call_operand.vmem [shape: f32[1,256], index: 8, kind: input, shape index: {}]
  %s9 = inlined_call_operand.vmem [shape: f32[1,256], index: 9, kind: input, shape index: {}]
  %s10 = inlined_call_operand.hbm [shape: f32[2,16,16,256], index: 10, kind: output, shape index: {}]
  %s11 = sld [smem:[#allocation0]]
  $region54: #{tpu_custom_call.1} parent=0
    _
  %s13 = ssub.s32 1, %s11
  %s14 = scalar_select 0, %s13, %s11
  $region1: #{tpu_custom_call.1} parent=0
    #allocation3 [shape = 'u8[524288]{0}', space=vmem, size = 0x80000, scoped, tag = 'input window, operand 0, single buffered']
    #allocation4 [shape = 's32[1]{0}', space=sflag, size = 0x4, scoped, tag = 'scoped memory for tpu_custom_call.1']
    #allocation5 [shape = 's32[1]{0}', space=sflag, size = 0x4, scoped, tag = 'scoped memory for tpu_custom_call.1']
    #allocation6 [shape = 'u8[524288]{0}', space=vmem, size = 0x80000, scoped, tag = 'output window, operand 0, single buffered']
    %15 = vsyncpa [#allocation4], 0
    %16 = vsyncpa [#allocation5], 0
    // Predicated region
    $region2: #{tpu_custom_call.1} parent=1 // pred_check
      _
    $region3: #{tpu_custom_call.1} parent=1 // pred_check_branch
      %18 = sbr.rel (0) target = $region5
    $region4: #{tpu_custom_call.1} parent=1 // pred_region
      %s20 = ssub.s32 16384, 16384
      %21 = vsyncadd [#allocation4], %s20
      %s22 = sshll.u32 [#allocation3], 4
      %s23 = int_to_ptr.vmem [resolvable:$true] %s22
      %28 = dma.hbm_to_vmem [thread:$0]  %s0, 16384, %s23, [#allocation4], 256, 256, 16
    $region5: #{tpu_custom_call.1} parent=1 // pred_fallthru
      _
    // Predicated region
    $region6: #{tpu_custom_call.1} parent=1 // pred_check
      _
    $region7: #{tpu_custom_call.1} parent=1 // pred_check_branch
      %30 = sbr.rel (0) target = $region9
    $region8: #{tpu_custom_call.1} parent=1 // pred_region
      _
    $region9: #{tpu_custom_call.1} parent=1 // pred_fallthru
      _
    // Predicated region
    $region10: #{tpu_custom_call.1} parent=1 // pred_check
      _
    $region11: #{tpu_custom_call.1} parent=1 // pred_check_branch
      %32 = sbr.rel (0) target = $region13
    $region12: #{tpu_custom_call.1} parent=1 // pred_region
      _
    $region13: #{tpu_custom_call.1} parent=1 // pred_fallthru
      _
    // Predicated region
    $region14: #{tpu_custom_call.1} parent=1 // pred_check
      _
    $region15: #{tpu_custom_call.1} parent=1 // pred_check_branch
      %34 = sbr.rel (0) target = $region17
    $region16: #{tpu_custom_call.1} parent=1 // pred_region
      _
    $region17: #{tpu_custom_call.1} parent=1 // pred_fallthru
      _
    // Predicated region
    $region18: #{tpu_custom_call.1} parent=1 // pred_check
      _
    $region19: #{tpu_custom_call.1} parent=1 // pred_check_branch
      %36 = sbr.rel (0) target = $region21
    $region20: #{tpu_custom_call.1} parent=1 // pred_region
      _
    $region21: #{tpu_custom_call.1} parent=1 // pred_fallthru
      _
    // Predicated region
    $region22: #{tpu_custom_call.1} parent=1 // pred_check
      _
    $region23: #{tpu_custom_call.1} parent=1 // pred_check_branch
      %38 = sbr.rel (0) target = $region25
    $region24: #{tpu_custom_call.1} parent=1 // pred_region
      _
    $region25: #{tpu_custom_call.1} parent=1 // pred_fallthru
      _
    // Predicated region
    $region26: #{tpu_custom_call.1} parent=1 // pred_check
      _
    $region27: #{tpu_custom_call.1} parent=1 // pred_check_branch
      %40 = sbr.rel (0) target = $region29
    $region28: #{tpu_custom_call.1} parent=1 // pred_region
      _
    $region29: #{tpu_custom_call.1} parent=1 // pred_fallthru
      _
    // Predicated region
    $region30: #{tpu_custom_call.1} parent=1 // pred_check
      _
    $region31: #{tpu_custom_call.1} parent=1 // pred_check_branch
      %42 = sbr.rel (0) target = $region33
    $region32: #{tpu_custom_call.1} parent=1 // pred_region
      _
    $region33: #{tpu_custom_call.1} parent=1 // pred_fallthru
      _
    // Predicated region
    $region34: #{tpu_custom_call.1} parent=1 // pred_check
      _
    $region35: #{tpu_custom_call.1} parent=1 // pred_check_branch
      %44 = sbr.rel (0) target = $region37
    $region36: #{tpu_custom_call.1} parent=1 // pred_region
      _
    $region37: #{tpu_custom_call.1} parent=1 // pred_fallthru
      _
    // Predicated region
    $region38: #{tpu_custom_call.1} parent=1 // pred_check
      _
    $region39: #{tpu_custom_call.1} parent=1 // pred_check_branch
      %46 = sbr.rel (0) target = $region41
    $region40: #{tpu_custom_call.1} parent=1 // pred_region
      _
    $region41: #{tpu_custom_call.1} parent=1 // pred_fallthru
      _
    // Predicated region
    $region42: #{tpu_custom_call.1} parent=1 // pred_check
      _
    $region43: #{tpu_custom_call.1} parent=1 // pred_check_branch
      %48 = sbr.rel (0) target = $region45
    $region44: #{tpu_custom_call.1} parent=1 // pred_region
      %49 = dma.done [#allocation4], 16384
    $region45: #{tpu_custom_call.1} parent=1 // pred_fallthru
      _
    %v51 = vld [vmem:[#allocation3] sm:$0xff]
    %v52 = vld [vmem:[#allocation3 + $0x8] sm:$0xff]
    %v53 = vld [vmem:[#allocation3 + $0x10] sm:$0xff]
    %v54 = vld [vmem:[#allocation3 + $0x18] sm:$0xff]
    %v55 = vld [vmem:[#allocation3 + $0x20] sm:$0xff]
    %v56 = vld [vmem:[#allocation3 + $0x28] sm:$0xff]
    %v57 = vld [vmem:[#allocation3 + $0x30] sm:$0xff]
    %v58 = vld [vmem:[#allocation3 + $0x38] sm:$0xff]
    %v59 = vld [vmem:[#allocation3 + $0x40] sm:$0xff]
    %v60 = vld [vmem:[#allocation3 + $0x48] sm:$0xff]
    %v61 = vld [vmem:[#allocation3 + $0x50] sm:$0xff]
    %v62 = vld [vmem:[#allocation3 + $0x58] sm:$0xff]
    %v63 = vld [vmem:[#allocation3 + $0x60] sm:$0xff]
    %v64 = vld [vmem:[#allocation3 + $0x68] sm:$0xff]
    %v65 = vld [vmem:[#allocation3 + $0x70] sm:$0xff]
    %v66 = vld [vmem:[#allocation3 + $0x78] sm:$0xff]
    %v67 = vld [vmem:[#allocation3 + $0x80] sm:$0xff]
    %v68 = vld [vmem:[#allocation3 + $0x88] sm:$0xff]
    %v69 = vld [vmem:[#allocation3 + $0x90] sm:$0xff]
    %v70 = vld [vmem:[#allocation3 + $0x98] sm:$0xff]
    %v71 = vld [vmem:[#allocation3 + $0xa0] sm:$0xff]
    %v72 = vld [vmem:[#allocation3 + $0xa8] sm:$0xff]
    %v73 = vld [vmem:[#allocation3 + $0xb0] sm:$0xff]
    %v74 = vld [vmem:[#allocation3 + $0xb8] sm:$0xff]
    %v75 = vld [vmem:[#allocation3 + $0xc0] sm:$0xff]
    %v76 = vld [vmem:[#allocation3 + $0xc8] sm:$0xff]
    %v77 = vld [vmem:[#allocation3 + $0xd0] sm:$0xff]
    %v78 = vld [vmem:[#allocation3 + $0xd8] sm:$0xff]
    %v79 = vld [vmem:[#allocation3 + $0xe0] sm:$0xff]
    %v80 = vld [vmem:[#allocation3 + $0xe8] sm:$0xff]
    %v81 = vld [vmem:[#allocation3 + $0xf0] sm:$0xff]
    %v82 = vld [vmem:[#allocation3 + $0xf8] sm:$0xff]
    %v83 = vld [vmem:[#allocation3 + $0x100] sm:$0xff]
    %v84 = vld [vmem:[#allocation3 + $0x108] sm:$0xff]
    %v85 = vld [vmem:[#allocation3 + $0x110] sm:$0xff]
    %v86 = vld [vmem:[#allocation3 + $0x118] sm:$0xff]
    %v87 = vld [vmem:[#allocation3 + $0x120] sm:$0xff]
    %v88 = vld [vmem:[#allocation3 + $0x128] sm:$0xff]
    %v89 = vld [vmem:[#allocation3 + $0x130] sm:$0xff]
    %v90 = vld [vmem:[#allocation3 + $0x138] sm:$0xff]
    %v91 = vld [vmem:[#allocation3 + $0x140] sm:$0xff]
    %v92 = vld [vmem:[#allocation3 + $0x148] sm:$0xff]
    %v93 = vld [vmem:[#allocation3 + $0x150] sm:$0xff]
    %v94 = vld [vmem:[#allocation3 + $0x158] sm:$0xff]
    %v95 = vld [vmem:[#allocation3 + $0x160] sm:$0xff]
    %v96 = vld [vmem:[#allocation3 + $0x168] sm:$0xff]
    %v97 = vld [vmem:[#allocation3 + $0x170] sm:$0xff]
    %v98 = vld [vmem:[#allocation3 + $0x178] sm:$0xff]
    %v99 = vld [vmem:[#allocation3 + $0x180] sm:$0xff]
    %v100 = vld [vmem:[#allocation3 + $0x188] sm:$0xff]
    %v101 = vld [vmem:[#allocation3 + $0x190] sm:$0xff]
    %v102 = vld [vmem:[#allocation3 + $0x198] sm:$0xff]
    %v103 = vld [vmem:[#allocation3 + $0x1a0] sm:$0xff]
    %v104 = vld [vmem:[#allocation3 + $0x1a8] sm:$0xff]
    %v105 = vld [vmem:[#allocation3 + $0x1b0] sm:$0xff]
    %v106 = vld [vmem:[#allocation3 + $0x1b8] sm:$0xff]
    %v107 = vld [vmem:[#allocation3 + $0x1c0] sm:$0xff]
    %v108 = vld [vmem:[#allocation3 + $0x1c8] sm:$0xff]
    %v109 = vld [vmem:[#allocation3 + $0x1d0] sm:$0xff]
    %v110 = vld [vmem:[#allocation3 + $0x1d8] sm:$0xff]
    %v111 = vld [vmem:[#allocation3 + $0x1e0] sm:$0xff]
    %v112 = vld [vmem:[#allocation3 + $0x1e8] sm:$0xff]
    %v113 = vld [vmem:[#allocation3 + $0x1f0] sm:$0xff]
    %v114 = vld [vmem:[#allocation3 + $0x1f8] sm:$0xff]
    %v115 = vld [vmem:[#allocation3 + $0x200] sm:$0xff]
    %v116 = vld [vmem:[#allocation3 + $0x208] sm:$0xff]
    %v117 = vld [vmem:[#allocation3 + $0x210] sm:$0xff]
    %v118 = vld [vmem:[#allocation3 + $0x218] sm:$0xff]
    %v119 = vld [vmem:[#allocation3 + $0x220] sm:$0xff]
    %v120 = vld [vmem:[#allocation3 + $0x228] sm:$0xff]
    %v121 = vld [vmem:[#allocation3 + $0x230] sm:$0xff]
    %v122 = vld [vmem:[#allocation3 + $0x238] sm:$0xff]
    %v123 = vld [vmem:[#allocation3 + $0x240] sm:$0xff]
    %v124 = vld [vmem:[#allocation3 + $0x248] sm:$0xff]
    %v125 = vld [vmem:[#allocation3 + $0x250] sm:$0xff]
    %v126 = vld [vmem:[#allocation3 + $0x258] sm:$0xff]
    %v127 = vld [vmem:[#allocation3 + $0x260] sm:$0xff]
    %v128 = vld [vmem:[#allocation3 + $0x268] sm:$0xff]
    %v129 = vld [vmem:[#allocation3 + $0x270] sm:$0xff]
    %v130 = vld [vmem:[#allocation3 + $0x278] sm:$0xff]
    %v131 = vld [vmem:[#allocation3 + $0x280] sm:$0xff]
    %v132 = vld [vmem:[#allocation3 + $0x288] sm:$0xff]
    %v133 = vld [vmem:[#allocation3 + $0x290] sm:$0xff]
    %v134 = vld [vmem:[#allocation3 + $0x298] sm:$0xff]
    %v135 = vld [vmem:[#allocation3 + $0x2a0] sm:$0xff]
    %v136 = vld [vmem:[#allocation3 + $0x2a8] sm:$0xff]
    %v137 = vld [vmem:[#allocation3 + $0x2b0] sm:$0xff]
    %v138 = vld [vmem:[#allocation3 + $0x2b8] sm:$0xff]
    %v139 = vld [vmem:[#allocation3 + $0x2c0] sm:$0xff]
    %v140 = vld [vmem:[#allocation3 + $0x2c8] sm:$0xff]
    %v141 = vld [vmem:[#allocation3 + $0x2d0] sm:$0xff]
    %v142 = vld [vmem:[#allocation3 + $0x2d8] sm:$0xff]
    %v143 = vld [vmem:[#allocation3 + $0x2e0] sm:$0xff]
    %v144 = vld [vmem:[#allocation3 + $0x2e8] sm:$0xff]
    %v145 = vld [vmem:[#allocation3 + $0x2f0] sm:$0xff]
    %v146 = vld [vmem:[#allocation3 + $0x2f8] sm:$0xff]
    %v147 = vld [vmem:[#allocation3 + $0x300] sm:$0xff]
    %v148 = vld [vmem:[#allocation3 + $0x308] sm:$0xff]
    %v149 = vld [vmem:[#allocation3 + $0x310] sm:$0xff]
    %v150 = vld [vmem:[#allocation3 + $0x318] sm:$0xff]
    %v151 = vld [vmem:[#allocation3 + $0x320] sm:$0xff]
    %v152 = vld [vmem:[#allocation3 + $0x328] sm:$0xff]
    %v153 = vld [vmem:[#allocation3 + $0x330] sm:$0xff]
    %v154 = vld [vmem:[#allocation3 + $0x338] sm:$0xff]
    %v155 = vld [vmem:[#allocation3 + $0x340] sm:$0xff]
    %v156 = vld [vmem:[#allocation3 + $0x348] sm:$0xff]
    %v157 = vld [vmem:[#allocation3 + $0x350] sm:$0xff]
    %v158 = vld [vmem:[#allocation3 + $0x358] sm:$0xff]
    %v159 = vld [vmem:[#allocation3 + $0x360] sm:$0xff]
    %v160 = vld [vmem:[#allocation3 + $0x368] sm:$0xff]
    %v161 = vld [vmem:[#allocation3 + $0x370] sm:$0xff]
    %v162 = vld [vmem:[#allocation3 + $0x378] sm:$0xff]
    %v163 = vld [vmem:[#allocation3 + $0x380] sm:$0xff]
    %v164 = vld [vmem:[#allocation3 + $0x388] sm:$0xff]
    %v165 = vld [vmem:[#allocation3 + $0x390] sm:$0xff]
    %v166 = vld [vmem:[#allocation3 + $0x398] sm:$0xff]
    %v167 = vld [vmem:[#allocation3 + $0x3a0] sm:$0xff]
    %v168 = vld [vmem:[#allocation3 + $0x3a8] sm:$0xff]
    %v169 = vld [vmem:[#allocation3 + $0x3b0] sm:$0xff]
    %v170 = vld [vmem:[#allocation3 + $0x3b8] sm:$0xff]
    %v171 = vld [vmem:[#allocation3 + $0x3c0] sm:$0xff]
    %v172 = vld [vmem:[#allocation3 + $0x3c8] sm:$0xff]
    %v173 = vld [vmem:[#allocation3 + $0x3d0] sm:$0xff]
    %v174 = vld [vmem:[#allocation3 + $0x3d8] sm:$0xff]
    %v175 = vld [vmem:[#allocation3 + $0x3e0] sm:$0xff]
    %v176 = vld [vmem:[#allocation3 + $0x3e8] sm:$0xff]
    %v177 = vld [vmem:[#allocation3 + $0x3f0] sm:$0xff]
    %v178 = vld [vmem:[#allocation3 + $0x3f8] sm:$0xff]
    %v179 = vpack.c.bf16 %v53, %v51
    %v180 = vpack.c.bf16 %v54, %v52
    %v181 = vpack.c.bf16 %v57, %v55
    %v182 = vpack.c.bf16 %v58, %v56
    %v183 = vpack.c.bf16 %v61, %v59
    %v184 = vpack.c.bf16 %v62, %v60
    %v185 = vpack.c.bf16 %v65, %v63
    %v186 = vpack.c.bf16 %v66, %v64
    %v187 = vpack.c.bf16 %v69, %v67
    %v188 = vpack.c.bf16 %v70, %v68
    %v189 = vpack.c.bf16 %v73, %v71
    %v190 = vpack.c.bf16 %v74, %v72
    %v191 = vpack.c.bf16 %v77, %v75
    %v192 = vpack.c.bf16 %v78, %v76
    %v193 = vpack.c.bf16 %v81, %v79
    %v194 = vpack.c.bf16 %v82, %v80
    %v195 = vpack.c.bf16 %v85, %v83
    %v196 = vpack.c.bf16 %v86, %v84
    %v197 = vpack.c.bf16 %v89, %v87
    %v198 = vpack.c.bf16 %v90, %v88
    %v199 = vpack.c.bf16 %v93, %v91
    %v200 = vpack.c.bf16 %v94, %v92
    %v201 = vpack.c.bf16 %v97, %v95
    %v202 = vpack.c.bf16 %v98, %v96
    %v203 = vpack.c.bf16 %v101, %v99
    %v204 = vpack.c.bf16 %v102, %v100
    %v205 = vpack.c.bf16 %v105, %v103
    %v206 = vpack.c.bf16 %v106, %v104
    %v207 = vpack.c.bf16 %v109, %v107
    %v208 = vpack.c.bf16 %v110, %v108
    %v209 = vpack.c.bf16 %v113, %v111
    %v210 = vpack.c.bf16 %v114, %v112
    %v211 = vpack.c.bf16 %v117, %v115
    %v212 = vpack.c.bf16 %v118, %v116
    %v213 = vpack.c.bf16 %v121, %v119
    %v214 = vpack.c.bf16 %v122, %v120
    %v215 = vpack.c.bf16 %v125, %v123
    %v216 = vpack.c.bf16 %v126, %v124
    %v217 = vpack.c.bf16 %v129, %v127
    %v218 = vpack.c.bf16 %v130, %v128
    %v219 = vpack.c.bf16 %v133, %v131
    %v220 = vpack.c.bf16 %v134, %v132
    %v221 = vpack.c.bf16 %v137, %v135
    %v222 = vpack.c.bf16 %v138, %v136
    %v223 = vpack.c.bf16 %v141, %v139
    %v224 = vpack.c.bf16 %v142, %v140
    %v225 = vpack.c.bf16 %v145, %v143
    %v226 = vpack.c.bf16 %v146, %v144
    %v227 = vpack.c.bf16 %v149, %v147
    %v228 = vpack.c.bf16 %v150, %v148
    %v229 = vpack.c.bf16 %v153, %v151
    %v230 = vpack.c.bf16 %v154, %v152
    %v231 = vpack.c.bf16 %v157, %v155
    %v232 = vpack.c.bf16 %v158, %v156
    %v233 = vpack.c.bf16 %v161, %v159
    %v234 = vpack.c.bf16 %v162, %v160
    %v235 = vpack.c.bf16 %v165, %v163
    %v236 = vpack.c.bf16 %v166, %v164
    %v237 = vpack.c.bf16 %v169, %v167
    %v238 = vpack.c.bf16 %v170, %v168
    %v239 = vpack.c.bf16 %v173, %v171
    %v240 = vpack.c.bf16 %v174, %v172
    %v241 = vpack.c.bf16 %v177, %v175
    %v242 = vpack.c.bf16 %v178, %v176
    %v243 = vld [vmem:[%s1] sm:$0xf]
    %v244 = vld [vmem:[%s1 + $0x4] sm:$0xf]
    %v245 = vld [vmem:[%s1 + $0x8] sm:$0xf]
    %v246 = vld [vmem:[%s1 + $0xc] sm:$0xf]
    %v247 = vld [vmem:[%s1 + $0x10] sm:$0xf]
    %v248 = vld [vmem:[%s1 + $0x14] sm:$0xf]
    %v249 = vld [vmem:[%s1 + $0x18] sm:$0xf]
    %v250 = vld [vmem:[%s1 + $0x1c] sm:$0xf]
    %v251 = vld [vmem:[%s1 + $0x20] sm:$0xf]
    %v252 = vld [vmem:[%s1 + $0x24] sm:$0xf]
    %v253 = vld [vmem:[%s1 + $0x28] sm:$0xf]
    %v254 = vld [vmem:[%s1 + $0x2c] sm:$0xf]
    %v255 = vld [vmem:[%s1 + $0x30] sm:$0xf]
    %v256 = vld [vmem:[%s1 + $0x34] sm:$0xf]
    %v257 = vld [vmem:[%s1 + $0x38] sm:$0xf]
    %v258 = vld [vmem:[%s1 + $0x3c] sm:$0xf]
    %v259 = vld [vmem:[%s1 + $0x40] sm:$0xf]
    %v260 = vld [vmem:[%s1 + $0x44] sm:$0xf]
    %v261 = vld [vmem:[%s1 + $0x48] sm:$0xf]
    %v262 = vld [vmem:[%s1 + $0x4c] sm:$0xf]
    %v263 = vld [vmem:[%s1 + $0x50] sm:$0xf]
    %v264 = vld [vmem:[%s1 + $0x54] sm:$0xf]
    %v265 = vld [vmem:[%s1 + $0x58] sm:$0xf]
    %v266 = vld [vmem:[%s1 + $0x5c] sm:$0xf]
    %v267 = vld [vmem:[%s1 + $0x60] sm:$0xf]
    %v268 = vld [vmem:[%s1 + $0x64] sm:$0xf]
    %v269 = vld [vmem:[%s1 + $0x68] sm:$0xf]
    %v270 = vld [vmem:[%s1 + $0x6c] sm:$0xf]
    %v271 = vld [vmem:[%s1 + $0x70] sm:$0xf]
    %v272 = vld [vmem:[%s1 + $0x74] sm:$0xf]
    %v273 = vld [vmem:[%s1 + $0x78] sm:$0xf]
    %v274 = vld [vmem:[%s1 + $0x7c] sm:$0xf]
    %v307 = vunpack.c.l.b16 %v243
    %v308 = vunpack.c.l.b16 %v244
    %v309 = vunpack.c.l.b16 %v245
    %v310 = vunpack.c.l.b16 %v246
    %v311 = vunpack.c.l.b16 %v247
    %v312 = vunpack.c.l.b16 %v248
    %v313 = vunpack.c.l.b16 %v249
    %v314 = vunpack.c.l.b16 %v250
    %v315 = vunpack.c.l.b16 %v251
    %v316 = vunpack.c.l.b16 %v252
    %v317 = vunpack.c.l.b16 %v253
    %v318 = vunpack.c.l.b16 %v254
    %v319 = vunpack.c.l.b16 %v255
    %v320 = vunpack.c.l.b16 %v256
    %v321 = vunpack.c.l.b16 %v257
    %v322 = vunpack.c.l.b16 %v258
    %v323 = vunpack.c.l.b16 %v259
    %v324 = vunpack.c.l.b16 %v260
    %v325 = vunpack.c.l.b16 %v261
    %v326 = vunpack.c.l.b16 %v262
    %v327 = vunpack.c.l.b16 %v263
    %v328 = vunpack.c.l.b16 %v264
    %v329 = vunpack.c.l.b16 %v265
    %v330 = vunpack.c.l.b16 %v266
    %v331 = vunpack.c.l.b16 %v267
    %v332 = vunpack.c.l.b16 %v268
    %v333 = vunpack.c.l.b16 %v269
    %v334 = vunpack.c.l.b16 %v270
    %v335 = vunpack.c.l.b16 %v271
    %v336 = vunpack.c.l.b16 %v272
    %v337 = vunpack.c.l.b16 %v273
    %v338 = vunpack.c.l.b16 %v274
    %v339 = vpack.c.b16 %v308, %v307
    %v340 = vpack.c.b16 %v310, %v309
    %v341 = vpack.c.b16 %v312, %v311
    %v342 = vpack.c.b16 %v314, %v313
    %v343 = vpack.c.b16 %v316, %v315
    %v344 = vpack.c.b16 %v318, %v317
    %v345 = vpack.c.b16 %v320, %v319
    %v346 = vpack.c.b16 %v322, %v321
    %v347 = vpack.c.b16 %v324, %v323
    %v348 = vpack.c.b16 %v326, %v325
    %v349 = vpack.c.b16 %v328, %v327
    %v350 = vpack.c.b16 %v330, %v329
    %v351 = vpack.c.b16 %v332, %v331
    %v352 = vpack.c.b16 %v334, %v333
    %v353 = vpack.c.b16 %v336, %v335
    %v354 = vpack.c.b16 %v338, %v337
    %371 = vmatprep.subr.bf16.mxu0 0
    %372 = vmatpush1.bf16.msra.mxu0 %v339
    %373 = vmatprep.subr.bf16.mxu0 0
    %374 = vmatpush1.bf16.msra.mxu0 %v340
    %375 = vmatprep.subr.bf16.mxu0 0
    %376 = vmatpush1.bf16.msra.mxu0 %v341
    %377 = vmatprep.subr.bf16.mxu0 0
    %378 = vmatpush1.bf16.msra.mxu0 %v342
    %379 = vmatprep.subr.bf16.mxu0 0
    %380 = vmatpush1.bf16.msra.mxu0 %v343
    %381 = vmatprep.subr.bf16.mxu0 0
    %382 = vmatpush1.bf16.msra.mxu0 %v344
    %383 = vmatprep.subr.bf16.mxu0 0
    %384 = vmatpush1.bf16.msra.mxu0 %v345
    %385 = vmatprep.subr.bf16.mxu0 0
    %386 = vmatpush1.bf16.msra.mxu0 %v346
    %387 = vmatprep.subr.bf16.mxu0 0
    %388 = vmatpush1.bf16.msra.mxu0 %v347
    %389 = vmatprep.subr.bf16.mxu0 0
    %390 = vmatpush1.bf16.msra.mxu0 %v348
    %391 = vmatprep.subr.bf16.mxu0 0
    %392 = vmatpush1.bf16.msra.mxu0 %v349
    %393 = vmatprep.subr.bf16.mxu0 0
    %394 = vmatpush1.bf16.msra.mxu0 %v350
    %395 = vmatprep.subr.bf16.mxu0 0
    %396 = vmatpush1.bf16.msra.mxu0 %v351
    %397 = vmatprep.subr.bf16.mxu0 0
    %398 = vmatpush1.bf16.msra.mxu0 %v352
    %399 = vmatprep.subr.bf16.mxu0 0
    %400 = vmatpush1.bf16.msra.mxu0 %v353
    %401 = vmatprep.subr.bf16.mxu0 0
    %402 = vmatpush1.bf16.msra.mxu0 %v354
    %403 = vmatprep.mubr.bf16.mxu0 %v180
    %404 = vmatmul.mubr.bf16.gmra.mrb[0].mxu0 %v179
    %v405 = vpop.f32.mrb[0].mxu0
    %v406 = vadd.f32 0.0, %v405
    %v407 = vpop.f32.mrb[0].mxu0
    %v408 = vpop.f32.mrb[0].mxu0
    %v409 = vadd.f32 0.0, %v408
    %v410 = vpop.f32.mrb[0].mxu0
    %411 = vmatprep.mubr.bf16.mxu0 %v182
    %412 = vmatmul.mubr.bf16.gmra.mrb[0].mxu0 %v181
    %v413 = vpop.f32.mrb[0].mxu0
    %v414 = vadd.f32 0.0, %v413
    %v415 = vpop.f32.mrb[0].mxu0
    %v416 = vpop.f32.mrb[0].mxu0
    %v417 = vadd.f32 0.0, %v416
    %v418 = vpop.f32.mrb[0].mxu0
    %419 = vmatprep.mubr.bf16.mxu0 %v184
    %420 = vmatmul.mubr.bf16.gmra.mrb[0].mxu0 %v183
    %v421 = vpop.f32.mrb[0].mxu0
    %v422 = vadd.f32 0.0, %v421
    %v423 = vpop.f32.mrb[0].mxu0
    %v424 = vpop.f32.mrb[0].mxu0
    %v425 = vadd.f32 0.0, %v424
    %v426 = vpop.f32.mrb[0].mxu0
    %427 = vmatprep.mubr.bf16.mxu0 %v186
    %428 = vmatmul.mubr.bf16.gmra.mrb[0].mxu0 %v185
    %v429 = vpop.f32.mrb[0].mxu0
    %v430 = vadd.f32 0.0, %v429
    %v431 = vpop.f32.mrb[0].mxu0
    %v432 = vpop.f32.mrb[0].mxu0
    %v433 = vadd.f32 0.0, %v432
    %v434 = vpop.f32.mrb[0].mxu0
    %435 = vmatprep.mubr.bf16.mxu0 %v188
    %436 = vmatmul.mubr.bf16.gmra.mrb[0].mxu0 %v187
    %v437 = vpop.f32.mrb[0].mxu0
    %v438 = vadd.f32 0.0, %v437
    %v439 = vpop.f32.mrb[0].mxu0
    %v440 = vpop.f32.mrb[0].mxu0
    %v441 = vadd.f32 0.0, %v440
    %v442 = vpop.f32.mrb[0].mxu0
    %443 = vmatprep.mubr.bf16.mxu0 %v190
    %444 = vmatmul.mubr.bf16.gmra.mrb[0].mxu0 %v189
    %v445 = vpop.f32.mrb[0].mxu0
    %v446 = vadd.f32 0.0, %v445
    %v447 = vpop.f32.mrb[0].mxu0
    %v448 = vpop.f32.mrb[0].mxu0
    %v449 = vadd.f32 0.0, %v448
    %v450 = vpop.f32.mrb[0].mxu0
    %451 = vmatprep.mubr.bf16.mxu0 %v192
    %452 = vmatmul.mubr.bf16.gmra.mrb[0].mxu0 %v191
    %v453 = vpop.f32.mrb[0].mxu0
    %v454 = vadd.f32 0.0, %v453
    %v455 = vpop.f32.mrb[0].mxu0
    %v456 = vpop.f32.mrb[0].mxu0
    %v457 = vadd.f32 0.0, %v456
    %v458 = vpop.f32.mrb[0].mxu0
    %459 = vmatprep.mubr.bf16.mxu0 %v194
    %460 = vmatmul.mubr.bf16.gmra.mrb[0].mxu0 %v193
    %v461 = vpop.f32.mrb[0].mxu0
    %v462 = vadd.f32 0.0, %v461
    %v463 = vpop.f32.mrb[0].mxu0
    %v464 = vpop.f32.mrb[0].mxu0
    %v465 = vadd.f32 0.0, %v464
    %v466 = vpop.f32.mrb[0].mxu0
    %467 = vmatprep.mubr.bf16.mxu0 %v196
    %468 = vmatmul.mubr.bf16.gmra.mrb[0].mxu0 %v195
    %v469 = vpop.f32.mrb[0].mxu0
    %v470 = vadd.f32 0.0, %v469
    %v471 = vpop.f32.mrb[0].mxu0
    %v472 = vpop.f32.mrb[0].mxu0
    %v473 = vadd.f32 0.0, %v472
    %v474 = vpop.f32.mrb[0].mxu0
    %475 = vmatprep.mubr.bf16.mxu0 %v198
    %476 = vmatmul.mubr.bf16.gmra.mrb[0].mxu0 %v197
    %v477 = vpop.f32.mrb[0].mxu0
    %v478 = vadd.f32 0.0, %v477
    %v479 = vpop.f32.mrb[0].mxu0
    %v480 = vpop.f32.mrb[0].mxu0
    %v481 = vadd.f32 0.0, %v480
    %v482 = vpop.f32.mrb[0].mxu0
    %483 = vmatprep.mubr.bf16.mxu0 %v200
    %484 = vmatmul.mubr.bf16.gmra.mrb[0].mxu0 %v199
    %v485 = vpop.f32.mrb[0].mxu0
    %v486 = vadd.f32 0.0, %v485
    %v487 = vpop.f32.mrb[0].mxu0
    %v488 = vpop.f32.mrb[0].mxu0
    %v489 = vadd.f32 0.0, %v488
    %v490 = vpop.f32.mrb[0].mxu0
    %491 = vmatprep.mubr.bf16.mxu0 %v202
    %492 = vmatmul.mubr.bf16.gmra.mrb[0].mxu0 %v201
    %v493 = vpop.f32.mrb[0].mxu0
    %v494 = vadd.f32 0.0, %v493
    %v495 = vpop.f32.mrb[0].mxu0
    %v496 = vpop.f32.mrb[0].mxu0
    %v497 = vadd.f32 0.0, %v496
    %v498 = vpop.f32.mrb[0].mxu0
    %499 = vmatprep.mubr.bf16.mxu0 %v204
    %500 = vmatmul.mubr.bf16.gmra.mrb[0].mxu0 %v203
    %v501 = vpop.f32.mrb[0].mxu0
    %v502 = vadd.f32 0.0, %v501
    %v503 = vpop.f32.mrb[0].mxu0
    %v504 = vpop.f32.mrb[0].mxu0
    %v505 = vadd.f32 0.0, %v504
    %v506 = vpop.f32.mrb[0].mxu0
    %507 = vmatprep.mubr.bf16.mxu0 %v206
    %508 = vmatmul.mubr.bf16.gmra.mrb[0].mxu0 %v205
    %v509 = vpop.f32.mrb[0].mxu0
    %v510 = vadd.f32 0.0, %v509
    %v511 = vpop.f32.mrb[0].mxu0
    %v512 = vpop.f32.mrb[0].mxu0
    %v513 = vadd.f32 0.0, %v512
    %v514 = vpop.f32.mrb[0].mxu0
    %515 = vmatprep.mubr.bf16.mxu0 %v208
    %516 = vmatmul.mubr.bf16.gmra.mrb[0].mxu0 %v207
    %v517 = vpop.f32.mrb[0].mxu0
    %v518 = vadd.f32 0.0, %v517
    %v519 = vpop.f32.mrb[0].mxu0
    %v520 = vpop.f32.mrb[0].mxu0
    %v521 = vadd.f32 0.0, %v520
    %v522 = vpop.f32.mrb[0].mxu0
    %523 = vmatprep.mubr.bf16.mxu0 %v210
    %524 = vmatmul.mubr.bf16.gmra.mrb[0].mxu0 %v209
    %v525 = vpop.f32.mrb[0].mxu0
    %v526 = vadd.f32 0.0, %v525
    %v527 = vpop.f32.mrb[0].mxu0
    %v528 = vpop.f32.mrb[0].mxu0
    %v529 = vadd.f32 0.0, %v528
    %v530 = vpop.f32.mrb[0].mxu0
    %531 = vmatprep.mubr.bf16.mxu0 %v212
    %532 = vmatmul.mubr.bf16.gmra.mrb[0].mxu0 %v211
    %v533 = vpop.f32.mrb[0].mxu0
    %v534 = vadd.f32 0.0, %v533
    %v535 = vpop.f32.mrb[0].mxu0
    %v536 = vpop.f32.mrb[0].mxu0
    %v537 = vadd.f32 0.0, %v536
    %v538 = vpop.f32.mrb[0].mxu0
    %539 = vmatprep.mubr.bf16.mxu0 %v214
    %540 = vmatmul.mubr.bf16.gmra.mrb[0].mxu0 %v213
    %v541 = vpop.f32.mrb[0].mxu0
    %v542 = vadd.f32 0.0, %v541
    %v543 = vpop.f32.mrb[0].mxu0
    %v544 = vpop.f32.mrb[0].mxu0
    %v545 = vadd.f32 0.0, %v544
    %v546 = vpop.f32.mrb[0].mxu0
    %547 = vmatprep.mubr.bf16.mxu0 %v216
    %548 = vmatmul.mubr.bf16.gmra.mrb[0].mxu0 %v215
    %v549 = vpop.f32.mrb[0].mxu0
    %v550 = vadd.f32 0.0, %v549
    %v551 = vpop.f32.mrb[0].mxu0
    %v552 = vpop.f32.mrb[0].mxu0
    %v553 = vadd.f32 0.0, %v552
    %v554 = vpop.f32.mrb[0].mxu0
    %555 = vmatprep.mubr.bf16.mxu0 %v218
    %556 = vmatmul.mubr.bf16.gmra.mrb[0].mxu0 %v217
    %v557 = vpop.f32.mrb[0].mxu0
    %v558 = vadd.f32 0.0, %v557
    %v559 = vpop.f32.mrb[0].mxu0
    %v560 = vpop.f32.mrb[0].mxu0
    %v561 = vadd.f32 0.0, %v560
    %v562 = vpop.f32.mrb[0].mxu0
    %563 = vmatprep.mubr.bf16.mxu0 %v220
    %564 = vmatmul.mubr.bf16.gmra.mrb[0].mxu0 %v219
    %v565 = vpop.f32.mrb[0].mxu0
    %v566 = vadd.f32 0.0, %v565
    %v567 = vpop.f32.mrb[0].mxu0
    %v568 = vpop.f32.mrb[0].mxu0
    %v569 = vadd.f32 0.0, %v568
    %v570 = vpop.f32.mrb[0].mxu0
    %571 = vmatprep.mubr.bf16.mxu0 %v222
    %572 = vmatmul.mubr.bf16.gmra.mrb[0].mxu0 %v221
    %v573 = vpop.f32.mrb[0].mxu0
    %v574 = vadd.f32 0.0, %v573
    %v575 = vpop.f32.mrb[0].mxu0
    %v576 = vpop.f32.mrb[0].mxu0
    %v577 = vadd.f32 0.0, %v576
    %v578 = vpop.f32.mrb[0].mxu0
    %579 = vmatprep.mubr.bf16.mxu0 %v224
    %580 = vmatmul.mubr.bf16.gmra.mrb[0].mxu0 %v223
    %v581 = vpop.f32.mrb[0].mxu0
    %v582 = vadd.f32 0.0, %v581
    %v583 = vpop.f32.mrb[0].mxu0
    %v584 = vpop.f32.mrb[0].mxu0
    %v585 = vadd.f32 0.0, %v584
    %v586 = vpop.f32.mrb[0].mxu0
    %587 = vmatprep.mubr.bf16.mxu0 %v226
    %588 = vmatmul.mubr.bf16.gmra.mrb[0].mxu0 %v225
    %v589 = vpop.f32.mrb[0].mxu0
    %v590 = vadd.f32 0.0, %v589
    %v591 = vpop.f32.mrb[0].mxu0
    %v592 = vpop.f32.mrb[0].mxu0
    %v593 = vadd.f32 0.0, %v592
    %v594 = vpop.f32.mrb[0].mxu0
    %595 = vmatprep.mubr.bf16.mxu0 %v228
    %596 = vmatmul.mubr.bf16.gmra.mrb[0].mxu0 %v227
    %v597 = vpop.f32.mrb[0].mxu0
    %v598 = vadd.f32 0.0, %v597
    %v599 = vpop.f32.mrb[0].mxu0
    %v600 = vpop.f32.mrb[0].mxu0
    %v601 = vadd.f32 0.0, %v600
    %v602 = vpop.f32.mrb[0].mxu0
    %603 = vmatprep.mubr.bf16.mxu0 %v230
    %604 = vmatmul.mubr.bf16.gmra.mrb[0].mxu0 %v229
    %v605 = vpop.f32.mrb[0].mxu0
    %v606 = vadd.f32 0.0, %v605
    %v607 = vpop.f32.mrb[0].mxu0
    %v608 = vpop.f32.mrb[0].mxu0
    %v609 = vadd.f32 0.0, %v608
    %v610 = vpop.f32.mrb[0].mxu0
    %611 = vmatprep.mubr.bf16.mxu0 %v232
    %612 = vmatmul.mubr.bf16.gmra.mrb[0].mxu0 %v231
    %v613 = vpop.f32.mrb[0].mxu0
    %v614 = vadd.f32 0.0, %v613
    %v615 = vpop.f32.mrb[0].mxu0
    %v616 = vpop.f32.mrb[0].mxu0
    %v617 = vadd.f32 0.0, %v616
    %v618 = vpop.f32.mrb[0].mxu0
    %619 = vmatprep.mubr.bf16.mxu0 %v234
    %620 = vmatmul.mubr.bf16.gmra.mrb[0].mxu0 %v233
    %v621 = vpop.f32.mrb[0].mxu0
    %v622 = vadd.f32 0.0, %v621
    %v623 = vpop.f32.mrb[0].mxu0
    %v624 = vpop.f32.mrb[0].mxu0
    %v625 = vadd.f32 0.0, %v624
    %v626 = vpop.f32.mrb[0].mxu0
    %627 = vmatprep.mubr.bf16.mxu0 %v236
    %628 = vmatmul.mubr.bf16.gmra.mrb[0].mxu0 %v235
    %v629 = vpop.f32.mrb[0].mxu0
    %v630 = vadd.f32 0.0, %v629
    %v631 = vpop.f32.mrb[0].mxu0
    %v632 = vpop.f32.mrb[0].mxu0
    %v633 = vadd.f32 0.0, %v632
    %v634 = vpop.f32.mrb[0].mxu0
    %635 = vmatprep.mubr.bf16.mxu0 %v238
    %636 = vmatmul.mubr.bf16.gmra.mrb[0].mxu0 %v237
    %v637 = vpop.f32.mrb[0].mxu0
    %v638 = vadd.f32 0.0, %v637
    %v639 = vpop.f32.mrb[0].mxu0
    %v640 = vpop.f32.mrb[0].mxu0
    %v641 = vadd.f32 0.0, %v640
    %v642 = vpop.f32.mrb[0].mxu0
    %643 = vmatprep.mubr.bf16.mxu0 %v240
    %644 = vmatmul.mubr.bf16.gmra.mrb[0].mxu0 %v239
    %v645 = vpop.f32.mrb[0].mxu0
    %v646 = vadd.f32 0.0, %v645
    %v647 = vpop.f32.mrb[0].mxu0
    %v648 = vpop.f32.mrb[0].mxu0
    %v649 = vadd.f32 0.0, %v648
    %v650 = vpop.f32.mrb[0].mxu0
    %651 = vmatprep.mubr.bf16.mxu0 %v242
    %652 = vmatmul.mubr.bf16.gmra.mrb[0].mxu0 %v241
    %v653 = vpop.f32.mrb[0].mxu0
    %v654 = vadd.f32 0.0, %v653
    %v655 = vpop.f32.mrb[0].mxu0
    %v656 = vpop.f32.mrb[0].mxu0
    %v657 = vadd.f32 0.0, %v656
    %v658 = vpop.f32.mrb[0].mxu0
    %659 = vdwg.mxu0
    %vm660 = vcmask 523264
    %v661 = vsel %vm660, %v406, 0.0
    %v662 = vsel %vm660, %v409, 0.0
    %v663 = vadd.f32 %v661, %v662
    %v664 = vsel %vm660, %v414, 0.0
    %v665 = vadd.f32 %v663, %v664
    %v666 = vsel %vm660, %v417, 0.0
    %v667 = vadd.f32 %v665, %v666
    %v668 = vsel %vm660, %v422, 0.0
    %v669 = vadd.f32 %v667, %v668
    %v670 = vsel %vm660, %v425, 0.0
    %v671 = vadd.f32 %v669, %v670
    %v672 = vsel %vm660, %v430, 0.0
    %v673 = vadd.f32 %v671, %v672
    %v674 = vsel %vm660, %v433, 0.0
    %v675 = vadd.f32 %v673, %v674
    %v676 = vsel %vm660, %v438, 0.0
    %v677 = vadd.f32 %v675, %v676
    %v678 = vsel %vm660, %v441, 0.0
    %v679 = vadd.f32 %v677, %v678
    %v680 = vsel %vm660, %v446, 0.0
    %v681 = vadd.f32 %v679, %v680
    %v682 = vsel %vm660, %v449, 0.0
    %v683 = vadd.f32 %v681, %v682
    %v684 = vsel %vm660, %v454, 0.0
    %v685 = vadd.f32 %v683, %v684
    %v686 = vsel %vm660, %v457, 0.0
    %v687 = vadd.f32 %v685, %v686
    %v688 = vsel %vm660, %v462, 0.0
    %v689 = vadd.f32 %v687, %v688
    %v690 = vsel %vm660, %v465, 0.0
    %v691 = vadd.f32 %v689, %v690
    %v692 = vsel %vm660, %v470, 0.0
    %v693 = vadd.f32 %v691, %v692
    %v694 = vsel %vm660, %v473, 0.0
    %v695 = vadd.f32 %v693, %v694
    %v696 = vsel %vm660, %v478, 0.0
    %v697 = vadd.f32 %v695, %v696
    %v698 = vsel %vm660, %v481, 0.0
    %v699 = vadd.f32 %v697, %v698
    %v700 = vsel %vm660, %v486, 0.0
    %v701 = vadd.f32 %v699, %v700
    %v702 = vsel %vm660, %v489, 0.0
    %v703 = vadd.f32 %v701, %v702
    %v704 = vsel %vm660, %v494, 0.0
    %v705 = vadd.f32 %v703, %v704
    %v706 = vsel %vm660, %v497, 0.0
    %v707 = vadd.f32 %v705, %v706
    %v708 = vsel %vm660, %v502, 0.0
    %v709 = vadd.f32 %v707, %v708
    %v710 = vsel %vm660, %v505, 0.0
    %v711 = vadd.f32 %v709, %v710
    %v712 = vsel %vm660, %v510, 0.0
    %v713 = vadd.f32 %v711, %v712
    %v714 = vsel %vm660, %v513, 0.0
    %v715 = vadd.f32 %v713, %v714
    %v716 = vsel %vm660, %v518, 0.0
    %v717 = vadd.f32 %v715, %v716
    %v718 = vsel %vm660, %v521, 0.0
    %v719 = vadd.f32 %v717, %v718
    %v720 = vsel %vm660, %v526, 0.0
    %v721 = vadd.f32 %v719, %v720
    %v722 = vsel %vm660, %v529, 0.0
    %v723 = vadd.f32 %v721, %v722
    %v724 = vsel %vm660, %v534, 0.0
    %v725 = vadd.f32 %v723, %v724
    %v726 = vsel %vm660, %v537, 0.0
    %v727 = vadd.f32 %v725, %v726
    %v728 = vsel %vm660, %v542, 0.0
    %v729 = vadd.f32 %v727, %v728
    %v730 = vsel %vm660, %v545, 0.0
    %v731 = vadd.f32 %v729, %v730
    %v732 = vsel %vm660, %v550, 0.0
    %v733 = vadd.f32 %v731, %v732
    %v734 = vsel %vm660, %v553, 0.0
    %v735 = vadd.f32 %v733, %v734
    %v736 = vsel %vm660, %v558, 0.0
    %v737 = vadd.f32 %v735, %v736
    %v738 = vsel %vm660, %v561, 0.0
    %v739 = vadd.f32 %v737, %v738
    %v740 = vsel %vm660, %v566, 0.0
    %v741 = vadd.f32 %v739, %v740
    %v742 = vsel %vm660, %v569, 0.0
    %v743 = vadd.f32 %v741, %v742
    %v744 = vsel %vm660, %v574, 0.0
    %v745 = vadd.f32 %v743, %v744
    %v746 = vsel %vm660, %v577, 0.0
    %v747 = vadd.f32 %v745, %v746
    %v748 = vsel %vm660, %v582, 0.0
    %v749 = vadd.f32 %v747, %v748
    %v750 = vsel %vm660, %v585, 0.0
    %v751 = vadd.f32 %v749, %v750
    %v752 = vsel %vm660, %v590, 0.0
    %v753 = vadd.f32 %v751, %v752
    %v754 = vsel %vm660, %v593, 0.0
    %v755 = vadd.f32 %v753, %v754
    %v756 = vsel %vm660, %v598, 0.0
    %v757 = vadd.f32 %v755, %v756
    %v758 = vsel %vm660, %v601, 0.0
    %v759 = vadd.f32 %v757, %v758
    %v760 = vsel %vm660, %v606, 0.0
    %v761 = vadd.f32 %v759, %v760
    %v762 = vsel %vm660, %v609, 0.0
    %v763 = vadd.f32 %v761, %v762
    %v764 = vsel %vm660, %v614, 0.0
    %v765 = vadd.f32 %v763, %v764
    %v766 = vsel %vm660, %v617, 0.0
    %v767 = vadd.f32 %v765, %v766
    %v768 = vsel %vm660, %v622, 0.0
    %v769 = vadd.f32 %v767, %v768
    %v770 = vsel %vm660, %v625, 0.0
    %v771 = vadd.f32 %v769, %v770
    %v772 = vsel %vm660, %v630, 0.0
    %v773 = vadd.f32 %v771, %v772
    %v774 = vsel %vm660, %v633, 0.0
    %v775 = vadd.f32 %v773, %v774
    %v776 = vsel %vm660, %v638, 0.0
    %v777 = vadd.f32 %v775, %v776
    %v778 = vsel %vm660, %v641, 0.0
    %v779 = vadd.f32 %v777, %v778
    %v780 = vsel %vm660, %v646, 0.0
    %v781 = vadd.f32 %v779, %v780
    %v782 = vsel %vm660, %v649, 0.0
    %v783 = vadd.f32 %v781, %v782
    %v784 = vsel %vm660, %v654, 0.0
    %v785 = vadd.f32 %v783, %v784
    %v786 = vsel %vm660, %v657, 0.0
    %v787 = vadd.f32 %v785, %v786
    %v788 = vrot.slane %v787, 4
    %v789 = vadd.f32 %v787, %v788
    %v790 = vrot.slane %v789, 2
    %v791 = vadd.f32 %v789, %v790
    %v792 = vrot.slane %v791, 1
    %v793 = vadd.f32 %v791, %v792
    %v794 = vmul.f32 %v793, 0.001953125
    %v795 = vmul.f32 %v406, %v406
    %v796 = vmul.f32 %v409, %v409
    %v797 = vmul.f32 %v414, %v414
    %v798 = vmul.f32 %v417, %v417
    %v799 = vmul.f32 %v422, %v422
    %v800 = vmul.f32 %v425, %v425
    %v801 = vmul.f32 %v430, %v430
    %v802 = vmul.f32 %v433, %v433
    %v803 = vmul.f32 %v438, %v438
    %v804 = vmul.f32 %v441, %v441
    %v805 = vmul.f32 %v446, %v446
    %v806 = vmul.f32 %v449, %v449
    %v807 = vmul.f32 %v454, %v454
    %v808 = vmul.f32 %v457, %v457
    %v809 = vmul.f32 %v462, %v462
    %v810 = vmul.f32 %v465, %v465
    %v811 = vmul.f32 %v470, %v470
    %v812 = vmul.f32 %v473, %v473
    %v813 = vmul.f32 %v478, %v478
    %v814 = vmul.f32 %v481, %v481
    %v815 = vmul.f32 %v486, %v486
    %v816 = vmul.f32 %v489, %v489
    %v817 = vmul.f32 %v494, %v494
    %v818 = vmul.f32 %v497, %v497
    %v819 = vmul.f32 %v502, %v502
    %v820 = vmul.f32 %v505, %v505
    %v821 = vmul.f32 %v510, %v510
    %v822 = vmul.f32 %v513, %v513
    %v823 = vmul.f32 %v518, %v518
    %v824 = vmul.f32 %v521, %v521
    %v825 = vmul.f32 %v526, %v526
    %v826 = vmul.f32 %v529, %v529
    %v827 = vmul.f32 %v534, %v534
    %v828 = vmul.f32 %v537, %v537
    %v829 = vmul.f32 %v542, %v542
    %v830 = vmul.f32 %v545, %v545
    %v831 = vmul.f32 %v550, %v550
    %v832 = vmul.f32 %v553, %v553
    %v833 = vmul.f32 %v558, %v558
    %v834 = vmul.f32 %v561, %v561
    %v835 = vmul.f32 %v566, %v566
    %v836 = vmul.f32 %v569, %v569
    %v837 = vmul.f32 %v574, %v574
    %v838 = vmul.f32 %v577, %v577
    %v839 = vmul.f32 %v582, %v582
    %v840 = vmul.f32 %v585, %v585
    %v841 = vmul.f32 %v590, %v590
    %v842 = vmul.f32 %v593, %v593
    %v843 = vmul.f32 %v598, %v598
    %v844 = vmul.f32 %v601, %v601
    %v845 = vmul.f32 %v606, %v606
    %v846 = vmul.f32 %v609, %v609
    %v847 = vmul.f32 %v614, %v614
    %v848 = vmul.f32 %v617, %v617
    %v849 = vmul.f32 %v622, %v622
    %v850 = vmul.f32 %v625, %v625
    %v851 = vmul.f32 %v630, %v630
    %v852 = vmul.f32 %v633, %v633
    %v853 = vmul.f32 %v638, %v638
    %v854 = vmul.f32 %v641, %v641
    %v855 = vmul.f32 %v646, %v646
    %v856 = vmul.f32 %v649, %v649
    %v857 = vmul.f32 %v654, %v654
    %v858 = vmul.f32 %v657, %v657
    %v859 = vsel %vm660, %v795, 0.0
    %v860 = vsel %vm660, %v796, 0.0
    %v861 = vadd.f32 %v859, %v860
    %v862 = vsel %vm660, %v797, 0.0
    %v863 = vadd.f32 %v861, %v862
    %v864 = vsel %vm660, %v798, 0.0
    %v865 = vadd.f32 %v863, %v864
    %v866 = vsel %vm660, %v799, 0.0
    %v867 = vadd.f32 %v865, %v866
    %v868 = vsel %vm660, %v800, 0.0
    %v869 = vadd.f32 %v867, %v868
    %v870 = vsel %vm660, %v801, 0.0
    %v871 = vadd.f32 %v869, %v870
    %v872 = vsel %vm660, %v802, 0.0
    %v873 = vadd.f32 %v871, %v872
    %v874 = vsel %vm660, %v803, 0.0
    %v875 = vadd.f32 %v873, %v874
    %v876 = vsel %vm660, %v804, 0.0
    %v877 = vadd.f32 %v875, %v876
    %v878 = vsel %vm660, %v805, 0.0
    %v879 = vadd.f32 %v877, %v878
    %v880 = vsel %vm660, %v806, 0.0
    %v881 = vadd.f32 %v879, %v880
    %v882 = vsel %vm660, %v807, 0.0
    %v883 = vadd.f32 %v881, %v882
    %v884 = vsel %vm660, %v808, 0.0
    %v885 = vadd.f32 %v883, %v884
    %v886 = vsel %vm660, %v809, 0.0
    %v887 = vadd.f32 %v885, %v886
    %v888 = vsel %vm660, %v810, 0.0
    %v889 = vadd.f32 %v887, %v888
    %v890 = vsel %vm660, %v811, 0.0
    %v891 = vadd.f32 %v889, %v890
    %v892 = vsel %vm660, %v812, 0.0
    %v893 = vadd.f32 %v891, %v892
    %v894 = vsel %vm660, %v813, 0.0
    %v895 = vadd.f32 %v893, %v894
    %v896 = vsel %vm660, %v814, 0.0
    %v897 = vadd.f32 %v895, %v896
    %v898 = vsel %vm660, %v815, 0.0
    %v899 = vadd.f32 %v897, %v898
    %v900 = vsel %vm660, %v816, 0.0
    %v901 = vadd.f32 %v899, %v900
    %v902 = vsel %vm660, %v817, 0.0
    %v903 = vadd.f32 %v901, %v902
    %v904 = vsel %vm660, %v818, 0.0
    %v905 = vadd.f32 %v903, %v904
    %v906 = vsel %vm660, %v819, 0.0
    %v907 = vadd.f32 %v905, %v906
    %v908 = vsel %vm660, %v820, 0.0
    %v909 = vadd.f32 %v907, %v908
    %v910 = vsel %vm660, %v821, 0.0
    %v911 = vadd.f32 %v909, %v910
    %v912 = vsel %vm660, %v822, 0.0
    %v913 = vadd.f32 %v911, %v912
    %v914 = vsel %vm660, %v823, 0.0
    %v915 = vadd.f32 %v913, %v914
    %v916 = vsel %vm660, %v824, 0.0
    %v917 = vadd.f32 %v915, %v916
    %v918 = vsel %vm660, %v825, 0.0
    %v919 = vadd.f32 %v917, %v918
    %v920 = vsel %vm660, %v826, 0.0
    %v921 = vadd.f32 %v919, %v920
    %v922 = vsel %vm660, %v827, 0.0
    %v923 = vadd.f32 %v921, %v922
    %v924 = vsel %vm660, %v828, 0.0
    %v925 = vadd.f32 %v923, %v924
    %v926 = vsel %vm660, %v829, 0.0
    %v927 = vadd.f32 %v925, %v926
    %v928 = vsel %vm660, %v830, 0.0
    %v929 = vadd.f32 %v927, %v928
    %v930 = vsel %vm660, %v831, 0.0
    %v931 = vadd.f32 %v929, %v930
    %v932 = vsel %vm660, %v832, 0.0
    %v933 = vadd.f32 %v931, %v932
    %v934 = vsel %vm660, %v833, 0.0
    %v935 = vadd.f32 %v933, %v934
    %v936 = vsel %vm660, %v834, 0.0
    %v937 = vadd.f32 %v935, %v936
    %v938 = vsel %vm660, %v835, 0.0
    %v939 = vadd.f32 %v937, %v938
    %v940 = vsel %vm660, %v836, 0.0
    %v941 = vadd.f32 %v939, %v940
    %v942 = vsel %vm660, %v837, 0.0
    %v943 = vadd.f32 %v941, %v942
    %v944 = vsel %vm660, %v838, 0.0
    %v945 = vadd.f32 %v943, %v944
    %v946 = vsel %vm660, %v839, 0.0
    %v947 = vadd.f32 %v945, %v946
    %v948 = vsel %vm660, %v840, 0.0
    %v949 = vadd.f32 %v947, %v948
    %v950 = vsel %vm660, %v841, 0.0
    %v951 = vadd.f32 %v949, %v950
    %v952 = vsel %vm660, %v842, 0.0
    %v953 = vadd.f32 %v951, %v952
    %v954 = vsel %vm660, %v843, 0.0
    %v955 = vadd.f32 %v953, %v954
    %v956 = vsel %vm660, %v844, 0.0
    %v957 = vadd.f32 %v955, %v956
    %v958 = vsel %vm660, %v845, 0.0
    %v959 = vadd.f32 %v957, %v958
    %v960 = vsel %vm660, %v846, 0.0
    %v961 = vadd.f32 %v959, %v960
    %v962 = vsel %vm660, %v847, 0.0
    %v963 = vadd.f32 %v961, %v962
    %v964 = vsel %vm660, %v848, 0.0
    %v965 = vadd.f32 %v963, %v964
    %v966 = vsel %vm660, %v849, 0.0
    %v967 = vadd.f32 %v965, %v966
    %v968 = vsel %vm660, %v850, 0.0
    %v969 = vadd.f32 %v967, %v968
    %v970 = vsel %vm660, %v851, 0.0
    %v971 = vadd.f32 %v969, %v970
    %v972 = vsel %vm660, %v852, 0.0
    %v973 = vadd.f32 %v971, %v972
    %v974 = vsel %vm660, %v853, 0.0
    %v975 = vadd.f32 %v973, %v974
    %v976 = vsel %vm660, %v854, 0.0
    %v977 = vadd.f32 %v975, %v976
    %v978 = vsel %vm660, %v855, 0.0
    %v979 = vadd.f32 %v977, %v978
    %v980 = vsel %vm660, %v856, 0.0
    %v981 = vadd.f32 %v979, %v980
    %v982 = vsel %vm660, %v857, 0.0
    %v983 = vadd.f32 %v981, %v982
    %v984 = vsel %vm660, %v858, 0.0
    %v985 = vadd.f32 %v983, %v984
    %v986 = vrot.slane %v985, 4
    %v987 = vadd.f32 %v985, %v986
    %v988 = vrot.slane %v987, 2
    %v989 = vadd.f32 %v987, %v988
    %v990 = vrot.slane %v989, 1
    %v991 = vadd.f32 %v989, %v990
    %v992 = vmul.f32 %v991, 0.001953125
    %v993 = vmul.f32 %v794, %v794
    %v994 = vsub.f32 %v992, %v993
    %v995 = vld [vmem:[%s4] sm:$0x1]
    %v996 = vadd.f32 %v994, 1e-05
    %v997 = vrsqrt.pop %v996
    %v998 = vmul.f32 %v995, %v997
    %v999 = vsub.f32 %v406, %v794
    %v1000 = vsub.f32 %v409, %v794
    %v1001 = vsub.f32 %v414, %v794
    %v1002 = vsub.f32 %v417, %v794
    %v1003 = vsub.f32 %v422, %v794
    %v1004 = vsub.f32 %v425, %v794
    %v1005 = vsub.f32 %v430, %v794
    %v1006 = vsub.f32 %v433, %v794
    %v1007 = vsub.f32 %v438, %v794
    %v1008 = vsub.f32 %v441, %v794
    %v1009 = vsub.f32 %v446, %v794
    %v1010 = vsub.f32 %v449, %v794
    %v1011 = vsub.f32 %v454, %v794
    %v1012 = vsub.f32 %v457, %v794
    %v1013 = vsub.f32 %v462, %v794
    %v1014 = vsub.f32 %v465, %v794
    %v1015 = vsub.f32 %v470, %v794
    %v1016 = vsub.f32 %v473, %v794
    %v1017 = vsub.f32 %v478, %v794
    %v1018 = vsub.f32 %v481, %v794
    %v1019 = vsub.f32 %v486, %v794
    %v1020 = vsub.f32 %v489, %v794
    %v1021 = vsub.f32 %v494, %v794
    %v1022 = vsub.f32 %v497, %v794
    %v1023 = vsub.f32 %v502, %v794
    %v1024 = vsub.f32 %v505, %v794
    %v1025 = vsub.f32 %v510, %v794
    %v1026 = vsub.f32 %v513, %v794
    %v1027 = vsub.f32 %v518, %v794
    %v1028 = vsub.f32 %v521, %v794
    %v1029 = vsub.f32 %v526, %v794
    %v1030 = vsub.f32 %v529, %v794
    %v1031 = vsub.f32 %v534, %v794
    %v1032 = vsub.f32 %v537, %v794
    %v1033 = vsub.f32 %v542, %v794
    %v1034 = vsub.f32 %v545, %v794
    %v1035 = vsub.f32 %v550, %v794
    %v1036 = vsub.f32 %v553, %v794
    %v1037 = vsub.f32 %v558, %v794
    %v1038 = vsub.f32 %v561, %v794
    %v1039 = vsub.f32 %v566, %v794
    %v1040 = vsub.f32 %v569, %v794
    %v1041 = vsub.f32 %v574, %v794
    %v1042 = vsub.f32 %v577, %v794
    %v1043 = vsub.f32 %v582, %v794
    %v1044 = vsub.f32 %v585, %v794
    %v1045 = vsub.f32 %v590, %v794
    %v1046 = vsub.f32 %v593, %v794
    %v1047 = vsub.f32 %v598, %v794
    %v1048 = vsub.f32 %v601, %v794
    %v1049 = vsub.f32 %v606, %v794
    %v1050 = vsub.f32 %v609, %v794
    %v1051 = vsub.f32 %v614, %v794
    %v1052 = vsub.f32 %v617, %v794
    %v1053 = vsub.f32 %v622, %v794
    %v1054 = vsub.f32 %v625, %v794
    %v1055 = vsub.f32 %v630, %v794
    %v1056 = vsub.f32 %v633, %v794
    %v1057 = vsub.f32 %v638, %v794
    %v1058 = vsub.f32 %v641, %v794
    %v1059 = vsub.f32 %v646, %v794
    %v1060 = vsub.f32 %v649, %v794
    %v1061 = vsub.f32 %v654, %v794
    %v1062 = vsub.f32 %v657, %v794
    %v1064 = vlaneseq
    %v1065 = vshrl.u32 %v1064, 7
    %v1066 = vsub.s32 0, %v1065
    %v1067 = vrot.slane %v998, %v1066
    %v1069 = vmul.f32 %v999, %v1067
    %v1070 = vmul.f32 %v1000, %v1067
    %v1071 = vmul.f32 %v1001, %v1067
    %v1072 = vmul.f32 %v1002, %v1067
    %v1073 = vmul.f32 %v1003, %v1067
    %v1074 = vmul.f32 %v1004, %v1067
    %v1075 = vmul.f32 %v1005, %v1067
    %v1076 = vmul.f32 %v1006, %v1067
    %v1077 = vmul.f32 %v1007, %v1067
    %v1078 = vmul.f32 %v1008, %v1067
    %v1079 = vmul.f32 %v1009, %v1067
    %v1080 = vmul.f32 %v1010, %v1067
    %v1081 = vmul.f32 %v1011, %v1067
    %v1082 = vmul.f32 %v1012, %v1067
    %v1083 = vmul.f32 %v1013, %v1067
    %v1084 = vmul.f32 %v1014, %v1067
    %v1085 = vmul.f32 %v1015, %v1067
    %v1086 = vmul.f32 %v1016, %v1067
    %v1087 = vmul.f32 %v1017, %v1067
    %v1088 = vmul.f32 %v1018, %v1067
    %v1089 = vmul.f32 %v1019, %v1067
    %v1090 = vmul.f32 %v1020, %v1067
    %v1091 = vmul.f32 %v1021, %v1067
    %v1092 = vmul.f32 %v1022, %v1067
    %v1093 = vmul.f32 %v1023, %v1067
    %v1094 = vmul.f32 %v1024, %v1067
    %v1095 = vmul.f32 %v1025, %v1067
    %v1096 = vmul.f32 %v1026, %v1067
    %v1097 = vmul.f32 %v1027, %v1067
    %v1098 = vmul.f32 %v1028, %v1067
    %v1099 = vmul.f32 %v1029, %v1067
    %v1100 = vmul.f32 %v1030, %v1067
    %v1101 = vmul.f32 %v1031, %v1067
    %v1102 = vmul.f32 %v1032, %v1067
    %v1103 = vmul.f32 %v1033, %v1067
    %v1104 = vmul.f32 %v1034, %v1067
    %v1105 = vmul.f32 %v1035, %v1067
    %v1106 = vmul.f32 %v1036, %v1067
    %v1107 = vmul.f32 %v1037, %v1067
    %v1108 = vmul.f32 %v1038, %v1067
    %v1109 = vmul.f32 %v1039, %v1067
    %v1110 = vmul.f32 %v1040, %v1067
    %v1111 = vmul.f32 %v1041, %v1067
    %v1112 = vmul.f32 %v1042, %v1067
    %v1113 = vmul.f32 %v1043, %v1067
    %v1114 = vmul.f32 %v1044, %v1067
    %v1115 = vmul.f32 %v1045, %v1067
    %v1116 = vmul.f32 %v1046, %v1067
    %v1117 = vmul.f32 %v1047, %v1067
    %v1118 = vmul.f32 %v1048, %v1067
    %v1119 = vmul.f32 %v1049, %v1067
    %v1120 = vmul.f32 %v1050, %v1067
    %v1121 = vmul.f32 %v1051, %v1067
    %v1122 = vmul.f32 %v1052, %v1067
    %v1123 = vmul.f32 %v1053, %v1067
    %v1124 = vmul.f32 %v1054, %v1067
    %v1125 = vmul.f32 %v1055, %v1067
    %v1126 = vmul.f32 %v1056, %v1067
    %v1127 = vmul.f32 %v1057, %v1067
    %v1128 = vmul.f32 %v1058, %v1067
    %v1129 = vmul.f32 %v1059, %v1067
    %v1130 = vmul.f32 %v1060, %v1067
    %v1131 = vmul.f32 %v1061, %v1067
    %v1132 = vmul.f32 %v1062, %v1067
    %v1133 = vld [vmem:[%s5] sm:$0x1]
    %v1135 = vlaneseq
    %v1136 = vshrl.u32 %v1135, 7
    %v1137 = vsub.s32 0, %v1136
    %v1138 = vrot.slane %v1133, %v1137
    %v1140 = vadd.f32 %v1069, %v1138
    %v1141 = vadd.f32 %v1070, %v1138
    %v1142 = vadd.f32 %v1071, %v1138
    %v1143 = vadd.f32 %v1072, %v1138
    %v1144 = vadd.f32 %v1073, %v1138
    %v1145 = vadd.f32 %v1074, %v1138
    %v1146 = vadd.f32 %v1075, %v1138
    %v1147 = vadd.f32 %v1076, %v1138
    %v1148 = vadd.f32 %v1077, %v1138
    %v1149 = vadd.f32 %v1078, %v1138
    %v1150 = vadd.f32 %v1079, %v1138
    %v1151 = vadd.f32 %v1080, %v1138
    %v1152 = vadd.f32 %v1081, %v1138
    %v1153 = vadd.f32 %v1082, %v1138
    %v1154 = vadd.f32 %v1083, %v1138
    %v1155 = vadd.f32 %v1084, %v1138
    %v1156 = vadd.f32 %v1085, %v1138
    %v1157 = vadd.f32 %v1086, %v1138
    %v1158 = vadd.f32 %v1087, %v1138
    %v1159 = vadd.f32 %v1088, %v1138
    %v1160 = vadd.f32 %v1089, %v1138
    %v1161 = vadd.f32 %v1090, %v1138
    %v1162 = vadd.f32 %v1091, %v1138
    %v1163 = vadd.f32 %v1092, %v1138
    %v1164 = vadd.f32 %v1093, %v1138
    %v1165 = vadd.f32 %v1094, %v1138
    %v1166 = vadd.f32 %v1095, %v1138
    %v1167 = vadd.f32 %v1096, %v1138
    %v1168 = vadd.f32 %v1097, %v1138
    %v1169 = vadd.f32 %v1098, %v1138
    %v1170 = vadd.f32 %v1099, %v1138
    %v1171 = vadd.f32 %v1100, %v1138
    %v1172 = vadd.f32 %v1101, %v1138
    %v1173 = vadd.f32 %v1102, %v1138
    %v1174 = vadd.f32 %v1103, %v1138
    %v1175 = vadd.f32 %v1104, %v1138
    %v1176 = vadd.f32 %v1105, %v1138
    %v1177 = vadd.f32 %v1106, %v1138
    %v1178 = vadd.f32 %v1107, %v1138
    %v1179 = vadd.f32 %v1108, %v1138
    %v1180 = vadd.f32 %v1109, %v1138
    %v1181 = vadd.f32 %v1110, %v1138
    %v1182 = vadd.f32 %v1111, %v1138
    %v1183 = vadd.f32 %v1112, %v1138
    %v1184 = vadd.f32 %v1113, %v1138
    %v1185 = vadd.f32 %v1114, %v1138
    %v1186 = vadd.f32 %v1115, %v1138
    %v1187 = vadd.f32 %v1116, %v1138
    %v1188 = vadd.f32 %v1117, %v1138
    %v1189 = vadd.f32 %v1118, %v1138
    %v1190 = vadd.f32 %v1119, %v1138
    %v1191 = vadd.f32 %v1120, %v1138
    %v1192 = vadd.f32 %v1121, %v1138
    %v1193 = vadd.f32 %v1122, %v1138
    %v1194 = vadd.f32 %v1123, %v1138
    %v1195 = vadd.f32 %v1124, %v1138
    %v1196 = vadd.f32 %v1125, %v1138
    %v1197 = vadd.f32 %v1126, %v1138
    %v1198 = vadd.f32 %v1127, %v1138
    %v1199 = vadd.f32 %v1128, %v1138
    %v1200 = vadd.f32 %v1129, %v1138
    %v1201 = vadd.f32 %v1130, %v1138
    %v1202 = vadd.f32 %v1131, %v1138
    %v1203 = vadd.f32 %v1132, %v1138
    %v1204 = vmax.f32 %v1140, 0.0
    %v1205 = vmax.f32 %v1141, 0.0
    %v1206 = vmax.f32 %v1142, 0.0
    %v1207 = vmax.f32 %v1143, 0.0
    %v1208 = vmax.f32 %v1144, 0.0
    %v1209 = vmax.f32 %v1145, 0.0
    %v1210 = vmax.f32 %v1146, 0.0
    %v1211 = vmax.f32 %v1147, 0.0
    %v1212 = vmax.f32 %v1148, 0.0
    %v1213 = vmax.f32 %v1149, 0.0
    %v1214 = vmax.f32 %v1150, 0.0
    %v1215 = vmax.f32 %v1151, 0.0
    %v1216 = vmax.f32 %v1152, 0.0
    %v1217 = vmax.f32 %v1153, 0.0
    %v1218 = vmax.f32 %v1154, 0.0
    %v1219 = vmax.f32 %v1155, 0.0
    %v1220 = vmax.f32 %v1156, 0.0
    %v1221 = vmax.f32 %v1157, 0.0
    %v1222 = vmax.f32 %v1158, 0.0
    %v1223 = vmax.f32 %v1159, 0.0
    %v1224 = vmax.f32 %v1160, 0.0
    %v1225 = vmax.f32 %v1161, 0.0
    %v1226 = vmax.f32 %v1162, 0.0
    %v1227 = vmax.f32 %v1163, 0.0
    %v1228 = vmax.f32 %v1164, 0.0
    %v1229 = vmax.f32 %v1165, 0.0
    %v1230 = vmax.f32 %v1166, 0.0
    %v1231 = vmax.f32 %v1167, 0.0
    %v1232 = vmax.f32 %v1168, 0.0
    %v1233 = vmax.f32 %v1169, 0.0
    %v1234 = vmax.f32 %v1170, 0.0
    %v1235 = vmax.f32 %v1171, 0.0
    %v1236 = vmax.f32 %v1172, 0.0
    %v1237 = vmax.f32 %v1173, 0.0
    %v1238 = vmax.f32 %v1174, 0.0
    %v1239 = vmax.f32 %v1175, 0.0
    %v1240 = vmax.f32 %v1176, 0.0
    %v1241 = vmax.f32 %v1177, 0.0
    %v1242 = vmax.f32 %v1178, 0.0
    %v1243 = vmax.f32 %v1179, 0.0
    %v1244 = vmax.f32 %v1180, 0.0
    %v1245 = vmax.f32 %v1181, 0.0
    %v1246 = vmax.f32 %v1182, 0.0
    %v1247 = vmax.f32 %v1183, 0.0
    %v1248 = vmax.f32 %v1184, 0.0
    %v1249 = vmax.f32 %v1185, 0.0
    %v1250 = vmax.f32 %v1186, 0.0
    %v1251 = vmax.f32 %v1187, 0.0
    %v1252 = vmax.f32 %v1188, 0.0
    %v1253 = vmax.f32 %v1189, 0.0
    %v1254 = vmax.f32 %v1190, 0.0
    %v1255 = vmax.f32 %v1191, 0.0
    %v1256 = vmax.f32 %v1192, 0.0
    %v1257 = vmax.f32 %v1193, 0.0
    %v1258 = vmax.f32 %v1194, 0.0
    %v1259 = vmax.f32 %v1195, 0.0
    %v1260 = vmax.f32 %v1196, 0.0
    %v1261 = vmax.f32 %v1197, 0.0
    %v1262 = vmax.f32 %v1198, 0.0
    %v1263 = vmax.f32 %v1199, 0.0
    %v1264 = vmax.f32 %v1200, 0.0
    %v1265 = vmax.f32 %v1201, 0.0
    %v1266 = vmax.f32 %v1202, 0.0
    %v1267 = vmax.f32 %v1203, 0.0
    %1268 = vst.msk [vmem:[#allocation2] sm:$0xff] %vm660, 0.0
    %1269 = vst.msk [vmem:[#allocation2 + $0x8] sm:$0xff] %vm660, 0.0
    %vm1270 = vcmask 517120
    %1271 = vst.msk [vmem:[#allocation2 + $0x10] sm:$0x3] %vm1270, 0.0
    %1272 = vst.msk [vmem:[#allocation2 + $0x1b0] sm:$0xff] %vm660, 0.0
    %1273 = vst.msk [vmem:[#allocation2 + $0x1b8] sm:$0xff] %vm660, 0.0
    %1274 = vst.msk [vmem:[#allocation2 + $0x1c0] sm:$0x3] %vm1270, 0.0
    %s1275 = scalar_lea.vmem [#allocation2], 408
    %1276 = vst.msk [vmem:[%s1275] sm:$0xff] %vm660, 0.0
    %1277 = vst.msk [vmem:[%s1275 + $0x8] sm:$0xff] %vm660, 0.0
    %1278 = vst.msk [vmem:[%s1275 + $0x10] sm:$0x3] %vm1270, 0.0
    %1279 = vst.msk [vmem:[%s1275 + $0x1b0] sm:$0xff] %vm660, 0.0
    %1280 = vst.msk [vmem:[%s1275 + $0x1b8] sm:$0xff] %vm660, 0.0
    %1281 = vst.msk [vmem:[%s1275 + $0x1c0] sm:$0x3] %vm1270, 0.0
    %s1282 = scalar_lea.vmem [#allocation2], 24
    %vm1283 = vcmask 516096
    %1284 = vst.msk [vmem:[%s1282] sm:$0x1] %vm1283, 0.0
    %1285 = vst.msk [vmem:[%s1282 + $0x18] sm:$0x1] %vm1283, 0.0
    %1286 = vst.msk [vmem:[%s1282 + $0x30] sm:$0x1] %vm1283, 0.0
    %1287 = vst.msk [vmem:[%s1282 + $0x48] sm:$0x1] %vm1283, 0.0
    %1288 = vst.msk [vmem:[%s1282 + $0x60] sm:$0x1] %vm1283, 0.0
    %1289 = vst.msk [vmem:[%s1282 + $0x78] sm:$0x1] %vm1283, 0.0
    %1290 = vst.msk [vmem:[%s1282 + $0x90] sm:$0x1] %vm1283, 0.0
    %1291 = vst.msk [vmem:[%s1282 + $0xa8] sm:$0x1] %vm1283, 0.0
    %1292 = vst.msk [vmem:[%s1282 + $0xc0] sm:$0x1] %vm1283, 0.0
    %1293 = vst.msk [vmem:[%s1282 + $0xd8] sm:$0x1] %vm1283, 0.0
    %1294 = vst.msk [vmem:[%s1282 + $0xf0] sm:$0x1] %vm1283, 0.0
    %1295 = vst.msk [vmem:[%s1282 + $0x108] sm:$0x1] %vm1283, 0.0
    %1296 = vst.msk [vmem:[%s1282 + $0x120] sm:$0x1] %vm1283, 0.0
    %1297 = vst.msk [vmem:[%s1282 + $0x138] sm:$0x1] %vm1283, 0.0
    %1298 = vst.msk [vmem:[%s1282 + $0x150] sm:$0x1] %vm1283, 0.0
    %1299 = vst.msk [vmem:[%s1282 + $0x168] sm:$0x1] %vm1283, 0.0
    %1300 = vst.msk [vmem:[%s1282 + $0x1b0] sm:$0x1] %vm1283, 0.0
    %1301 = vst.msk [vmem:[%s1282 + $0x1c8] sm:$0x1] %vm1283, 0.0
    %1302 = vst.msk [vmem:[%s1282 + $0x1e0] sm:$0x1] %vm1283, 0.0
    %1303 = vst.msk [vmem:[%s1282 + $0x1f8] sm:$0x1] %vm1283, 0.0
    %1304 = vst.msk [vmem:[%s1282 + $0x210] sm:$0x1] %vm1283, 0.0
    %1305 = vst.msk [vmem:[%s1282 + $0x228] sm:$0x1] %vm1283, 0.0
    %1306 = vst.msk [vmem:[%s1282 + $0x240] sm:$0x1] %vm1283, 0.0
    %1307 = vst.msk [vmem:[%s1282 + $0x258] sm:$0x1] %vm1283, 0.0
    %1308 = vst.msk [vmem:[%s1282 + $0x270] sm:$0x1] %vm1283, 0.0
    %1309 = vst.msk [vmem:[%s1282 + $0x288] sm:$0x1] %vm1283, 0.0
    %1310 = vst.msk [vmem:[%s1282 + $0x2a0] sm:$0x1] %vm1283, 0.0
    %1311 = vst.msk [vmem:[%s1282 + $0x2b8] sm:$0x1] %vm1283, 0.0
    %1312 = vst.msk [vmem:[%s1282 + $0x2d0] sm:$0x1] %vm1283, 0.0
    %1313 = vst.msk [vmem:[%s1282 + $0x2e8] sm:$0x1] %vm1283, 0.0
    %1314 = vst.msk [vmem:[%s1282 + $0x300] sm:$0x1] %vm1283, 0.0
    %1315 = vst.msk [vmem:[%s1282 + $0x318] sm:$0x1] %vm1283, 0.0
    %1316 = vst.msk [vmem:[%s1282 + $0x11] sm:$0x1] %vm1283, 0.0
    %1317 = vst.msk [vmem:[%s1282 + $0x29] sm:$0x1] %vm1283, 0.0
    %1318 = vst.msk [vmem:[%s1282 + $0x41] sm:$0x1] %vm1283, 0.0
    %1319 = vst.msk [vmem:[%s1282 + $0x59] sm:$0x1] %vm1283, 0.0
    %1320 = vst.msk [vmem:[%s1282 + $0x71] sm:$0x1] %vm1283, 0.0
    %1321 = vst.msk [vmem:[%s1282 + $0x89] sm:$0x1] %vm1283, 0.0
    %1322 = vst.msk [vmem:[%s1282 + $0xa1] sm:$0x1] %vm1283, 0.0
    %1323 = vst.msk [vmem:[%s1282 + $0xb9] sm:$0x1] %vm1283, 0.0
    %1324 = vst.msk [vmem:[%s1282 + $0xd1] sm:$0x1] %vm1283, 0.0
    %1325 = vst.msk [vmem:[%s1282 + $0xe9] sm:$0x1] %vm1283, 0.0
    %1326 = vst.msk [vmem:[%s1282 + $0x101] sm:$0x1] %vm1283, 0.0
    %1327 = vst.msk [vmem:[%s1282 + $0x119] sm:$0x1] %vm1283, 0.0
    %1328 = vst.msk [vmem:[%s1282 + $0x131] sm:$0x1] %vm1283, 0.0
    %1329 = vst.msk [vmem:[%s1282 + $0x149] sm:$0x1] %vm1283, 0.0
    %1330 = vst.msk [vmem:[%s1282 + $0x161] sm:$0x1] %vm1283, 0.0
    %1331 = vst.msk [vmem:[%s1282 + $0x179] sm:$0x1] %vm1283, 0.0
    %1332 = vst.msk [vmem:[%s1282 + $0x1c1] sm:$0x1] %vm1283, 0.0
    %1333 = vst.msk [vmem:[%s1282 + $0x1d9] sm:$0x1] %vm1283, 0.0
    %1334 = vst.msk [vmem:[%s1282 + $0x1f1] sm:$0x1] %vm1283, 0.0
    %1335 = vst.msk [vmem:[%s1282 + $0x209] sm:$0x1] %vm1283, 0.0
    %1336 = vst.msk [vmem:[%s1282 + $0x221] sm:$0x1] %vm1283, 0.0
    %1337 = vst.msk [vmem:[%s1282 + $0x239] sm:$0x1] %vm1283, 0.0
    %1338 = vst.msk [vmem:[%s1282 + $0x251] sm:$0x1] %vm1283, 0.0
    %1339 = vst.msk [vmem:[%s1282 + $0x269] sm:$0x1] %vm1283, 0.0
    %1340 = vst.msk [vmem:[%s1282 + $0x281] sm:$0x1] %vm1283, 0.0
    %1341 = vst.msk [vmem:[%s1282 + $0x299] sm:$0x1] %vm1283, 0.0
    %1342 = vst.msk [vmem:[%s1282 + $0x2b1] sm:$0x1] %vm1283, 0.0
    %1343 = vst.msk [vmem:[%s1282 + $0x2c9] sm:$0x1] %vm1283, 0.0
    %1344 = vst.msk [vmem:[%s1282 + $0x2e1] sm:$0x1] %vm1283, 0.0
    %1345 = vst.msk [vmem:[%s1282 + $0x2f9] sm:$0x1] %vm1283, 0.0
    %1346 = vst.msk [vmem:[%s1282 + $0x311] sm:$0x1] %vm1283, 0.0
    %1347 = vst.msk [vmem:[%s1282 + $0x329] sm:$0x1] %vm1283, 0.0
    %1348 = vst.msk [vmem:[%s1282 + $0x1] sm:$0xff] %vm660, %v1204
    %1349 = vst.msk [vmem:[%s1282 + $0x9] sm:$0xff] %vm660, %v1205
    %1350 = vst.msk [vmem:[%s1282 + $0x19] sm:$0xff] %vm660, %v1206
    %1351 = vst.msk [vmem:[%s1282 + $0x21] sm:$0xff] %vm660, %v1207
    %1352 = vst.msk [vmem:[%s1282 + $0x31] sm:$0xff] %vm660, %v1208
    %1353 = vst.msk [vmem:[%s1282 + $0x39] sm:$0xff] %vm660, %v1209
    %1354 = vst.msk [vmem:[%s1282 + $0x49] sm:$0xff] %vm660, %v1210
    %1355 = vst.msk [vmem:[%s1282 + $0x51] sm:$0xff] %vm660, %v1211
    %1356 = vst.msk [vmem:[%s1282 + $0x61] sm:$0xff] %vm660, %v1212
    %1357 = vst.msk [vmem:[%s1282 + $0x69] sm:$0xff] %vm660, %v1213
    %1358 = vst.msk [vmem:[%s1282 + $0x79] sm:$0xff] %vm660, %v1214
    %1359 = vst.msk [vmem:[%s1282 + $0x81] sm:$0xff] %vm660, %v1215
    %1360 = vst.msk [vmem:[%s1282 + $0x91] sm:$0xff] %vm660, %v1216
    %1361 = vst.msk [vmem:[%s1282 + $0x99] sm:$0xff] %vm660, %v1217
    %1362 = vst.msk [vmem:[%s1282 + $0xa9] sm:$0xff] %vm660, %v1218
    %1363 = vst.msk [vmem:[%s1282 + $0xb1] sm:$0xff] %vm660, %v1219
    %1364 = vst.msk [vmem:[%s1282 + $0xc1] sm:$0xff] %vm660, %v1220
    %1365 = vst.msk [vmem:[%s1282 + $0xc9] sm:$0xff] %vm660, %v1221
    %1366 = vst.msk [vmem:[%s1282 + $0xd9] sm:$0xff] %vm660, %v1222
    %1367 = vst.msk [vmem:[%s1282 + $0xe1] sm:$0xff] %vm660, %v1223
    %1368 = vst.msk [vmem:[%s1282 + $0xf1] sm:$0xff] %vm660, %v1224
    %1369 = vst.msk [vmem:[%s1282 + $0xf9] sm:$0xff] %vm660, %v1225
    %1370 = vst.msk [vmem:[%s1282 + $0x109] sm:$0xff] %vm660, %v1226
    %1371 = vst.msk [vmem:[%s1282 + $0x111] sm:$0xff] %vm660, %v1227
    %1372 = vst.msk [vmem:[%s1282 + $0x121] sm:$0xff] %vm660, %v1228
    %1373 = vst.msk [vmem:[%s1282 + $0x129] sm:$0xff] %vm660, %v1229
    %1374 = vst.msk [vmem:[%s1282 + $0x139] sm:$0xff] %vm660, %v1230
    %1375 = vst.msk [vmem:[%s1282 + $0x141] sm:$0xff] %vm660, %v1231
    %1376 = vst.msk [vmem:[%s1282 + $0x151] sm:$0xff] %vm660, %v1232
    %1377 = vst.msk [vmem:[%s1282 + $0x159] sm:$0xff] %vm660, %v1233
    %1378 = vst.msk [vmem:[%s1282 + $0x169] sm:$0xff] %vm660, %v1234
    %1379 = vst.msk [vmem:[%s1282 + $0x171] sm:$0xff] %vm660, %v1235
    %1380 = vst.msk [vmem:[%s1282 + $0x1b1] sm:$0xff] %vm660, %v1236
    %1381 = vst.msk [vmem:[%s1282 + $0x1b9] sm:$0xff] %vm660, %v1237
    %1382 = vst.msk [vmem:[%s1282 + $0x1c9] sm:$0xff] %vm660, %v1238
    %1383 = vst.msk [vmem:[%s1282 + $0x1d1] sm:$0xff] %vm660, %v1239
    %1384 = vst.msk [vmem:[%s1282 + $0x1e1] sm:$0xff] %vm660, %v1240
    %1385 = vst.msk [vmem:[%s1282 + $0x1e9] sm:$0xff] %vm660, %v1241
    %1386 = vst.msk [vmem:[%s1282 + $0x1f9] sm:$0xff] %vm660, %v1242
    %1387 = vst.msk [vmem:[%s1282 + $0x201] sm:$0xff] %vm660, %v1243
    %1388 = vst.msk [vmem:[%s1282 + $0x211] sm:$0xff] %vm660, %v1244
    %1389 = vst.msk [vmem:[%s1282 + $0x219] sm:$0xff] %vm660, %v1245
    %1390 = vst.msk [vmem:[%s1282 + $0x229] sm:$0xff] %vm660, %v1246
    %1391 = vst.msk [vmem:[%s1282 + $0x231] sm:$0xff] %vm660, %v1247
    %1392 = vst.msk [vmem:[%s1282 + $0x241] sm:$0xff] %vm660, %v1248
    %1393 = vst.msk [vmem:[%s1282 + $0x249] sm:$0xff] %vm660, %v1249
    %1394 = vst.msk [vmem:[%s1282 + $0x259] sm:$0xff] %vm660, %v1250
    %1395 = vst.msk [vmem:[%s1282 + $0x261] sm:$0xff] %vm660, %v1251
    %1396 = vst.msk [vmem:[%s1282 + $0x271] sm:$0xff] %vm660, %v1252
    %1397 = vst.msk [vmem:[%s1282 + $0x279] sm:$0xff] %vm660, %v1253
    %1398 = vst.msk [vmem:[%s1282 + $0x289] sm:$0xff] %vm660, %v1254
    %1399 = vst.msk [vmem:[%s1282 + $0x291] sm:$0xff] %vm660, %v1255
    %1400 = vst.msk [vmem:[%s1282 + $0x2a1] sm:$0xff] %vm660, %v1256
    %1401 = vst.msk [vmem:[%s1282 + $0x2a9] sm:$0xff] %vm660, %v1257
    %1402 = vst.msk [vmem:[%s1282 + $0x2b9] sm:$0xff] %vm660, %v1258
    %1403 = vst.msk [vmem:[%s1282 + $0x2c1] sm:$0xff] %vm660, %v1259
    %1404 = vst.msk [vmem:[%s1282 + $0x2d1] sm:$0xff] %vm660, %v1260
    %1405 = vst.msk [vmem:[%s1282 + $0x2d9] sm:$0xff] %vm660, %v1261
    %1406 = vst.msk [vmem:[%s1282 + $0x2e9] sm:$0xff] %vm660, %v1262
    %1407 = vst.msk [vmem:[%s1282 + $0x2f1] sm:$0xff] %vm660, %v1263
    %1408 = vst.msk [vmem:[%s1282 + $0x301] sm:$0xff] %vm660, %v1264
    %1409 = vst.msk [vmem:[%s1282 + $0x309] sm:$0xff] %vm660, %v1265
    %1410 = vst.msk [vmem:[%s1282 + $0x319] sm:$0xff] %vm660, %v1266
    %1411 = vst.msk [vmem:[%s1282 + $0x321] sm:$0xff] %vm660, %v1267
    %v1412 = vld [vmem:[#allocation2] sm:$0xff]
    %v1413 = vld [vmem:[#allocation2 + $0x8] sm:$0xff]
    %v1414 = vld [vmem:[#allocation2 + $0x18] sm:$0xff]
    %v1415 = vld [vmem:[#allocation2 + $0x20] sm:$0xff]
    %v1416 = vld [vmem:[#allocation2 + $0x30] sm:$0xff]
    %v1417 = vld [vmem:[#allocation2 + $0x38] sm:$0xff]
    %v1418 = vld [vmem:[#allocation2 + $0x48] sm:$0xff]
    %v1419 = vld [vmem:[#allocation2 + $0x50] sm:$0xff]
    %v1420 = vld [vmem:[#allocation2 + $0x60] sm:$0xff]
    %v1421 = vld [vmem:[#allocation2 + $0x68] sm:$0xff]
    %v1422 = vld [vmem:[#allocation2 + $0x78] sm:$0xff]
    %v1423 = vld [vmem:[#allocation2 + $0x80] sm:$0xff]
    %v1424 = vld [vmem:[#allocation2 + $0x90] sm:$0xff]
    %v1425 = vld [vmem:[#allocation2 + $0x98] sm:$0xff]
    %v1426 = vld [vmem:[#allocation2 + $0xa8] sm:$0xff]
    %v1427 = vld [vmem:[#allocation2 + $0xb0] sm:$0xff]
    %v1428 = vld [vmem:[#allocation2 + $0xc0] sm:$0xff]
    %v1429 = vld [vmem:[#allocation2 + $0xc8] sm:$0xff]
    %v1430 = vld [vmem:[#allocation2 + $0xd8] sm:$0xff]
    %v1431 = vld [vmem:[#allocation2 + $0xe0] sm:$0xff]
    %v1432 = vld [vmem:[#allocation2 + $0xf0] sm:$0xff]
    %v1433 = vld [vmem:[#allocation2 + $0xf8] sm:$0xff]
    %v1434 = vld [vmem:[#allocation2 + $0x108] sm:$0xff]
    %v1435 = vld [vmem:[#allocation2 + $0x110] sm:$0xff]
    %v1436 = vld [vmem:[#allocation2 + $0x120] sm:$0xff]
    %v1437 = vld [vmem:[#allocation2 + $0x128] sm:$0xff]
    %v1438 = vld [vmem:[#allocation2 + $0x138] sm:$0xff]
    %v1439 = vld [vmem:[#allocation2 + $0x140] sm:$0xff]
    %v1440 = vld [vmem:[#allocation2 + $0x150] sm:$0xff]
    %v1441 = vld [vmem:[#allocation2 + $0x158] sm:$0xff]
    %v1442 = vld [vmem:[#allocation2 + $0x168] sm:$0xff]
    %v1443 = vld [vmem:[#allocation2 + $0x170] sm:$0xff]
    %v1444 = vld [vmem:[#allocation2 + $0x1b0] sm:$0xff]
    %v1445 = vld [vmem:[#allocation2 + $0x1b8] sm:$0xff]
    %v1446 = vld [vmem:[#allocation2 + $0x1c8] sm:$0xff]
    %v1447 = vld [vmem:[#allocation2 + $0x1d0] sm:$0xff]
    %v1448 = vld [vmem:[#allocation2 + $0x1e0] sm:$0xff]
    %v1449 = vld [vmem:[#allocation2 + $0x1e8] sm:$0xff]
    %v1450 = vld [vmem:[#allocation2 + $0x1f8] sm:$0xff]
    %v1451 = vld [vmem:[#allocation2 + $0x200] sm:$0xff]
    %v1452 = vld [vmem:[#allocation2 + $0x210] sm:$0xff]
    %v1453 = vld [vmem:[#allocation2 + $0x218] sm:$0xff]
    %v1454 = vld [vmem:[#allocation2 + $0x228] sm:$0xff]
    %v1455 = vld [vmem:[#allocation2 + $0x230] sm:$0xff]
    %v1456 = vld [vmem:[#allocation2 + $0x240] sm:$0xff]
    %v1457 = vld [vmem:[#allocation2 + $0x248] sm:$0xff]
    %v1458 = vld [vmem:[#allocation2 + $0x258] sm:$0xff]
    %v1459 = vld [vmem:[#allocation2 + $0x260] sm:$0xff]
    %v1460 = vld [vmem:[#allocation2 + $0x270] sm:$0xff]
    %v1461 = vld [vmem:[#allocation2 + $0x278] sm:$0xff]
    %v1462 = vld [vmem:[#allocation2 + $0x288] sm:$0xff]
    %v1463 = vld [vmem:[#allocation2 + $0x290] sm:$0xff]
    %v1464 = vld [vmem:[#allocation2 + $0x2a0] sm:$0xff]
    %v1465 = vld [vmem:[#allocation2 + $0x2a8] sm:$0xff]
    %v1466 = vld [vmem:[#allocation2 + $0x2b8] sm:$0xff]
    %v1467 = vld [vmem:[#allocation2 + $0x2c0] sm:$0xff]
    %v1468 = vld [vmem:[#allocation2 + $0x2d0] sm:$0xff]
    %v1469 = vld [vmem:[#allocation2 + $0x2d8] sm:$0xff]
    %v1470 = vld [vmem:[#allocation2 + $0x2e8] sm:$0xff]
    %v1471 = vld [vmem:[#allocation2 + $0x2f0] sm:$0xff]
    %v1472 = vld [vmem:[#allocation2 + $0x300] sm:$0xff]
    %v1473 = vld [vmem:[#allocation2 + $0x308] sm:$0xff]
    %v1474 = vld [vmem:[#allocation2 + $0x318] sm:$0xff]
    %v1475 = vld [vmem:[#allocation2 + $0x320] sm:$0xff]
    %v1476 = vld [vmem:[#allocation2 + $0x1] sm:$0xff]
    %v1477 = vld [vmem:[#allocation2 + $0x9] sm:$0xff]
    %v1478 = vld [vmem:[#allocation2 + $0x19] sm:$0xff]
    %v1479 = vld [vmem:[#allocation2 + $0x21] sm:$0xff]
    %v1480 = vld [vmem:[#allocation2 + $0x31] sm:$0xff]
    %v1481 = vld [vmem:[#allocation2 + $0x39] sm:$0xff]
    %v1482 = vld [vmem:[#allocation2 + $0x49] sm:$0xff]
    %v1483 = vld [vmem:[#allocation2 + $0x51] sm:$0xff]
    %v1484 = vld [vmem:[#allocation2 + $0x61] sm:$0xff]
    %v1485 = vld [vmem:[#allocation2 + $0x69] sm:$0xff]
    %v1486 = vld [vmem:[#allocation2 + $0x79] sm:$0xff]
    %v1487 = vld [vmem:[#allocation2 + $0x81] sm:$0xff]
    %v1488 = vld [vmem:[#allocation2 + $0x91] sm:$0xff]
    %v1489 = vld [vmem:[#allocation2 + $0x99] sm:$0xff]
    %v1490 = vld [vmem:[#allocation2 + $0xa9] sm:$0xff]
    %v1491 = vld [vmem:[#allocation2 + $0xb1] sm:$0xff]
    %v1492 = vld [vmem:[#allocation2 + $0xc1] sm:$0xff]
    %v1493 = vld [vmem:[#allocation2 + $0xc9] sm:$0xff]
    %v1494 = vld [vmem:[#allocation2 + $0xd9] sm:$0xff]
    %v1495 = vld [vmem:[#allocation2 + $0xe1] sm:$0xff]
    %v1496 = vld [vmem:[#allocation2 + $0xf1] sm:$0xff]
    %v1497 = vld [vmem:[#allocation2 + $0xf9] sm:$0xff]
    %v1498 = vld [vmem:[#allocation2 + $0x109] sm:$0xff]
    %v1499 = vld [vmem:[#allocation2 + $0x111] sm:$0xff]
    %v1500 = vld [vmem:[#allocation2 + $0x121] sm:$0xff]
    %v1501 = vld [vmem:[#allocation2 + $0x129] sm:$0xff]
    %v1502 = vld [vmem:[#allocation2 + $0x139] sm:$0xff]
    %v1503 = vld [vmem:[#allocation2 + $0x141] sm:$0xff]
    %v1504 = vld [vmem:[#allocation2 + $0x151] sm:$0xff]
    %v1505 = vld [vmem:[#allocation2 + $0x159] sm:$0xff]
    %v1506 = vld [vmem:[#allocation2 + $0x169] sm:$0xff]
    %v1507 = vld [vmem:[#allocation2 + $0x171] sm:$0xff]
    %v1508 = vld [vmem:[#allocation2 + $0x1b1] sm:$0xff]
    %v1509 = vld [vmem:[#allocation2 + $0x1b9] sm:$0xff]
    %v1510 = vld [vmem:[#allocation2 + $0x1c9] sm:$0xff]
    %v1511 = vld [vmem:[#allocation2 + $0x1d1] sm:$0xff]
    %v1512 = vld [vmem:[#allocation2 + $0x1e1] sm:$0xff]
    %v1513 = vld [vmem:[#allocation2 + $0x1e9] sm:$0xff]
    %v1514 = vld [vmem:[#allocation2 + $0x1f9] sm:$0xff]
    %v1515 = vld [vmem:[#allocation2 + $0x201] sm:$0xff]
    %v1516 = vld [vmem:[#allocation2 + $0x211] sm:$0xff]
    %v1517 = vld [vmem:[#allocation2 + $0x219] sm:$0xff]
    %v1518 = vld [vmem:[#allocation2 + $0x229] sm:$0xff]
    %v1519 = vld [vmem:[#allocation2 + $0x231] sm:$0xff]
    %v1520 = vld [vmem:[#allocation2 + $0x241] sm:$0xff]
    %v1521 = vld [vmem:[#allocation2 + $0x249] sm:$0xff]
    %v1522 = vld [vmem:[#allocation2 + $0x259] sm:$0xff]
    %v1523 = vld [vmem:[#allocation2 + $0x261] sm:$0xff]
    %v1524 = vld [vmem:[#allocation2 + $0x271] sm:$0xff]
    %v1525 = vld [vmem:[#allocation2 + $0x279] sm:$0xff]
    %v1526 = vld [vmem:[#allocation2 + $0x289] sm:$0xff]
    %v1527 = vld [vmem:[#allocation2 + $0x291] sm:$0xff]
    %v1528 = vld [vmem:[#allocation2 + $0x2a1] sm:$0xff]
    %v1529 = vld [vmem:[#allocation2 + $0x2a9] sm:$0xff]
    %v1530 = vld [vmem:[#allocation2 + $0x2b9] sm:$0xff]
    %v1531 = vld [vmem:[#allocation2 + $0x2c1] sm:$0xff]
    %v1532 = vld [vmem:[#allocation2 + $0x2d1] sm:$0xff]
    %v1533 = vld [vmem:[#allocation2 + $0x2d9] sm:$0xff]
    %v1534 = vld [vmem:[#allocation2 + $0x2e9] sm:$0xff]
    %v1535 = vld [vmem:[#allocation2 + $0x2f1] sm:$0xff]
    %v1536 = vld [vmem:[#allocation2 + $0x301] sm:$0xff]
    %v1537 = vld [vmem:[#allocation2 + $0x309] sm:$0xff]
    %v1538 = vld [vmem:[#allocation2 + $0x319] sm:$0xff]
    %v1539 = vld [vmem:[#allocation2 + $0x321] sm:$0xff]
    %v1540 = vld [vmem:[#allocation2 + $0x2] sm:$0xff]
    %v1541 = vld [vmem:[#allocation2 + $0xa] sm:$0xff]
    %v1542 = vld [vmem:[#allocation2 + $0x1a] sm:$0xff]
    %v1543 = vld [vmem:[#allocation2 + $0x22] sm:$0xff]
    %v1544 = vld [vmem:[#allocation2 + $0x32] sm:$0xff]
    %v1545 = vld [vmem:[#allocation2 + $0x3a] sm:$0xff]
    %v1546 = vld [vmem:[#allocation2 + $0x4a] sm:$0xff]
    %v1547 = vld [vmem:[#allocation2 + $0x52] sm:$0xff]
    %v1548 = vld [vmem:[#allocation2 + $0x62] sm:$0xff]
    %v1549 = vld [vmem:[#allocation2 + $0x6a] sm:$0xff]
    %v1550 = vld [vmem:[#allocation2 + $0x7a] sm:$0xff]
    %v1551 = vld [vmem:[#allocation2 + $0x82] sm:$0xff]
    %v1552 = vld [vmem:[#allocation2 + $0x92] sm:$0xff]
    %v1553 = vld [vmem:[#allocation2 + $0x9a] sm:$0xff]
    %v1554 = vld [vmem:[#allocation2 + $0xaa] sm:$0xff]
    %v1555 = vld [vmem:[#allocation2 + $0xb2] sm:$0xff]
    %v1556 = vld [vmem:[#allocation2 + $0xc2] sm:$0xff]
    %v1557 = vld [vmem:[#allocation2 + $0xca] sm:$0xff]
    %v1558 = vld [vmem:[#allocation2 + $0xda] sm:$0xff]
    %v1559 = vld [vmem:[#allocation2 + $0xe2] sm:$0xff]
    %v1560 = vld [vmem:[#allocation2 + $0xf2] sm:$0xff]
    %v1561 = vld [vmem:[#allocation2 + $0xfa] sm:$0xff]
    %v1562 = vld [vmem:[#allocation2 + $0x10a] sm:$0xff]
    %v1563 = vld [vmem:[#allocation2 + $0x112] sm:$0xff]
    %v1564 = vld [vmem:[#allocation2 + $0x122] sm:$0xff]
    %v1565 = vld [vmem:[#allocation2 + $0x12a] sm:$0xff]
    %v1566 = vld [vmem:[#allocation2 + $0x13a] sm:$0xff]
    %v1567 = vld [vmem:[#allocation2 + $0x142] sm:$0xff]
    %v1568 = vld [vmem:[#allocation2 + $0x152] sm:$0xff]
    %v1569 = vld [vmem:[#allocation2 + $0x15a] sm:$0xff]
    %v1570 = vld [vmem:[#allocation2 + $0x16a] sm:$0xff]
    %v1571 = vld [vmem:[#allocation2 + $0x172] sm:$0xff]
    %v1572 = vld [vmem:[#allocation2 + $0x1b2] sm:$0xff]
    %v1573 = vld [vmem:[#allocation2 + $0x1ba] sm:$0xff]
    %v1574 = vld [vmem:[#allocation2 + $0x1ca] sm:$0xff]
    %v1575 = vld [vmem:[#allocation2 + $0x1d2] sm:$0xff]
    %v1576 = vld [vmem:[#allocation2 + $0x1e2] sm:$0xff]
    %v1577 = vld [vmem:[#allocation2 + $0x1ea] sm:$0xff]
    %v1578 = vld [vmem:[#allocation2 + $0x1fa] sm:$0xff]
    %v1579 = vld [vmem:[#allocation2 + $0x202] sm:$0xff]
    %v1580 = vld [vmem:[#allocation2 + $0x212] sm:$0xff]
    %v1581 = vld [vmem:[#allocation2 + $0x21a] sm:$0xff]
    %v1582 = vld [vmem:[#allocation2 + $0x22a] sm:$0xff]
    %v1583 = vld [vmem:[#allocation2 + $0x232] sm:$0xff]
    %v1584 = vld [vmem:[#allocation2 + $0x242] sm:$0xff]
    %v1585 = vld [vmem:[#allocation2 + $0x24a] sm:$0xff]
    %v1586 = vld [vmem:[#allocation2 + $0x25a] sm:$0xff]
    %v1587 = vld [vmem:[#allocation2 + $0x262] sm:$0xff]
    %v1588 = vld [vmem:[#allocation2 + $0x272] sm:$0xff]
    %v1589 = vld [vmem:[#allocation2 + $0x27a] sm:$0xff]
    %v1590 = vld [vmem:[#allocation2 + $0x28a] sm:$0xff]
    %v1591 = vld [vmem:[#allocation2 + $0x292] sm:$0xff]
    %v1592 = vld [vmem:[#allocation2 + $0x2a2] sm:$0xff]
    %v1593 = vld [vmem:[#allocation2 + $0x2aa] sm:$0xff]
    %v1594 = vld [vmem:[#allocation2 + $0x2ba] sm:$0xff]
    %v1595 = vld [vmem:[#allocation2 + $0x2c2] sm:$0xff]
    %v1596 = vld [vmem:[#allocation2 + $0x2d2] sm:$0xff]
    %v1597 = vld [vmem:[#allocation2 + $0x2da] sm:$0xff]
    %v1598 = vld [vmem:[#allocation2 + $0x2ea] sm:$0xff]
    %v1599 = vld [vmem:[#allocation2 + $0x2f2] sm:$0xff]
    %v1600 = vld [vmem:[#allocation2 + $0x302] sm:$0xff]
    %v1601 = vld [vmem:[#allocation2 + $0x30a] sm:$0xff]
    %v1602 = vld [vmem:[#allocation2 + $0x31a] sm:$0xff]
    %v1603 = vld [vmem:[#allocation2 + $0x322] sm:$0xff]
    %v1604 = vld [vmem:[%s1282] sm:$0xff]
    %v1605 = vld [vmem:[%s1282 + $0x8] sm:$0xff]
    %v1606 = vld [vmem:[%s1282 + $0x18] sm:$0xff]
    %v1607 = vld [vmem:[%s1282 + $0x20] sm:$0xff]
    %v1608 = vld [vmem:[%s1282 + $0x30] sm:$0xff]
    %v1609 = vld [vmem:[%s1282 + $0x38] sm:$0xff]
    %v1610 = vld [vmem:[%s1282 + $0x48] sm:$0xff]
    %v1611 = vld [vmem:[%s1282 + $0x50] sm:$0xff]
    %v1612 = vld [vmem:[%s1282 + $0x60] sm:$0xff]
    %v1613 = vld [vmem:[%s1282 + $0x68] sm:$0xff]
    %v1614 = vld [vmem:[%s1282 + $0x78] sm:$0xff]
    %v1615 = vld [vmem:[%s1282 + $0x80] sm:$0xff]
    %v1616 = vld [vmem:[%s1282 + $0x90] sm:$0xff]
    %v1617 = vld [vmem:[%s1282 + $0x98] sm:$0xff]
    %v1618 = vld [vmem:[%s1282 + $0xa8] sm:$0xff]
    %v1619 = vld [vmem:[%s1282 + $0xb0] sm:$0xff]
    %v1620 = vld [vmem:[%s1282 + $0xc0] sm:$0xff]
    %v1621 = vld [vmem:[%s1282 + $0xc8] sm:$0xff]
    %v1622 = vld [vmem:[%s1282 + $0xd8] sm:$0xff]
    %v1623 = vld [vmem:[%s1282 + $0xe0] sm:$0xff]
    %v1624 = vld [vmem:[%s1282 + $0xf0] sm:$0xff]
    %v1625 = vld [vmem:[%s1282 + $0xf8] sm:$0xff]
    %v1626 = vld [vmem:[%s1282 + $0x108] sm:$0xff]
    %v1627 = vld [vmem:[%s1282 + $0x110] sm:$0xff]
    %v1628 = vld [vmem:[%s1282 + $0x120] sm:$0xff]
    %v1629 = vld [vmem:[%s1282 + $0x128] sm:$0xff]
    %v1630 = vld [vmem:[%s1282 + $0x138] sm:$0xff]
    %v1631 = vld [vmem:[%s1282 + $0x140] sm:$0xff]
    %v1632 = vld [vmem:[%s1282 + $0x150] sm:$0xff]
    %v1633 = vld [vmem:[%s1282 + $0x158] sm:$0xff]
    %v1634 = vld [vmem:[%s1282 + $0x168] sm:$0xff]
    %v1635 = vld [vmem:[%s1282 + $0x170] sm:$0xff]
    %v1636 = vld [vmem:[%s1282 + $0x1b0] sm:$0xff]
    %v1637 = vld [vmem:[%s1282 + $0x1b8] sm:$0xff]
    %v1638 = vld [vmem:[%s1282 + $0x1c8] sm:$0xff]
    %v1639 = vld [vmem:[%s1282 + $0x1d0] sm:$0xff]
    %v1640 = vld [vmem:[%s1282 + $0x1e0] sm:$0xff]
    %v1641 = vld [vmem:[%s1282 + $0x1e8] sm:$0xff]
    %v1642 = vld [vmem:[%s1282 + $0x1f8] sm:$0xff]
    %v1643 = vld [vmem:[%s1282 + $0x200] sm:$0xff]
    %v1644 = vld [vmem:[%s1282 + $0x210] sm:$0xff]
    %v1645 = vld [vmem:[%s1282 + $0x218] sm:$0xff]
    %v1646 = vld [vmem:[%s1282 + $0x228] sm:$0xff]
    %v1647 = vld [vmem:[%s1282 + $0x230] sm:$0xff]
    %v1648 = vld [vmem:[%s1282 + $0x240] sm:$0xff]
    %v1649 = vld [vmem:[%s1282 + $0x248] sm:$0xff]
    %v1650 = vld [vmem:[%s1282 + $0x258] sm:$0xff]
    %v1651 = vld [vmem:[%s1282 + $0x260] sm:$0xff]
    %v1652 = vld [vmem:[%s1282 + $0x270] sm:$0xff]
    %v1653 = vld [vmem:[%s1282 + $0x278] sm:$0xff]
    %v1654 = vld [vmem:[%s1282 + $0x288] sm:$0xff]
    %v1655 = vld [vmem:[%s1282 + $0x290] sm:$0xff]
    %v1656 = vld [vmem:[%s1282 + $0x2a0] sm:$0xff]
    %v1657 = vld [vmem:[%s1282 + $0x2a8] sm:$0xff]
    %v1658 = vld [vmem:[%s1282 + $0x2b8] sm:$0xff]
    %v1659 = vld [vmem:[%s1282 + $0x2c0] sm:$0xff]
    %v1660 = vld [vmem:[%s1282 + $0x2d0] sm:$0xff]
    %v1661 = vld [vmem:[%s1282 + $0x2d8] sm:$0xff]
    %v1662 = vld [vmem:[%s1282 + $0x2e8] sm:$0xff]
    %v1663 = vld [vmem:[%s1282 + $0x2f0] sm:$0xff]
    %v1664 = vld [vmem:[%s1282 + $0x300] sm:$0xff]
    %v1665 = vld [vmem:[%s1282 + $0x308] sm:$0xff]
    %v1666 = vld [vmem:[%s1282 + $0x318] sm:$0xff]
    %v1667 = vld [vmem:[%s1282 + $0x320] sm:$0xff]
    %v1668 = vld [vmem:[%s1282 + $0x1] sm:$0xff]
    %v1669 = vld [vmem:[%s1282 + $0x9] sm:$0xff]
    %v1670 = vld [vmem:[%s1282 + $0x19] sm:$0xff]
    %v1671 = vld [vmem:[%s1282 + $0x21] sm:$0xff]
    %v1672 = vld [vmem:[%s1282 + $0x31] sm:$0xff]
    %v1673 = vld [vmem:[%s1282 + $0x39] sm:$0xff]
    %v1674 = vld [vmem:[%s1282 + $0x49] sm:$0xff]
    %v1675 = vld [vmem:[%s1282 + $0x51] sm:$0xff]
    %v1676 = vld [vmem:[%s1282 + $0x61] sm:$0xff]
    %v1677 = vld [vmem:[%s1282 + $0x69] sm:$0xff]
    %v1678 = vld [vmem:[%s1282 + $0x79] sm:$0xff]
    %v1679 = vld [vmem:[%s1282 + $0x81] sm:$0xff]
    %v1680 = vld [vmem:[%s1282 + $0x91] sm:$0xff]
    %v1681 = vld [vmem:[%s1282 + $0x99] sm:$0xff]
    %v1682 = vld [vmem:[%s1282 + $0xa9] sm:$0xff]
    %v1683 = vld [vmem:[%s1282 + $0xb1] sm:$0xff]
    %v1684 = vld [vmem:[%s1282 + $0xc1] sm:$0xff]
    %v1685 = vld [vmem:[%s1282 + $0xc9] sm:$0xff]
    %v1686 = vld [vmem:[%s1282 + $0xd9] sm:$0xff]
    %v1687 = vld [vmem:[%s1282 + $0xe1] sm:$0xff]
    %v1688 = vld [vmem:[%s1282 + $0xf1] sm:$0xff]
    %v1689 = vld [vmem:[%s1282 + $0xf9] sm:$0xff]
    %v1690 = vld [vmem:[%s1282 + $0x109] sm:$0xff]
    %v1691 = vld [vmem:[%s1282 + $0x111] sm:$0xff]
    %v1692 = vld [vmem:[%s1282 + $0x121] sm:$0xff]
    %v1693 = vld [vmem:[%s1282 + $0x129] sm:$0xff]
    %v1694 = vld [vmem:[%s1282 + $0x139] sm:$0xff]
    %v1695 = vld [vmem:[%s1282 + $0x141] sm:$0xff]
    %v1696 = vld [vmem:[%s1282 + $0x151] sm:$0xff]
    %v1697 = vld [vmem:[%s1282 + $0x159] sm:$0xff]
    %v1698 = vld [vmem:[%s1282 + $0x169] sm:$0xff]
    %v1699 = vld [vmem:[%s1282 + $0x171] sm:$0xff]
    %v1700 = vld [vmem:[%s1282 + $0x1b1] sm:$0xff]
    %v1701 = vld [vmem:[%s1282 + $0x1b9] sm:$0xff]
    %v1702 = vld [vmem:[%s1282 + $0x1c9] sm:$0xff]
    %v1703 = vld [vmem:[%s1282 + $0x1d1] sm:$0xff]
    %v1704 = vld [vmem:[%s1282 + $0x1e1] sm:$0xff]
    %v1705 = vld [vmem:[%s1282 + $0x1e9] sm:$0xff]
    %v1706 = vld [vmem:[%s1282 + $0x1f9] sm:$0xff]
    %v1707 = vld [vmem:[%s1282 + $0x201] sm:$0xff]
    %v1708 = vld [vmem:[%s1282 + $0x211] sm:$0xff]
    %v1709 = vld [vmem:[%s1282 + $0x219] sm:$0xff]
    %v1710 = vld [vmem:[%s1282 + $0x229] sm:$0xff]
    %v1711 = vld [vmem:[%s1282 + $0x231] sm:$0xff]
    %v1712 = vld [vmem:[%s1282 + $0x241] sm:$0xff]
    %v1713 = vld [vmem:[%s1282 + $0x249] sm:$0xff]
    %v1714 = vld [vmem:[%s1282 + $0x259] sm:$0xff]
    %v1715 = vld [vmem:[%s1282 + $0x261] sm:$0xff]
    %v1716 = vld [vmem:[%s1282 + $0x271] sm:$0xff]
    %v1717 = vld [vmem:[%s1282 + $0x279] sm:$0xff]
    %v1718 = vld [vmem:[%s1282 + $0x289] sm:$0xff]
    %v1719 = vld [vmem:[%s1282 + $0x291] sm:$0xff]
    %v1720 = vld [vmem:[%s1282 + $0x2a1] sm:$0xff]
    %v1721 = vld [vmem:[%s1282 + $0x2a9] sm:$0xff]
    %v1722 = vld [vmem:[%s1282 + $0x2b9] sm:$0xff]
    %v1723 = vld [vmem:[%s1282 + $0x2c1] sm:$0xff]
    %v1724 = vld [vmem:[%s1282 + $0x2d1] sm:$0xff]
    %v1725 = vld [vmem:[%s1282 + $0x2d9] sm:$0xff]
    %v1726 = vld [vmem:[%s1282 + $0x2e9] sm:$0xff]
    %v1727 = vld [vmem:[%s1282 + $0x2f1] sm:$0xff]
    %v1728 = vld [vmem:[%s1282 + $0x301] sm:$0xff]
    %v1729 = vld [vmem:[%s1282 + $0x309] sm:$0xff]
    %v1730 = vld [vmem:[%s1282 + $0x319] sm:$0xff]
    %v1731 = vld [vmem:[%s1282 + $0x321] sm:$0xff]
    %v1732 = vld [vmem:[%s1282 + $0x2] sm:$0xff]
    %v1733 = vld [vmem:[%s1282 + $0xa] sm:$0xff]
    %v1734 = vld [vmem:[%s1282 + $0x1a] sm:$0xff]
    %v1735 = vld [vmem:[%s1282 + $0x22] sm:$0xff]
    %v1736 = vld [vmem:[%s1282 + $0x32] sm:$0xff]
    %v1737 = vld [vmem:[%s1282 + $0x3a] sm:$0xff]
    %v1738 = vld [vmem:[%s1282 + $0x4a] sm:$0xff]
    %v1739 = vld [vmem:[%s1282 + $0x52] sm:$0xff]
    %v1740 = vld [vmem:[%s1282 + $0x62] sm:$0xff]
    %v1741 = vld [vmem:[%s1282 + $0x6a] sm:$0xff]
    %v1742 = vld [vmem:[%s1282 + $0x7a] sm:$0xff]
    %v1743 = vld [vmem:[%s1282 + $0x82] sm:$0xff]
    %v1744 = vld [vmem:[%s1282 + $0x92] sm:$0xff]
    %v1745 = vld [vmem:[%s1282 + $0x9a] sm:$0xff]
    %v1746 = vld [vmem:[%s1282 + $0xaa] sm:$0xff]
    %v1747 = vld [vmem:[%s1282 + $0xb2] sm:$0xff]
    %v1748 = vld [vmem:[%s1282 + $0xc2] sm:$0xff]
    %v1749 = vld [vmem:[%s1282 + $0xca] sm:$0xff]
    %v1750 = vld [vmem:[%s1282 + $0xda] sm:$0xff]
    %v1751 = vld [vmem:[%s1282 + $0xe2] sm:$0xff]
    %v1752 = vld [vmem:[%s1282 + $0xf2] sm:$0xff]
    %v1753 = vld [vmem:[%s1282 + $0xfa] sm:$0xff]
    %v1754 = vld [vmem:[%s1282 + $0x10a] sm:$0xff]
    %v1755 = vld [vmem:[%s1282 + $0x112] sm:$0xff]
    %v1756 = vld [vmem:[%s1282 + $0x122] sm:$0xff]
    %v1757 = vld [vmem:[%s1282 + $0x12a] sm:$0xff]
    %v1758 = vld [vmem:[%s1282 + $0x13a] sm:$0xff]
    %v1759 = vld [vmem:[%s1282 + $0x142] sm:$0xff]
    %v1760 = vld [vmem:[%s1282 + $0x152] sm:$0xff]
    %v1761 = vld [vmem:[%s1282 + $0x15a] sm:$0xff]
    %v1762 = vld [vmem:[%s1282 + $0x16a] sm:$0xff]
    %v1763 = vld [vmem:[%s1282 + $0x172] sm:$0xff]
    %v1764 = vld [vmem:[%s1282 + $0x1b2] sm:$0xff]
    %v1765 = vld [vmem:[%s1282 + $0x1ba] sm:$0xff]
    %v1766 = vld [vmem:[%s1282 + $0x1ca] sm:$0xff]
    %v1767 = vld [vmem:[%s1282 + $0x1d2] sm:$0xff]
    %v1768 = vld [vmem:[%s1282 + $0x1e2] sm:$0xff]
    %v1769 = vld [vmem:[%s1282 + $0x1ea] sm:$0xff]
    %v1770 = vld [vmem:[%s1282 + $0x1fa] sm:$0xff]
    %v1771 = vld [vmem:[%s1282 + $0x202] sm:$0xff]
    %v1772 = vld [vmem:[%s1282 + $0x212] sm:$0xff]
    %v1773 = vld [vmem:[%s1282 + $0x21a] sm:$0xff]
    %v1774 = vld [vmem:[%s1282 + $0x22a] sm:$0xff]
    %v1775 = vld [vmem:[%s1282 + $0x232] sm:$0xff]
    %v1776 = vld [vmem:[%s1282 + $0x242] sm:$0xff]
    %v1777 = vld [vmem:[%s1282 + $0x24a] sm:$0xff]
    %v1778 = vld [vmem:[%s1282 + $0x25a] sm:$0xff]
    %v1779 = vld [vmem:[%s1282 + $0x262] sm:$0xff]
    %v1780 = vld [vmem:[%s1282 + $0x272] sm:$0xff]
    %v1781 = vld [vmem:[%s1282 + $0x27a] sm:$0xff]
    %v1782 = vld [vmem:[%s1282 + $0x28a] sm:$0xff]
    %v1783 = vld [vmem:[%s1282 + $0x292] sm:$0xff]
    %v1784 = vld [vmem:[%s1282 + $0x2a2] sm:$0xff]
    %v1785 = vld [vmem:[%s1282 + $0x2aa] sm:$0xff]
    %v1786 = vld [vmem:[%s1282 + $0x2ba] sm:$0xff]
    %v1787 = vld [vmem:[%s1282 + $0x2c2] sm:$0xff]
    %v1788 = vld [vmem:[%s1282 + $0x2d2] sm:$0xff]
    %v1789 = vld [vmem:[%s1282 + $0x2da] sm:$0xff]
    %v1790 = vld [vmem:[%s1282 + $0x2ea] sm:$0xff]
    %v1791 = vld [vmem:[%s1282 + $0x2f2] sm:$0xff]
    %v1792 = vld [vmem:[%s1282 + $0x302] sm:$0xff]
    %v1793 = vld [vmem:[%s1282 + $0x30a] sm:$0xff]
    %v1794 = vld [vmem:[%s1282 + $0x31a] sm:$0xff]
    %v1795 = vld [vmem:[%s1282 + $0x322] sm:$0xff]
    %s1796 = scalar_lea.vmem [#allocation2], 48
    %v1797 = vld [vmem:[%s1796] sm:$0xff]
    %v1798 = vld [vmem:[%s1796 + $0x8] sm:$0xff]
    %v1799 = vld [vmem:[%s1796 + $0x18] sm:$0xff]
    %v1800 = vld [vmem:[%s1796 + $0x20] sm:$0xff]
    %v1801 = vld [vmem:[%s1796 + $0x30] sm:$0xff]
    %v1802 = vld [vmem:[%s1796 + $0x38] sm:$0xff]
    %v1803 = vld [vmem:[%s1796 + $0x48] sm:$0xff]
    %v1804 = vld [vmem:[%s1796 + $0x50] sm:$0xff]
    %v1805 = vld [vmem:[%s1796 + $0x60] sm:$0xff]
    %v1806 = vld [vmem:[%s1796 + $0x68] sm:$0xff]
    %v1807 = vld [vmem:[%s1796 + $0x78] sm:$0xff]
    %v1808 = vld [vmem:[%s1796 + $0x80] sm:$0xff]
    %v1809 = vld [vmem:[%s1796 + $0x90] sm:$0xff]
    %v1810 = vld [vmem:[%s1796 + $0x98] sm:$0xff]
    %v1811 = vld [vmem:[%s1796 + $0xa8] sm:$0xff]
    %v1812 = vld [vmem:[%s1796 + $0xb0] sm:$0xff]
    %v1813 = vld [vmem:[%s1796 + $0xc0] sm:$0xff]
    %v1814 = vld [vmem:[%s1796 + $0xc8] sm:$0xff]
    %v1815 = vld [vmem:[%s1796 + $0xd8] sm:$0xff]
    %v1816 = vld [vmem:[%s1796 + $0xe0] sm:$0xff]
    %v1817 = vld [vmem:[%s1796 + $0xf0] sm:$0xff]
    %v1818 = vld [vmem:[%s1796 + $0xf8] sm:$0xff]
    %v1819 = vld [vmem:[%s1796 + $0x108] sm:$0xff]
    %v1820 = vld [vmem:[%s1796 + $0x110] sm:$0xff]
    %v1821 = vld [vmem:[%s1796 + $0x120] sm:$0xff]
    %v1822 = vld [vmem:[%s1796 + $0x128] sm:$0xff]
    %v1823 = vld [vmem:[%s1796 + $0x138] sm:$0xff]
    %v1824 = vld [vmem:[%s1796 + $0x140] sm:$0xff]
    %v1825 = vld [vmem:[%s1796 + $0x150] sm:$0xff]
    %v1826 = vld [vmem:[%s1796 + $0x158] sm:$0xff]
    %v1827 = vld [vmem:[%s1796 + $0x168] sm:$0xff]
    %v1828 = vld [vmem:[%s1796 + $0x170] sm:$0xff]
    %v1829 = vld [vmem:[%s1796 + $0x1b0] sm:$0xff]
    %v1830 = vld [vmem:[%s1796 + $0x1b8] sm:$0xff]
    %v1831 = vld [vmem:[%s1796 + $0x1c8] sm:$0xff]
    %v1832 = vld [vmem:[%s1796 + $0x1d0] sm:$0xff]
    %v1833 = vld [vmem:[%s1796 + $0x1e0] sm:$0xff]
    %v1834 = vld [vmem:[%s1796 + $0x1e8] sm:$0xff]
    %v1835 = vld [vmem:[%s1796 + $0x1f8] sm:$0xff]
    %v1836 = vld [vmem:[%s1796 + $0x200] sm:$0xff]
    %v1837 = vld [vmem:[%s1796 + $0x210] sm:$0xff]
    %v1838 = vld [vmem:[%s1796 + $0x218] sm:$0xff]
    %v1839 = vld [vmem:[%s1796 + $0x228] sm:$0xff]
    %v1840 = vld [vmem:[%s1796 + $0x230] sm:$0xff]
    %v1841 = vld [vmem:[%s1796 + $0x240] sm:$0xff]
    %v1842 = vld [vmem:[%s1796 + $0x248] sm:$0xff]
    %v1843 = vld [vmem:[%s1796 + $0x258] sm:$0xff]
    %v1844 = vld [vmem:[%s1796 + $0x260] sm:$0xff]
    %v1845 = vld [vmem:[%s1796 + $0x270] sm:$0xff]
    %v1846 = vld [vmem:[%s1796 + $0x278] sm:$0xff]
    %v1847 = vld [vmem:[%s1796 + $0x288] sm:$0xff]
    %v1848 = vld [vmem:[%s1796 + $0x290] sm:$0xff]
    %v1849 = vld [vmem:[%s1796 + $0x2a0] sm:$0xff]
    %v1850 = vld [vmem:[%s1796 + $0x2a8] sm:$0xff]
    %v1851 = vld [vmem:[%s1796 + $0x2b8] sm:$0xff]
    %v1852 = vld [vmem:[%s1796 + $0x2c0] sm:$0xff]
    %v1853 = vld [vmem:[%s1796 + $0x2d0] sm:$0xff]
    %v1854 = vld [vmem:[%s1796 + $0x2d8] sm:$0xff]
    %v1855 = vld [vmem:[%s1796 + $0x2e8] sm:$0xff]
    %v1856 = vld [vmem:[%s1796 + $0x2f0] sm:$0xff]
    %v1857 = vld [vmem:[%s1796 + $0x300] sm:$0xff]
    %v1858 = vld [vmem:[%s1796 + $0x308] sm:$0xff]
    %v1859 = vld [vmem:[%s1796 + $0x318] sm:$0xff]
    %v1860 = vld [vmem:[%s1796 + $0x320] sm:$0xff]
    %v1861 = vld [vmem:[%s1796 + $0x1] sm:$0xff]
    %v1862 = vld [vmem:[%s1796 + $0x9] sm:$0xff]
    %v1863 = vld [vmem:[%s1796 + $0x19] sm:$0xff]
    %v1864 = vld [vmem:[%s1796 + $0x21] sm:$0xff]
    %v1865 = vld [vmem:[%s1796 + $0x31] sm:$0xff]
    %v1866 = vld [vmem:[%s1796 + $0x39] sm:$0xff]
    %v1867 = vld [vmem:[%s1796 + $0x49] sm:$0xff]
    %v1868 = vld [vmem:[%s1796 + $0x51] sm:$0xff]
    %v1869 = vld [vmem:[%s1796 + $0x61] sm:$0xff]
    %v1870 = vld [vmem:[%s1796 + $0x69] sm:$0xff]
    %v1871 = vld [vmem:[%s1796 + $0x79] sm:$0xff]
    %v1872 = vld [vmem:[%s1796 + $0x81] sm:$0xff]
    %v1873 = vld [vmem:[%s1796 + $0x91] sm:$0xff]
    %v1874 = vld [vmem:[%s1796 + $0x99] sm:$0xff]
    %v1875 = vld [vmem:[%s1796 + $0xa9] sm:$0xff]
    %v1876 = vld [vmem:[%s1796 + $0xb1] sm:$0xff]
    %v1877 = vld [vmem:[%s1796 + $0xc1] sm:$0xff]
    %v1878 = vld [vmem:[%s1796 + $0xc9] sm:$0xff]
    %v1879 = vld [vmem:[%s1796 + $0xd9] sm:$0xff]
    %v1880 = vld [vmem:[%s1796 + $0xe1] sm:$0xff]
    %v1881 = vld [vmem:[%s1796 + $0xf1] sm:$0xff]
    %v1882 = vld [vmem:[%s1796 + $0xf9] sm:$0xff]
    %v1883 = vld [vmem:[%s1796 + $0x109] sm:$0xff]
    %v1884 = vld [vmem:[%s1796 + $0x111] sm:$0xff]
    %v1885 = vld [vmem:[%s1796 + $0x121] sm:$0xff]
    %v1886 = vld [vmem:[%s1796 + $0x129] sm:$0xff]
    %v1887 = vld [vmem:[%s1796 + $0x139] sm:$0xff]
    %v1888 = vld [vmem:[%s1796 + $0x141] sm:$0xff]
    %v1889 = vld [vmem:[%s1796 + $0x151] sm:$0xff]
    %v1890 = vld [vmem:[%s1796 + $0x159] sm:$0xff]
    %v1891 = vld [vmem:[%s1796 + $0x169] sm:$0xff]
    %v1892 = vld [vmem:[%s1796 + $0x171] sm:$0xff]
    %v1893 = vld [vmem:[%s1796 + $0x1b1] sm:$0xff]
    %v1894 = vld [vmem:[%s1796 + $0x1b9] sm:$0xff]
    %v1895 = vld [vmem:[%s1796 + $0x1c9] sm:$0xff]
    %v1896 = vld [vmem:[%s1796 + $0x1d1] sm:$0xff]
    %v1897 = vld [vmem:[%s1796 + $0x1e1] sm:$0xff]
    %v1898 = vld [vmem:[%s1796 + $0x1e9] sm:$0xff]
    %v1899 = vld [vmem:[%s1796 + $0x1f9] sm:$0xff]
    %v1900 = vld [vmem:[%s1796 + $0x201] sm:$0xff]
    %v1901 = vld [vmem:[%s1796 + $0x211] sm:$0xff]
    %v1902 = vld [vmem:[%s1796 + $0x219] sm:$0xff]
    %v1903 = vld [vmem:[%s1796 + $0x229] sm:$0xff]
    %v1904 = vld [vmem:[%s1796 + $0x231] sm:$0xff]
    %v1905 = vld [vmem:[%s1796 + $0x241] sm:$0xff]
    %v1906 = vld [vmem:[%s1796 + $0x249] sm:$0xff]
    %v1907 = vld [vmem:[%s1796 + $0x259] sm:$0xff]
    %v1908 = vld [vmem:[%s1796 + $0x261] sm:$0xff]
    %v1909 = vld [vmem:[%s1796 + $0x271] sm:$0xff]
    %v1910 = vld [vmem:[%s1796 + $0x279] sm:$0xff]
    %v1911 = vld [vmem:[%s1796 + $0x289] sm:$0xff]
    %v1912 = vld [vmem:[%s1796 + $0x291] sm:$0xff]
    %v1913 = vld [vmem:[%s1796 + $0x2a1] sm:$0xff]
    %v1914 = vld [vmem:[%s1796 + $0x2a9] sm:$0xff]
    %v1915 = vld [vmem:[%s1796 + $0x2b9] sm:$0xff]
    %v1916 = vld [vmem:[%s1796 + $0x2c1] sm:$0xff]
    %v1917 = vld [vmem:[%s1796 + $0x2d1] sm:$0xff]
    %v1918 = vld [vmem:[%s1796 + $0x2d9] sm:$0xff]
    %v1919 = vld [vmem:[%s1796 + $0x2e9] sm:$0xff]
    %v1920 = vld [vmem:[%s1796 + $0x2f1] sm:$0xff]
    %v1921 = vld [vmem:[%s1796 + $0x301] sm:$0xff]
    %v1922 = vld [vmem:[%s1796 + $0x309] sm:$0xff]
    %v1923 = vld [vmem:[%s1796 + $0x319] sm:$0xff]
    %v1924 = vld [vmem:[%s1796 + $0x321] sm:$0xff]
    %v1925 = vld [vmem:[%s1796 + $0x2] sm:$0xff]
    %v1926 = vld [vmem:[%s1796 + $0xa] sm:$0xff]
    %v1927 = vld [vmem:[%s1796 + $0x1a] sm:$0xff]
    %v1928 = vld [vmem:[%s1796 + $0x22] sm:$0xff]
    %v1929 = vld [vmem:[%s1796 + $0x32] sm:$0xff]
    %v1930 = vld [vmem:[%s1796 + $0x3a] sm:$0xff]
    %v1931 = vld [vmem:[%s1796 + $0x4a] sm:$0xff]
    %v1932 = vld [vmem:[%s1796 + $0x52] sm:$0xff]
    %v1933 = vld [vmem:[%s1796 + $0x62] sm:$0xff]
    %v1934 = vld [vmem:[%s1796 + $0x6a] sm:$0xff]
    %v1935 = vld [vmem:[%s1796 + $0x7a] sm:$0xff]
    %v1936 = vld [vmem:[%s1796 + $0x82] sm:$0xff]
    %v1937 = vld [vmem:[%s1796 + $0x92] sm:$0xff]
    %v1938 = vld [vmem:[%s1796 + $0x9a] sm:$0xff]
    %v1939 = vld [vmem:[%s1796 + $0xaa] sm:$0xff]
    %v1940 = vld [vmem:[%s1796 + $0xb2] sm:$0xff]
    %v1941 = vld [vmem:[%s1796 + $0xc2] sm:$0xff]
    %v1942 = vld [vmem:[%s1796 + $0xca] sm:$0xff]
    %v1943 = vld [vmem:[%s1796 + $0xda] sm:$0xff]
    %v1944 = vld [vmem:[%s1796 + $0xe2] sm:$0xff]
    %v1945 = vld [vmem:[%s1796 + $0xf2] sm:$0xff]
    %v1946 = vld [vmem:[%s1796 + $0xfa] sm:$0xff]
    %v1947 = vld [vmem:[%s1796 + $0x10a] sm:$0xff]
    %v1948 = vld [vmem:[%s1796 + $0x112] sm:$0xff]
    %v1949 = vld [vmem:[%s1796 + $0x122] sm:$0xff]
    %v1950 = vld [vmem:[%s1796 + $0x12a] sm:$0xff]
    %v1951 = vld [vmem:[%s1796 + $0x13a] sm:$0xff]
    %v1952 = vld [vmem:[%s1796 + $0x142] sm:$0xff]
    %v1953 = vld [vmem:[%s1796 + $0x152] sm:$0xff]
    %v1954 = vld [vmem:[%s1796 + $0x15a] sm:$0xff]
    %v1955 = vld [vmem:[%s1796 + $0x16a] sm:$0xff]
    %v1956 = vld [vmem:[%s1796 + $0x172] sm:$0xff]
    %v1957 = vld [vmem:[%s1796 + $0x1b2] sm:$0xff]
    %v1958 = vld [vmem:[%s1796 + $0x1ba] sm:$0xff]
    %v1959 = vld [vmem:[%s1796 + $0x1ca] sm:$0xff]
    %v1960 = vld [vmem:[%s1796 + $0x1d2] sm:$0xff]
    %v1961 = vld [vmem:[%s1796 + $0x1e2] sm:$0xff]
    %v1962 = vld [vmem:[%s1796 + $0x1ea] sm:$0xff]
    %v1963 = vld [vmem:[%s1796 + $0x1fa] sm:$0xff]
    %v1964 = vld [vmem:[%s1796 + $0x202] sm:$0xff]
    %v1965 = vld [vmem:[%s1796 + $0x212] sm:$0xff]
    %v1966 = vld [vmem:[%s1796 + $0x21a] sm:$0xff]
    %v1967 = vld [vmem:[%s1796 + $0x22a] sm:$0xff]
    %v1968 = vld [vmem:[%s1796 + $0x232] sm:$0xff]
    %v1969 = vld [vmem:[%s1796 + $0x242] sm:$0xff]
    %v1970 = vld [vmem:[%s1796 + $0x24a] sm:$0xff]
    %v1971 = vld [vmem:[%s1796 + $0x25a] sm:$0xff]
    %v1972 = vld [vmem:[%s1796 + $0x262] sm:$0xff]
    %v1973 = vld [vmem:[%s1796 + $0x272] sm:$0xff]
    %v1974 = vld [vmem:[%s1796 + $0x27a] sm:$0xff]
    %v1975 = vld [vmem:[%s1796 + $0x28a] sm:$0xff]
    %v1976 = vld [vmem:[%s1796 + $0x292] sm:$0xff]
    %v1977 = vld [vmem:[%s1796 + $0x2a2] sm:$0xff]
    %v1978 = vld [vmem:[%s1796 + $0x2aa] sm:$0xff]
    %v1979 = vld [vmem:[%s1796 + $0x2ba] sm:$0xff]
    %v1980 = vld [vmem:[%s1796 + $0x2c2] sm:$0xff]
    %v1981 = vld [vmem:[%s1796 + $0x2d2] sm:$0xff]
    %v1982 = vld [vmem:[%s1796 + $0x2da] sm:$0xff]
    %v1983 = vld [vmem:[%s1796 + $0x2ea] sm:$0xff]
    %v1984 = vld [vmem:[%s1796 + $0x2f2] sm:$0xff]
    %v1985 = vld [vmem:[%s1796 + $0x302] sm:$0xff]
    %v1986 = vld [vmem:[%s1796 + $0x30a] sm:$0xff]
    %v1987 = vld [vmem:[%s1796 + $0x31a] sm:$0xff]
    %v1988 = vld [vmem:[%s1796 + $0x322] sm:$0xff]
    %2053 = vrot.lane.b32.xlu0 %v1476, 64
    %v2054 = vpop.permute.xlu0 %2053
    %2055 = vrot.lane.b32.xlu0 %v1477, 64
    %v2056 = vpop.permute.xlu0 %2055
    %2057 = vrot.lane.b32.xlu0 %v1478, 64
    %v2058 = vpop.permute.xlu0 %2057
    %2059 = vrot.lane.b32.xlu0 %v1479, 64
    %v2060 = vpop.permute.xlu0 %2059
    %2061 = vrot.lane.b32.xlu0 %v1480, 64
    %v2062 = vpop.permute.xlu0 %2061
    %2063 = vrot.lane.b32.xlu0 %v1481, 64
    %v2064 = vpop.permute.xlu0 %2063
    %2065 = vrot.lane.b32.xlu0 %v1482, 64
    %v2066 = vpop.permute.xlu0 %2065
    %2067 = vrot.lane.b32.xlu0 %v1483, 64
    %v2068 = vpop.permute.xlu0 %2067
    %2069 = vrot.lane.b32.xlu0 %v1484, 64
    %v2070 = vpop.permute.xlu0 %2069
    %2071 = vrot.lane.b32.xlu0 %v1485, 64
    %v2072 = vpop.permute.xlu0 %2071
    %2073 = vrot.lane.b32.xlu0 %v1486, 64
    %v2074 = vpop.permute.xlu0 %2073
    %2075 = vrot.lane.b32.xlu0 %v1487, 64
    %v2076 = vpop.permute.xlu0 %2075
    %2077 = vrot.lane.b32.xlu0 %v1488, 64
    %v2078 = vpop.permute.xlu0 %2077
    %2079 = vrot.lane.b32.xlu0 %v1489, 64
    %v2080 = vpop.permute.xlu0 %2079
    %2081 = vrot.lane.b32.xlu0 %v1490, 64
    %v2082 = vpop.permute.xlu0 %2081
    %2083 = vrot.lane.b32.xlu0 %v1491, 64
    %v2084 = vpop.permute.xlu0 %2083
    %2085 = vrot.lane.b32.xlu0 %v1492, 64
    %v2086 = vpop.permute.xlu0 %2085
    %2087 = vrot.lane.b32.xlu0 %v1493, 64
    %v2088 = vpop.permute.xlu0 %2087
    %2089 = vrot.lane.b32.xlu0 %v1494, 64
    %v2090 = vpop.permute.xlu0 %2089
    %2091 = vrot.lane.b32.xlu0 %v1495, 64
    %v2092 = vpop.permute.xlu0 %2091
    %2093 = vrot.lane.b32.xlu0 %v1496, 64
    %v2094 = vpop.permute.xlu0 %2093
    %2095 = vrot.lane.b32.xlu0 %v1497, 64
    %v2096 = vpop.permute.xlu0 %2095
    %2097 = vrot.lane.b32.xlu0 %v1498, 64
    %v2098 = vpop.permute.xlu0 %2097
    %2099 = vrot.lane.b32.xlu0 %v1499, 64
    %v2100 = vpop.permute.xlu0 %2099
    %2101 = vrot.lane.b32.xlu0 %v1500, 64
    %v2102 = vpop.permute.xlu0 %2101
    %2103 = vrot.lane.b32.xlu0 %v1501, 64
    %v2104 = vpop.permute.xlu0 %2103
    %2105 = vrot.lane.b32.xlu0 %v1502, 64
    %v2106 = vpop.permute.xlu0 %2105
    %2107 = vrot.lane.b32.xlu0 %v1503, 64
    %v2108 = vpop.permute.xlu0 %2107
    %2109 = vrot.lane.b32.xlu0 %v1504, 64
    %v2110 = vpop.permute.xlu0 %2109
    %2111 = vrot.lane.b32.xlu0 %v1505, 64
    %v2112 = vpop.permute.xlu0 %2111
    %2113 = vrot.lane.b32.xlu0 %v1506, 64
    %v2114 = vpop.permute.xlu0 %2113
    %2115 = vrot.lane.b32.xlu0 %v1507, 64
    %v2116 = vpop.permute.xlu0 %2115
    %2117 = vrot.lane.b32.xlu0 %v1508, 64
    %v2118 = vpop.permute.xlu0 %2117
    %2119 = vrot.lane.b32.xlu0 %v1509, 64
    %v2120 = vpop.permute.xlu0 %2119
    %2121 = vrot.lane.b32.xlu0 %v1510, 64
    %v2122 = vpop.permute.xlu0 %2121
    %2123 = vrot.lane.b32.xlu0 %v1511, 64
    %v2124 = vpop.permute.xlu0 %2123
    %2125 = vrot.lane.b32.xlu0 %v1512, 64
    %v2126 = vpop.permute.xlu0 %2125
    %2127 = vrot.lane.b32.xlu0 %v1513, 64
    %v2128 = vpop.permute.xlu0 %2127
    %2129 = vrot.lane.b32.xlu0 %v1514, 64
    %v2130 = vpop.permute.xlu0 %2129
    %2131 = vrot.lane.b32.xlu0 %v1515, 64
    %v2132 = vpop.permute.xlu0 %2131
    %2133 = vrot.lane.b32.xlu0 %v1516, 64
    %v2134 = vpop.permute.xlu0 %2133
    %2135 = vrot.lane.b32.xlu0 %v1517, 64
    %v2136 = vpop.permute.xlu0 %2135
    %2137 = vrot.lane.b32.xlu0 %v1518, 64
    %v2138 = vpop.permute.xlu0 %2137
    %2139 = vrot.lane.b32.xlu0 %v1519, 64
    %v2140 = vpop.permute.xlu0 %2139
    %2141 = vrot.lane.b32.xlu0 %v1520, 64
    %v2142 = vpop.permute.xlu0 %2141
    %2143 = vrot.lane.b32.xlu0 %v1521, 64
    %v2144 = vpop.permute.xlu0 %2143
    %2145 = vrot.lane.b32.xlu0 %v1522, 64
    %v2146 = vpop.permute.xlu0 %2145
    %2147 = vrot.lane.b32.xlu0 %v1523, 64
    %v2148 = vpop.permute.xlu0 %2147
    %2149 = vrot.lane.b32.xlu0 %v1524, 64
    %v2150 = vpop.permute.xlu0 %2149
    %2151 = vrot.lane.b32.xlu0 %v1525, 64
    %v2152 = vpop.permute.xlu0 %2151
    %2153 = vrot.lane.b32.xlu0 %v1526, 64
    %v2154 = vpop.permute.xlu0 %2153
    %2155 = vrot.lane.b32.xlu0 %v1527, 64
    %v2156 = vpop.permute.xlu0 %2155
    %2157 = vrot.lane.b32.xlu0 %v1528, 64
    %v2158 = vpop.permute.xlu0 %2157
    %2159 = vrot.lane.b32.xlu0 %v1529, 64
    %v2160 = vpop.permute.xlu0 %2159
    %2161 = vrot.lane.b32.xlu0 %v1530, 64
    %v2162 = vpop.permute.xlu0 %2161
    %2163 = vrot.lane.b32.xlu0 %v1531, 64
    %v2164 = vpop.permute.xlu0 %2163
    %2165 = vrot.lane.b32.xlu0 %v1532, 64
    %v2166 = vpop.permute.xlu0 %2165
    %2167 = vrot.lane.b32.xlu0 %v1533, 64
    %v2168 = vpop.permute.xlu0 %2167
    %2169 = vrot.lane.b32.xlu0 %v1534, 64
    %v2170 = vpop.permute.xlu0 %2169
    %2171 = vrot.lane.b32.xlu0 %v1535, 64
    %v2172 = vpop.permute.xlu0 %2171
    %2173 = vrot.lane.b32.xlu0 %v1536, 64
    %v2174 = vpop.permute.xlu0 %2173
    %2175 = vrot.lane.b32.xlu0 %v1537, 64
    %v2176 = vpop.permute.xlu0 %2175
    %2177 = vrot.lane.b32.xlu0 %v1538, 64
    %v2178 = vpop.permute.xlu0 %2177
    %2179 = vrot.lane.b32.xlu0 %v1539, 64
    %v2180 = vpop.permute.xlu0 %2179
    %2309 = vrot.lane.b32.xlu0 %v1604, 64
    %v2310 = vpop.permute.xlu0 %2309
    %2311 = vrot.lane.b32.xlu0 %v1605, 64
    %v2312 = vpop.permute.xlu0 %2311
    %2313 = vrot.lane.b32.xlu0 %v1606, 64
    %v2314 = vpop.permute.xlu0 %2313
    %2315 = vrot.lane.b32.xlu0 %v1607, 64
    %v2316 = vpop.permute.xlu0 %2315
    %2317 = vrot.lane.b32.xlu0 %v1608, 64
    %v2318 = vpop.permute.xlu0 %2317
    %2319 = vrot.lane.b32.xlu0 %v1609, 64
    %v2320 = vpop.permute.xlu0 %2319
    %2321 = vrot.lane.b32.xlu0 %v1610, 64
    %v2322 = vpop.permute.xlu0 %2321
    %2323 = vrot.lane.b32.xlu0 %v1611, 64
    %v2324 = vpop.permute.xlu0 %2323
    %2325 = vrot.lane.b32.xlu0 %v1612, 64
    %v2326 = vpop.permute.xlu0 %2325
    %2327 = vrot.lane.b32.xlu0 %v1613, 64
    %v2328 = vpop.permute.xlu0 %2327
    %2329 = vrot.lane.b32.xlu0 %v1614, 64
    %v2330 = vpop.permute.xlu0 %2329
    %2331 = vrot.lane.b32.xlu0 %v1615, 64
    %v2332 = vpop.permute.xlu0 %2331
    %2333 = vrot.lane.b32.xlu0 %v1616, 64
    %v2334 = vpop.permute.xlu0 %2333
    %2335 = vrot.lane.b32.xlu0 %v1617, 64
    %v2336 = vpop.permute.xlu0 %2335
    %2337 = vrot.lane.b32.xlu0 %v1618, 64
    %v2338 = vpop.permute.xlu0 %2337
    %2339 = vrot.lane.b32.xlu0 %v1619, 64
    %v2340 = vpop.permute.xlu0 %2339
    %2341 = vrot.lane.b32.xlu0 %v1620, 64
    %v2342 = vpop.permute.xlu0 %2341
    %2343 = vrot.lane.b32.xlu0 %v1621, 64
    %v2344 = vpop.permute.xlu0 %2343
    %2345 = vrot.lane.b32.xlu0 %v1622, 64
    %v2346 = vpop.permute.xlu0 %2345
    %2347 = vrot.lane.b32.xlu0 %v1623, 64
    %v2348 = vpop.permute.xlu0 %2347
    %2349 = vrot.lane.b32.xlu0 %v1624, 64
    %v2350 = vpop.permute.xlu0 %2349
    %2351 = vrot.lane.b32.xlu0 %v1625, 64
    %v2352 = vpop.permute.xlu0 %2351
    %2353 = vrot.lane.b32.xlu0 %v1626, 64
    %v2354 = vpop.permute.xlu0 %2353
    %2355 = vrot.lane.b32.xlu0 %v1627, 64
    %v2356 = vpop.permute.xlu0 %2355
    %2357 = vrot.lane.b32.xlu0 %v1628, 64
    %v2358 = vpop.permute.xlu0 %2357
    %2359 = vrot.lane.b32.xlu0 %v1629, 64
    %v2360 = vpop.permute.xlu0 %2359
    %2361 = vrot.lane.b32.xlu0 %v1630, 64
    %v2362 = vpop.permute.xlu0 %2361
    %2363 = vrot.lane.b32.xlu0 %v1631, 64
    %v2364 = vpop.permute.xlu0 %2363
    %2365 = vrot.lane.b32.xlu0 %v1632, 64
    %v2366 = vpop.permute.xlu0 %2365
    %2367 = vrot.lane.b32.xlu0 %v1633, 64
    %v2368 = vpop.permute.xlu0 %2367
    %2369 = vrot.lane.b32.xlu0 %v1634, 64
    %v2370 = vpop.permute.xlu0 %2369
    %2371 = vrot.lane.b32.xlu0 %v1635, 64
    %v2372 = vpop.permute.xlu0 %2371
    %2373 = vrot.lane.b32.xlu0 %v1636, 64
    %v2374 = vpop.permute.xlu0 %2373
    %2375 = vrot.lane.b32.xlu0 %v1637, 64
    %v2376 = vpop.permute.xlu0 %2375
    %2377 = vrot.lane.b32.xlu0 %v1638, 64
    %v2378 = vpop.permute.xlu0 %2377
    %2379 = vrot.lane.b32.xlu0 %v1639, 64
    %v2380 = vpop.permute.xlu0 %2379
    %2381 = vrot.lane.b32.xlu0 %v1640, 64
    %v2382 = vpop.permute.xlu0 %2381
    %2383 = vrot.lane.b32.xlu0 %v1641, 64
    %v2384 = vpop.permute.xlu0 %2383
    %2385 = vrot.lane.b32.xlu0 %v1642, 64
    %v2386 = vpop.permute.xlu0 %2385
    %2387 = vrot.lane.b32.xlu0 %v1643, 64
    %v2388 = vpop.permute.xlu0 %2387
    %2389 = vrot.lane.b32.xlu0 %v1644, 64
    %v2390 = vpop.permute.xlu0 %2389
    %2391 = vrot.lane.b32.xlu0 %v1645, 64
    %v2392 = vpop.permute.xlu0 %2391
    %2393 = vrot.lane.b32.xlu0 %v1646, 64
    %v2394 = vpop.permute.xlu0 %2393
    %2395 = vrot.lane.b32.xlu0 %v1647, 64
    %v2396 = vpop.permute.xlu0 %2395
    %2397 = vrot.lane.b32.xlu0 %v1648, 64
    %v2398 = vpop.permute.xlu0 %2397
    %2399 = vrot.lane.b32.xlu0 %v1649, 64
    %v2400 = vpop.permute.xlu0 %2399
    %2401 = vrot.lane.b32.xlu0 %v1650, 64
    %v2402 = vpop.permute.xlu0 %2401
    %2403 = vrot.lane.b32.xlu0 %v1651, 64
    %v2404 = vpop.permute.xlu0 %2403
    %2405 = vrot.lane.b32.xlu0 %v1652, 64
    %v2406 = vpop.permute.xlu0 %2405
    %2407 = vrot.lane.b32.xlu0 %v1653, 64
    %v2408 = vpop.permute.xlu0 %2407
    %2409 = vrot.lane.b32.xlu0 %v1654, 64
    %v2410 = vpop.permute.xlu0 %2409
    %2411 = vrot.lane.b32.xlu0 %v1655, 64
    %v2412 = vpop.permute.xlu0 %2411
    %2413 = vrot.lane.b32.xlu0 %v1656, 64
    %v2414 = vpop.permute.xlu0 %2413
    %2415 = vrot.lane.b32.xlu0 %v1657, 64
    %v2416 = vpop.permute.xlu0 %2415
    %2417 = vrot.lane.b32.xlu0 %v1658, 64
    %v2418 = vpop.permute.xlu0 %2417
    %2419 = vrot.lane.b32.xlu0 %v1659, 64
    %v2420 = vpop.permute.xlu0 %2419
    %2421 = vrot.lane.b32.xlu0 %v1660, 64
    %v2422 = vpop.permute.xlu0 %2421
    %2423 = vrot.lane.b32.xlu0 %v1661, 64
    %v2424 = vpop.permute.xlu0 %2423
    %2425 = vrot.lane.b32.xlu0 %v1662, 64
    %v2426 = vpop.permute.xlu0 %2425
    %2427 = vrot.lane.b32.xlu0 %v1663, 64
    %v2428 = vpop.permute.xlu0 %2427
    %2429 = vrot.lane.b32.xlu0 %v1664, 64
    %v2430 = vpop.permute.xlu0 %2429
    %2431 = vrot.lane.b32.xlu0 %v1665, 64
    %v2432 = vpop.permute.xlu0 %2431
    %2433 = vrot.lane.b32.xlu0 %v1666, 64
    %v2434 = vpop.permute.xlu0 %2433
    %2435 = vrot.lane.b32.xlu0 %v1667, 64
    %v2436 = vpop.permute.xlu0 %2435
    %2565 = vrot.lane.b32.xlu0 %v1732, 64
    %v2566 = vpop.permute.xlu0 %2565
    %2567 = vrot.lane.b32.xlu0 %v1733, 64
    %v2568 = vpop.permute.xlu0 %2567
    %2569 = vrot.lane.b32.xlu0 %v1734, 64
    %v2570 = vpop.permute.xlu0 %2569
    %2571 = vrot.lane.b32.xlu0 %v1735, 64
    %v2572 = vpop.permute.xlu0 %2571
    %2573 = vrot.lane.b32.xlu0 %v1736, 64
    %v2574 = vpop.permute.xlu0 %2573
    %2575 = vrot.lane.b32.xlu0 %v1737, 64
    %v2576 = vpop.permute.xlu0 %2575
    %2577 = vrot.lane.b32.xlu0 %v1738, 64
    %v2578 = vpop.permute.xlu0 %2577
    %2579 = vrot.lane.b32.xlu0 %v1739, 64
    %v2580 = vpop.permute.xlu0 %2579
    %2581 = vrot.lane.b32.xlu0 %v1740, 64
    %v2582 = vpop.permute.xlu0 %2581
    %2583 = vrot.lane.b32.xlu0 %v1741, 64
    %v2584 = vpop.permute.xlu0 %2583
    %2585 = vrot.lane.b32.xlu0 %v1742, 64
    %v2586 = vpop.permute.xlu0 %2585
    %2587 = vrot.lane.b32.xlu0 %v1743, 64
    %v2588 = vpop.permute.xlu0 %2587
    %2589 = vrot.lane.b32.xlu0 %v1744, 64
    %v2590 = vpop.permute.xlu0 %2589
    %2591 = vrot.lane.b32.xlu0 %v1745, 64
    %v2592 = vpop.permute.xlu0 %2591
    %2593 = vrot.lane.b32.xlu0 %v1746, 64
    %v2594 = vpop.permute.xlu0 %2593
    %2595 = vrot.lane.b32.xlu0 %v1747, 64
    %v2596 = vpop.permute.xlu0 %2595
    %2597 = vrot.lane.b32.xlu0 %v1748, 64
    %v2598 = vpop.permute.xlu0 %2597
    %2599 = vrot.lane.b32.xlu0 %v1749, 64
    %v2600 = vpop.permute.xlu0 %2599
    %2601 = vrot.lane.b32.xlu0 %v1750, 64
    %v2602 = vpop.permute.xlu0 %2601
    %2603 = vrot.lane.b32.xlu0 %v1751, 64
    %v2604 = vpop.permute.xlu0 %2603
    %2605 = vrot.lane.b32.xlu0 %v1752, 64
    %v2606 = vpop.permute.xlu0 %2605
    %2607 = vrot.lane.b32.xlu0 %v1753, 64
    %v2608 = vpop.permute.xlu0 %2607
    %2609 = vrot.lane.b32.xlu0 %v1754, 64
    %v2610 = vpop.permute.xlu0 %2609
    %2611 = vrot.lane.b32.xlu0 %v1755, 64
    %v2612 = vpop.permute.xlu0 %2611
    %2613 = vrot.lane.b32.xlu0 %v1756, 64
    %v2614 = vpop.permute.xlu0 %2613
    %2615 = vrot.lane.b32.xlu0 %v1757, 64
    %v2616 = vpop.permute.xlu0 %2615
    %2617 = vrot.lane.b32.xlu0 %v1758, 64
    %v2618 = vpop.permute.xlu0 %2617
    %2619 = vrot.lane.b32.xlu0 %v1759, 64
    %v2620 = vpop.permute.xlu0 %2619
    %2621 = vrot.lane.b32.xlu0 %v1760, 64
    %v2622 = vpop.permute.xlu0 %2621
    %2623 = vrot.lane.b32.xlu0 %v1761, 64
    %v2624 = vpop.permute.xlu0 %2623
    %2625 = vrot.lane.b32.xlu0 %v1762, 64
    %v2626 = vpop.permute.xlu0 %2625
    %2627 = vrot.lane.b32.xlu0 %v1763, 64
    %v2628 = vpop.permute.xlu0 %2627
    %2629 = vrot.lane.b32.xlu0 %v1764, 64
    %v2630 = vpop.permute.xlu0 %2629
    %2631 = vrot.lane.b32.xlu0 %v1765, 64
    %v2632 = vpop.permute.xlu0 %2631
    %2633 = vrot.lane.b32.xlu0 %v1766, 64
    %v2634 = vpop.permute.xlu0 %2633
    %2635 = vrot.lane.b32.xlu0 %v1767, 64
    %v2636 = vpop.permute.xlu0 %2635
    %2637 = vrot.lane.b32.xlu0 %v1768, 64
    %v2638 = vpop.permute.xlu0 %2637
    %2639 = vrot.lane.b32.xlu0 %v1769, 64
    %v2640 = vpop.permute.xlu0 %2639
    %2641 = vrot.lane.b32.xlu0 %v1770, 64
    %v2642 = vpop.permute.xlu0 %2641
    %2643 = vrot.lane.b32.xlu0 %v1771, 64
    %v2644 = vpop.permute.xlu0 %2643
    %2645 = vrot.lane.b32.xlu0 %v1772, 64
    %v2646 = vpop.permute.xlu0 %2645
    %2647 = vrot.lane.b32.xlu0 %v1773, 64
    %v2648 = vpop.permute.xlu0 %2647
    %2649 = vrot.lane.b32.xlu0 %v1774, 64
    %v2650 = vpop.permute.xlu0 %2649
    %2651 = vrot.lane.b32.xlu0 %v1775, 64
    %v2652 = vpop.permute.xlu0 %2651
    %2653 = vrot.lane.b32.xlu0 %v1776, 64
    %v2654 = vpop.permute.xlu0 %2653
    %2655 = vrot.lane.b32.xlu0 %v1777, 64
    %v2656 = vpop.permute.xlu0 %2655
    %2657 = vrot.lane.b32.xlu0 %v1778, 64
    %v2658 = vpop.permute.xlu0 %2657
    %2659 = vrot.lane.b32.xlu0 %v1779, 64
    %v2660 = vpop.permute.xlu0 %2659
    %2661 = vrot.lane.b32.xlu0 %v1780, 64
    %v2662 = vpop.permute.xlu0 %2661
    %2663 = vrot.lane.b32.xlu0 %v1781, 64
    %v2664 = vpop.permute.xlu0 %2663
    %2665 = vrot.lane.b32.xlu0 %v1782, 64
    %v2666 = vpop.permute.xlu0 %2665
    %2667 = vrot.lane.b32.xlu0 %v1783, 64
    %v2668 = vpop.permute.xlu0 %2667
    %2669 = vrot.lane.b32.xlu0 %v1784, 64
    %v2670 = vpop.permute.xlu0 %2669
    %2671 = vrot.lane.b32.xlu0 %v1785, 64
    %v2672 = vpop.permute.xlu0 %2671
    %2673 = vrot.lane.b32.xlu0 %v1786, 64
    %v2674 = vpop.permute.xlu0 %2673
    %2675 = vrot.lane.b32.xlu0 %v1787, 64
    %v2676 = vpop.permute.xlu0 %2675
    %2677 = vrot.lane.b32.xlu0 %v1788, 64
    %v2678 = vpop.permute.xlu0 %2677
    %2679 = vrot.lane.b32.xlu0 %v1789, 64
    %v2680 = vpop.permute.xlu0 %2679
    %2681 = vrot.lane.b32.xlu0 %v1790, 64
    %v2682 = vpop.permute.xlu0 %2681
    %2683 = vrot.lane.b32.xlu0 %v1791, 64
    %v2684 = vpop.permute.xlu0 %2683
    %2685 = vrot.lane.b32.xlu0 %v1792, 64
    %v2686 = vpop.permute.xlu0 %2685
    %2687 = vrot.lane.b32.xlu0 %v1793, 64
    %v2688 = vpop.permute.xlu0 %2687
    %2689 = vrot.lane.b32.xlu0 %v1794, 64
    %v2690 = vpop.permute.xlu0 %2689
    %2691 = vrot.lane.b32.xlu0 %v1795, 64
    %v2692 = vpop.permute.xlu0 %2691
    %2821 = vrot.lane.b32.xlu0 %v1861, 64
    %v2822 = vpop.permute.xlu0 %2821
    %2823 = vrot.lane.b32.xlu0 %v1862, 64
    %v2824 = vpop.permute.xlu0 %2823
    %2825 = vrot.lane.b32.xlu0 %v1863, 64
    %v2826 = vpop.permute.xlu0 %2825
    %2827 = vrot.lane.b32.xlu0 %v1864, 64
    %v2828 = vpop.permute.xlu0 %2827
    %2829 = vrot.lane.b32.xlu0 %v1865, 64
    %v2830 = vpop.permute.xlu0 %2829
    %2831 = vrot.lane.b32.xlu0 %v1866, 64
    %v2832 = vpop.permute.xlu0 %2831
    %2833 = vrot.lane.b32.xlu0 %v1867, 64
    %v2834 = vpop.permute.xlu0 %2833
    %2835 = vrot.lane.b32.xlu0 %v1868, 64
    %v2836 = vpop.permute.xlu0 %2835
    %2837 = vrot.lane.b32.xlu0 %v1869, 64
    %v2838 = vpop.permute.xlu0 %2837
    %2839 = vrot.lane.b32.xlu0 %v1870, 64
    %v2840 = vpop.permute.xlu0 %2839
    %2841 = vrot.lane.b32.xlu0 %v1871, 64
    %v2842 = vpop.permute.xlu0 %2841
    %2843 = vrot.lane.b32.xlu0 %v1872, 64
    %v2844 = vpop.permute.xlu0 %2843
    %2845 = vrot.lane.b32.xlu0 %v1873, 64
    %v2846 = vpop.permute.xlu0 %2845
    %2847 = vrot.lane.b32.xlu0 %v1874, 64
    %v2848 = vpop.permute.xlu0 %2847
    %2849 = vrot.lane.b32.xlu0 %v1875, 64
    %v2850 = vpop.permute.xlu0 %2849
    %2851 = vrot.lane.b32.xlu0 %v1876, 64
    %v2852 = vpop.permute.xlu0 %2851
    %2853 = vrot.lane.b32.xlu0 %v1877, 64
    %v2854 = vpop.permute.xlu0 %2853
    %2855 = vrot.lane.b32.xlu0 %v1878, 64
    %v2856 = vpop.permute.xlu0 %2855
    %2857 = vrot.lane.b32.xlu0 %v1879, 64
    %v2858 = vpop.permute.xlu0 %2857
    %2859 = vrot.lane.b32.xlu0 %v1880, 64
    %v2860 = vpop.permute.xlu0 %2859
    %2861 = vrot.lane.b32.xlu0 %v1881, 64
    %v2862 = vpop.permute.xlu0 %2861
    %2863 = vrot.lane.b32.xlu0 %v1882, 64
    %v2864 = vpop.permute.xlu0 %2863
    %2865 = vrot.lane.b32.xlu0 %v1883, 64
    %v2866 = vpop.permute.xlu0 %2865
    %2867 = vrot.lane.b32.xlu0 %v1884, 64
    %v2868 = vpop.permute.xlu0 %2867
    %2869 = vrot.lane.b32.xlu0 %v1885, 64
    %v2870 = vpop.permute.xlu0 %2869
    %2871 = vrot.lane.b32.xlu0 %v1886, 64
    %v2872 = vpop.permute.xlu0 %2871
    %2873 = vrot.lane.b32.xlu0 %v1887, 64
    %v2874 = vpop.permute.xlu0 %2873
    %2875 = vrot.lane.b32.xlu0 %v1888, 64
    %v2876 = vpop.permute.xlu0 %2875
    %2877 = vrot.lane.b32.xlu0 %v1889, 64
    %v2878 = vpop.permute.xlu0 %2877
    %2879 = vrot.lane.b32.xlu0 %v1890, 64
    %v2880 = vpop.permute.xlu0 %2879
    %2881 = vrot.lane.b32.xlu0 %v1891, 64
    %v2882 = vpop.permute.xlu0 %2881
    %2883 = vrot.lane.b32.xlu0 %v1892, 64
    %v2884 = vpop.permute.xlu0 %2883
    %2885 = vrot.lane.b32.xlu0 %v1893, 64
    %v2886 = vpop.permute.xlu0 %2885
    %2887 = vrot.lane.b32.xlu0 %v1894, 64
    %v2888 = vpop.permute.xlu0 %2887
    %2889 = vrot.lane.b32.xlu0 %v1895, 64
    %v2890 = vpop.permute.xlu0 %2889
    %2891 = vrot.lane.b32.xlu0 %v1896, 64
    %v2892 = vpop.permute.xlu0 %2891
    %2893 = vrot.lane.b32.xlu0 %v1897, 64
    %v2894 = vpop.permute.xlu0 %2893
    %2895 = vrot.lane.b32.xlu0 %v1898, 64
    %v2896 = vpop.permute.xlu0 %2895
    %2897 = vrot.lane.b32.xlu0 %v1899, 64
    %v2898 = vpop.permute.xlu0 %2897
    %2899 = vrot.lane.b32.xlu0 %v1900, 64
    %v2900 = vpop.permute.xlu0 %2899
    %2901 = vrot.lane.b32.xlu0 %v1901, 64
    %v2902 = vpop.permute.xlu0 %2901
    %2903 = vrot.lane.b32.xlu0 %v1902, 64
    %v2904 = vpop.permute.xlu0 %2903
    %2905 = vrot.lane.b32.xlu0 %v1903, 64
    %v2906 = vpop.permute.xlu0 %2905
    %2907 = vrot.lane.b32.xlu0 %v1904, 64
    %v2908 = vpop.permute.xlu0 %2907
    %2909 = vrot.lane.b32.xlu0 %v1905, 64
    %v2910 = vpop.permute.xlu0 %2909
    %2911 = vrot.lane.b32.xlu0 %v1906, 64
    %v2912 = vpop.permute.xlu0 %2911
    %2913 = vrot.lane.b32.xlu0 %v1907, 64
    %v2914 = vpop.permute.xlu0 %2913
    %2915 = vrot.lane.b32.xlu0 %v1908, 64
    %v2916 = vpop.permute.xlu0 %2915
    %2917 = vrot.lane.b32.xlu0 %v1909, 64
    %v2918 = vpop.permute.xlu0 %2917
    %2919 = vrot.lane.b32.xlu0 %v1910, 64
    %v2920 = vpop.permute.xlu0 %2919
    %2921 = vrot.lane.b32.xlu0 %v1911, 64
    %v2922 = vpop.permute.xlu0 %2921
    %2923 = vrot.lane.b32.xlu0 %v1912, 64
    %v2924 = vpop.permute.xlu0 %2923
    %2925 = vrot.lane.b32.xlu0 %v1913, 64
    %v2926 = vpop.permute.xlu0 %2925
    %2927 = vrot.lane.b32.xlu0 %v1914, 64
    %v2928 = vpop.permute.xlu0 %2927
    %2929 = vrot.lane.b32.xlu0 %v1915, 64
    %v2930 = vpop.permute.xlu0 %2929
    %2931 = vrot.lane.b32.xlu0 %v1916, 64
    %v2932 = vpop.permute.xlu0 %2931
    %2933 = vrot.lane.b32.xlu0 %v1917, 64
    %v2934 = vpop.permute.xlu0 %2933
    %2935 = vrot.lane.b32.xlu0 %v1918, 64
    %v2936 = vpop.permute.xlu0 %2935
    %2937 = vrot.lane.b32.xlu0 %v1919, 64
    %v2938 = vpop.permute.xlu0 %2937
    %2939 = vrot.lane.b32.xlu0 %v1920, 64
    %v2940 = vpop.permute.xlu0 %2939
    %2941 = vrot.lane.b32.xlu0 %v1921, 64
    %v2942 = vpop.permute.xlu0 %2941
    %2943 = vrot.lane.b32.xlu0 %v1922, 64
    %v2944 = vpop.permute.xlu0 %2943
    %2945 = vrot.lane.b32.xlu0 %v1923, 64
    %v2946 = vpop.permute.xlu0 %2945
    %2947 = vrot.lane.b32.xlu0 %v1924, 64
    %v2948 = vpop.permute.xlu0 %2947
    %v3013 = vsel %vm660, %v1412, %v2054
    %v3014 = vsel %vm660, %v1413, %v2056
    %v3015 = vsel %vm660, %v1414, %v2058
    %v3016 = vsel %vm660, %v1415, %v2060
    %v3017 = vsel %vm660, %v1416, %v2062
    %v3018 = vsel %vm660, %v1417, %v2064
    %v3019 = vsel %vm660, %v1418, %v2066
    %v3020 = vsel %vm660, %v1419, %v2068
    %v3021 = vsel %vm660, %v1420, %v2070
    %v3022 = vsel %vm660, %v1421, %v2072
    %v3023 = vsel %vm660, %v1422, %v2074
    %v3024 = vsel %vm660, %v1423, %v2076
    %v3025 = vsel %vm660, %v1424, %v2078
    %v3026 = vsel %vm660, %v1425, %v2080
    %v3027 = vsel %vm660, %v1426, %v2082
    %v3028 = vsel %vm660, %v1427, %v2084
    %v3029 = vsel %vm660, %v1428, %v2086
    %v3030 = vsel %vm660, %v1429, %v2088
    %v3031 = vsel %vm660, %v1430, %v2090
    %v3032 = vsel %vm660, %v1431, %v2092
    %v3033 = vsel %vm660, %v1432, %v2094
    %v3034 = vsel %vm660, %v1433, %v2096
    %v3035 = vsel %vm660, %v1434, %v2098
    %v3036 = vsel %vm660, %v1435, %v2100
    %v3037 = vsel %vm660, %v1436, %v2102
    %v3038 = vsel %vm660, %v1437, %v2104
    %v3039 = vsel %vm660, %v1438, %v2106
    %v3040 = vsel %vm660, %v1439, %v2108
    %v3041 = vsel %vm660, %v1440, %v2110
    %v3042 = vsel %vm660, %v1441, %v2112
    %v3043 = vsel %vm660, %v1442, %v2114
    %v3044 = vsel %vm660, %v1443, %v2116
    %v3045 = vsel %vm660, %v1444, %v2118
    %v3046 = vsel %vm660, %v1445, %v2120
    %v3047 = vsel %vm660, %v1446, %v2122
    %v3048 = vsel %vm660, %v1447, %v2124
    %v3049 = vsel %vm660, %v1448, %v2126
    %v3050 = vsel %vm660, %v1449, %v2128
    %v3051 = vsel %vm660, %v1450, %v2130
    %v3052 = vsel %vm660, %v1451, %v2132
    %v3053 = vsel %vm660, %v1452, %v2134
    %v3054 = vsel %vm660, %v1453, %v2136
    %v3055 = vsel %vm660, %v1454, %v2138
    %v3056 = vsel %vm660, %v1455, %v2140
    %v3057 = vsel %vm660, %v1456, %v2142
    %v3058 = vsel %vm660, %v1457, %v2144
    %v3059 = vsel %vm660, %v1458, %v2146
    %v3060 = vsel %vm660, %v1459, %v2148
    %v3061 = vsel %vm660, %v1460, %v2150
    %v3062 = vsel %vm660, %v1461, %v2152
    %v3063 = vsel %vm660, %v1462, %v2154
    %v3064 = vsel %vm660, %v1463, %v2156
    %v3065 = vsel %vm660, %v1464, %v2158
    %v3066 = vsel %vm660, %v1465, %v2160
    %v3067 = vsel %vm660, %v1466, %v2162
    %v3068 = vsel %vm660, %v1467, %v2164
    %v3069 = vsel %vm660, %v1468, %v2166
    %v3070 = vsel %vm660, %v1469, %v2168
    %v3071 = vsel %vm660, %v1470, %v2170
    %v3072 = vsel %vm660, %v1471, %v2172
    %v3073 = vsel %vm660, %v1472, %v2174
    %v3074 = vsel %vm660, %v1473, %v2176
    %v3075 = vsel %vm660, %v1474, %v2178
    %v3076 = vsel %vm660, %v1475, %v2180
    %v3077 = vsel %vm660, %v1540, %v2310
    %v3078 = vsel %vm660, %v1541, %v2312
    %v3079 = vsel %vm660, %v1542, %v2314
    %v3080 = vsel %vm660, %v1543, %v2316
    %v3081 = vsel %vm660, %v1544, %v2318
    %v3082 = vsel %vm660, %v1545, %v2320
    %v3083 = vsel %vm660, %v1546, %v2322
    %v3084 = vsel %vm660, %v1547, %v2324
    %v3085 = vsel %vm660, %v1548, %v2326
    %v3086 = vsel %vm660, %v1549, %v2328
    %v3087 = vsel %vm660, %v1550, %v2330
    %v3088 = vsel %vm660, %v1551, %v2332
    %v3089 = vsel %vm660, %v1552, %v2334
    %v3090 = vsel %vm660, %v1553, %v2336
    %v3091 = vsel %vm660, %v1554, %v2338
    %v3092 = vsel %vm660, %v1555, %v2340
    %v3093 = vsel %vm660, %v1556, %v2342
    %v3094 = vsel %vm660, %v1557, %v2344
    %v3095 = vsel %vm660, %v1558, %v2346
    %v3096 = vsel %vm660, %v1559, %v2348
    %v3097 = vsel %vm660, %v1560, %v2350
    %v3098 = vsel %vm660, %v1561, %v2352
    %v3099 = vsel %vm660, %v1562, %v2354
    %v3100 = vsel %vm660, %v1563, %v2356
    %v3101 = vsel %vm660, %v1564, %v2358
    %v3102 = vsel %vm660, %v1565, %v2360
    %v3103 = vsel %vm660, %v1566, %v2362
    %v3104 = vsel %vm660, %v1567, %v2364
    %v3105 = vsel %vm660, %v1568, %v2366
    %v3106 = vsel %vm660, %v1569, %v2368
    %v3107 = vsel %vm660, %v1570, %v2370
    %v3108 = vsel %vm660, %v1571, %v2372
    %v3109 = vsel %vm660, %v1572, %v2374
    %v3110 = vsel %vm660, %v1573, %v2376
    %v3111 = vsel %vm660, %v1574, %v2378
    %v3112 = vsel %vm660, %v1575, %v2380
    %v3113 = vsel %vm660, %v1576, %v2382
    %v3114 = vsel %vm660, %v1577, %v2384
    %v3115 = vsel %vm660, %v1578, %v2386
    %v3116 = vsel %vm660, %v1579, %v2388
    %v3117 = vsel %vm660, %v1580, %v2390
    %v3118 = vsel %vm660, %v1581, %v2392
    %v3119 = vsel %vm660, %v1582, %v2394
    %v3120 = vsel %vm660, %v1583, %v2396
    %v3121 = vsel %vm660, %v1584, %v2398
    %v3122 = vsel %vm660, %v1585, %v2400
    %v3123 = vsel %vm660, %v1586, %v2402
    %v3124 = vsel %vm660, %v1587, %v2404
    %v3125 = vsel %vm660, %v1588, %v2406
    %v3126 = vsel %vm660, %v1589, %v2408
    %v3127 = vsel %vm660, %v1590, %v2410
    %v3128 = vsel %vm660, %v1591, %v2412
    %v3129 = vsel %vm660, %v1592, %v2414
    %v3130 = vsel %vm660, %v1593, %v2416
    %v3131 = vsel %vm660, %v1594, %v2418
    %v3132 = vsel %vm660, %v1595, %v2420
    %v3133 = vsel %vm660, %v1596, %v2422
    %v3134 = vsel %vm660, %v1597, %v2424
    %v3135 = vsel %vm660, %v1598, %v2426
    %v3136 = vsel %vm660, %v1599, %v2428
    %v3137 = vsel %vm660, %v1600, %v2430
    %v3138 = vsel %vm660, %v1601, %v2432
    %v3139 = vsel %vm660, %v1602, %v2434
    %v3140 = vsel %vm660, %v1603, %v2436
    %v3141 = vsel %vm660, %v1668, %v2566
    %v3142 = vsel %vm660, %v1669, %v2568
    %v3143 = vsel %vm660, %v1670, %v2570
    %v3144 = vsel %vm660, %v1671, %v2572
    %v3145 = vsel %vm660, %v1672, %v2574
    %v3146 = vsel %vm660, %v1673, %v2576
    %v3147 = vsel %vm660, %v1674, %v2578
    %v3148 = vsel %vm660, %v1675, %v2580
    %v3149 = vsel %vm660, %v1676, %v2582
    %v3150 = vsel %vm660, %v1677, %v2584
    %v3151 = vsel %vm660, %v1678, %v2586
    %v3152 = vsel %vm660, %v1679, %v2588
    %v3153 = vsel %vm660, %v1680, %v2590
    %v3154 = vsel %vm660, %v1681, %v2592
    %v3155 = vsel %vm660, %v1682, %v2594
    %v3156 = vsel %vm660, %v1683, %v2596
    %v3157 = vsel %vm660, %v1684, %v2598
    %v3158 = vsel %vm660, %v1685, %v2600
    %v3159 = vsel %vm660, %v1686, %v2602
    %v3160 = vsel %vm660, %v1687, %v2604
    %v3161 = vsel %vm660, %v1688, %v2606
    %v3162 = vsel %vm660, %v1689, %v2608
    %v3163 = vsel %vm660, %v1690, %v2610
    %v3164 = vsel %vm660, %v1691, %v2612
    %v3165 = vsel %vm660, %v1692, %v2614
    %v3166 = vsel %vm660, %v1693, %v2616
    %v3167 = vsel %vm660, %v1694, %v2618
    %v3168 = vsel %vm660, %v1695, %v2620
    %v3169 = vsel %vm660, %v1696, %v2622
    %v3170 = vsel %vm660, %v1697, %v2624
    %v3171 = vsel %vm660, %v1698, %v2626
    %v3172 = vsel %vm660, %v1699, %v2628
    %v3173 = vsel %vm660, %v1700, %v2630
    %v3174 = vsel %vm660, %v1701, %v2632
    %v3175 = vsel %vm660, %v1702, %v2634
    %v3176 = vsel %vm660, %v1703, %v2636
    %v3177 = vsel %vm660, %v1704, %v2638
    %v3178 = vsel %vm660, %v1705, %v2640
    %v3179 = vsel %vm660, %v1706, %v2642
    %v3180 = vsel %vm660, %v1707, %v2644
    %v3181 = vsel %vm660, %v1708, %v2646
    %v3182 = vsel %vm660, %v1709, %v2648
    %v3183 = vsel %vm660, %v1710, %v2650
    %v3184 = vsel %vm660, %v1711, %v2652
    %v3185 = vsel %vm660, %v1712, %v2654
    %v3186 = vsel %vm660, %v1713, %v2656
    %v3187 = vsel %vm660, %v1714, %v2658
    %v3188 = vsel %vm660, %v1715, %v2660
    %v3189 = vsel %vm660, %v1716, %v2662
    %v3190 = vsel %vm660, %v1717, %v2664
    %v3191 = vsel %vm660, %v1718, %v2666
    %v3192 = vsel %vm660, %v1719, %v2668
    %v3193 = vsel %vm660, %v1720, %v2670
    %v3194 = vsel %vm660, %v1721, %v2672
    %v3195 = vsel %vm660, %v1722, %v2674
    %v3196 = vsel %vm660, %v1723, %v2676
    %v3197 = vsel %vm660, %v1724, %v2678
    %v3198 = vsel %vm660, %v1725, %v2680
    %v3199 = vsel %vm660, %v1726, %v2682
    %v3200 = vsel %vm660, %v1727, %v2684
    %v3201 = vsel %vm660, %v1728, %v2686
    %v3202 = vsel %vm660, %v1729, %v2688
    %v3203 = vsel %vm660, %v1730, %v2690
    %v3204 = vsel %vm660, %v1731, %v2692
    %v3205 = vsel %vm660, %v1797, %v2822
    %v3206 = vsel %vm660, %v1798, %v2824
    %v3207 = vsel %vm660, %v1799, %v2826
    %v3208 = vsel %vm660, %v1800, %v2828
    %v3209 = vsel %vm660, %v1801, %v2830
    %v3210 = vsel %vm660, %v1802, %v2832
    %v3211 = vsel %vm660, %v1803, %v2834
    %v3212 = vsel %vm660, %v1804, %v2836
    %v3213 = vsel %vm660, %v1805, %v2838
    %v3214 = vsel %vm660, %v1806, %v2840
    %v3215 = vsel %vm660, %v1807, %v2842
    %v3216 = vsel %vm660, %v1808, %v2844
    %v3217 = vsel %vm660, %v1809, %v2846
    %v3218 = vsel %vm660, %v1810, %v2848
    %v3219 = vsel %vm660, %v1811, %v2850
    %v3220 = vsel %vm660, %v1812, %v2852
    %v3221 = vsel %vm660, %v1813, %v2854
    %v3222 = vsel %vm660, %v1814, %v2856
    %v3223 = vsel %vm660, %v1815, %v2858
    %v3224 = vsel %vm660, %v1816, %v2860
    %v3225 = vsel %vm660, %v1817, %v2862
    %v3226 = vsel %vm660, %v1818, %v2864
    %v3227 = vsel %vm660, %v1819, %v2866
    %v3228 = vsel %vm660, %v1820, %v2868
    %v3229 = vsel %vm660, %v1821, %v2870
    %v3230 = vsel %vm660, %v1822, %v2872
    %v3231 = vsel %vm660, %v1823, %v2874
    %v3232 = vsel %vm660, %v1824, %v2876
    %v3233 = vsel %vm660, %v1825, %v2878
    %v3234 = vsel %vm660, %v1826, %v2880
    %v3235 = vsel %vm660, %v1827, %v2882
    %v3236 = vsel %vm660, %v1828, %v2884
    %v3237 = vsel %vm660, %v1829, %v2886
    %v3238 = vsel %vm660, %v1830, %v2888
    %v3239 = vsel %vm660, %v1831, %v2890
    %v3240 = vsel %vm660, %v1832, %v2892
    %v3241 = vsel %vm660, %v1833, %v2894
    %v3242 = vsel %vm660, %v1834, %v2896
    %v3243 = vsel %vm660, %v1835, %v2898
    %v3244 = vsel %vm660, %v1836, %v2900
    %v3245 = vsel %vm660, %v1837, %v2902
    %v3246 = vsel %vm660, %v1838, %v2904
    %v3247 = vsel %vm660, %v1839, %v2906
    %v3248 = vsel %vm660, %v1840, %v2908
    %v3249 = vsel %vm660, %v1841, %v2910
    %v3250 = vsel %vm660, %v1842, %v2912
    %v3251 = vsel %vm660, %v1843, %v2914
    %v3252 = vsel %vm660, %v1844, %v2916
    %v3253 = vsel %vm660, %v1845, %v2918
    %v3254 = vsel %vm660, %v1846, %v2920
    %v3255 = vsel %vm660, %v1847, %v2922
    %v3256 = vsel %vm660, %v1848, %v2924
    %v3257 = vsel %vm660, %v1849, %v2926
    %v3258 = vsel %vm660, %v1850, %v2928
    %v3259 = vsel %vm660, %v1851, %v2930
    %v3260 = vsel %vm660, %v1852, %v2932
    %v3261 = vsel %vm660, %v1853, %v2934
    %v3262 = vsel %vm660, %v1854, %v2936
    %v3263 = vsel %vm660, %v1855, %v2938
    %v3264 = vsel %vm660, %v1856, %v2940
    %v3265 = vsel %vm660, %v1857, %v2942
    %v3266 = vsel %vm660, %v1858, %v2944
    %v3267 = vsel %vm660, %v1859, %v2946
    %v3268 = vsel %vm660, %v1860, %v2948
    %v3269 = vpack.c.bf16 %v3014, %v3013
    %v3270 = vpack.c.bf16 %v3078, %v3077
    %v3271 = vpack.c.bf16 %v3142, %v3141
    %v3272 = vpack.c.bf16 %v3206, %v3205
    %v3273 = vpack.c.bf16 %v1926, %v1925
    %v3274 = vpack.c.bf16 %v3016, %v3015
    %v3275 = vpack.c.bf16 %v3080, %v3079
    %v3276 = vpack.c.bf16 %v3144, %v3143
    %v3277 = vpack.c.bf16 %v3208, %v3207
    %v3278 = vpack.c.bf16 %v1928, %v1927
    %v3279 = vpack.c.bf16 %v3018, %v3017
    %v3280 = vpack.c.bf16 %v3082, %v3081
    %v3281 = vpack.c.bf16 %v3146, %v3145
    %v3282 = vpack.c.bf16 %v3210, %v3209
    %v3283 = vpack.c.bf16 %v1930, %v1929
    %v3284 = vpack.c.bf16 %v3020, %v3019
    %v3285 = vpack.c.bf16 %v3084, %v3083
    %v3286 = vpack.c.bf16 %v3148, %v3147
    %v3287 = vpack.c.bf16 %v3212, %v3211
    %v3288 = vpack.c.bf16 %v1932, %v1931
    %v3289 = vpack.c.bf16 %v3022, %v3021
    %v3290 = vpack.c.bf16 %v3086, %v3085
    %v3291 = vpack.c.bf16 %v3150, %v3149
    %v3292 = vpack.c.bf16 %v3214, %v3213
    %v3293 = vpack.c.bf16 %v1934, %v1933
    %v3294 = vpack.c.bf16 %v3024, %v3023
    %v3295 = vpack.c.bf16 %v3088, %v3087
    %v3296 = vpack.c.bf16 %v3152, %v3151
    %v3297 = vpack.c.bf16 %v3216, %v3215
    %v3298 = vpack.c.bf16 %v1936, %v1935
    %v3299 = vpack.c.bf16 %v3026, %v3025
    %v3300 = vpack.c.bf16 %v3090, %v3089
    %v3301 = vpack.c.bf16 %v3154, %v3153
    %v3302 = vpack.c.bf16 %v3218, %v3217
    %v3303 = vpack.c.bf16 %v1938, %v1937
    %v3304 = vpack.c.bf16 %v3028, %v3027
    %v3305 = vpack.c.bf16 %v3092, %v3091
    %v3306 = vpack.c.bf16 %v3156, %v3155
    %v3307 = vpack.c.bf16 %v3220, %v3219
    %v3308 = vpack.c.bf16 %v1940, %v1939
    %v3309 = vpack.c.bf16 %v3030, %v3029
    %v3310 = vpack.c.bf16 %v3094, %v3093
    %v3311 = vpack.c.bf16 %v3158, %v3157
    %v3312 = vpack.c.bf16 %v3222, %v3221
    %v3313 = vpack.c.bf16 %v1942, %v1941
    %v3314 = vpack.c.bf16 %v3032, %v3031
    %v3315 = vpack.c.bf16 %v3096, %v3095
    %v3316 = vpack.c.bf16 %v3160, %v3159
    %v3317 = vpack.c.bf16 %v3224, %v3223
    %v3318 = vpack.c.bf16 %v1944, %v1943
    %v3319 = vpack.c.bf16 %v3034, %v3033
    %v3320 = vpack.c.bf16 %v3098, %v3097
    %v3321 = vpack.c.bf16 %v3162, %v3161
    %v3322 = vpack.c.bf16 %v3226, %v3225
    %v3323 = vpack.c.bf16 %v1946, %v1945
    %v3324 = vpack.c.bf16 %v3036, %v3035
    %v3325 = vpack.c.bf16 %v3100, %v3099
    %v3326 = vpack.c.bf16 %v3164, %v3163
    %v3327 = vpack.c.bf16 %v3228, %v3227
    %v3328 = vpack.c.bf16 %v1948, %v1947
    %v3329 = vpack.c.bf16 %v3038, %v3037
    %v3330 = vpack.c.bf16 %v3102, %v3101
    %v3331 = vpack.c.bf16 %v3166, %v3165
    %v3332 = vpack.c.bf16 %v3230, %v3229
    %v3333 = vpack.c.bf16 %v1950, %v1949
    %v3334 = vpack.c.bf16 %v3040, %v3039
    %v3335 = vpack.c.bf16 %v3104, %v3103
    %v3336 = vpack.c.bf16 %v3168, %v3167
    %v3337 = vpack.c.bf16 %v3232, %v3231
    %v3338 = vpack.c.bf16 %v1952, %v1951
    %v3339 = vpack.c.bf16 %v3042, %v3041
    %v3340 = vpack.c.bf16 %v3106, %v3105
    %v3341 = vpack.c.bf16 %v3170, %v3169
    %v3342 = vpack.c.bf16 %v3234, %v3233
    %v3343 = vpack.c.bf16 %v1954, %v1953
    %v3344 = vpack.c.bf16 %v3044, %v3043
    %v3345 = vpack.c.bf16 %v3108, %v3107
    %v3346 = vpack.c.bf16 %v3172, %v3171
    %v3347 = vpack.c.bf16 %v3236, %v3235
    %v3348 = vpack.c.bf16 %v1956, %v1955
    %v3349 = vpack.c.bf16 %v3046, %v3045
    %v3350 = vpack.c.bf16 %v3110, %v3109
    %v3351 = vpack.c.bf16 %v3174, %v3173
    %v3352 = vpack.c.bf16 %v3238, %v3237
    %v3353 = vpack.c.bf16 %v1958, %v1957
    %v3354 = vpack.c.bf16 %v3048, %v3047
    %v3355 = vpack.c.bf16 %v3112, %v3111
    %v3356 = vpack.c.bf16 %v3176, %v3175
    %v3357 = vpack.c.bf16 %v3240, %v3239
    %v3358 = vpack.c.bf16 %v1960, %v1959
    %v3359 = vpack.c.bf16 %v3050, %v3049
    %v3360 = vpack.c.bf16 %v3114, %v3113
    %v3361 = vpack.c.bf16 %v3178, %v3177
    %v3362 = vpack.c.bf16 %v3242, %v3241
    %v3363 = vpack.c.bf16 %v1962, %v1961
    %v3364 = vpack.c.bf16 %v3052, %v3051
    %v3365 = vpack.c.bf16 %v3116, %v3115
    %v3366 = vpack.c.bf16 %v3180, %v3179
    %v3367 = vpack.c.bf16 %v3244, %v3243
    %v3368 = vpack.c.bf16 %v1964, %v1963
    %v3369 = vpack.c.bf16 %v3054, %v3053
    %v3370 = vpack.c.bf16 %v3118, %v3117
    %v3371 = vpack.c.bf16 %v3182, %v3181
    %v3372 = vpack.c.bf16 %v3246, %v3245
    %v3373 = vpack.c.bf16 %v1966, %v1965
    %v3374 = vpack.c.bf16 %v3056, %v3055
    %v3375 = vpack.c.bf16 %v3120, %v3119
    %v3376 = vpack.c.bf16 %v3184, %v3183
    %v3377 = vpack.c.bf16 %v3248, %v3247
    %v3378 = vpack.c.bf16 %v1968, %v1967
    %v3379 = vpack.c.bf16 %v3058, %v3057
    %v3380 = vpack.c.bf16 %v3122, %v3121
    %v3381 = vpack.c.bf16 %v3186, %v3185
    %v3382 = vpack.c.bf16 %v3250, %v3249
    %v3383 = vpack.c.bf16 %v1970, %v1969
    %v3384 = vpack.c.bf16 %v3060, %v3059
    %v3385 = vpack.c.bf16 %v3124, %v3123
    %v3386 = vpack.c.bf16 %v3188, %v3187
    %v3387 = vpack.c.bf16 %v3252, %v3251
    %v3388 = vpack.c.bf16 %v1972, %v1971
    %v3389 = vpack.c.bf16 %v3062, %v3061
    %v3390 = vpack.c.bf16 %v3126, %v3125
    %v3391 = vpack.c.bf16 %v3190, %v3189
    %v3392 = vpack.c.bf16 %v3254, %v3253
    %v3393 = vpack.c.bf16 %v1974, %v1973
    %v3394 = vpack.c.bf16 %v3064, %v3063
    %v3395 = vpack.c.bf16 %v3128, %v3127
    %v3396 = vpack.c.bf16 %v3192, %v3191
    %v3397 = vpack.c.bf16 %v3256, %v3255
    %v3398 = vpack.c.bf16 %v1976, %v1975
    %v3399 = vpack.c.bf16 %v3066, %v3065
    %v3400 = vpack.c.bf16 %v3130, %v3129
    %v3401 = vpack.c.bf16 %v3194, %v3193
    %v3402 = vpack.c.bf16 %v3258, %v3257
    %v3403 = vpack.c.bf16 %v1978, %v1977
    %v3404 = vpack.c.bf16 %v3068, %v3067
    %v3405 = vpack.c.bf16 %v3132, %v3131
    %v3406 = vpack.c.bf16 %v3196, %v3195
    %v3407 = vpack.c.bf16 %v3260, %v3259
    %v3408 = vpack.c.bf16 %v1980, %v1979
    %v3409 = vpack.c.bf16 %v3070, %v3069
    %v3410 = vpack.c.bf16 %v3134, %v3133
    %v3411 = vpack.c.bf16 %v3198, %v3197
    %v3412 = vpack.c.bf16 %v3262, %v3261
    %v3413 = vpack.c.bf16 %v1982, %v1981
    %v3414 = vpack.c.bf16 %v3072, %v3071
    %v3415 = vpack.c.bf16 %v3136, %v3135
    %v3416 = vpack.c.bf16 %v3200, %v3199
    %v3417 = vpack.c.bf16 %v3264, %v3263
    %v3418 = vpack.c.bf16 %v1984, %v1983
    %v3419 = vpack.c.bf16 %v3074, %v3073
    %v3420 = vpack.c.bf16 %v3138, %v3137
    %v3421 = vpack.c.bf16 %v3202, %v3201
    %v3422 = vpack.c.bf16 %v3266, %v3265
    %v3423 = vpack.c.bf16 %v1986, %v1985
    %v3424 = vpack.c.bf16 %v3076, %v3075
    %v3425 = vpack.c.bf16 %v3140, %v3139
    %v3426 = vpack.c.bf16 %v3204, %v3203
    %v3427 = vpack.c.bf16 %v3268, %v3267
    %v3428 = vpack.c.bf16 %v1988, %v1987
    %v3429 = vld [vmem:[%s2] sm:$0xf]
    %v3430 = vld [vmem:[%s2 + $0x4] sm:$0xf]
    %v3431 = vld [vmem:[%s2 + $0x8] sm:$0xf]
    %v3432 = vld [vmem:[%s2 + $0xc] sm:$0xf]
    %v3433 = vld [vmem:[%s2 + $0x10] sm:$0xf]
    %v3434 = vld [vmem:[%s2 + $0x14] sm:$0xf]
    %v3435 = vld [vmem:[%s2 + $0x18] sm:$0xf]
    %v3436 = vld [vmem:[%s2 + $0x1c] sm:$0xf]
    %v3437 = vld [vmem:[%s2 + $0x20] sm:$0xf]
    %v3438 = vld [vmem:[%s2 + $0x24] sm:$0xf]
    %v3439 = vld [vmem:[%s2 + $0x28] sm:$0xf]
    %v3440 = vld [vmem:[%s2 + $0x2c] sm:$0xf]
    %v3441 = vld [vmem:[%s2 + $0x30] sm:$0xf]
    %v3442 = vld [vmem:[%s2 + $0x34] sm:$0xf]
    %v3443 = vld [vmem:[%s2 + $0x38] sm:$0xf]
    %v3444 = vld [vmem:[%s2 + $0x3c] sm:$0xf]
    %v3445 = vld [vmem:[%s2 + $0x40] sm:$0xf]
    %v3446 = vld [vmem:[%s2 + $0x44] sm:$0xf]
    %v3447 = vld [vmem:[%s2 + $0x48] sm:$0xf]
    %v3448 = vld [vmem:[%s2 + $0x4c] sm:$0xf]
    %v3449 = vld [vmem:[%s2 + $0x50] sm:$0xf]
    %v3450 = vld [vmem:[%s2 + $0x54] sm:$0xf]
    %v3451 = vld [vmem:[%s2 + $0x58] sm:$0xf]
    %v3452 = vld [vmem:[%s2 + $0x5c] sm:$0xf]
    %v3453 = vld [vmem:[%s2 + $0x60] sm:$0xf]
    %v3454 = vld [vmem:[%s2 + $0x64] sm:$0xf]
    %v3455 = vld [vmem:[%s2 + $0x68] sm:$0xf]
    %v3456 = vld [vmem:[%s2 + $0x6c] sm:$0xf]
    %v3457 = vld [vmem:[%s2 + $0x70] sm:$0xf]
    %v3458 = vld [vmem:[%s2 + $0x74] sm:$0xf]
    %v3459 = vld [vmem:[%s2 + $0x78] sm:$0xf]
    %v3460 = vld [vmem:[%s2 + $0x7c] sm:$0xf]
    %v3461 = vld [vmem:[%s2 + $0x80] sm:$0xf]
    %v3462 = vld [vmem:[%s2 + $0x84] sm:$0xf]
    %v3463 = vld [vmem:[%s2 + $0x88] sm:$0xf]
    %v3464 = vld [vmem:[%s2 + $0x8c] sm:$0xf]
    %v3465 = vld [vmem:[%s2 + $0x90] sm:$0xf]
    %v3466 = vld [vmem:[%s2 + $0x94] sm:$0xf]
    %v3467 = vld [vmem:[%s2 + $0x98] sm:$0xf]
    %v3468 = vld [vmem:[%s2 + $0x9c] sm:$0xf]
    %v3469 = vld [vmem:[%s2 + $0xa0] sm:$0xf]
    %v3470 = vld [vmem:[%s2 + $0xa4] sm:$0xf]
    %v3471 = vld [vmem:[%s2 + $0xa8] sm:$0xf]
    %v3472 = vld [vmem:[%s2 + $0xac] sm:$0xf]
    %v3473 = vld [vmem:[%s2 + $0xb0] sm:$0xf]
    %v3474 = vld [vmem:[%s2 + $0xb4] sm:$0xf]
    %v3475 = vld [vmem:[%s2 + $0xb8] sm:$0xf]
    %v3476 = vld [vmem:[%s2 + $0xbc] sm:$0xf]
    %v3477 = vld [vmem:[%s2 + $0xc0] sm:$0xf]
    %v3478 = vld [vmem:[%s2 + $0xc4] sm:$0xf]
    %v3479 = vld [vmem:[%s2 + $0xc8] sm:$0xf]
    %v3480 = vld [vmem:[%s2 + $0xcc] sm:$0xf]
    %v3481 = vld [vmem:[%s2 + $0xd0] sm:$0xf]
    %v3482 = vld [vmem:[%s2 + $0xd4] sm:$0xf]
    %v3483 = vld [vmem:[%s2 + $0xd8] sm:$0xf]
    %v3484 = vld [vmem:[%s2 + $0xdc] sm:$0xf]
    %v3485 = vld [vmem:[%s2 + $0xe0] sm:$0xf]
    %v3486 = vld [vmem:[%s2 + $0xe4] sm:$0xf]
    %v3487 = vld [vmem:[%s2 + $0xe8] sm:$0xf]
    %v3488 = vld [vmem:[%s2 + $0xec] sm:$0xf]
    %v3489 = vld [vmem:[%s2 + $0xf0] sm:$0xf]
    %v3490 = vld [vmem:[%s2 + $0xf4] sm:$0xf]
    %v3491 = vld [vmem:[%s2 + $0xf8] sm:$0xf]
    %v3492 = vld [vmem:[%s2 + $0xfc] sm:$0xf]
    %v3493 = vld [vmem:[%s2 + $0x100] sm:$0xf]
    %v3494 = vld [vmem:[%s2 + $0x104] sm:$0xf]
    %v3495 = vld [vmem:[%s2 + $0x108] sm:$0xf]
    %v3496 = vld [vmem:[%s2 + $0x10c] sm:$0xf]
    %v3497 = vld [vmem:[%s2 + $0x110] sm:$0xf]
    %v3498 = vld [vmem:[%s2 + $0x114] sm:$0xf]
    %v3499 = vld [vmem:[%s2 + $0x118] sm:$0xf]
    %v3500 = vld [vmem:[%s2 + $0x11c] sm:$0xf]
    %v3573 = vunpack.c.l.b16 %v3429
    %v3574 = vunpack.c.l.b16 %v3430
    %v3575 = vunpack.c.l.b16 %v3431
    %v3576 = vunpack.c.l.b16 %v3432
    %v3577 = vunpack.c.l.b16 %v3433
    %v3578 = vunpack.c.l.b16 %v3434
    %v3579 = vunpack.c.l.b16 %v3435
    %v3580 = vunpack.c.l.b16 %v3436
    %v3581 = vunpack.c.l.b16 %v3437
    %v3582 = vunpack.c.l.b16 %v3438
    %v3583 = vunpack.c.l.b16 %v3439
    %v3584 = vunpack.c.l.b16 %v3440
    %v3585 = vunpack.c.l.b16 %v3441
    %v3586 = vunpack.c.l.b16 %v3442
    %v3587 = vunpack.c.l.b16 %v3443
    %v3588 = vunpack.c.l.b16 %v3444
    %v3589 = vunpack.c.l.b16 %v3445
    %v3590 = vunpack.c.l.b16 %v3446
    %v3591 = vunpack.c.l.b16 %v3447
    %v3592 = vunpack.c.l.b16 %v3448
    %v3593 = vunpack.c.l.b16 %v3449
    %v3594 = vunpack.c.l.b16 %v3450
    %v3595 = vunpack.c.l.b16 %v3451
    %v3596 = vunpack.c.l.b16 %v3452
    %v3597 = vunpack.c.l.b16 %v3453
    %v3598 = vunpack.c.l.b16 %v3454
    %v3599 = vunpack.c.l.b16 %v3455
    %v3600 = vunpack.c.l.b16 %v3456
    %v3601 = vunpack.c.l.b16 %v3457
    %v3602 = vunpack.c.l.b16 %v3458
    %v3603 = vunpack.c.l.b16 %v3459
    %v3604 = vunpack.c.l.b16 %v3460
    %v3605 = vunpack.c.l.b16 %v3461
    %v3606 = vunpack.c.l.b16 %v3462
    %v3607 = vunpack.c.l.b16 %v3463
    %v3608 = vunpack.c.l.b16 %v3464
    %v3609 = vunpack.c.l.b16 %v3465
    %v3610 = vunpack.c.l.b16 %v3466
    %v3611 = vunpack.c.l.b16 %v3467
    %v3612 = vunpack.c.l.b16 %v3468
    %v3613 = vunpack.c.l.b16 %v3469
    %v3614 = vunpack.c.l.b16 %v3470
    %v3615 = vunpack.c.l.b16 %v3471
    %v3616 = vunpack.c.l.b16 %v3472
    %v3617 = vunpack.c.l.b16 %v3473
    %v3618 = vunpack.c.l.b16 %v3474
    %v3619 = vunpack.c.l.b16 %v3475
    %v3620 = vunpack.c.l.b16 %v3476
    %v3621 = vunpack.c.l.b16 %v3477
    %v3622 = vunpack.c.l.b16 %v3478
    %v3623 = vunpack.c.l.b16 %v3479
    %v3624 = vunpack.c.l.b16 %v3480
    %v3625 = vunpack.c.l.b16 %v3481
    %v3626 = vunpack.c.l.b16 %v3482
    %v3627 = vunpack.c.l.b16 %v3483
    %v3628 = vunpack.c.l.b16 %v3484
    %v3629 = vunpack.c.l.b16 %v3485
    %v3630 = vunpack.c.l.b16 %v3486
    %v3631 = vunpack.c.l.b16 %v3487
    %v3632 = vunpack.c.l.b16 %v3488
    %v3633 = vunpack.c.l.b16 %v3489
    %v3634 = vunpack.c.l.b16 %v3490
    %v3635 = vunpack.c.l.b16 %v3491
    %v3636 = vunpack.c.l.b16 %v3492
    %v3637 = vunpack.c.l.b16 %v3493
    %v3638 = vunpack.c.l.b16 %v3494
    %v3639 = vunpack.c.l.b16 %v3495
    %v3640 = vunpack.c.l.b16 %v3496
    %v3641 = vunpack.c.l.b16 %v3497
    %v3642 = vunpack.c.l.b16 %v3498
    %v3643 = vunpack.c.l.b16 %v3499
    %v3644 = vunpack.c.l.b16 %v3500
    %v3645 = vpack.c.b16 %v3574, %v3573
    %v3646 = vpack.c.b16 %v3576, %v3575
    %v3647 = vpack.c.b16 %v3578, %v3577
    %v3648 = vpack.c.b16 %v3580, %v3579
    %v3649 = vpack.c.b16 %v3582, %v3581
    %v3650 = vpack.c.b16 %v3584, %v3583
    %v3651 = vpack.c.b16 %v3586, %v3585
    %v3652 = vpack.c.b16 %v3588, %v3587
    %v3653 = vpack.c.b16 %v3590, %v3589
    %v3654 = vpack.c.b16 %v3592, %v3591
    %v3655 = vpack.c.b16 %v3594, %v3593
    %v3656 = vpack.c.b16 %v3596, %v3595
    %v3657 = vpack.c.b16 %v3598, %v3597
    %v3658 = vpack.c.b16 %v3600, %v3599
    %v3659 = vpack.c.b16 %v3602, %v3601
    %v3660 = vpack.c.b16 %v3604, %v3603
    %v3661 = vpack.c.b16 %v3606, %v3605
    %v3662 = vpack.c.b16 %v3608, %v3607
    %v3663 = vpack.c.b16 %v3610, %v3609
    %v3664 = vpack.c.b16 %v3612, %v3611
    %v3665 = vpack.c.b16 %v3614, %v3613
    %v3666 = vpack.c.b16 %v3616, %v3615
    %v3667 = vpack.c.b16 %v3618, %v3617
    %v3668 = vpack.c.b16 %v3620, %v3619
    %v3669 = vpack.c.b16 %v3622, %v3621
    %v3670 = vpack.c.b16 %v3624, %v3623
    %v3671 = vpack.c.b16 %v3626, %v3625
    %v3672 = vpack.c.b16 %v3628, %v3627
    %v3673 = vpack.c.b16 %v3630, %v3629
    %v3674 = vpack.c.b16 %v3632, %v3631
    %v3675 = vpack.c.b16 %v3634, %v3633
    %v3676 = vpack.c.b16 %v3636, %v3635
    %v3677 = vpack.c.b16 %v3638, %v3637
    %v3678 = vpack.c.b16 %v3640, %v3639
    %v3679 = vpack.c.b16 %v3642, %v3641
    %v3680 = vpack.c.b16 %v3644, %v3643
    %v3718 = vsel %vm660, %v3273, 0
    %v3721 = vsel %vm660, %v3278, 0
    %v3724 = vsel %vm660, %v3283, 0
    %v3727 = vsel %vm660, %v3288, 0
    %v3730 = vsel %vm660, %v3293, 0
    %v3733 = vsel %vm660, %v3298, 0
    %v3736 = vsel %vm660, %v3303, 0
    %v3739 = vsel %vm660, %v3308, 0
    %v3742 = vsel %vm660, %v3313, 0
    %v3745 = vsel %vm660, %v3318, 0
    %v3748 = vsel %vm660, %v3323, 0
    %v3751 = vsel %vm660, %v3328, 0
    %v3754 = vsel %vm660, %v3333, 0
    %v3757 = vsel %vm660, %v3338, 0
    %v3760 = vsel %vm660, %v3343, 0
    %v3763 = vsel %vm660, %v3348, 0
    %v3766 = vsel %vm660, %v3353, 0
    %v3769 = vsel %vm660, %v3358, 0
    %v3772 = vsel %vm660, %v3363, 0
    %v3775 = vsel %vm660, %v3368, 0
    %v3778 = vsel %vm660, %v3373, 0
    %v3781 = vsel %vm660, %v3378, 0
    %v3784 = vsel %vm660, %v3383, 0
    %v3787 = vsel %vm660, %v3388, 0
    %v3790 = vsel %vm660, %v3393, 0
    %v3793 = vsel %vm660, %v3398, 0
    %v3796 = vsel %vm660, %v3403, 0
    %v3799 = vsel %vm660, %v3408, 0
    %v3802 = vsel %vm660, %v3413, 0
    %v3805 = vsel %vm660, %v3418, 0
    %v3808 = vsel %vm660, %v3423, 0
    %v3811 = vsel %vm660, %v3428, 0
    %3813 = vmatprep.subr.bf16.mxu0 0
    %3814 = vmatpush1.bf16.msra.mxu0 %v3645
    %3815 = vmatprep.subr.bf16.mxu0 0
    %3816 = vmatpush1.bf16.msra.mxu0 %v3646
    %3817 = vmatprep.subr.bf16.mxu0 0
    %3818 = vmatpush1.bf16.msra.mxu0 %v3647
    %3819 = vmatprep.subr.bf16.mxu0 0
    %3820 = vmatpush1.bf16.msra.mxu0 %v3648
    %3821 = vmatprep.subr.bf16.mxu0 0
    %3822 = vmatpush1.bf16.msra.mxu0 %v3649
    %3823 = vmatprep.subr.bf16.mxu0 0
    %3824 = vmatpush1.bf16.msra.mxu0 %v3650
    %3825 = vmatprep.subr.bf16.mxu0 0
    %3826 = vmatpush1.bf16.msra.mxu0 %v3651
    %3827 = vmatprep.subr.bf16.mxu0 0
    %3828 = vmatpush1.bf16.msra.mxu0 %v3652
    %3829 = vmatprep.subr.bf16.mxu0 0
    %3830 = vmatpush1.bf16.msra.mxu0 %v3653
    %3831 = vmatprep.subr.bf16.mxu0 0
    %3832 = vmatpush1.bf16.msra.mxu0 %v3654
    %3833 = vmatprep.subr.bf16.mxu0 0
    %3834 = vmatpush1.bf16.msra.mxu0 %v3655
    %3835 = vmatprep.subr.bf16.mxu0 0
    %3836 = vmatpush1.bf16.msra.mxu0 %v3656
    %3837 = vmatprep.subr.bf16.mxu0 0
    %3838 = vmatpush1.bf16.msra.mxu0 %v3657
    %3839 = vmatprep.subr.bf16.mxu0 0
    %3840 = vmatpush1.bf16.msra.mxu0 %v3658
    %3841 = vmatprep.subr.bf16.mxu0 0
    %3842 = vmatpush1.bf16.msra.mxu0 %v3659
    %3843 = vmatprep.subr.bf16.mxu0 0
    %3844 = vmatpush1.bf16.msra.mxu0 %v3660
    %3845 = vmatprep.mubr.bf16.mxu0 %v3270
    %3846 = vmatmul.mubr.bf16.gmra.mrb[0].mxu0 %v3269
    %v3847 = vpop.f32.mrb[0].mxu0
    %v3848 = vadd.f32 0.0, %v3847
    %v3849 = vpop.f32.mrb[0].mxu0
    %v3850 = vpop.f32.mrb[0].mxu0
    %v3851 = vadd.f32 0.0, %v3850
    %v3852 = vpop.f32.mrb[0].mxu0
    %3853 = vmatprep.mubr.bf16.mxu0 %v3275
    %3854 = vmatmul.mubr.bf16.gmra.mrb[0].mxu0 %v3274
    %v3855 = vpop.f32.mrb[0].mxu0
    %v3856 = vadd.f32 0.0, %v3855
    %v3857 = vpop.f32.mrb[0].mxu0
    %v3858 = vpop.f32.mrb[0].mxu0
    %v3859 = vadd.f32 0.0, %v3858
    %v3860 = vpop.f32.mrb[0].mxu0
    %3861 = vmatprep.mubr.bf16.mxu0 %v3280
    %3862 = vmatmul.mubr.bf16.gmra.mrb[0].mxu0 %v3279
    %v3863 = vpop.f32.mrb[0].mxu0
    %v3864 = vadd.f32 0.0, %v3863
    %v3865 = vpop.f32.mrb[0].mxu0
    %v3866 = vpop.f32.mrb[0].mxu0
    %v3867 = vadd.f32 0.0, %v3866
    %v3868 = vpop.f32.mrb[0].mxu0
    %3869 = vmatprep.mubr.bf16.mxu0 %v3285
    %3870 = vmatmul.mubr.bf16.gmra.mrb[0].mxu0 %v3284
    %v3871 = vpop.f32.mrb[0].mxu0
    %v3872 = vadd.f32 0.0, %v3871
    %v3873 = vpop.f32.mrb[0].mxu0
    %v3874 = vpop.f32.mrb[0].mxu0
    %v3875 = vadd.f32 0.0, %v3874
    %v3876 = vpop.f32.mrb[0].mxu0
    %3877 = vmatprep.mubr.bf16.mxu0 %v3290
    %3878 = vmatmul.mubr.bf16.gmra.mrb[0].mxu0 %v3289
    %v3879 = vpop.f32.mrb[0].mxu0
    %v3880 = vadd.f32 0.0, %v3879
    %v3881 = vpop.f32.mrb[0].mxu0
    %v3882 = vpop.f32.mrb[0].mxu0
    %v3883 = vadd.f32 0.0, %v3882
    %v3884 = vpop.f32.mrb[0].mxu0
    %3885 = vmatprep.mubr.bf16.mxu0 %v3295
    %3886 = vmatmul.mubr.bf16.gmra.mrb[0].mxu0 %v3294
    %v3887 = vpop.f32.mrb[0].mxu0
    %v3888 = vadd.f32 0.0, %v3887
    %v3889 = vpop.f32.mrb[0].mxu0
    %v3890 = vpop.f32.mrb[0].mxu0
    %v3891 = vadd.f32 0.0, %v3890
    %v3892 = vpop.f32.mrb[0].mxu0
    %3893 = vmatprep.mubr.bf16.mxu0 %v3300
    %3894 = vmatmul.mubr.bf16.gmra.mrb[0].mxu0 %v3299
    %v3895 = vpop.f32.mrb[0].mxu0
    %v3896 = vadd.f32 0.0, %v3895
    %v3897 = vpop.f32.mrb[0].mxu0
    %v3898 = vpop.f32.mrb[0].mxu0
    %v3899 = vadd.f32 0.0, %v3898
    %v3900 = vpop.f32.mrb[0].mxu0
    %3901 = vmatprep.mubr.bf16.mxu0 %v3305
    %3902 = vmatmul.mubr.bf16.gmra.mrb[0].mxu0 %v3304
    %v3903 = vpop.f32.mrb[0].mxu0
    %v3904 = vadd.f32 0.0, %v3903
    %v3905 = vpop.f32.mrb[0].mxu0
    %v3906 = vpop.f32.mrb[0].mxu0
    %v3907 = vadd.f32 0.0, %v3906
    %v3908 = vpop.f32.mrb[0].mxu0
    %3909 = vmatprep.mubr.bf16.mxu0 %v3310
    %3910 = vmatmul.mubr.bf16.gmra.mrb[0].mxu0 %v3309
    %v3911 = vpop.f32.mrb[0].mxu0
    %v3912 = vadd.f32 0.0, %v3911
    %v3913 = vpop.f32.mrb[0].mxu0
    %v3914 = vpop.f32.mrb[0].mxu0
    %v3915 = vadd.f32 0.0, %v3914
    %v3916 = vpop.f32.mrb[0].mxu0
    %3917 = vmatprep.mubr.bf16.mxu0 %v3315
    %3918 = vmatmul.mubr.bf16.gmra.mrb[0].mxu0 %v3314
    %v3919 = vpop.f32.mrb[0].mxu0
    %v3920 = vadd.f32 0.0, %v3919
    %v3921 = vpop.f32.mrb[0].mxu0
    %v3922 = vpop.f32.mrb[0].mxu0
    %v3923 = vadd.f32 0.0, %v3922
    %v3924 = vpop.f32.mrb[0].mxu0
    %3925 = vmatprep.mubr.bf16.mxu0 %v3320
    %3926 = vmatmul.mubr.bf16.gmra.mrb[0].mxu0 %v3319
    %v3927 = vpop.f32.mrb[0].mxu0
    %v3928 = vadd.f32 0.0, %v3927
    %v3929 = vpop.f32.mrb[0].mxu0
    %v3930 = vpop.f32.mrb[0].mxu0
    %v3931 = vadd.f32 0.0, %v3930
    %v3932 = vpop.f32.mrb[0].mxu0
    %3933 = vmatprep.mubr.bf16.mxu0 %v3325
    %3934 = vmatmul.mubr.bf16.gmra.mrb[0].mxu0 %v3324
    %v3935 = vpop.f32.mrb[0].mxu0
    %v3936 = vadd.f32 0.0, %v3935
    %v3937 = vpop.f32.mrb[0].mxu0
    %v3938 = vpop.f32.mrb[0].mxu0
    %v3939 = vadd.f32 0.0, %v3938
    %v3940 = vpop.f32.mrb[0].mxu0
    %3941 = vmatprep.mubr.bf16.mxu0 %v3330
    %3942 = vmatmul.mubr.bf16.gmra.mrb[0].mxu0 %v3329
    %v3943 = vpop.f32.mrb[0].mxu0
    %v3944 = vadd.f32 0.0, %v3943
    %v3945 = vpop.f32.mrb[0].mxu0
    %v3946 = vpop.f32.mrb[0].mxu0
    %v3947 = vadd.f32 0.0, %v3946
    %v3948 = vpop.f32.mrb[0].mxu0
    %3949 = vmatprep.mubr.bf16.mxu0 %v3335
    %3950 = vmatmul.mubr.bf16.gmra.mrb[0].mxu0 %v3334
    %v3951 = vpop.f32.mrb[0].mxu0
    %v3952 = vadd.f32 0.0, %v3951
    %v3953 = vpop.f32.mrb[0].mxu0
    %v3954 = vpop.f32.mrb[0].mxu0
    %v3955 = vadd.f32 0.0, %v3954
    %v3956 = vpop.f32.mrb[0].mxu0
    %3957 = vmatprep.mubr.bf16.mxu0 %v3340
    %3958 = vmatmul.mubr.bf16.gmra.mrb[0].mxu0 %v3339
    %v3959 = vpop.f32.mrb[0].mxu0
    %v3960 = vadd.f32 0.0, %v3959
    %v3961 = vpop.f32.mrb[0].mxu0
    %v3962 = vpop.f32.mrb[0].mxu0
    %v3963 = vadd.f32 0.0, %v3962
    %v3964 = vpop.f32.mrb[0].mxu0
    %3965 = vmatprep.mubr.bf16.mxu0 %v3345
    %3966 = vmatmul.mubr.bf16.gmra.mrb[0].mxu0 %v3344
    %v3967 = vpop.f32.mrb[0].mxu0
    %v3968 = vadd.f32 0.0, %v3967
    %v3969 = vpop.f32.mrb[0].mxu0
    %v3970 = vpop.f32.mrb[0].mxu0
    %v3971 = vadd.f32 0.0, %v3970
    %v3972 = vpop.f32.mrb[0].mxu0
    %3973 = vmatprep.mubr.bf16.mxu0 %v3350
    %3974 = vmatmul.mubr.bf16.gmra.mrb[0].mxu0 %v3349
    %v3975 = vpop.f32.mrb[0].mxu0
    %v3976 = vadd.f32 0.0, %v3975
    %v3977 = vpop.f32.mrb[0].mxu0
    %v3978 = vpop.f32.mrb[0].mxu0
    %v3979 = vadd.f32 0.0, %v3978
    %v3980 = vpop.f32.mrb[0].mxu0
    %3981 = vmatprep.mubr.bf16.mxu0 %v3355
    %3982 = vmatmul.mubr.bf16.gmra.mrb[0].mxu0 %v3354
    %v3983 = vpop.f32.mrb[0].mxu0
    %v3984 = vadd.f32 0.0, %v3983
    %v3985 = vpop.f32.mrb[0].mxu0
    %v3986 = vpop.f32.mrb[0].mxu0
    %v3987 = vadd.f32 0.0, %v3986
    %v3988 = vpop.f32.mrb[0].mxu0
    %3989 = vmatprep.mubr.bf16.mxu0 %v3360
    %3990 = vmatmul.mubr.bf16.gmra.mrb[0].mxu0 %v3359
    %v3991 = vpop.f32.mrb[0].mxu0
    %v3992 = vadd.f32 0.0, %v3991
    %v3993 = vpop.f32.mrb[0].mxu0
    %v3994 = vpop.f32.mrb[0].mxu0
    %v3995 = vadd.f32 0.0, %v3994
    %v3996 = vpop.f32.mrb[0].mxu0
    %3997 = vmatprep.mubr.bf16.mxu0 %v3365
    %3998 = vmatmul.mubr.bf16.gmra.mrb[0].mxu0 %v3364
    %v3999 = vpop.f32.mrb[0].mxu0
    %v4000 = vadd.f32 0.0, %v3999
    %v4001 = vpop.f32.mrb[0].mxu0
    %v4002 = vpop.f32.mrb[0].mxu0
    %v4003 = vadd.f32 0.0, %v4002
    %v4004 = vpop.f32.mrb[0].mxu0
    %4005 = vmatprep.mubr.bf16.mxu0 %v3370
    %4006 = vmatmul.mubr.bf16.gmra.mrb[0].mxu0 %v3369
    %v4007 = vpop.f32.mrb[0].mxu0
    %v4008 = vadd.f32 0.0, %v4007
    %v4009 = vpop.f32.mrb[0].mxu0
    %v4010 = vpop.f32.mrb[0].mxu0
    %v4011 = vadd.f32 0.0, %v4010
    %v4012 = vpop.f32.mrb[0].mxu0
    %4013 = vmatprep.mubr.bf16.mxu0 %v3375
    %4014 = vmatmul.mubr.bf16.gmra.mrb[0].mxu0 %v3374
    %v4015 = vpop.f32.mrb[0].mxu0
    %v4016 = vadd.f32 0.0, %v4015
    %v4017 = vpop.f32.mrb[0].mxu0
    %v4018 = vpop.f32.mrb[0].mxu0
    %v4019 = vadd.f32 0.0, %v4018
    %v4020 = vpop.f32.mrb[0].mxu0
    %4021 = vmatprep.mubr.bf16.mxu0 %v3380
    %4022 = vmatmul.mubr.bf16.gmra.mrb[0].mxu0 %v3379
    %v4023 = vpop.f32.mrb[0].mxu0
    %v4024 = vadd.f32 0.0, %v4023
    %v4025 = vpop.f32.mrb[0].mxu0
    %v4026 = vpop.f32.mrb[0].mxu0
    %v4027 = vadd.f32 0.0, %v4026
    %v4028 = vpop.f32.mrb[0].mxu0
    %4029 = vmatprep.mubr.bf16.mxu0 %v3385
    %4030 = vmatmul.mubr.bf16.gmra.mrb[0].mxu0 %v3384
    %v4031 = vpop.f32.mrb[0].mxu0
    %v4032 = vadd.f32 0.0, %v4031
    %v4033 = vpop.f32.mrb[0].mxu0
    %v4034 = vpop.f32.mrb[0].mxu0
    %v4035 = vadd.f32 0.0, %v4034
    %v4036 = vpop.f32.mrb[0].mxu0
    %4037 = vmatprep.mubr.bf16.mxu0 %v3390
    %4038 = vmatmul.mubr.bf16.gmra.mrb[0].mxu0 %v3389
    %v4039 = vpop.f32.mrb[0].mxu0
    %v4040 = vadd.f32 0.0, %v4039
    %v4041 = vpop.f32.mrb[0].mxu0
    %v4042 = vpop.f32.mrb[0].mxu0
    %v4043 = vadd.f32 0.0, %v4042
    %v4044 = vpop.f32.mrb[0].mxu0
    %4045 = vmatprep.mubr.bf16.mxu0 %v3395
    %4046 = vmatmul.mubr.bf16.gmra.mrb[0].mxu0 %v3394
    %v4047 = vpop.f32.mrb[0].mxu0
    %v4048 = vadd.f32 0.0, %v4047
    %v4049 = vpop.f32.mrb[0].mxu0
    %v4050 = vpop.f32.mrb[0].mxu0
    %v4051 = vadd.f32 0.0, %v4050
    %v4052 = vpop.f32.mrb[0].mxu0
    %4053 = vmatprep.mubr.bf16.mxu0 %v3400
    %4054 = vmatmul.mubr.bf16.gmra.mrb[0].mxu0 %v3399
    %v4055 = vpop.f32.mrb[0].mxu0
    %v4056 = vadd.f32 0.0, %v4055
    %v4057 = vpop.f32.mrb[0].mxu0
    %v4058 = vpop.f32.mrb[0].mxu0
    %v4059 = vadd.f32 0.0, %v4058
    %v4060 = vpop.f32.mrb[0].mxu0
    %4061 = vmatprep.mubr.bf16.mxu0 %v3405
    %4062 = vmatmul.mubr.bf16.gmra.mrb[0].mxu0 %v3404
    %v4063 = vpop.f32.mrb[0].mxu0
    %v4064 = vadd.f32 0.0, %v4063
    %v4065 = vpop.f32.mrb[0].mxu0
    %v4066 = vpop.f32.mrb[0].mxu0
    %v4067 = vadd.f32 0.0, %v4066
    %v4068 = vpop.f32.mrb[0].mxu0
    %4069 = vmatprep.mubr.bf16.mxu0 %v3410
    %4070 = vmatmul.mubr.bf16.gmra.mrb[0].mxu0 %v3409
    %v4071 = vpop.f32.mrb[0].mxu0
    %v4072 = vadd.f32 0.0, %v4071
    %v4073 = vpop.f32.mrb[0].mxu0
    %v4074 = vpop.f32.mrb[0].mxu0
    %v4075 = vadd.f32 0.0, %v4074
    %v4076 = vpop.f32.mrb[0].mxu0
    %4077 = vmatprep.mubr.bf16.mxu0 %v3415
    %4078 = vmatmul.mubr.bf16.gmra.mrb[0].mxu0 %v3414
    %v4079 = vpop.f32.mrb[0].mxu0
    %v4080 = vadd.f32 0.0, %v4079
    %v4081 = vpop.f32.mrb[0].mxu0
    %v4082 = vpop.f32.mrb[0].mxu0
    %v4083 = vadd.f32 0.0, %v4082
    %v4084 = vpop.f32.mrb[0].mxu0
    %4085 = vmatprep.mubr.bf16.mxu0 %v3420
    %4086 = vmatmul.mubr.bf16.gmra.mrb[0].mxu0 %v3419
    %v4087 = vpop.f32.mrb[0].mxu0
    %v4088 = vadd.f32 0.0, %v4087
    %v4089 = vpop.f32.mrb[0].mxu0
    %v4090 = vpop.f32.mrb[0].mxu0
    %v4091 = vadd.f32 0.0, %v4090
    %v4092 = vpop.f32.mrb[0].mxu0
    %4093 = vmatprep.mubr.bf16.mxu0 %v3425
    %4094 = vmatmul.mubr.bf16.gmra.mrb[0].mxu0 %v3424
    %v4095 = vpop.f32.mrb[0].mxu0
    %v4096 = vadd.f32 0.0, %v4095
    %v4097 = vpop.f32.mrb[0].mxu0
    %v4098 = vpop.f32.mrb[0].mxu0
    %v4099 = vadd.f32 0.0, %v4098
    %v4100 = vpop.f32.mrb[0].mxu0
    %4101 = vdwg.mxu0
    %4102 = vmatprep.subr.bf16.mxu0 0
    %4103 = vmatpush1.bf16.msra.mxu0 %v3661
    %4104 = vmatprep.subr.bf16.mxu0 0
    %4105 = vmatpush1.bf16.msra.mxu0 %v3662
    %4106 = vmatprep.subr.bf16.mxu0 0
    %4107 = vmatpush1.bf16.msra.mxu0 %v3663
    %4108 = vmatprep.subr.bf16.mxu0 0
    %4109 = vmatpush1.bf16.msra.mxu0 %v3664
    %4110 = vmatprep.subr.bf16.mxu0 0
    %4111 = vmatpush1.bf16.msra.mxu0 %v3665
    %4112 = vmatprep.subr.bf16.mxu0 0
    %4113 = vmatpush1.bf16.msra.mxu0 %v3666
    %4114 = vmatprep.subr.bf16.mxu0 0
    %4115 = vmatpush1.bf16.msra.mxu0 %v3667
    %4116 = vmatprep.subr.bf16.mxu0 0
    %4117 = vmatpush1.bf16.msra.mxu0 %v3668
    %4118 = vmatprep.subr.bf16.mxu0 0
    %4119 = vmatpush1.bf16.msra.mxu0 %v3669
    %4120 = vmatprep.subr.bf16.mxu0 0
    %4121 = vmatpush1.bf16.msra.mxu0 %v3670
    %4122 = vmatprep.subr.bf16.mxu0 0
    %4123 = vmatpush1.bf16.msra.mxu0 %v3671
    %4124 = vmatprep.subr.bf16.mxu0 0
    %4125 = vmatpush1.bf16.msra.mxu0 %v3672
    %4126 = vmatprep.subr.bf16.mxu0 0
    %4127 = vmatpush1.bf16.msra.mxu0 %v3673
    %4128 = vmatprep.subr.bf16.mxu0 0
    %4129 = vmatpush1.bf16.msra.mxu0 %v3674
    %4130 = vmatprep.subr.bf16.mxu0 0
    %4131 = vmatpush1.bf16.msra.mxu0 %v3675
    %4132 = vmatprep.subr.bf16.mxu0 0
    %4133 = vmatpush1.bf16.msra.mxu0 %v3676
    %4134 = vmatprep.mubr.bf16.mxu0 %v3272
    %4135 = vmatmul.mubr.bf16.gmra.mrb[0].mxu0 %v3271
    %v4136 = vpop.f32.mrb[0].mxu0
    %v4137 = vadd.f32 %v3848, %v4136
    %v4138 = vpop.f32.mrb[0].mxu0
    %v4139 = vpop.f32.mrb[0].mxu0
    %v4140 = vadd.f32 %v3851, %v4139
    %v4141 = vpop.f32.mrb[0].mxu0
    %4142 = vmatprep.mubr.bf16.mxu0 %v3277
    %4143 = vmatmul.mubr.bf16.gmra.mrb[0].mxu0 %v3276
    %v4144 = vpop.f32.mrb[0].mxu0
    %v4145 = vadd.f32 %v3856, %v4144
    %v4146 = vpop.f32.mrb[0].mxu0
    %v4147 = vpop.f32.mrb[0].mxu0
    %v4148 = vadd.f32 %v3859, %v4147
    %v4149 = vpop.f32.mrb[0].mxu0
    %4150 = vmatprep.mubr.bf16.mxu0 %v3282
    %4151 = vmatmul.mubr.bf16.gmra.mrb[0].mxu0 %v3281
    %v4152 = vpop.f32.mrb[0].mxu0
    %v4153 = vadd.f32 %v3864, %v4152
    %v4154 = vpop.f32.mrb[0].mxu0
    %v4155 = vpop.f32.mrb[0].mxu0
    %v4156 = vadd.f32 %v3867, %v4155
    %v4157 = vpop.f32.mrb[0].mxu0
    %4158 = vmatprep.mubr.bf16.mxu0 %v3287
    %4159 = vmatmul.mubr.bf16.gmra.mrb[0].mxu0 %v3286
    %v4160 = vpop.f32.mrb[0].mxu0
    %v4161 = vadd.f32 %v3872, %v4160
    %v4162 = vpop.f32.mrb[0].mxu0
    %v4163 = vpop.f32.mrb[0].mxu0
    %v4164 = vadd.f32 %v3875, %v4163
    %v4165 = vpop.f32.mrb[0].mxu0
    %4166 = vmatprep.mubr.bf16.mxu0 %v3292
    %4167 = vmatmul.mubr.bf16.gmra.mrb[0].mxu0 %v3291
    %v4168 = vpop.f32.mrb[0].mxu0
    %v4169 = vadd.f32 %v3880, %v4168
    %v4170 = vpop.f32.mrb[0].mxu0
    %v4171 = vpop.f32.mrb[0].mxu0
    %v4172 = vadd.f32 %v3883, %v4171
    %v4173 = vpop.f32.mrb[0].mxu0
    %4174 = vmatprep.mubr.bf16.mxu0 %v3297
    %4175 = vmatmul.mubr.bf16.gmra.mrb[0].mxu0 %v3296
    %v4176 = vpop.f32.mrb[0].mxu0
    %v4177 = vadd.f32 %v3888, %v4176
    %v4178 = vpop.f32.mrb[0].mxu0
    %v4179 = vpop.f32.mrb[0].mxu0
    %v4180 = vadd.f32 %v3891, %v4179
    %v4181 = vpop.f32.mrb[0].mxu0
    %4182 = vmatprep.mubr.bf16.mxu0 %v3302
    %4183 = vmatmul.mubr.bf16.gmra.mrb[0].mxu0 %v3301
    %v4184 = vpop.f32.mrb[0].mxu0
    %v4185 = vadd.f32 %v3896, %v4184
    %v4186 = vpop.f32.mrb[0].mxu0
    %v4187 = vpop.f32.mrb[0].mxu0
    %v4188 = vadd.f32 %v3899, %v4187
    %v4189 = vpop.f32.mrb[0].mxu0
    %4190 = vmatprep.mubr.bf16.mxu0 %v3307
    %4191 = vmatmul.mubr.bf16.gmra.mrb[0].mxu0 %v3306
    %v4192 = vpop.f32.mrb[0].mxu0
    %v4193 = vadd.f32 %v3904, %v4192
    %v4194 = vpop.f32.mrb[0].mxu0
    %v4195 = vpop.f32.mrb[0].mxu0
    %v4196 = vadd.f32 %v3907, %v4195
    %v4197 = vpop.f32.mrb[0].mxu0
    %4198 = vmatprep.mubr.bf16.mxu0 %v3312
    %4199 = vmatmul.mubr.bf16.gmra.mrb[0].mxu0 %v3311
    %v4200 = vpop.f32.mrb[0].mxu0
    %v4201 = vadd.f32 %v3912, %v4200
    %v4202 = vpop.f32.mrb[0].mxu0
    %v4203 = vpop.f32.mrb[0].mxu0
    %v4204 = vadd.f32 %v3915, %v4203
    %v4205 = vpop.f32.mrb[0].mxu0
    %4206 = vmatprep.mubr.bf16.mxu0 %v3317
    %4207 = vmatmul.mubr.bf16.gmra.mrb[0].mxu0 %v3316
    %v4208 = vpop.f32.mrb[0].mxu0
    %v4209 = vadd.f32 %v3920, %v4208
    %v4210 = vpop.f32.mrb[0].mxu0
    %v4211 = vpop.f32.mrb[0].mxu0
    %v4212 = vadd.f32 %v3923, %v4211
    %v4213 = vpop.f32.mrb[0].mxu0
    %4214 = vmatprep.mubr.bf16.mxu0 %v3322
    %4215 = vmatmul.mubr.bf16.gmra.mrb[0].mxu0 %v3321
    %v4216 = vpop.f32.mrb[0].mxu0
    %v4217 = vadd.f32 %v3928, %v4216
    %v4218 = vpop.f32.mrb[0].mxu0
    %v4219 = vpop.f32.mrb[0].mxu0
    %v4220 = vadd.f32 %v3931, %v4219
    %v4221 = vpop.f32.mrb[0].mxu0
    %4222 = vmatprep.mubr.bf16.mxu0 %v3327
    %4223 = vmatmul.mubr.bf16.gmra.mrb[0].mxu0 %v3326
    %v4224 = vpop.f32.mrb[0].mxu0
    %v4225 = vadd.f32 %v3936, %v4224
    %v4226 = vpop.f32.mrb[0].mxu0
    %v4227 = vpop.f32.mrb[0].mxu0
    %v4228 = vadd.f32 %v3939, %v4227
    %v4229 = vpop.f32.mrb[0].mxu0
    %4230 = vmatprep.mubr.bf16.mxu0 %v3332
    %4231 = vmatmul.mubr.bf16.gmra.mrb[0].mxu0 %v3331
    %v4232 = vpop.f32.mrb[0].mxu0
    %v4233 = vadd.f32 %v3944, %v4232
    %v4234 = vpop.f32.mrb[0].mxu0
    %v4235 = vpop.f32.mrb[0].mxu0
    %v4236 = vadd.f32 %v3947, %v4235
    %v4237 = vpop.f32.mrb[0].mxu0
    %4238 = vmatprep.mubr.bf16.mxu0 %v3337
    %4239 = vmatmul.mubr.bf16.gmra.mrb[0].mxu0 %v3336
    %v4240 = vpop.f32.mrb[0].mxu0
    %v4241 = vadd.f32 %v3952, %v4240
    %v4242 = vpop.f32.mrb[0].mxu0
    %v4243 = vpop.f32.mrb[0].mxu0
    %v4244 = vadd.f32 %v3955, %v4243
    %v4245 = vpop.f32.mrb[0].mxu0
    %4246 = vmatprep.mubr.bf16.mxu0 %v3342
    %4247 = vmatmul.mubr.bf16.gmra.mrb[0].mxu0 %v3341
    %v4248 = vpop.f32.mrb[0].mxu0
    %v4249 = vadd.f32 %v3960, %v4248
    %v4250 = vpop.f32.mrb[0].mxu0
    %v4251 = vpop.f32.mrb[0].mxu0
    %v4252 = vadd.f32 %v3963, %v4251
    %v4253 = vpop.f32.mrb[0].mxu0
    %4254 = vmatprep.mubr.bf16.mxu0 %v3347
    %4255 = vmatmul.mubr.bf16.gmra.mrb[0].mxu0 %v3346
    %v4256 = vpop.f32.mrb[0].mxu0
    %v4257 = vadd.f32 %v3968, %v4256
    %v4258 = vpop.f32.mrb[0].mxu0
    %v4259 = vpop.f32.mrb[0].mxu0
    %v4260 = vadd.f32 %v3971, %v4259
    %v4261 = vpop.f32.mrb[0].mxu0
    %4262 = vmatprep.mubr.bf16.mxu0 %v3352
    %4263 = vmatmul.mubr.bf16.gmra.mrb[0].mxu0 %v3351
    %v4264 = vpop.f32.mrb[0].mxu0
    %v4265 = vadd.f32 %v3976, %v4264
    %v4266 = vpop.f32.mrb[0].mxu0
    %v4267 = vpop.f32.mrb[0].mxu0
    %v4268 = vadd.f32 %v3979, %v4267
    %v4269 = vpop.f32.mrb[0].mxu0
    %4270 = vmatprep.mubr.bf16.mxu0 %v3357
    %4271 = vmatmul.mubr.bf16.gmra.mrb[0].mxu0 %v3356
    %v4272 = vpop.f32.mrb[0].mxu0
    %v4273 = vadd.f32 %v3984, %v4272
    %v4274 = vpop.f32.mrb[0].mxu0
    %v4275 = vpop.f32.mrb[0].mxu0
    %v4276 = vadd.f32 %v3987, %v4275
    %v4277 = vpop.f32.mrb[0].mxu0
    %4278 = vmatprep.mubr.bf16.mxu0 %v3362
    %4279 = vmatmul.mubr.bf16.gmra.mrb[0].mxu0 %v3361
    %v4280 = vpop.f32.mrb[0].mxu0
    %v4281 = vadd.f32 %v3992, %v4280
    %v4282 = vpop.f32.mrb[0].mxu0
    %v4283 = vpop.f32.mrb[0].mxu0
    %v4284 = vadd.f32 %v3995, %v4283
    %v4285 = vpop.f32.mrb[0].mxu0
    %4286 = vmatprep.mubr.bf16.mxu0 %v3367
    %4287 = vmatmul.mubr.bf16.gmra.mrb[0].mxu0 %v3366
    %v4288 = vpop.f32.mrb[0].mxu0
    %v4289 = vadd.f32 %v4000, %v4288
    %v4290 = vpop.f32.mrb[0].mxu0
    %v4291 = vpop.f32.mrb[0].mxu0
    %v4292 = vadd.f32 %v4003, %v4291
    %v4293 = vpop.f32.mrb[0].mxu0
    %4294 = vmatprep.mubr.bf16.mxu0 %v3372
    %4295 = vmatmul.mubr.bf16.gmra.mrb[0].mxu0 %v3371
    %v4296 = vpop.f32.mrb[0].mxu0
    %v4297 = vadd.f32 %v4008, %v4296
    %v4298 = vpop.f32.mrb[0].mxu0
    %v4299 = vpop.f32.mrb[0].mxu0
    %v4300 = vadd.f32 %v4011, %v4299
    %v4301 = vpop.f32.mrb[0].mxu0
    %4302 = vmatprep.mubr.bf16.mxu0 %v3377
    %4303 = vmatmul.mubr.bf16.gmra.mrb[0].mxu0 %v3376
    %v4304 = vpop.f32.mrb[0].mxu0
    %v4305 = vadd.f32 %v4016, %v4304
    %v4306 = vpop.f32.mrb[0].mxu0
    %v4307 = vpop.f32.mrb[0].mxu0
    %v4308 = vadd.f32 %v4019, %v4307
    %v4309 = vpop.f32.mrb[0].mxu0
    %4310 = vmatprep.mubr.bf16.mxu0 %v3382
    %4311 = vmatmul.mubr.bf16.gmra.mrb[0].mxu0 %v3381
    %v4312 = vpop.f32.mrb[0].mxu0
    %v4313 = vadd.f32 %v4024, %v4312
    %v4314 = vpop.f32.mrb[0].mxu0
    %v4315 = vpop.f32.mrb[0].mxu0
    %v4316 = vadd.f32 %v4027, %v4315
    %v4317 = vpop.f32.mrb[0].mxu0
    %4318 = vmatprep.mubr.bf16.mxu0 %v3387
    %4319 = vmatmul.mubr.bf16.gmra.mrb[0].mxu0 %v3386
    %v4320 = vpop.f32.mrb[0].mxu0
    %v4321 = vadd.f32 %v4032, %v4320
    %v4322 = vpop.f32.mrb[0].mxu0
    %v4323 = vpop.f32.mrb[0].mxu0
    %v4324 = vadd.f32 %v4035, %v4323
    %v4325 = vpop.f32.mrb[0].mxu0
    %4326 = vmatprep.mubr.bf16.mxu0 %v3392
    %4327 = vmatmul.mubr.bf16.gmra.mrb[0].mxu0 %v3391
    %v4328 = vpop.f32.mrb[0].mxu0
    %v4329 = vadd.f32 %v4040, %v4328
    %v4330 = vpop.f32.mrb[0].mxu0
    %v4331 = vpop.f32.mrb[0].mxu0
    %v4332 = vadd.f32 %v4043, %v4331
    %v4333 = vpop.f32.mrb[0].mxu0
    %4334 = vmatprep.mubr.bf16.mxu0 %v3397
    %4335 = vmatmul.mubr.bf16.gmra.mrb[0].mxu0 %v3396
    %v4336 = vpop.f32.mrb[0].mxu0
    %v4337 = vadd.f32 %v4048, %v4336
    %v4338 = vpop.f32.mrb[0].mxu0
    %v4339 = vpop.f32.mrb[0].mxu0
    %v4340 = vadd.f32 %v4051, %v4339
    %v4341 = vpop.f32.mrb[0].mxu0
    %4342 = vmatprep.mubr.bf16.mxu0 %v3402
    %4343 = vmatmul.mubr.bf16.gmra.mrb[0].mxu0 %v3401
    %v4344 = vpop.f32.mrb[0].mxu0
    %v4345 = vadd.f32 %v4056, %v4344
    %v4346 = vpop.f32.mrb[0].mxu0
    %v4347 = vpop.f32.mrb[0].mxu0
    %v4348 = vadd.f32 %v4059, %v4347
    %v4349 = vpop.f32.mrb[0].mxu0
    %4350 = vmatprep.mubr.bf16.mxu0 %v3407
    %4351 = vmatmul.mubr.bf16.gmra.mrb[0].mxu0 %v3406
    %v4352 = vpop.f32.mrb[0].mxu0
    %v4353 = vadd.f32 %v4064, %v4352
    %v4354 = vpop.f32.mrb[0].mxu0
    %v4355 = vpop.f32.mrb[0].mxu0
    %v4356 = vadd.f32 %v4067, %v4355
    %v4357 = vpop.f32.mrb[0].mxu0
    %4358 = vmatprep.mubr.bf16.mxu0 %v3412
    %4359 = vmatmul.mubr.bf16.gmra.mrb[0].mxu0 %v3411
    %v4360 = vpop.f32.mrb[0].mxu0
    %v4361 = vadd.f32 %v4072, %v4360
    %v4362 = vpop.f32.mrb[0].mxu0
    %v4363 = vpop.f32.mrb[0].mxu0
    %v4364 = vadd.f32 %v4075, %v4363
    %v4365 = vpop.f32.mrb[0].mxu0
    %4366 = vmatprep.mubr.bf16.mxu0 %v3417
    %4367 = vmatmul.mubr.bf16.gmra.mrb[0].mxu0 %v3416
    %v4368 = vpop.f32.mrb[0].mxu0
    %v4369 = vadd.f32 %v4080, %v4368
    %v4370 = vpop.f32.mrb[0].mxu0
    %v4371 = vpop.f32.mrb[0].mxu0
    %v4372 = vadd.f32 %v4083, %v4371
    %v4373 = vpop.f32.mrb[0].mxu0
    %4374 = vmatprep.mubr.bf16.mxu0 %v3422
    %4375 = vmatmul.mubr.bf16.gmra.mrb[0].mxu0 %v3421
    %v4376 = vpop.f32.mrb[0].mxu0
    %v4377 = vadd.f32 %v4088, %v4376
    %v4378 = vpop.f32.mrb[0].mxu0
    %v4379 = vpop.f32.mrb[0].mxu0
    %v4380 = vadd.f32 %v4091, %v4379
    %v4381 = vpop.f32.mrb[0].mxu0
    %4382 = vmatprep.mubr.bf16.mxu0 %v3427
    %4383 = vmatmul.mubr.bf16.gmra.mrb[0].mxu0 %v3426
    %v4384 = vpop.f32.mrb[0].mxu0
    %v4385 = vadd.f32 %v4096, %v4384
    %v4386 = vpop.f32.mrb[0].mxu0
    %v4387 = vpop.f32.mrb[0].mxu0
    %v4388 = vadd.f32 %v4099, %v4387
    %v4389 = vpop.f32.mrb[0].mxu0
    %4390 = vdwg.mxu0
    %4391 = vmatprep.subr.bf16.mxu0 0
    %4392 = vmatpush1.bf16.msra.mxu0 %v3677
    %4393 = vmatprep.subr.bf16.mxu0 0
    %4394 = vmatpush1.bf16.msra.mxu0 %v3678
    %4395 = vmatprep.subr.bf16.mxu0 0
    %4396 = vmatpush1.bf16.msra.mxu0 %v3679
    %4397 = vmatprep.subr.bf16.mxu0 0
    %4398 = vmatpush1.bf16.msra.mxu0 %v3680
    %4399 = vmatprep.subr.bf16.mxu0 0
    %4400 = vmatpush1.bf16.msra.mxu0 0
    %4401 = vmatprep.subr.bf16.mxu0 0
    %4402 = vmatpush1.bf16.msra.mxu0 0
    %4403 = vmatprep.subr.bf16.mxu0 0
    %4404 = vmatpush1.bf16.msra.mxu0 0
    %4405 = vmatprep.subr.bf16.mxu0 0
    %4406 = vmatpush1.bf16.msra.mxu0 0
    %4407 = vmatprep.subr.bf16.mxu0 0
    %4408 = vmatpush1.bf16.msra.mxu0 0
    %4409 = vmatprep.subr.bf16.mxu0 0
    %4410 = vmatpush1.bf16.msra.mxu0 0
    %4411 = vmatprep.subr.bf16.mxu0 0
    %4412 = vmatpush1.bf16.msra.mxu0 0
    %4413 = vmatprep.subr.bf16.mxu0 0
    %4414 = vmatpush1.bf16.msra.mxu0 0
    %4415 = vmatprep.subr.bf16.mxu0 0
    %4416 = vmatpush1.bf16.msra.mxu0 0
    %4417 = vmatprep.subr.bf16.mxu0 0
    %4418 = vmatpush1.bf16.msra.mxu0 0
    %4419 = vmatprep.subr.bf16.mxu0 0
    %4420 = vmatpush1.bf16.msra.mxu0 0
    %4421 = vmatprep.subr.bf16.mxu0 0
    %4422 = vmatpush1.bf16.msra.mxu0 0
    %4423 = vmatprep.mubr.bf16.mxu0 0
    %4424 = vmatmul.mubr.bf16.gmra.mrb[0].mxu0 %v3718
    %v4425 = vpop.f32.mrb[0].mxu0
    %v4426 = vadd.f32 %v4137, %v4425
    %v4427 = vpop.f32.mrb[0].mxu0
    %v4428 = vpop.f32.mrb[0].mxu0
    %v4429 = vadd.f32 %v4140, %v4428
    %v4430 = vpop.f32.mrb[0].mxu0
    %4431 = vmatprep.mubr.bf16.mxu0 0
    %4432 = vmatmul.mubr.bf16.gmra.mrb[0].mxu0 %v3721
    %v4433 = vpop.f32.mrb[0].mxu0
    %v4434 = vadd.f32 %v4145, %v4433
    %v4435 = vpop.f32.mrb[0].mxu0
    %v4436 = vpop.f32.mrb[0].mxu0
    %v4437 = vadd.f32 %v4148, %v4436
    %v4438 = vpop.f32.mrb[0].mxu0
    %4439 = vmatprep.mubr.bf16.mxu0 0
    %4440 = vmatmul.mubr.bf16.gmra.mrb[0].mxu0 %v3724
    %v4441 = vpop.f32.mrb[0].mxu0
    %v4442 = vadd.f32 %v4153, %v4441
    %v4443 = vpop.f32.mrb[0].mxu0
    %v4444 = vpop.f32.mrb[0].mxu0
    %v4445 = vadd.f32 %v4156, %v4444
    %v4446 = vpop.f32.mrb[0].mxu0
    %4447 = vmatprep.mubr.bf16.mxu0 0
    %4448 = vmatmul.mubr.bf16.gmra.mrb[0].mxu0 %v3727
    %v4449 = vpop.f32.mrb[0].mxu0
    %v4450 = vadd.f32 %v4161, %v4449
    %v4451 = vpop.f32.mrb[0].mxu0
    %v4452 = vpop.f32.mrb[0].mxu0
    %v4453 = vadd.f32 %v4164, %v4452
    %v4454 = vpop.f32.mrb[0].mxu0
    %4455 = vmatprep.mubr.bf16.mxu0 0
    %4456 = vmatmul.mubr.bf16.gmra.mrb[0].mxu0 %v3730
    %v4457 = vpop.f32.mrb[0].mxu0
    %v4458 = vadd.f32 %v4169, %v4457
    %v4459 = vpop.f32.mrb[0].mxu0
    %v4460 = vpop.f32.mrb[0].mxu0
    %v4461 = vadd.f32 %v4172, %v4460
    %v4462 = vpop.f32.mrb[0].mxu0
    %4463 = vmatprep.mubr.bf16.mxu0 0
    %4464 = vmatmul.mubr.bf16.gmra.mrb[0].mxu0 %v3733
    %v4465 = vpop.f32.mrb[0].mxu0
    %v4466 = vadd.f32 %v4177, %v4465
    %v4467 = vpop.f32.mrb[0].mxu0
    %v4468 = vpop.f32.mrb[0].mxu0
    %v4469 = vadd.f32 %v4180, %v4468
    %v4470 = vpop.f32.mrb[0].mxu0
    %4471 = vmatprep.mubr.bf16.mxu0 0
    %4472 = vmatmul.mubr.bf16.gmra.mrb[0].mxu0 %v3736
    %v4473 = vpop.f32.mrb[0].mxu0
    %v4474 = vadd.f32 %v4185, %v4473
    %v4475 = vpop.f32.mrb[0].mxu0
    %v4476 = vpop.f32.mrb[0].mxu0
    %v4477 = vadd.f32 %v4188, %v4476
    %v4478 = vpop.f32.mrb[0].mxu0
    %4479 = vmatprep.mubr.bf16.mxu0 0
    %4480 = vmatmul.mubr.bf16.gmra.mrb[0].mxu0 %v3739
    %v4481 = vpop.f32.mrb[0].mxu0
    %v4482 = vadd.f32 %v4193, %v4481
    %v4483 = vpop.f32.mrb[0].mxu0
    %v4484 = vpop.f32.mrb[0].mxu0
    %v4485 = vadd.f32 %v4196, %v4484
    %v4486 = vpop.f32.mrb[0].mxu0
    %4487 = vmatprep.mubr.bf16.mxu0 0
    %4488 = vmatmul.mubr.bf16.gmra.mrb[0].mxu0 %v3742
    %v4489 = vpop.f32.mrb[0].mxu0
    %v4490 = vadd.f32 %v4201, %v4489
    %v4491 = vpop.f32.mrb[0].mxu0
    %v4492 = vpop.f32.mrb[0].mxu0
    %v4493 = vadd.f32 %v4204, %v4492
    %v4494 = vpop.f32.mrb[0].mxu0
    %4495 = vmatprep.mubr.bf16.mxu0 0
    %4496 = vmatmul.mubr.bf16.gmra.mrb[0].mxu0 %v3745
    %v4497 = vpop.f32.mrb[0].mxu0
    %v4498 = vadd.f32 %v4209, %v4497
    %v4499 = vpop.f32.mrb[0].mxu0
    %v4500 = vpop.f32.mrb[0].mxu0
    %v4501 = vadd.f32 %v4212, %v4500
    %v4502 = vpop.f32.mrb[0].mxu0
    %4503 = vmatprep.mubr.bf16.mxu0 0
    %4504 = vmatmul.mubr.bf16.gmra.mrb[0].mxu0 %v3748
    %v4505 = vpop.f32.mrb[0].mxu0
    %v4506 = vadd.f32 %v4217, %v4505
    %v4507 = vpop.f32.mrb[0].mxu0
    %v4508 = vpop.f32.mrb[0].mxu0
    %v4509 = vadd.f32 %v4220, %v4508
    %v4510 = vpop.f32.mrb[0].mxu0
    %4511 = vmatprep.mubr.bf16.mxu0 0
    %4512 = vmatmul.mubr.bf16.gmra.mrb[0].mxu0 %v3751
    %v4513 = vpop.f32.mrb[0].mxu0
    %v4514 = vadd.f32 %v4225, %v4513
    %v4515 = vpop.f32.mrb[0].mxu0
    %v4516 = vpop.f32.mrb[0].mxu0
    %v4517 = vadd.f32 %v4228, %v4516
    %v4518 = vpop.f32.mrb[0].mxu0
    %4519 = vmatprep.mubr.bf16.mxu0 0
    %4520 = vmatmul.mubr.bf16.gmra.mrb[0].mxu0 %v3754
    %v4521 = vpop.f32.mrb[0].mxu0
    %v4522 = vadd.f32 %v4233, %v4521
    %v4523 = vpop.f32.mrb[0].mxu0
    %v4524 = vpop.f32.mrb[0].mxu0
    %v4525 = vadd.f32 %v4236, %v4524
    %v4526 = vpop.f32.mrb[0].mxu0
    %4527 = vmatprep.mubr.bf16.mxu0 0
    %4528 = vmatmul.mubr.bf16.gmra.mrb[0].mxu0 %v3757
    %v4529 = vpop.f32.mrb[0].mxu0
    %v4530 = vadd.f32 %v4241, %v4529
    %v4531 = vpop.f32.mrb[0].mxu0
    %v4532 = vpop.f32.mrb[0].mxu0
    %v4533 = vadd.f32 %v4244, %v4532
    %v4534 = vpop.f32.mrb[0].mxu0
    %4535 = vmatprep.mubr.bf16.mxu0 0
    %4536 = vmatmul.mubr.bf16.gmra.mrb[0].mxu0 %v3760
    %v4537 = vpop.f32.mrb[0].mxu0
    %v4538 = vadd.f32 %v4249, %v4537
    %v4539 = vpop.f32.mrb[0].mxu0
    %v4540 = vpop.f32.mrb[0].mxu0
    %v4541 = vadd.f32 %v4252, %v4540
    %v4542 = vpop.f32.mrb[0].mxu0
    %4543 = vmatprep.mubr.bf16.mxu0 0
    %4544 = vmatmul.mubr.bf16.gmra.mrb[0].mxu0 %v3763
    %v4545 = vpop.f32.mrb[0].mxu0
    %v4546 = vadd.f32 %v4257, %v4545
    %v4547 = vpop.f32.mrb[0].mxu0
    %v4548 = vpop.f32.mrb[0].mxu0
    %v4549 = vadd.f32 %v4260, %v4548
    %v4550 = vpop.f32.mrb[0].mxu0
    %4551 = vmatprep.mubr.bf16.mxu0 0
    %4552 = vmatmul.mubr.bf16.gmra.mrb[0].mxu0 %v3766
    %v4553 = vpop.f32.mrb[0].mxu0
    %v4554 = vadd.f32 %v4265, %v4553
    %v4555 = vpop.f32.mrb[0].mxu0
    %v4556 = vpop.f32.mrb[0].mxu0
    %v4557 = vadd.f32 %v4268, %v4556
    %v4558 = vpop.f32.mrb[0].mxu0
    %4559 = vmatprep.mubr.bf16.mxu0 0
    %4560 = vmatmul.mubr.bf16.gmra.mrb[0].mxu0 %v3769
    %v4561 = vpop.f32.mrb[0].mxu0
    %v4562 = vadd.f32 %v4273, %v4561
    %v4563 = vpop.f32.mrb[0].mxu0
    %v4564 = vpop.f32.mrb[0].mxu0
    %v4565 = vadd.f32 %v4276, %v4564
    %v4566 = vpop.f32.mrb[0].mxu0
    %4567 = vmatprep.mubr.bf16.mxu0 0
    %4568 = vmatmul.mubr.bf16.gmra.mrb[0].mxu0 %v3772
    %v4569 = vpop.f32.mrb[0].mxu0
    %v4570 = vadd.f32 %v4281, %v4569
    %v4571 = vpop.f32.mrb[0].mxu0
    %v4572 = vpop.f32.mrb[0].mxu0
    %v4573 = vadd.f32 %v4284, %v4572
    %v4574 = vpop.f32.mrb[0].mxu0
    %4575 = vmatprep.mubr.bf16.mxu0 0
    %4576 = vmatmul.mubr.bf16.gmra.mrb[0].mxu0 %v3775
    %v4577 = vpop.f32.mrb[0].mxu0
    %v4578 = vadd.f32 %v4289, %v4577
    %v4579 = vpop.f32.mrb[0].mxu0
    %v4580 = vpop.f32.mrb[0].mxu0
    %v4581 = vadd.f32 %v4292, %v4580
    %v4582 = vpop.f32.mrb[0].mxu0
    %4583 = vmatprep.mubr.bf16.mxu0 0
    %4584 = vmatmul.mubr.bf16.gmra.mrb[0].mxu0 %v3778
    %v4585 = vpop.f32.mrb[0].mxu0
    %v4586 = vadd.f32 %v4297, %v4585
    %v4587 = vpop.f32.mrb[0].mxu0
    %v4588 = vpop.f32.mrb[0].mxu0
    %v4589 = vadd.f32 %v4300, %v4588
    %v4590 = vpop.f32.mrb[0].mxu0
    %4591 = vmatprep.mubr.bf16.mxu0 0
    %4592 = vmatmul.mubr.bf16.gmra.mrb[0].mxu0 %v3781
    %v4593 = vpop.f32.mrb[0].mxu0
    %v4594 = vadd.f32 %v4305, %v4593
    %v4595 = vpop.f32.mrb[0].mxu0
    %v4596 = vpop.f32.mrb[0].mxu0
    %v4597 = vadd.f32 %v4308, %v4596
    %v4598 = vpop.f32.mrb[0].mxu0
    %4599 = vmatprep.mubr.bf16.mxu0 0
    %4600 = vmatmul.mubr.bf16.gmra.mrb[0].mxu0 %v3784
    %v4601 = vpop.f32.mrb[0].mxu0
    %v4602 = vadd.f32 %v4313, %v4601
    %v4603 = vpop.f32.mrb[0].mxu0
    %v4604 = vpop.f32.mrb[0].mxu0
    %v4605 = vadd.f32 %v4316, %v4604
    %v4606 = vpop.f32.mrb[0].mxu0
    %4607 = vmatprep.mubr.bf16.mxu0 0
    %4608 = vmatmul.mubr.bf16.gmra.mrb[0].mxu0 %v3787
    %v4609 = vpop.f32.mrb[0].mxu0
    %v4610 = vadd.f32 %v4321, %v4609
    %v4611 = vpop.f32.mrb[0].mxu0
    %v4612 = vpop.f32.mrb[0].mxu0
    %v4613 = vadd.f32 %v4324, %v4612
    %v4614 = vpop.f32.mrb[0].mxu0
    %4615 = vmatprep.mubr.bf16.mxu0 0
    %4616 = vmatmul.mubr.bf16.gmra.mrb[0].mxu0 %v3790
    %v4617 = vpop.f32.mrb[0].mxu0
    %v4618 = vadd.f32 %v4329, %v4617
    %v4619 = vpop.f32.mrb[0].mxu0
    %v4620 = vpop.f32.mrb[0].mxu0
    %v4621 = vadd.f32 %v4332, %v4620
    %v4622 = vpop.f32.mrb[0].mxu0
    %4623 = vmatprep.mubr.bf16.mxu0 0
    %4624 = vmatmul.mubr.bf16.gmra.mrb[0].mxu0 %v3793
    %v4625 = vpop.f32.mrb[0].mxu0
    %v4626 = vadd.f32 %v4337, %v4625
    %v4627 = vpop.f32.mrb[0].mxu0
    %v4628 = vpop.f32.mrb[0].mxu0
    %v4629 = vadd.f32 %v4340, %v4628
    %v4630 = vpop.f32.mrb[0].mxu0
    %4631 = vmatprep.mubr.bf16.mxu0 0
    %4632 = vmatmul.mubr.bf16.gmra.mrb[0].mxu0 %v3796
    %v4633 = vpop.f32.mrb[0].mxu0
    %v4634 = vadd.f32 %v4345, %v4633
    %v4635 = vpop.f32.mrb[0].mxu0
    %v4636 = vpop.f32.mrb[0].mxu0
    %v4637 = vadd.f32 %v4348, %v4636
    %v4638 = vpop.f32.mrb[0].mxu0
    %4639 = vmatprep.mubr.bf16.mxu0 0
    %4640 = vmatmul.mubr.bf16.gmra.mrb[0].mxu0 %v3799
    %v4641 = vpop.f32.mrb[0].mxu0
    %v4642 = vadd.f32 %v4353, %v4641
    %v4643 = vpop.f32.mrb[0].mxu0
    %v4644 = vpop.f32.mrb[0].mxu0
    %v4645 = vadd.f32 %v4356, %v4644
    %v4646 = vpop.f32.mrb[0].mxu0
    %4647 = vmatprep.mubr.bf16.mxu0 0
    %4648 = vmatmul.mubr.bf16.gmra.mrb[0].mxu0 %v3802
    %v4649 = vpop.f32.mrb[0].mxu0
    %v4650 = vadd.f32 %v4361, %v4649
    %v4651 = vpop.f32.mrb[0].mxu0
    %v4652 = vpop.f32.mrb[0].mxu0
    %v4653 = vadd.f32 %v4364, %v4652
    %v4654 = vpop.f32.mrb[0].mxu0
    %4655 = vmatprep.mubr.bf16.mxu0 0
    %4656 = vmatmul.mubr.bf16.gmra.mrb[0].mxu0 %v3805
    %v4657 = vpop.f32.mrb[0].mxu0
    %v4658 = vadd.f32 %v4369, %v4657
    %v4659 = vpop.f32.mrb[0].mxu0
    %v4660 = vpop.f32.mrb[0].mxu0
    %v4661 = vadd.f32 %v4372, %v4660
    %v4662 = vpop.f32.mrb[0].mxu0
    %4663 = vmatprep.mubr.bf16.mxu0 0
    %4664 = vmatmul.mubr.bf16.gmra.mrb[0].mxu0 %v3808
    %v4665 = vpop.f32.mrb[0].mxu0
    %v4666 = vadd.f32 %v4377, %v4665
    %v4667 = vpop.f32.mrb[0].mxu0
    %v4668 = vpop.f32.mrb[0].mxu0
    %v4669 = vadd.f32 %v4380, %v4668
    %v4670 = vpop.f32.mrb[0].mxu0
    %4671 = vmatprep.mubr.bf16.mxu0 0
    %4672 = vmatmul.mubr.bf16.gmra.mrb[0].mxu0 %v3811
    %v4673 = vpop.f32.mrb[0].mxu0
    %v4674 = vadd.f32 %v4385, %v4673
    %v4675 = vpop.f32.mrb[0].mxu0
    %v4676 = vpop.f32.mrb[0].mxu0
    %v4677 = vadd.f32 %v4388, %v4676
    %v4678 = vpop.f32.mrb[0].mxu0
    %4679 = vdwg.mxu0
    %v4680 = vsel %vm660, %v4426, 0.0
    %v4681 = vsel %vm660, %v4429, 0.0
    %v4682 = vadd.f32 %v4680, %v4681
    %v4683 = vsel %vm660, %v4434, 0.0
    %v4684 = vadd.f32 %v4682, %v4683
    %v4685 = vsel %vm660, %v4437, 0.0
    %v4686 = vadd.f32 %v4684, %v4685
    %v4687 = vsel %vm660, %v4442, 0.0
    %v4688 = vadd.f32 %v4686, %v4687
    %v4689 = vsel %vm660, %v4445, 0.0
    %v4690 = vadd.f32 %v4688, %v4689
    %v4691 = vsel %vm660, %v4450, 0.0
    %v4692 = vadd.f32 %v4690, %v4691
    %v4693 = vsel %vm660, %v4453, 0.0
    %v4694 = vadd.f32 %v4692, %v4693
    %v4695 = vsel %vm660, %v4458, 0.0
    %v4696 = vadd.f32 %v4694, %v4695
    %v4697 = vsel %vm660, %v4461, 0.0
    %v4698 = vadd.f32 %v4696, %v4697
    %v4699 = vsel %vm660, %v4466, 0.0
    %v4700 = vadd.f32 %v4698, %v4699
    %v4701 = vsel %vm660, %v4469, 0.0
    %v4702 = vadd.f32 %v4700, %v4701
    %v4703 = vsel %vm660, %v4474, 0.0
    %v4704 = vadd.f32 %v4702, %v4703
    %v4705 = vsel %vm660, %v4477, 0.0
    %v4706 = vadd.f32 %v4704, %v4705
    %v4707 = vsel %vm660, %v4482, 0.0
    %v4708 = vadd.f32 %v4706, %v4707
    %v4709 = vsel %vm660, %v4485, 0.0
    %v4710 = vadd.f32 %v4708, %v4709
    %v4711 = vsel %vm660, %v4490, 0.0
    %v4712 = vadd.f32 %v4710, %v4711
    %v4713 = vsel %vm660, %v4493, 0.0
    %v4714 = vadd.f32 %v4712, %v4713
    %v4715 = vsel %vm660, %v4498, 0.0
    %v4716 = vadd.f32 %v4714, %v4715
    %v4717 = vsel %vm660, %v4501, 0.0
    %v4718 = vadd.f32 %v4716, %v4717
    %v4719 = vsel %vm660, %v4506, 0.0
    %v4720 = vadd.f32 %v4718, %v4719
    %v4721 = vsel %vm660, %v4509, 0.0
    %v4722 = vadd.f32 %v4720, %v4721
    %v4723 = vsel %vm660, %v4514, 0.0
    %v4724 = vadd.f32 %v4722, %v4723
    %v4725 = vsel %vm660, %v4517, 0.0
    %v4726 = vadd.f32 %v4724, %v4725
    %v4727 = vsel %vm660, %v4522, 0.0
    %v4728 = vadd.f32 %v4726, %v4727
    %v4729 = vsel %vm660, %v4525, 0.0
    %v4730 = vadd.f32 %v4728, %v4729
    %v4731 = vsel %vm660, %v4530, 0.0
    %v4732 = vadd.f32 %v4730, %v4731
    %v4733 = vsel %vm660, %v4533, 0.0
    %v4734 = vadd.f32 %v4732, %v4733
    %v4735 = vsel %vm660, %v4538, 0.0
    %v4736 = vadd.f32 %v4734, %v4735
    %v4737 = vsel %vm660, %v4541, 0.0
    %v4738 = vadd.f32 %v4736, %v4737
    %v4739 = vsel %vm660, %v4546, 0.0
    %v4740 = vadd.f32 %v4738, %v4739
    %v4741 = vsel %vm660, %v4549, 0.0
    %v4742 = vadd.f32 %v4740, %v4741
    %v4743 = vsel %vm660, %v4554, 0.0
    %v4744 = vadd.f32 %v4742, %v4743
    %v4745 = vsel %vm660, %v4557, 0.0
    %v4746 = vadd.f32 %v4744, %v4745
    %v4747 = vsel %vm660, %v4562, 0.0
    %v4748 = vadd.f32 %v4746, %v4747
    %v4749 = vsel %vm660, %v4565, 0.0
    %v4750 = vadd.f32 %v4748, %v4749
    %v4751 = vsel %vm660, %v4570, 0.0
    %v4752 = vadd.f32 %v4750, %v4751
    %v4753 = vsel %vm660, %v4573, 0.0
    %v4754 = vadd.f32 %v4752, %v4753
    %v4755 = vsel %vm660, %v4578, 0.0
    %v4756 = vadd.f32 %v4754, %v4755
    %v4757 = vsel %vm660, %v4581, 0.0
    %v4758 = vadd.f32 %v4756, %v4757
    %v4759 = vsel %vm660, %v4586, 0.0
    %v4760 = vadd.f32 %v4758, %v4759
    %v4761 = vsel %vm660, %v4589, 0.0
    %v4762 = vadd.f32 %v4760, %v4761
    %v4763 = vsel %vm660, %v4594, 0.0
    %v4764 = vadd.f32 %v4762, %v4763
    %v4765 = vsel %vm660, %v4597, 0.0
    %v4766 = vadd.f32 %v4764, %v4765
    %v4767 = vsel %vm660, %v4602, 0.0
    %v4768 = vadd.f32 %v4766, %v4767
    %v4769 = vsel %vm660, %v4605, 0.0
    %v4770 = vadd.f32 %v4768, %v4769
    %v4771 = vsel %vm660, %v4610, 0.0
    %v4772 = vadd.f32 %v4770, %v4771
    %v4773 = vsel %vm660, %v4613, 0.0
    %v4774 = vadd.f32 %v4772, %v4773
    %v4775 = vsel %vm660, %v4618, 0.0
    %v4776 = vadd.f32 %v4774, %v4775
    %v4777 = vsel %vm660, %v4621, 0.0
    %v4778 = vadd.f32 %v4776, %v4777
    %v4779 = vsel %vm660, %v4626, 0.0
    %v4780 = vadd.f32 %v4778, %v4779
    %v4781 = vsel %vm660, %v4629, 0.0
    %v4782 = vadd.f32 %v4780, %v4781
    %v4783 = vsel %vm660, %v4634, 0.0
    %v4784 = vadd.f32 %v4782, %v4783
    %v4785 = vsel %vm660, %v4637, 0.0
    %v4786 = vadd.f32 %v4784, %v4785
    %v4787 = vsel %vm660, %v4642, 0.0
    %v4788 = vadd.f32 %v4786, %v4787
    %v4789 = vsel %vm660, %v4645, 0.0
    %v4790 = vadd.f32 %v4788, %v4789
    %v4791 = vsel %vm660, %v4650, 0.0
    %v4792 = vadd.f32 %v4790, %v4791
    %v4793 = vsel %vm660, %v4653, 0.0
    %v4794 = vadd.f32 %v4792, %v4793
    %v4795 = vsel %vm660, %v4658, 0.0
    %v4796 = vadd.f32 %v4794, %v4795
    %v4797 = vsel %vm660, %v4661, 0.0
    %v4798 = vadd.f32 %v4796, %v4797
    %v4799 = vsel %vm660, %v4666, 0.0
    %v4800 = vadd.f32 %v4798, %v4799
    %v4801 = vsel %vm660, %v4669, 0.0
    %v4802 = vadd.f32 %v4800, %v4801
    %v4803 = vsel %vm660, %v4674, 0.0
    %v4804 = vadd.f32 %v4802, %v4803
    %v4805 = vsel %vm660, %v4677, 0.0
    %v4806 = vadd.f32 %v4804, %v4805
    %v4807 = vrot.slane %v4806, 4
    %v4808 = vadd.f32 %v4806, %v4807
    %v4809 = vrot.slane %v4808, 2
    %v4810 = vadd.f32 %v4808, %v4809
    %v4811 = vrot.slane %v4810, 1
    %v4812 = vadd.f32 %v4810, %v4811
    %v4813 = vmul.f32 %v4812, 0.001953125
    %v4814 = vmul.f32 %v4426, %v4426
    %v4815 = vmul.f32 %v4429, %v4429
    %v4816 = vmul.f32 %v4434, %v4434
    %v4817 = vmul.f32 %v4437, %v4437
    %v4818 = vmul.f32 %v4442, %v4442
    %v4819 = vmul.f32 %v4445, %v4445
    %v4820 = vmul.f32 %v4450, %v4450
    %v4821 = vmul.f32 %v4453, %v4453
    %v4822 = vmul.f32 %v4458, %v4458
    %v4823 = vmul.f32 %v4461, %v4461
    %v4824 = vmul.f32 %v4466, %v4466
    %v4825 = vmul.f32 %v4469, %v4469
    %v4826 = vmul.f32 %v4474, %v4474
    %v4827 = vmul.f32 %v4477, %v4477
    %v4828 = vmul.f32 %v4482, %v4482
    %v4829 = vmul.f32 %v4485, %v4485
    %v4830 = vmul.f32 %v4490, %v4490
    %v4831 = vmul.f32 %v4493, %v4493
    %v4832 = vmul.f32 %v4498, %v4498
    %v4833 = vmul.f32 %v4501, %v4501
    %v4834 = vmul.f32 %v4506, %v4506
    %v4835 = vmul.f32 %v4509, %v4509
    %v4836 = vmul.f32 %v4514, %v4514
    %v4837 = vmul.f32 %v4517, %v4517
    %v4838 = vmul.f32 %v4522, %v4522
    %v4839 = vmul.f32 %v4525, %v4525
    %v4840 = vmul.f32 %v4530, %v4530
    %v4841 = vmul.f32 %v4533, %v4533
    %v4842 = vmul.f32 %v4538, %v4538
    %v4843 = vmul.f32 %v4541, %v4541
    %v4844 = vmul.f32 %v4546, %v4546
    %v4845 = vmul.f32 %v4549, %v4549
    %v4846 = vmul.f32 %v4554, %v4554
    %v4847 = vmul.f32 %v4557, %v4557
    %v4848 = vmul.f32 %v4562, %v4562
    %v4849 = vmul.f32 %v4565, %v4565
    %v4850 = vmul.f32 %v4570, %v4570
    %v4851 = vmul.f32 %v4573, %v4573
    %v4852 = vmul.f32 %v4578, %v4578
    %v4853 = vmul.f32 %v4581, %v4581
    %v4854 = vmul.f32 %v4586, %v4586
    %v4855 = vmul.f32 %v4589, %v4589
    %v4856 = vmul.f32 %v4594, %v4594
    %v4857 = vmul.f32 %v4597, %v4597
    %v4858 = vmul.f32 %v4602, %v4602
    %v4859 = vmul.f32 %v4605, %v4605
    %v4860 = vmul.f32 %v4610, %v4610
    %v4861 = vmul.f32 %v4613, %v4613
    %v4862 = vmul.f32 %v4618, %v4618
    %v4863 = vmul.f32 %v4621, %v4621
    %v4864 = vmul.f32 %v4626, %v4626
    %v4865 = vmul.f32 %v4629, %v4629
    %v4866 = vmul.f32 %v4634, %v4634
    %v4867 = vmul.f32 %v4637, %v4637
    %v4868 = vmul.f32 %v4642, %v4642
    %v4869 = vmul.f32 %v4645, %v4645
    %v4870 = vmul.f32 %v4650, %v4650
    %v4871 = vmul.f32 %v4653, %v4653
    %v4872 = vmul.f32 %v4658, %v4658
    %v4873 = vmul.f32 %v4661, %v4661
    %v4874 = vmul.f32 %v4666, %v4666
    %v4875 = vmul.f32 %v4669, %v4669
    %v4876 = vmul.f32 %v4674, %v4674
    %v4877 = vmul.f32 %v4677, %v4677
    %v4878 = vsel %vm660, %v4814, 0.0
    %v4879 = vsel %vm660, %v4815, 0.0
    %v4880 = vadd.f32 %v4878, %v4879
    %v4881 = vsel %vm660, %v4816, 0.0
    %v4882 = vadd.f32 %v4880, %v4881
    %v4883 = vsel %vm660, %v4817, 0.0
    %v4884 = vadd.f32 %v4882, %v4883
    %v4885 = vsel %vm660, %v4818, 0.0
    %v4886 = vadd.f32 %v4884, %v4885
    %v4887 = vsel %vm660, %v4819, 0.0
    %v4888 = vadd.f32 %v4886, %v4887
    %v4889 = vsel %vm660, %v4820, 0.0
    %v4890 = vadd.f32 %v4888, %v4889
    %v4891 = vsel %vm660, %v4821, 0.0
    %v4892 = vadd.f32 %v4890, %v4891
    %v4893 = vsel %vm660, %v4822, 0.0
    %v4894 = vadd.f32 %v4892, %v4893
    %v4895 = vsel %vm660, %v4823, 0.0
    %v4896 = vadd.f32 %v4894, %v4895
    %v4897 = vsel %vm660, %v4824, 0.0
    %v4898 = vadd.f32 %v4896, %v4897
    %v4899 = vsel %vm660, %v4825, 0.0
    %v4900 = vadd.f32 %v4898, %v4899
    %v4901 = vsel %vm660, %v4826, 0.0
    %v4902 = vadd.f32 %v4900, %v4901
    %v4903 = vsel %vm660, %v4827, 0.0
    %v4904 = vadd.f32 %v4902, %v4903
    %v4905 = vsel %vm660, %v4828, 0.0
    %v4906 = vadd.f32 %v4904, %v4905
    %v4907 = vsel %vm660, %v4829, 0.0
    %v4908 = vadd.f32 %v4906, %v4907
    %v4909 = vsel %vm660, %v4830, 0.0
    %v4910 = vadd.f32 %v4908, %v4909
    %v4911 = vsel %vm660, %v4831, 0.0
    %v4912 = vadd.f32 %v4910, %v4911
    %v4913 = vsel %vm660, %v4832, 0.0
    %v4914 = vadd.f32 %v4912, %v4913
    %v4915 = vsel %vm660, %v4833, 0.0
    %v4916 = vadd.f32 %v4914, %v4915
    %v4917 = vsel %vm660, %v4834, 0.0
    %v4918 = vadd.f32 %v4916, %v4917
    %v4919 = vsel %vm660, %v4835, 0.0
    %v4920 = vadd.f32 %v4918, %v4919
    %v4921 = vsel %vm660, %v4836, 0.0
    %v4922 = vadd.f32 %v4920, %v4921
    %v4923 = vsel %vm660, %v4837, 0.0
    %v4924 = vadd.f32 %v4922, %v4923
    %v4925 = vsel %vm660, %v4838, 0.0
    %v4926 = vadd.f32 %v4924, %v4925
    %v4927 = vsel %vm660, %v4839, 0.0
    %v4928 = vadd.f32 %v4926, %v4927
    %v4929 = vsel %vm660, %v4840, 0.0
    %v4930 = vadd.f32 %v4928, %v4929
    %v4931 = vsel %vm660, %v4841, 0.0
    %v4932 = vadd.f32 %v4930, %v4931
    %v4933 = vsel %vm660, %v4842, 0.0
    %v4934 = vadd.f32 %v4932, %v4933
    %v4935 = vsel %vm660, %v4843, 0.0
    %v4936 = vadd.f32 %v4934, %v4935
    %v4937 = vsel %vm660, %v4844, 0.0
    %v4938 = vadd.f32 %v4936, %v4937
    %v4939 = vsel %vm660, %v4845, 0.0
    %v4940 = vadd.f32 %v4938, %v4939
    %v4941 = vsel %vm660, %v4846, 0.0
    %v4942 = vadd.f32 %v4940, %v4941
    %v4943 = vsel %vm660, %v4847, 0.0
    %v4944 = vadd.f32 %v4942, %v4943
    %v4945 = vsel %vm660, %v4848, 0.0
    %v4946 = vadd.f32 %v4944, %v4945
    %v4947 = vsel %vm660, %v4849, 0.0
    %v4948 = vadd.f32 %v4946, %v4947
    %v4949 = vsel %vm660, %v4850, 0.0
    %v4950 = vadd.f32 %v4948, %v4949
    %v4951 = vsel %vm660, %v4851, 0.0
    %v4952 = vadd.f32 %v4950, %v4951
    %v4953 = vsel %vm660, %v4852, 0.0
    %v4954 = vadd.f32 %v4952, %v4953
    %v4955 = vsel %vm660, %v4853, 0.0
    %v4956 = vadd.f32 %v4954, %v4955
    %v4957 = vsel %vm660, %v4854, 0.0
    %v4958 = vadd.f32 %v4956, %v4957
    %v4959 = vsel %vm660, %v4855, 0.0
    %v4960 = vadd.f32 %v4958, %v4959
    %v4961 = vsel %vm660, %v4856, 0.0
    %v4962 = vadd.f32 %v4960, %v4961
    %v4963 = vsel %vm660, %v4857, 0.0
    %v4964 = vadd.f32 %v4962, %v4963
    %v4965 = vsel %vm660, %v4858, 0.0
    %v4966 = vadd.f32 %v4964, %v4965
    %v4967 = vsel %vm660, %v4859, 0.0
    %v4968 = vadd.f32 %v4966, %v4967
    %v4969 = vsel %vm660, %v4860, 0.0
    %v4970 = vadd.f32 %v4968, %v4969
    %v4971 = vsel %vm660, %v4861, 0.0
    %v4972 = vadd.f32 %v4970, %v4971
    %v4973 = vsel %vm660, %v4862, 0.0
    %v4974 = vadd.f32 %v4972, %v4973
    %v4975 = vsel %vm660, %v4863, 0.0
    %v4976 = vadd.f32 %v4974, %v4975
    %v4977 = vsel %vm660, %v4864, 0.0
    %v4978 = vadd.f32 %v4976, %v4977
    %v4979 = vsel %vm660, %v4865, 0.0
    %v4980 = vadd.f32 %v4978, %v4979
    %v4981 = vsel %vm660, %v4866, 0.0
    %v4982 = vadd.f32 %v4980, %v4981
    %v4983 = vsel %vm660, %v4867, 0.0
    %v4984 = vadd.f32 %v4982, %v4983
    %v4985 = vsel %vm660, %v4868, 0.0
    %v4986 = vadd.f32 %v4984, %v4985
    %v4987 = vsel %vm660, %v4869, 0.0
    %v4988 = vadd.f32 %v4986, %v4987
    %v4989 = vsel %vm660, %v4870, 0.0
    %v4990 = vadd.f32 %v4988, %v4989
    %v4991 = vsel %vm660, %v4871, 0.0
    %v4992 = vadd.f32 %v4990, %v4991
    %v4993 = vsel %vm660, %v4872, 0.0
    %v4994 = vadd.f32 %v4992, %v4993
    %v4995 = vsel %vm660, %v4873, 0.0
    %v4996 = vadd.f32 %v4994, %v4995
    %v4997 = vsel %vm660, %v4874, 0.0
    %v4998 = vadd.f32 %v4996, %v4997
    %v4999 = vsel %vm660, %v4875, 0.0
    %v5000 = vadd.f32 %v4998, %v4999
    %v5001 = vsel %vm660, %v4876, 0.0
    %v5002 = vadd.f32 %v5000, %v5001
    %v5003 = vsel %vm660, %v4877, 0.0
    %v5004 = vadd.f32 %v5002, %v5003
    %v5005 = vrot.slane %v5004, 4
    %v5006 = vadd.f32 %v5004, %v5005
    %v5007 = vrot.slane %v5006, 2
    %v5008 = vadd.f32 %v5006, %v5007
    %v5009 = vrot.slane %v5008, 1
    %v5010 = vadd.f32 %v5008, %v5009
    %v5011 = vmul.f32 %v5010, 0.001953125
    %v5012 = vmul.f32 %v4813, %v4813
    %v5013 = vsub.f32 %v5011, %v5012
    %v5014 = vld [vmem:[%s6] sm:$0x1]
    %v5015 = vadd.f32 %v5013, 1e-05
    %v5016 = vrsqrt.pop %v5015
    %v5017 = vmul.f32 %v5014, %v5016
    %v5018 = vsub.f32 %v4426, %v4813
    %v5019 = vsub.f32 %v4429, %v4813
    %v5020 = vsub.f32 %v4434, %v4813
    %v5021 = vsub.f32 %v4437, %v4813
    %v5022 = vsub.f32 %v4442, %v4813
    %v5023 = vsub.f32 %v4445, %v4813
    %v5024 = vsub.f32 %v4450, %v4813
    %v5025 = vsub.f32 %v4453, %v4813
    %v5026 = vsub.f32 %v4458, %v4813
    %v5027 = vsub.f32 %v4461, %v4813
    %v5028 = vsub.f32 %v4466, %v4813
    %v5029 = vsub.f32 %v4469, %v4813
    %v5030 = vsub.f32 %v4474, %v4813
    %v5031 = vsub.f32 %v4477, %v4813
    %v5032 = vsub.f32 %v4482, %v4813
    %v5033 = vsub.f32 %v4485, %v4813
    %v5034 = vsub.f32 %v4490, %v4813
    %v5035 = vsub.f32 %v4493, %v4813
    %v5036 = vsub.f32 %v4498, %v4813
    %v5037 = vsub.f32 %v4501, %v4813
    %v5038 = vsub.f32 %v4506, %v4813
    %v5039 = vsub.f32 %v4509, %v4813
    %v5040 = vsub.f32 %v4514, %v4813
    %v5041 = vsub.f32 %v4517, %v4813
    %v5042 = vsub.f32 %v4522, %v4813
    %v5043 = vsub.f32 %v4525, %v4813
    %v5044 = vsub.f32 %v4530, %v4813
    %v5045 = vsub.f32 %v4533, %v4813
    %v5046 = vsub.f32 %v4538, %v4813
    %v5047 = vsub.f32 %v4541, %v4813
    %v5048 = vsub.f32 %v4546, %v4813
    %v5049 = vsub.f32 %v4549, %v4813
    %v5050 = vsub.f32 %v4554, %v4813
    %v5051 = vsub.f32 %v4557, %v4813
    %v5052 = vsub.f32 %v4562, %v4813
    %v5053 = vsub.f32 %v4565, %v4813
    %v5054 = vsub.f32 %v4570, %v4813
    %v5055 = vsub.f32 %v4573, %v4813
    %v5056 = vsub.f32 %v4578, %v4813
    %v5057 = vsub.f32 %v4581, %v4813
    %v5058 = vsub.f32 %v4586, %v4813
    %v5059 = vsub.f32 %v4589, %v4813
    %v5060 = vsub.f32 %v4594, %v4813
    %v5061 = vsub.f32 %v4597, %v4813
    %v5062 = vsub.f32 %v4602, %v4813
    %v5063 = vsub.f32 %v4605, %v4813
    %v5064 = vsub.f32 %v4610, %v4813
    %v5065 = vsub.f32 %v4613, %v4813
    %v5066 = vsub.f32 %v4618, %v4813
    %v5067 = vsub.f32 %v4621, %v4813
    %v5068 = vsub.f32 %v4626, %v4813
    %v5069 = vsub.f32 %v4629, %v4813
    %v5070 = vsub.f32 %v4634, %v4813
    %v5071 = vsub.f32 %v4637, %v4813
    %v5072 = vsub.f32 %v4642, %v4813
    %v5073 = vsub.f32 %v4645, %v4813
    %v5074 = vsub.f32 %v4650, %v4813
    %v5075 = vsub.f32 %v4653, %v4813
    %v5076 = vsub.f32 %v4658, %v4813
    %v5077 = vsub.f32 %v4661, %v4813
    %v5078 = vsub.f32 %v4666, %v4813
    %v5079 = vsub.f32 %v4669, %v4813
    %v5080 = vsub.f32 %v4674, %v4813
    %v5081 = vsub.f32 %v4677, %v4813
    %v5083 = vlaneseq
    %v5084 = vshrl.u32 %v5083, 7
    %v5085 = vsub.s32 0, %v5084
    %v5086 = vrot.slane %v5017, %v5085
    %v5088 = vmul.f32 %v5018, %v5086
    %v5089 = vmul.f32 %v5019, %v5086
    %v5090 = vmul.f32 %v5020, %v5086
    %v5091 = vmul.f32 %v5021, %v5086
    %v5092 = vmul.f32 %v5022, %v5086
    %v5093 = vmul.f32 %v5023, %v5086
    %v5094 = vmul.f32 %v5024, %v5086
    %v5095 = vmul.f32 %v5025, %v5086
    %v5096 = vmul.f32 %v5026, %v5086
    %v5097 = vmul.f32 %v5027, %v5086
    %v5098 = vmul.f32 %v5028, %v5086
    %v5099 = vmul.f32 %v5029, %v5086
    %v5100 = vmul.f32 %v5030, %v5086
    %v5101 = vmul.f32 %v5031, %v5086
    %v5102 = vmul.f32 %v5032, %v5086
    %v5103 = vmul.f32 %v5033, %v5086
    %v5104 = vmul.f32 %v5034, %v5086
    %v5105 = vmul.f32 %v5035, %v5086
    %v5106 = vmul.f32 %v5036, %v5086
    %v5107 = vmul.f32 %v5037, %v5086
    %v5108 = vmul.f32 %v5038, %v5086
    %v5109 = vmul.f32 %v5039, %v5086
    %v5110 = vmul.f32 %v5040, %v5086
    %v5111 = vmul.f32 %v5041, %v5086
    %v5112 = vmul.f32 %v5042, %v5086
    %v5113 = vmul.f32 %v5043, %v5086
    %v5114 = vmul.f32 %v5044, %v5086
    %v5115 = vmul.f32 %v5045, %v5086
    %v5116 = vmul.f32 %v5046, %v5086
    %v5117 = vmul.f32 %v5047, %v5086
    %v5118 = vmul.f32 %v5048, %v5086
    %v5119 = vmul.f32 %v5049, %v5086
    %v5120 = vmul.f32 %v5050, %v5086
    %v5121 = vmul.f32 %v5051, %v5086
    %v5122 = vmul.f32 %v5052, %v5086
    %v5123 = vmul.f32 %v5053, %v5086
    %v5124 = vmul.f32 %v5054, %v5086
    %v5125 = vmul.f32 %v5055, %v5086
    %v5126 = vmul.f32 %v5056, %v5086
    %v5127 = vmul.f32 %v5057, %v5086
    %v5128 = vmul.f32 %v5058, %v5086
    %v5129 = vmul.f32 %v5059, %v5086
    %v5130 = vmul.f32 %v5060, %v5086
    %v5131 = vmul.f32 %v5061, %v5086
    %v5132 = vmul.f32 %v5062, %v5086
    %v5133 = vmul.f32 %v5063, %v5086
    %v5134 = vmul.f32 %v5064, %v5086
    %v5135 = vmul.f32 %v5065, %v5086
    %v5136 = vmul.f32 %v5066, %v5086
    %v5137 = vmul.f32 %v5067, %v5086
    %v5138 = vmul.f32 %v5068, %v5086
    %v5139 = vmul.f32 %v5069, %v5086
    %v5140 = vmul.f32 %v5070, %v5086
    %v5141 = vmul.f32 %v5071, %v5086
    %v5142 = vmul.f32 %v5072, %v5086
    %v5143 = vmul.f32 %v5073, %v5086
    %v5144 = vmul.f32 %v5074, %v5086
    %v5145 = vmul.f32 %v5075, %v5086
    %v5146 = vmul.f32 %v5076, %v5086
    %v5147 = vmul.f32 %v5077, %v5086
    %v5148 = vmul.f32 %v5078, %v5086
    %v5149 = vmul.f32 %v5079, %v5086
    %v5150 = vmul.f32 %v5080, %v5086
    %v5151 = vmul.f32 %v5081, %v5086
    %v5152 = vld [vmem:[%s7] sm:$0x1]
    %v5154 = vlaneseq
    %v5155 = vshrl.u32 %v5154, 7
    %v5156 = vsub.s32 0, %v5155
    %v5157 = vrot.slane %v5152, %v5156
    %v5159 = vadd.f32 %v5088, %v5157
    %v5160 = vadd.f32 %v5089, %v5157
    %v5161 = vadd.f32 %v5090, %v5157
    %v5162 = vadd.f32 %v5091, %v5157
    %v5163 = vadd.f32 %v5092, %v5157
    %v5164 = vadd.f32 %v5093, %v5157
    %v5165 = vadd.f32 %v5094, %v5157
    %v5166 = vadd.f32 %v5095, %v5157
    %v5167 = vadd.f32 %v5096, %v5157
    %v5168 = vadd.f32 %v5097, %v5157
    %v5169 = vadd.f32 %v5098, %v5157
    %v5170 = vadd.f32 %v5099, %v5157
    %v5171 = vadd.f32 %v5100, %v5157
    %v5172 = vadd.f32 %v5101, %v5157
    %v5173 = vadd.f32 %v5102, %v5157
    %v5174 = vadd.f32 %v5103, %v5157
    %v5175 = vadd.f32 %v5104, %v5157
    %v5176 = vadd.f32 %v5105, %v5157
    %v5177 = vadd.f32 %v5106, %v5157
    %v5178 = vadd.f32 %v5107, %v5157
    %v5179 = vadd.f32 %v5108, %v5157
    %v5180 = vadd.f32 %v5109, %v5157
    %v5181 = vadd.f32 %v5110, %v5157
    %v5182 = vadd.f32 %v5111, %v5157
    %v5183 = vadd.f32 %v5112, %v5157
    %v5184 = vadd.f32 %v5113, %v5157
    %v5185 = vadd.f32 %v5114, %v5157
    %v5186 = vadd.f32 %v5115, %v5157
    %v5187 = vadd.f32 %v5116, %v5157
    %v5188 = vadd.f32 %v5117, %v5157
    %v5189 = vadd.f32 %v5118, %v5157
    %v5190 = vadd.f32 %v5119, %v5157
    %v5191 = vadd.f32 %v5120, %v5157
    %v5192 = vadd.f32 %v5121, %v5157
    %v5193 = vadd.f32 %v5122, %v5157
    %v5194 = vadd.f32 %v5123, %v5157
    %v5195 = vadd.f32 %v5124, %v5157
    %v5196 = vadd.f32 %v5125, %v5157
    %v5197 = vadd.f32 %v5126, %v5157
    %v5198 = vadd.f32 %v5127, %v5157
    %v5199 = vadd.f32 %v5128, %v5157
    %v5200 = vadd.f32 %v5129, %v5157
    %v5201 = vadd.f32 %v5130, %v5157
    %v5202 = vadd.f32 %v5131, %v5157
    %v5203 = vadd.f32 %v5132, %v5157
    %v5204 = vadd.f32 %v5133, %v5157
    %v5205 = vadd.f32 %v5134, %v5157
    %v5206 = vadd.f32 %v5135, %v5157
    %v5207 = vadd.f32 %v5136, %v5157
    %v5208 = vadd.f32 %v5137, %v5157
    %v5209 = vadd.f32 %v5138, %v5157
    %v5210 = vadd.f32 %v5139, %v5157
    %v5211 = vadd.f32 %v5140, %v5157
    %v5212 = vadd.f32 %v5141, %v5157
    %v5213 = vadd.f32 %v5142, %v5157
    %v5214 = vadd.f32 %v5143, %v5157
    %v5215 = vadd.f32 %v5144, %v5157
    %v5216 = vadd.f32 %v5145, %v5157
    %v5217 = vadd.f32 %v5146, %v5157
    %v5218 = vadd.f32 %v5147, %v5157
    %v5219 = vadd.f32 %v5148, %v5157
    %v5220 = vadd.f32 %v5149, %v5157
    %v5221 = vadd.f32 %v5150, %v5157
    %v5222 = vadd.f32 %v5151, %v5157
    %v5223 = vmax.f32 %v5159, 0.0
    %v5224 = vmax.f32 %v5160, 0.0
    %v5225 = vmax.f32 %v5161, 0.0
    %v5226 = vmax.f32 %v5162, 0.0
    %v5227 = vmax.f32 %v5163, 0.0
    %v5228 = vmax.f32 %v5164, 0.0
    %v5229 = vmax.f32 %v5165, 0.0
    %v5230 = vmax.f32 %v5166, 0.0
    %v5231 = vmax.f32 %v5167, 0.0
    %v5232 = vmax.f32 %v5168, 0.0
    %v5233 = vmax.f32 %v5169, 0.0
    %v5234 = vmax.f32 %v5170, 0.0
    %v5235 = vmax.f32 %v5171, 0.0
    %v5236 = vmax.f32 %v5172, 0.0
    %v5237 = vmax.f32 %v5173, 0.0
    %v5238 = vmax.f32 %v5174, 0.0
    %v5239 = vmax.f32 %v5175, 0.0
    %v5240 = vmax.f32 %v5176, 0.0
    %v5241 = vmax.f32 %v5177, 0.0
    %v5242 = vmax.f32 %v5178, 0.0
    %v5243 = vmax.f32 %v5179, 0.0
    %v5244 = vmax.f32 %v5180, 0.0
    %v5245 = vmax.f32 %v5181, 0.0
    %v5246 = vmax.f32 %v5182, 0.0
    %v5247 = vmax.f32 %v5183, 0.0
    %v5248 = vmax.f32 %v5184, 0.0
    %v5249 = vmax.f32 %v5185, 0.0
    %v5250 = vmax.f32 %v5186, 0.0
    %v5251 = vmax.f32 %v5187, 0.0
    %v5252 = vmax.f32 %v5188, 0.0
    %v5253 = vmax.f32 %v5189, 0.0
    %v5254 = vmax.f32 %v5190, 0.0
    %v5255 = vmax.f32 %v5191, 0.0
    %v5256 = vmax.f32 %v5192, 0.0
    %v5257 = vmax.f32 %v5193, 0.0
    %v5258 = vmax.f32 %v5194, 0.0
    %v5259 = vmax.f32 %v5195, 0.0
    %v5260 = vmax.f32 %v5196, 0.0
    %v5261 = vmax.f32 %v5197, 0.0
    %v5262 = vmax.f32 %v5198, 0.0
    %v5263 = vmax.f32 %v5199, 0.0
    %v5264 = vmax.f32 %v5200, 0.0
    %v5265 = vmax.f32 %v5201, 0.0
    %v5266 = vmax.f32 %v5202, 0.0
    %v5267 = vmax.f32 %v5203, 0.0
    %v5268 = vmax.f32 %v5204, 0.0
    %v5269 = vmax.f32 %v5205, 0.0
    %v5270 = vmax.f32 %v5206, 0.0
    %v5271 = vmax.f32 %v5207, 0.0
    %v5272 = vmax.f32 %v5208, 0.0
    %v5273 = vmax.f32 %v5209, 0.0
    %v5274 = vmax.f32 %v5210, 0.0
    %v5275 = vmax.f32 %v5211, 0.0
    %v5276 = vmax.f32 %v5212, 0.0
    %v5277 = vmax.f32 %v5213, 0.0
    %v5278 = vmax.f32 %v5214, 0.0
    %v5279 = vmax.f32 %v5215, 0.0
    %v5280 = vmax.f32 %v5216, 0.0
    %v5281 = vmax.f32 %v5217, 0.0
    %v5282 = vmax.f32 %v5218, 0.0
    %v5283 = vmax.f32 %v5219, 0.0
    %v5284 = vmax.f32 %v5220, 0.0
    %v5285 = vmax.f32 %v5221, 0.0
    %v5286 = vmax.f32 %v5222, 0.0
    %v5287 = vpack.c.bf16 %v5224, %v5223
    %v5288 = vpack.c.bf16 %v5226, %v5225
    %v5289 = vpack.c.bf16 %v5228, %v5227
    %v5290 = vpack.c.bf16 %v5230, %v5229
    %v5291 = vpack.c.bf16 %v5232, %v5231
    %v5292 = vpack.c.bf16 %v5234, %v5233
    %v5293 = vpack.c.bf16 %v5236, %v5235
    %v5294 = vpack.c.bf16 %v5238, %v5237
    %v5295 = vpack.c.bf16 %v5240, %v5239
    %v5296 = vpack.c.bf16 %v5242, %v5241
    %v5297 = vpack.c.bf16 %v5244, %v5243
    %v5298 = vpack.c.bf16 %v5246, %v5245
    %v5299 = vpack.c.bf16 %v5248, %v5247
    %v5300 = vpack.c.bf16 %v5250, %v5249
    %v5301 = vpack.c.bf16 %v5252, %v5251
    %v5302 = vpack.c.bf16 %v5254, %v5253
    %v5303 = vpack.c.bf16 %v5256, %v5255
    %v5304 = vpack.c.bf16 %v5258, %v5257
    %v5305 = vpack.c.bf16 %v5260, %v5259
    %v5306 = vpack.c.bf16 %v5262, %v5261
    %v5307 = vpack.c.bf16 %v5264, %v5263
    %v5308 = vpack.c.bf16 %v5266, %v5265
    %v5309 = vpack.c.bf16 %v5268, %v5267
    %v5310 = vpack.c.bf16 %v5270, %v5269
    %v5311 = vpack.c.bf16 %v5272, %v5271
    %v5312 = vpack.c.bf16 %v5274, %v5273
    %v5313 = vpack.c.bf16 %v5276, %v5275
    %v5314 = vpack.c.bf16 %v5278, %v5277
    %v5315 = vpack.c.bf16 %v5280, %v5279
    %v5316 = vpack.c.bf16 %v5282, %v5281
    %v5317 = vpack.c.bf16 %v5284, %v5283
    %v5318 = vpack.c.bf16 %v5286, %v5285
    %v5319 = vld [vmem:[%s3] sm:$0xff]
    %v5320 = vld [vmem:[%s3 + $0x8] sm:$0xff]
    %v5321 = vld [vmem:[%s3 + $0x10] sm:$0xff]
    %v5322 = vld [vmem:[%s3 + $0x18] sm:$0xff]
    %v5323 = vld [vmem:[%s3 + $0x20] sm:$0xff]
    %v5324 = vld [vmem:[%s3 + $0x28] sm:$0xff]
    %v5325 = vld [vmem:[%s3 + $0x30] sm:$0xff]
    %v5326 = vld [vmem:[%s3 + $0x38] sm:$0xff]
    %v5335 = vunpack.c.l.b16 %v5319
    %v5336 = vunpack.c.h.b16 %v5319
    %v5337 = vunpack.c.l.b16 %v5320
    %v5338 = vunpack.c.h.b16 %v5320
    %v5339 = vunpack.c.l.b16 %v5321
    %v5340 = vunpack.c.h.b16 %v5321
    %v5341 = vunpack.c.l.b16 %v5322
    %v5342 = vunpack.c.h.b16 %v5322
    %v5343 = vunpack.c.l.b16 %v5323
    %v5344 = vunpack.c.h.b16 %v5323
    %v5345 = vunpack.c.l.b16 %v5324
    %v5346 = vunpack.c.h.b16 %v5324
    %v5347 = vunpack.c.l.b16 %v5325
    %v5348 = vunpack.c.h.b16 %v5325
    %v5349 = vunpack.c.l.b16 %v5326
    %v5350 = vunpack.c.h.b16 %v5326
    %v5351 = vpack.c.b16 %v5337, %v5335
    %v5352 = vpack.c.b16 %v5338, %v5336
    %v5353 = vpack.c.b16 %v5341, %v5339
    %v5354 = vpack.c.b16 %v5342, %v5340
    %v5355 = vpack.c.b16 %v5345, %v5343
    %v5356 = vpack.c.b16 %v5346, %v5344
    %v5357 = vpack.c.b16 %v5349, %v5347
    %v5358 = vpack.c.b16 %v5350, %v5348
    %v5368 = vsel %vm660, %v5287, 0
    %v5371 = vsel %vm660, %v5288, 0
    %v5374 = vsel %vm660, %v5289, 0
    %v5377 = vsel %vm660, %v5290, 0
    %v5380 = vsel %vm660, %v5291, 0
    %v5383 = vsel %vm660, %v5292, 0
    %v5386 = vsel %vm660, %v5293, 0
    %v5389 = vsel %vm660, %v5294, 0
    %v5392 = vsel %vm660, %v5295, 0
    %v5395 = vsel %vm660, %v5296, 0
    %v5398 = vsel %vm660, %v5297, 0
    %v5401 = vsel %vm660, %v5298, 0
    %v5404 = vsel %vm660, %v5299, 0
    %v5407 = vsel %vm660, %v5300, 0
    %v5410 = vsel %vm660, %v5301, 0
    %v5413 = vsel %vm660, %v5302, 0
    %v5416 = vsel %vm660, %v5303, 0
    %v5419 = vsel %vm660, %v5304, 0
    %v5422 = vsel %vm660, %v5305, 0
    %v5425 = vsel %vm660, %v5306, 0
    %v5428 = vsel %vm660, %v5307, 0
    %v5431 = vsel %vm660, %v5308, 0
    %v5434 = vsel %vm660, %v5309, 0
    %v5437 = vsel %vm660, %v5310, 0
    %v5440 = vsel %vm660, %v5311, 0
    %v5443 = vsel %vm660, %v5312, 0
    %v5446 = vsel %vm660, %v5313, 0
    %v5449 = vsel %vm660, %v5314, 0
    %v5452 = vsel %vm660, %v5315, 0
    %v5455 = vsel %vm660, %v5316, 0
    %v5458 = vsel %vm660, %v5317, 0
    %v5461 = vsel %vm660, %v5318, 0
    %5463 = vmatprep.subr.bf16.mxu0 %v5352
    %5464 = vmatpush1.bf16.msra.mxu0 %v5351
    %5465 = vmatprep.subr.bf16.mxu0 %v5354
    %5466 = vmatpush1.bf16.msra.mxu0 %v5353
    %5467 = vmatprep.subr.bf16.mxu0 %v5356
    %5468 = vmatpush1.bf16.msra.mxu0 %v5355
    %5469 = vmatprep.subr.bf16.mxu0 %v5358
    %5470 = vmatpush1.bf16.msra.mxu0 %v5357
    %5471 = vmatprep.subr.bf16.mxu0 0
    %5472 = vmatpush1.bf16.msra.mxu0 0
    %5473 = vmatprep.subr.bf16.mxu0 0
    %5474 = vmatpush1.bf16.msra.mxu0 0
    %5475 = vmatprep.subr.bf16.mxu0 0
    %5476 = vmatpush1.bf16.msra.mxu0 0
    %5477 = vmatprep.subr.bf16.mxu0 0
    %5478 = vmatpush1.bf16.msra.mxu0 0
    %5479 = vmatprep.subr.bf16.mxu0 0
    %5480 = vmatpush1.bf16.msra.mxu0 0
    %5481 = vmatprep.subr.bf16.mxu0 0
    %5482 = vmatpush1.bf16.msra.mxu0 0
    %5483 = vmatprep.subr.bf16.mxu0 0
    %5484 = vmatpush1.bf16.msra.mxu0 0
    %5485 = vmatprep.subr.bf16.mxu0 0
    %5486 = vmatpush1.bf16.msra.mxu0 0
    %5487 = vmatprep.subr.bf16.mxu0 0
    %5488 = vmatpush1.bf16.msra.mxu0 0
    %5489 = vmatprep.subr.bf16.mxu0 0
    %5490 = vmatpush1.bf16.msra.mxu0 0
    %5491 = vmatprep.subr.bf16.mxu0 0
    %5492 = vmatpush1.bf16.msra.mxu0 0
    %5493 = vmatprep.subr.bf16.mxu0 0
    %5494 = vmatpush1.bf16.msra.mxu0 0
    %5495 = vmatprep.mubr.bf16.mxu0 0
    %5496 = vmatmul.mubr.bf16.gmra.mrb[0].mxu0 %v5368
    %v5497 = vpop.f32.mrb[0].mxu0
    %v5498 = vadd.f32 0.0, %v5497
    %v5499 = vpop.f32.mrb[0].mxu0
    %v5500 = vadd.f32 0.0, %v5499
    %v5501 = vpop.f32.mrb[0].mxu0
    %v5502 = vadd.f32 0.0, %v5501
    %v5503 = vpop.f32.mrb[0].mxu0
    %v5504 = vadd.f32 0.0, %v5503
    %5505 = vmatprep.mubr.bf16.mxu0 0
    %5506 = vmatmul.mubr.bf16.gmra.mrb[0].mxu0 %v5371
    %v5507 = vpop.f32.mrb[0].mxu0
    %v5508 = vadd.f32 0.0, %v5507
    %v5509 = vpop.f32.mrb[0].mxu0
    %v5510 = vadd.f32 0.0, %v5509
    %v5511 = vpop.f32.mrb[0].mxu0
    %v5512 = vadd.f32 0.0, %v5511
    %v5513 = vpop.f32.mrb[0].mxu0
    %v5514 = vadd.f32 0.0, %v5513
    %5515 = vmatprep.mubr.bf16.mxu0 0
    %5516 = vmatmul.mubr.bf16.gmra.mrb[0].mxu0 %v5374
    %v5517 = vpop.f32.mrb[0].mxu0
    %v5518 = vadd.f32 0.0, %v5517
    %v5519 = vpop.f32.mrb[0].mxu0
    %v5520 = vadd.f32 0.0, %v5519
    %v5521 = vpop.f32.mrb[0].mxu0
    %v5522 = vadd.f32 0.0, %v5521
    %v5523 = vpop.f32.mrb[0].mxu0
    %v5524 = vadd.f32 0.0, %v5523
    %5525 = vmatprep.mubr.bf16.mxu0 0
    %5526 = vmatmul.mubr.bf16.gmra.mrb[0].mxu0 %v5377
    %v5527 = vpop.f32.mrb[0].mxu0
    %v5528 = vadd.f32 0.0, %v5527
    %v5529 = vpop.f32.mrb[0].mxu0
    %v5530 = vadd.f32 0.0, %v5529
    %v5531 = vpop.f32.mrb[0].mxu0
    %v5532 = vadd.f32 0.0, %v5531
    %v5533 = vpop.f32.mrb[0].mxu0
    %v5534 = vadd.f32 0.0, %v5533
    %5535 = vmatprep.mubr.bf16.mxu0 0
    %5536 = vmatmul.mubr.bf16.gmra.mrb[0].mxu0 %v5380
    %v5537 = vpop.f32.mrb[0].mxu0
    %v5538 = vadd.f32 0.0, %v5537
    %v5539 = vpop.f32.mrb[0].mxu0
    %v5540 = vadd.f32 0.0, %v5539
    %v5541 = vpop.f32.mrb[0].mxu0
    %v5542 = vadd.f32 0.0, %v5541
    %v5543 = vpop.f32.mrb[0].mxu0
    %v5544 = vadd.f32 0.0, %v5543
    %5545 = vmatprep.mubr.bf16.mxu0 0
    %5546 = vmatmul.mubr.bf16.gmra.mrb[0].mxu0 %v5383
    %v5547 = vpop.f32.mrb[0].mxu0
    %v5548 = vadd.f32 0.0, %v5547
    %v5549 = vpop.f32.mrb[0].mxu0
    %v5550 = vadd.f32 0.0, %v5549
    %v5551 = vpop.f32.mrb[0].mxu0
    %v5552 = vadd.f32 0.0, %v5551
    %v5553 = vpop.f32.mrb[0].mxu0
    %v5554 = vadd.f32 0.0, %v5553
    %5555 = vmatprep.mubr.bf16.mxu0 0
    %5556 = vmatmul.mubr.bf16.gmra.mrb[0].mxu0 %v5386
    %v5557 = vpop.f32.mrb[0].mxu0
    %v5558 = vadd.f32 0.0, %v5557
    %v5559 = vpop.f32.mrb[0].mxu0
    %v5560 = vadd.f32 0.0, %v5559
    %v5561 = vpop.f32.mrb[0].mxu0
    %v5562 = vadd.f32 0.0, %v5561
    %v5563 = vpop.f32.mrb[0].mxu0
    %v5564 = vadd.f32 0.0, %v5563
    %5565 = vmatprep.mubr.bf16.mxu0 0
    %5566 = vmatmul.mubr.bf16.gmra.mrb[0].mxu0 %v5389
    %v5567 = vpop.f32.mrb[0].mxu0
    %v5568 = vadd.f32 0.0, %v5567
    %v5569 = vpop.f32.mrb[0].mxu0
    %v5570 = vadd.f32 0.0, %v5569
    %v5571 = vpop.f32.mrb[0].mxu0
    %v5572 = vadd.f32 0.0, %v5571
    %v5573 = vpop.f32.mrb[0].mxu0
    %v5574 = vadd.f32 0.0, %v5573
    %5575 = vmatprep.mubr.bf16.mxu0 0
    %5576 = vmatmul.mubr.bf16.gmra.mrb[0].mxu0 %v5392
    %v5577 = vpop.f32.mrb[0].mxu0
    %v5578 = vadd.f32 0.0, %v5577
    %v5579 = vpop.f32.mrb[0].mxu0
    %v5580 = vadd.f32 0.0, %v5579
    %v5581 = vpop.f32.mrb[0].mxu0
    %v5582 = vadd.f32 0.0, %v5581
    %v5583 = vpop.f32.mrb[0].mxu0
    %v5584 = vadd.f32 0.0, %v5583
    %5585 = vmatprep.mubr.bf16.mxu0 0
    %5586 = vmatmul.mubr.bf16.gmra.mrb[0].mxu0 %v5395
    %v5587 = vpop.f32.mrb[0].mxu0
    %v5588 = vadd.f32 0.0, %v5587
    %v5589 = vpop.f32.mrb[0].mxu0
    %v5590 = vadd.f32 0.0, %v5589
    %v5591 = vpop.f32.mrb[0].mxu0
    %v5592 = vadd.f32 0.0, %v5591
    %v5593 = vpop.f32.mrb[0].mxu0
    %v5594 = vadd.f32 0.0, %v5593
    %5595 = vmatprep.mubr.bf16.mxu0 0
    %5596 = vmatmul.mubr.bf16.gmra.mrb[0].mxu0 %v5398
    %v5597 = vpop.f32.mrb[0].mxu0
    %v5598 = vadd.f32 0.0, %v5597
    %v5599 = vpop.f32.mrb[0].mxu0
    %v5600 = vadd.f32 0.0, %v5599
    %v5601 = vpop.f32.mrb[0].mxu0
    %v5602 = vadd.f32 0.0, %v5601
    %v5603 = vpop.f32.mrb[0].mxu0
    %v5604 = vadd.f32 0.0, %v5603
    %5605 = vmatprep.mubr.bf16.mxu0 0
    %5606 = vmatmul.mubr.bf16.gmra.mrb[0].mxu0 %v5401
    %v5607 = vpop.f32.mrb[0].mxu0
    %v5608 = vadd.f32 0.0, %v5607
    %v5609 = vpop.f32.mrb[0].mxu0
    %v5610 = vadd.f32 0.0, %v5609
    %v5611 = vpop.f32.mrb[0].mxu0
    %v5612 = vadd.f32 0.0, %v5611
    %v5613 = vpop.f32.mrb[0].mxu0
    %v5614 = vadd.f32 0.0, %v5613
    %5615 = vmatprep.mubr.bf16.mxu0 0
    %5616 = vmatmul.mubr.bf16.gmra.mrb[0].mxu0 %v5404
    %v5617 = vpop.f32.mrb[0].mxu0
    %v5618 = vadd.f32 0.0, %v5617
    %v5619 = vpop.f32.mrb[0].mxu0
    %v5620 = vadd.f32 0.0, %v5619
    %v5621 = vpop.f32.mrb[0].mxu0
    %v5622 = vadd.f32 0.0, %v5621
    %v5623 = vpop.f32.mrb[0].mxu0
    %v5624 = vadd.f32 0.0, %v5623
    %5625 = vmatprep.mubr.bf16.mxu0 0
    %5626 = vmatmul.mubr.bf16.gmra.mrb[0].mxu0 %v5407
    %v5627 = vpop.f32.mrb[0].mxu0
    %v5628 = vadd.f32 0.0, %v5627
    %v5629 = vpop.f32.mrb[0].mxu0
    %v5630 = vadd.f32 0.0, %v5629
    %v5631 = vpop.f32.mrb[0].mxu0
    %v5632 = vadd.f32 0.0, %v5631
    %v5633 = vpop.f32.mrb[0].mxu0
    %v5634 = vadd.f32 0.0, %v5633
    %5635 = vmatprep.mubr.bf16.mxu0 0
    %5636 = vmatmul.mubr.bf16.gmra.mrb[0].mxu0 %v5410
    %v5637 = vpop.f32.mrb[0].mxu0
    %v5638 = vadd.f32 0.0, %v5637
    %v5639 = vpop.f32.mrb[0].mxu0
    %v5640 = vadd.f32 0.0, %v5639
    %v5641 = vpop.f32.mrb[0].mxu0
    %v5642 = vadd.f32 0.0, %v5641
    %v5643 = vpop.f32.mrb[0].mxu0
    %v5644 = vadd.f32 0.0, %v5643
    %5645 = vmatprep.mubr.bf16.mxu0 0
    %5646 = vmatmul.mubr.bf16.gmra.mrb[0].mxu0 %v5413
    %v5647 = vpop.f32.mrb[0].mxu0
    %v5648 = vadd.f32 0.0, %v5647
    %v5649 = vpop.f32.mrb[0].mxu0
    %v5650 = vadd.f32 0.0, %v5649
    %v5651 = vpop.f32.mrb[0].mxu0
    %v5652 = vadd.f32 0.0, %v5651
    %v5653 = vpop.f32.mrb[0].mxu0
    %v5654 = vadd.f32 0.0, %v5653
    %5655 = vmatprep.mubr.bf16.mxu0 0
    %5656 = vmatmul.mubr.bf16.gmra.mrb[0].mxu0 %v5416
    %v5657 = vpop.f32.mrb[0].mxu0
    %v5658 = vadd.f32 0.0, %v5657
    %v5659 = vpop.f32.mrb[0].mxu0
    %v5660 = vadd.f32 0.0, %v5659
    %v5661 = vpop.f32.mrb[0].mxu0
    %v5662 = vadd.f32 0.0, %v5661
    %v5663 = vpop.f32.mrb[0].mxu0
    %v5664 = vadd.f32 0.0, %v5663
    %5665 = vmatprep.mubr.bf16.mxu0 0
    %5666 = vmatmul.mubr.bf16.gmra.mrb[0].mxu0 %v5419
    %v5667 = vpop.f32.mrb[0].mxu0
    %v5668 = vadd.f32 0.0, %v5667
    %v5669 = vpop.f32.mrb[0].mxu0
    %v5670 = vadd.f32 0.0, %v5669
    %v5671 = vpop.f32.mrb[0].mxu0
    %v5672 = vadd.f32 0.0, %v5671
    %v5673 = vpop.f32.mrb[0].mxu0
    %v5674 = vadd.f32 0.0, %v5673
    %5675 = vmatprep.mubr.bf16.mxu0 0
    %5676 = vmatmul.mubr.bf16.gmra.mrb[0].mxu0 %v5422
    %v5677 = vpop.f32.mrb[0].mxu0
    %v5678 = vadd.f32 0.0, %v5677
    %v5679 = vpop.f32.mrb[0].mxu0
    %v5680 = vadd.f32 0.0, %v5679
    %v5681 = vpop.f32.mrb[0].mxu0
    %v5682 = vadd.f32 0.0, %v5681
    %v5683 = vpop.f32.mrb[0].mxu0
    %v5684 = vadd.f32 0.0, %v5683
    %5685 = vmatprep.mubr.bf16.mxu0 0
    %5686 = vmatmul.mubr.bf16.gmra.mrb[0].mxu0 %v5425
    %v5687 = vpop.f32.mrb[0].mxu0
    %v5688 = vadd.f32 0.0, %v5687
    %v5689 = vpop.f32.mrb[0].mxu0
    %v5690 = vadd.f32 0.0, %v5689
    %v5691 = vpop.f32.mrb[0].mxu0
    %v5692 = vadd.f32 0.0, %v5691
    %v5693 = vpop.f32.mrb[0].mxu0
    %v5694 = vadd.f32 0.0, %v5693
    %5695 = vmatprep.mubr.bf16.mxu0 0
    %5696 = vmatmul.mubr.bf16.gmra.mrb[0].mxu0 %v5428
    %v5697 = vpop.f32.mrb[0].mxu0
    %v5698 = vadd.f32 0.0, %v5697
    %v5699 = vpop.f32.mrb[0].mxu0
    %v5700 = vadd.f32 0.0, %v5699
    %v5701 = vpop.f32.mrb[0].mxu0
    %v5702 = vadd.f32 0.0, %v5701
    %v5703 = vpop.f32.mrb[0].mxu0
    %v5704 = vadd.f32 0.0, %v5703
    %5705 = vmatprep.mubr.bf16.mxu0 0
    %5706 = vmatmul.mubr.bf16.gmra.mrb[0].mxu0 %v5431
    %v5707 = vpop.f32.mrb[0].mxu0
    %v5708 = vadd.f32 0.0, %v5707
    %v5709 = vpop.f32.mrb[0].mxu0
    %v5710 = vadd.f32 0.0, %v5709
    %v5711 = vpop.f32.mrb[0].mxu0
    %v5712 = vadd.f32 0.0, %v5711
    %v5713 = vpop.f32.mrb[0].mxu0
    %v5714 = vadd.f32 0.0, %v5713
    %5715 = vmatprep.mubr.bf16.mxu0 0
    %5716 = vmatmul.mubr.bf16.gmra.mrb[0].mxu0 %v5434
    %v5717 = vpop.f32.mrb[0].mxu0
    %v5718 = vadd.f32 0.0, %v5717
    %v5719 = vpop.f32.mrb[0].mxu0
    %v5720 = vadd.f32 0.0, %v5719
    %v5721 = vpop.f32.mrb[0].mxu0
    %v5722 = vadd.f32 0.0, %v5721
    %v5723 = vpop.f32.mrb[0].mxu0
    %v5724 = vadd.f32 0.0, %v5723
    %5725 = vmatprep.mubr.bf16.mxu0 0
    %5726 = vmatmul.mubr.bf16.gmra.mrb[0].mxu0 %v5437
    %v5727 = vpop.f32.mrb[0].mxu0
    %v5728 = vadd.f32 0.0, %v5727
    %v5729 = vpop.f32.mrb[0].mxu0
    %v5730 = vadd.f32 0.0, %v5729
    %v5731 = vpop.f32.mrb[0].mxu0
    %v5732 = vadd.f32 0.0, %v5731
    %v5733 = vpop.f32.mrb[0].mxu0
    %v5734 = vadd.f32 0.0, %v5733
    %5735 = vmatprep.mubr.bf16.mxu0 0
    %5736 = vmatmul.mubr.bf16.gmra.mrb[0].mxu0 %v5440
    %v5737 = vpop.f32.mrb[0].mxu0
    %v5738 = vadd.f32 0.0, %v5737
    %v5739 = vpop.f32.mrb[0].mxu0
    %v5740 = vadd.f32 0.0, %v5739
    %v5741 = vpop.f32.mrb[0].mxu0
    %v5742 = vadd.f32 0.0, %v5741
    %v5743 = vpop.f32.mrb[0].mxu0
    %v5744 = vadd.f32 0.0, %v5743
    %5745 = vmatprep.mubr.bf16.mxu0 0
    %5746 = vmatmul.mubr.bf16.gmra.mrb[0].mxu0 %v5443
    %v5747 = vpop.f32.mrb[0].mxu0
    %v5748 = vadd.f32 0.0, %v5747
    %v5749 = vpop.f32.mrb[0].mxu0
    %v5750 = vadd.f32 0.0, %v5749
    %v5751 = vpop.f32.mrb[0].mxu0
    %v5752 = vadd.f32 0.0, %v5751
    %v5753 = vpop.f32.mrb[0].mxu0
    %v5754 = vadd.f32 0.0, %v5753
    %5755 = vmatprep.mubr.bf16.mxu0 0
    %5756 = vmatmul.mubr.bf16.gmra.mrb[0].mxu0 %v5446
    %v5757 = vpop.f32.mrb[0].mxu0
    %v5758 = vadd.f32 0.0, %v5757
    %v5759 = vpop.f32.mrb[0].mxu0
    %v5760 = vadd.f32 0.0, %v5759
    %v5761 = vpop.f32.mrb[0].mxu0
    %v5762 = vadd.f32 0.0, %v5761
    %v5763 = vpop.f32.mrb[0].mxu0
    %v5764 = vadd.f32 0.0, %v5763
    %5765 = vmatprep.mubr.bf16.mxu0 0
    %5766 = vmatmul.mubr.bf16.gmra.mrb[0].mxu0 %v5449
    %v5767 = vpop.f32.mrb[0].mxu0
    %v5768 = vadd.f32 0.0, %v5767
    %v5769 = vpop.f32.mrb[0].mxu0
    %v5770 = vadd.f32 0.0, %v5769
    %v5771 = vpop.f32.mrb[0].mxu0
    %v5772 = vadd.f32 0.0, %v5771
    %v5773 = vpop.f32.mrb[0].mxu0
    %v5774 = vadd.f32 0.0, %v5773
    %5775 = vmatprep.mubr.bf16.mxu0 0
    %5776 = vmatmul.mubr.bf16.gmra.mrb[0].mxu0 %v5452
    %v5777 = vpop.f32.mrb[0].mxu0
    %v5778 = vadd.f32 0.0, %v5777
    %v5779 = vpop.f32.mrb[0].mxu0
    %v5780 = vadd.f32 0.0, %v5779
    %v5781 = vpop.f32.mrb[0].mxu0
    %v5782 = vadd.f32 0.0, %v5781
    %v5783 = vpop.f32.mrb[0].mxu0
    %v5784 = vadd.f32 0.0, %v5783
    %5785 = vmatprep.mubr.bf16.mxu0 0
    %5786 = vmatmul.mubr.bf16.gmra.mrb[0].mxu0 %v5455
    %v5787 = vpop.f32.mrb[0].mxu0
    %v5788 = vadd.f32 0.0, %v5787
    %v5789 = vpop.f32.mrb[0].mxu0
    %v5790 = vadd.f32 0.0, %v5789
    %v5791 = vpop.f32.mrb[0].mxu0
    %v5792 = vadd.f32 0.0, %v5791
    %v5793 = vpop.f32.mrb[0].mxu0
    %v5794 = vadd.f32 0.0, %v5793
    %5795 = vmatprep.mubr.bf16.mxu0 0
    %5796 = vmatmul.mubr.bf16.gmra.mrb[0].mxu0 %v5458
    %v5797 = vpop.f32.mrb[0].mxu0
    %v5798 = vadd.f32 0.0, %v5797
    %v5799 = vpop.f32.mrb[0].mxu0
    %v5800 = vadd.f32 0.0, %v5799
    %v5801 = vpop.f32.mrb[0].mxu0
    %v5802 = vadd.f32 0.0, %v5801
    %v5803 = vpop.f32.mrb[0].mxu0
    %v5804 = vadd.f32 0.0, %v5803
    %5805 = vmatprep.mubr.bf16.mxu0 0
    %5806 = vmatmul.mubr.bf16.gmra.mrb[0].mxu0 %v5461
    %v5807 = vpop.f32.mrb[0].mxu0
    %v5808 = vadd.f32 0.0, %v5807
    %v5809 = vpop.f32.mrb[0].mxu0
    %v5810 = vadd.f32 0.0, %v5809
    %v5811 = vpop.f32.mrb[0].mxu0
    %v5812 = vadd.f32 0.0, %v5811
    %v5813 = vpop.f32.mrb[0].mxu0
    %v5814 = vadd.f32 0.0, %v5813
    %5815 = vdwg.mxu0
    %v5816 = vadd.f32 %v5498, %v5502
    %v5817 = vadd.f32 %v5816, %v5508
    %v5818 = vadd.f32 %v5817, %v5512
    %v5819 = vadd.f32 %v5818, %v5518
    %v5820 = vadd.f32 %v5819, %v5522
    %v5821 = vadd.f32 %v5820, %v5528
    %v5822 = vadd.f32 %v5821, %v5532
    %v5823 = vadd.f32 %v5822, %v5538
    %v5824 = vadd.f32 %v5823, %v5542
    %v5825 = vadd.f32 %v5824, %v5548
    %v5826 = vadd.f32 %v5825, %v5552
    %v5827 = vadd.f32 %v5826, %v5558
    %v5828 = vadd.f32 %v5827, %v5562
    %v5829 = vadd.f32 %v5828, %v5568
    %v5830 = vadd.f32 %v5829, %v5572
    %v5831 = vadd.f32 %v5830, %v5578
    %v5832 = vadd.f32 %v5831, %v5582
    %v5833 = vadd.f32 %v5832, %v5588
    %v5834 = vadd.f32 %v5833, %v5592
    %v5835 = vadd.f32 %v5834, %v5598
    %v5836 = vadd.f32 %v5835, %v5602
    %v5837 = vadd.f32 %v5836, %v5608
    %v5838 = vadd.f32 %v5837, %v5612
    %v5839 = vadd.f32 %v5838, %v5618
    %v5840 = vadd.f32 %v5839, %v5622
    %v5841 = vadd.f32 %v5840, %v5628
    %v5842 = vadd.f32 %v5841, %v5632
    %v5843 = vadd.f32 %v5842, %v5638
    %v5844 = vadd.f32 %v5843, %v5642
    %v5845 = vadd.f32 %v5844, %v5648
    %v5846 = vadd.f32 %v5845, %v5652
    %v5847 = vadd.f32 %v5846, %v5658
    %v5848 = vadd.f32 %v5847, %v5662
    %v5849 = vadd.f32 %v5848, %v5668
    %v5850 = vadd.f32 %v5849, %v5672
    %v5851 = vadd.f32 %v5850, %v5678
    %v5852 = vadd.f32 %v5851, %v5682
    %v5853 = vadd.f32 %v5852, %v5688
    %v5854 = vadd.f32 %v5853, %v5692
    %v5855 = vadd.f32 %v5854, %v5698
    %v5856 = vadd.f32 %v5855, %v5702
    %v5857 = vadd.f32 %v5856, %v5708
    %v5858 = vadd.f32 %v5857, %v5712
    %v5859 = vadd.f32 %v5858, %v5718
    %v5860 = vadd.f32 %v5859, %v5722
    %v5861 = vadd.f32 %v5860, %v5728
    %v5862 = vadd.f32 %v5861, %v5732
    %v5863 = vadd.f32 %v5862, %v5738
    %v5864 = vadd.f32 %v5863, %v5742
    %v5865 = vadd.f32 %v5864, %v5748
    %v5866 = vadd.f32 %v5865, %v5752
    %v5867 = vadd.f32 %v5866, %v5758
    %v5868 = vadd.f32 %v5867, %v5762
    %v5869 = vadd.f32 %v5868, %v5768
    %v5870 = vadd.f32 %v5869, %v5772
    %v5871 = vadd.f32 %v5870, %v5778
    %v5872 = vadd.f32 %v5871, %v5782
    %v5873 = vadd.f32 %v5872, %v5788
    %v5874 = vadd.f32 %v5873, %v5792
    %v5875 = vadd.f32 %v5874, %v5798
    %v5876 = vadd.f32 %v5875, %v5802
    %v5877 = vadd.f32 %v5876, %v5808
    %v5878 = vadd.f32 %v5877, %v5812
    %v5879 = vrot.slane %v5878, 4
    %v5880 = vadd.f32 %v5878, %v5879
    %v5881 = vrot.slane %v5880, 2
    %v5882 = vadd.f32 %v5880, %v5881
    %v5883 = vrot.slane %v5882, 1
    %v5884 = vadd.f32 %v5882, %v5883
    %v5885 = vadd.f32 %v5500, %v5504
    %v5886 = vadd.f32 %v5885, %v5510
    %v5887 = vadd.f32 %v5886, %v5514
    %v5888 = vadd.f32 %v5887, %v5520
    %v5889 = vadd.f32 %v5888, %v5524
    %v5890 = vadd.f32 %v5889, %v5530
    %v5891 = vadd.f32 %v5890, %v5534
    %v5892 = vadd.f32 %v5891, %v5540
    %v5893 = vadd.f32 %v5892, %v5544
    %v5894 = vadd.f32 %v5893, %v5550
    %v5895 = vadd.f32 %v5894, %v5554
    %v5896 = vadd.f32 %v5895, %v5560
    %v5897 = vadd.f32 %v5896, %v5564
    %v5898 = vadd.f32 %v5897, %v5570
    %v5899 = vadd.f32 %v5898, %v5574
    %v5900 = vadd.f32 %v5899, %v5580
    %v5901 = vadd.f32 %v5900, %v5584
    %v5902 = vadd.f32 %v5901, %v5590
    %v5903 = vadd.f32 %v5902, %v5594
    %v5904 = vadd.f32 %v5903, %v5600
    %v5905 = vadd.f32 %v5904, %v5604
    %v5906 = vadd.f32 %v5905, %v5610
    %v5907 = vadd.f32 %v5906, %v5614
    %v5908 = vadd.f32 %v5907, %v5620
    %v5909 = vadd.f32 %v5908, %v5624
    %v5910 = vadd.f32 %v5909, %v5630
    %v5911 = vadd.f32 %v5910, %v5634
    %v5912 = vadd.f32 %v5911, %v5640
    %v5913 = vadd.f32 %v5912, %v5644
    %v5914 = vadd.f32 %v5913, %v5650
    %v5915 = vadd.f32 %v5914, %v5654
    %v5916 = vadd.f32 %v5915, %v5660
    %v5917 = vadd.f32 %v5916, %v5664
    %v5918 = vadd.f32 %v5917, %v5670
    %v5919 = vadd.f32 %v5918, %v5674
    %v5920 = vadd.f32 %v5919, %v5680
    %v5921 = vadd.f32 %v5920, %v5684
    %v5922 = vadd.f32 %v5921, %v5690
    %v5923 = vadd.f32 %v5922, %v5694
    %v5924 = vadd.f32 %v5923, %v5700
    %v5925 = vadd.f32 %v5924, %v5704
    %v5926 = vadd.f32 %v5925, %v5710
    %v5927 = vadd.f32 %v5926, %v5714
    %v5928 = vadd.f32 %v5927, %v5720
    %v5929 = vadd.f32 %v5928, %v5724
    %v5930 = vadd.f32 %v5929, %v5730
    %v5931 = vadd.f32 %v5930, %v5734
    %v5932 = vadd.f32 %v5931, %v5740
    %v5933 = vadd.f32 %v5932, %v5744
    %v5934 = vadd.f32 %v5933, %v5750
    %v5935 = vadd.f32 %v5934, %v5754
    %v5936 = vadd.f32 %v5935, %v5760
    %v5937 = vadd.f32 %v5936, %v5764
    %v5938 = vadd.f32 %v5937, %v5770
    %v5939 = vadd.f32 %v5938, %v5774
    %v5940 = vadd.f32 %v5939, %v5780
    %v5941 = vadd.f32 %v5940, %v5784
    %v5942 = vadd.f32 %v5941, %v5790
    %v5943 = vadd.f32 %v5942, %v5794
    %v5944 = vadd.f32 %v5943, %v5800
    %v5945 = vadd.f32 %v5944, %v5804
    %v5946 = vadd.f32 %v5945, %v5810
    %v5947 = vadd.f32 %v5946, %v5814
    %v5948 = vrot.slane %v5947, 4
    %v5949 = vadd.f32 %v5947, %v5948
    %v5950 = vrot.slane %v5949, 2
    %v5951 = vadd.f32 %v5949, %v5950
    %v5952 = vrot.slane %v5951, 1
    %v5953 = vadd.f32 %v5951, %v5952
    %v5954 = vmul.f32 %v5884, 0.001953125
    %v5955 = vmul.f32 %v5953, 0.001953125
    %v5956 = vmul.f32 %v5498, %v5498
    %v5957 = vmul.f32 %v5500, %v5500
    %v5958 = vmul.f32 %v5502, %v5502
    %v5959 = vmul.f32 %v5504, %v5504
    %v5960 = vmul.f32 %v5508, %v5508
    %v5961 = vmul.f32 %v5510, %v5510
    %v5962 = vmul.f32 %v5512, %v5512
    %v5963 = vmul.f32 %v5514, %v5514
    %v5964 = vmul.f32 %v5518, %v5518
    %v5965 = vmul.f32 %v5520, %v5520
    %v5966 = vmul.f32 %v5522, %v5522
    %v5967 = vmul.f32 %v5524, %v5524
    %v5968 = vmul.f32 %v5528, %v5528
    %v5969 = vmul.f32 %v5530, %v5530
    %v5970 = vmul.f32 %v5532, %v5532
    %v5971 = vmul.f32 %v5534, %v5534
    %v5972 = vmul.f32 %v5538, %v5538
    %v5973 = vmul.f32 %v5540, %v5540
    %v5974 = vmul.f32 %v5542, %v5542
    %v5975 = vmul.f32 %v5544, %v5544
    %v5976 = vmul.f32 %v5548, %v5548
    %v5977 = vmul.f32 %v5550, %v5550
    %v5978 = vmul.f32 %v5552, %v5552
    %v5979 = vmul.f32 %v5554, %v5554
    %v5980 = vmul.f32 %v5558, %v5558
    %v5981 = vmul.f32 %v5560, %v5560
    %v5982 = vmul.f32 %v5562, %v5562
    %v5983 = vmul.f32 %v5564, %v5564
    %v5984 = vmul.f32 %v5568, %v5568
    %v5985 = vmul.f32 %v5570, %v5570
    %v5986 = vmul.f32 %v5572, %v5572
    %v5987 = vmul.f32 %v5574, %v5574
    %v5988 = vmul.f32 %v5578, %v5578
    %v5989 = vmul.f32 %v5580, %v5580
    %v5990 = vmul.f32 %v5582, %v5582
    %v5991 = vmul.f32 %v5584, %v5584
    %v5992 = vmul.f32 %v5588, %v5588
    %v5993 = vmul.f32 %v5590, %v5590
    %v5994 = vmul.f32 %v5592, %v5592
    %v5995 = vmul.f32 %v5594, %v5594
    %v5996 = vmul.f32 %v5598, %v5598
    %v5997 = vmul.f32 %v5600, %v5600
    %v5998 = vmul.f32 %v5602, %v5602
    %v5999 = vmul.f32 %v5604, %v5604
    %v6000 = vmul.f32 %v5608, %v5608
    %v6001 = vmul.f32 %v5610, %v5610
    %v6002 = vmul.f32 %v5612, %v5612
    %v6003 = vmul.f32 %v5614, %v5614
    %v6004 = vmul.f32 %v5618, %v5618
    %v6005 = vmul.f32 %v5620, %v5620
    %v6006 = vmul.f32 %v5622, %v5622
    %v6007 = vmul.f32 %v5624, %v5624
    %v6008 = vmul.f32 %v5628, %v5628
    %v6009 = vmul.f32 %v5630, %v5630
    %v6010 = vmul.f32 %v5632, %v5632
    %v6011 = vmul.f32 %v5634, %v5634
    %v6012 = vmul.f32 %v5638, %v5638
    %v6013 = vmul.f32 %v5640, %v5640
    %v6014 = vmul.f32 %v5642, %v5642
    %v6015 = vmul.f32 %v5644, %v5644
    %v6016 = vmul.f32 %v5648, %v5648
    %v6017 = vmul.f32 %v5650, %v5650
    %v6018 = vmul.f32 %v5652, %v5652
    %v6019 = vmul.f32 %v5654, %v5654
    %v6020 = vmul.f32 %v5658, %v5658
    %v6021 = vmul.f32 %v5660, %v5660
    %v6022 = vmul.f32 %v5662, %v5662
    %v6023 = vmul.f32 %v5664, %v5664
    %v6024 = vmul.f32 %v5668, %v5668
    %v6025 = vmul.f32 %v5670, %v5670
    %v6026 = vmul.f32 %v5672, %v5672
    %v6027 = vmul.f32 %v5674, %v5674
    %v6028 = vmul.f32 %v5678, %v5678
    %v6029 = vmul.f32 %v5680, %v5680
    %v6030 = vmul.f32 %v5682, %v5682
    %v6031 = vmul.f32 %v5684, %v5684
    %v6032 = vmul.f32 %v5688, %v5688
    %v6033 = vmul.f32 %v5690, %v5690
    %v6034 = vmul.f32 %v5692, %v5692
    %v6035 = vmul.f32 %v5694, %v5694
    %v6036 = vmul.f32 %v5698, %v5698
    %v6037 = vmul.f32 %v5700, %v5700
    %v6038 = vmul.f32 %v5702, %v5702
    %v6039 = vmul.f32 %v5704, %v5704
    %v6040 = vmul.f32 %v5708, %v5708
    %v6041 = vmul.f32 %v5710, %v5710
    %v6042 = vmul.f32 %v5712, %v5712
    %v6043 = vmul.f32 %v5714, %v5714
    %v6044 = vmul.f32 %v5718, %v5718
    %v6045 = vmul.f32 %v5720, %v5720
    %v6046 = vmul.f32 %v5722, %v5722
    %v6047 = vmul.f32 %v5724, %v5724
    %v6048 = vmul.f32 %v5728, %v5728
    %v6049 = vmul.f32 %v5730, %v5730
    %v6050 = vmul.f32 %v5732, %v5732
    %v6051 = vmul.f32 %v5734, %v5734
    %v6052 = vmul.f32 %v5738, %v5738
    %v6053 = vmul.f32 %v5740, %v5740
    %v6054 = vmul.f32 %v5742, %v5742
    %v6055 = vmul.f32 %v5744, %v5744
    %v6056 = vmul.f32 %v5748, %v5748
    %v6057 = vmul.f32 %v5750, %v5750
    %v6058 = vmul.f32 %v5752, %v5752
    %v6059 = vmul.f32 %v5754, %v5754
    %v6060 = vmul.f32 %v5758, %v5758
    %v6061 = vmul.f32 %v5760, %v5760
    %v6062 = vmul.f32 %v5762, %v5762
    %v6063 = vmul.f32 %v5764, %v5764
    %v6064 = vmul.f32 %v5768, %v5768
    %v6065 = vmul.f32 %v5770, %v5770
    %v6066 = vmul.f32 %v5772, %v5772
    %v6067 = vmul.f32 %v5774, %v5774
    %v6068 = vmul.f32 %v5778, %v5778
    %v6069 = vmul.f32 %v5780, %v5780
    %v6070 = vmul.f32 %v5782, %v5782
    %v6071 = vmul.f32 %v5784, %v5784
    %v6072 = vmul.f32 %v5788, %v5788
    %v6073 = vmul.f32 %v5790, %v5790
    %v6074 = vmul.f32 %v5792, %v5792
    %v6075 = vmul.f32 %v5794, %v5794
    %v6076 = vmul.f32 %v5798, %v5798
    %v6077 = vmul.f32 %v5800, %v5800
    %v6078 = vmul.f32 %v5802, %v5802
    %v6079 = vmul.f32 %v5804, %v5804
    %v6080 = vmul.f32 %v5808, %v5808
    %v6081 = vmul.f32 %v5810, %v5810
    %v6082 = vmul.f32 %v5812, %v5812
    %v6083 = vmul.f32 %v5814, %v5814
    %v6084 = vadd.f32 %v5956, %v5958
    %v6085 = vadd.f32 %v6084, %v5960
    %v6086 = vadd.f32 %v6085, %v5962
    %v6087 = vadd.f32 %v6086, %v5964
    %v6088 = vadd.f32 %v6087, %v5966
    %v6089 = vadd.f32 %v6088, %v5968
    %v6090 = vadd.f32 %v6089, %v5970
    %v6091 = vadd.f32 %v6090, %v5972
    %v6092 = vadd.f32 %v6091, %v5974
    %v6093 = vadd.f32 %v6092, %v5976
    %v6094 = vadd.f32 %v6093, %v5978
    %v6095 = vadd.f32 %v6094, %v5980
    %v6096 = vadd.f32 %v6095, %v5982
    %v6097 = vadd.f32 %v6096, %v5984
    %v6098 = vadd.f32 %v6097, %v5986
    %v6099 = vadd.f32 %v6098, %v5988
    %v6100 = vadd.f32 %v6099, %v5990
    %v6101 = vadd.f32 %v6100, %v5992
    %v6102 = vadd.f32 %v6101, %v5994
    %v6103 = vadd.f32 %v6102, %v5996
    %v6104 = vadd.f32 %v6103, %v5998
    %v6105 = vadd.f32 %v6104, %v6000
    %v6106 = vadd.f32 %v6105, %v6002
    %v6107 = vadd.f32 %v6106, %v6004
    %v6108 = vadd.f32 %v6107, %v6006
    %v6109 = vadd.f32 %v6108, %v6008
    %v6110 = vadd.f32 %v6109, %v6010
    %v6111 = vadd.f32 %v6110, %v6012
    %v6112 = vadd.f32 %v6111, %v6014
    %v6113 = vadd.f32 %v6112, %v6016
    %v6114 = vadd.f32 %v6113, %v6018
    %v6115 = vadd.f32 %v6114, %v6020
    %v6116 = vadd.f32 %v6115, %v6022
    %v6117 = vadd.f32 %v6116, %v6024
    %v6118 = vadd.f32 %v6117, %v6026
    %v6119 = vadd.f32 %v6118, %v6028
    %v6120 = vadd.f32 %v6119, %v6030
    %v6121 = vadd.f32 %v6120, %v6032
    %v6122 = vadd.f32 %v6121, %v6034
    %v6123 = vadd.f32 %v6122, %v6036
    %v6124 = vadd.f32 %v6123, %v6038
    %v6125 = vadd.f32 %v6124, %v6040
    %v6126 = vadd.f32 %v6125, %v6042
    %v6127 = vadd.f32 %v6126, %v6044
    %v6128 = vadd.f32 %v6127, %v6046
    %v6129 = vadd.f32 %v6128, %v6048
    %v6130 = vadd.f32 %v6129, %v6050
    %v6131 = vadd.f32 %v6130, %v6052
    %v6132 = vadd.f32 %v6131, %v6054
    %v6133 = vadd.f32 %v6132, %v6056
    %v6134 = vadd.f32 %v6133, %v6058
    %v6135 = vadd.f32 %v6134, %v6060
    %v6136 = vadd.f32 %v6135, %v6062
    %v6137 = vadd.f32 %v6136, %v6064
    %v6138 = vadd.f32 %v6137, %v6066
    %v6139 = vadd.f32 %v6138, %v6068
    %v6140 = vadd.f32 %v6139, %v6070
    %v6141 = vadd.f32 %v6140, %v6072
    %v6142 = vadd.f32 %v6141, %v6074
    %v6143 = vadd.f32 %v6142, %v6076
    %v6144 = vadd.f32 %v6143, %v6078
    %v6145 = vadd.f32 %v6144, %v6080
    %v6146 = vadd.f32 %v6145, %v6082
    %v6147 = vrot.slane %v6146, 4
    %v6148 = vadd.f32 %v6146, %v6147
    %v6149 = vrot.slane %v6148, 2
    %v6150 = vadd.f32 %v6148, %v6149
    %v6151 = vrot.slane %v6150, 1
    %v6152 = vadd.f32 %v6150, %v6151
    %v6153 = vadd.f32 %v5957, %v5959
    %v6154 = vadd.f32 %v6153, %v5961
    %v6155 = vadd.f32 %v6154, %v5963
    %v6156 = vadd.f32 %v6155, %v5965
    %v6157 = vadd.f32 %v6156, %v5967
    %v6158 = vadd.f32 %v6157, %v5969
    %v6159 = vadd.f32 %v6158, %v5971
    %v6160 = vadd.f32 %v6159, %v5973
    %v6161 = vadd.f32 %v6160, %v5975
    %v6162 = vadd.f32 %v6161, %v5977
    %v6163 = vadd.f32 %v6162, %v5979
    %v6164 = vadd.f32 %v6163, %v5981
    %v6165 = vadd.f32 %v6164, %v5983
    %v6166 = vadd.f32 %v6165, %v5985
    %v6167 = vadd.f32 %v6166, %v5987
    %v6168 = vadd.f32 %v6167, %v5989
    %v6169 = vadd.f32 %v6168, %v5991
    %v6170 = vadd.f32 %v6169, %v5993
    %v6171 = vadd.f32 %v6170, %v5995
    %v6172 = vadd.f32 %v6171, %v5997
    %v6173 = vadd.f32 %v6172, %v5999
    %v6174 = vadd.f32 %v6173, %v6001
    %v6175 = vadd.f32 %v6174, %v6003
    %v6176 = vadd.f32 %v6175, %v6005
    %v6177 = vadd.f32 %v6176, %v6007
    %v6178 = vadd.f32 %v6177, %v6009
    %v6179 = vadd.f32 %v6178, %v6011
    %v6180 = vadd.f32 %v6179, %v6013
    %v6181 = vadd.f32 %v6180, %v6015
    %v6182 = vadd.f32 %v6181, %v6017
    %v6183 = vadd.f32 %v6182, %v6019
    %v6184 = vadd.f32 %v6183, %v6021
    %v6185 = vadd.f32 %v6184, %v6023
    %v6186 = vadd.f32 %v6185, %v6025
    %v6187 = vadd.f32 %v6186, %v6027
    %v6188 = vadd.f32 %v6187, %v6029
    %v6189 = vadd.f32 %v6188, %v6031
    %v6190 = vadd.f32 %v6189, %v6033
    %v6191 = vadd.f32 %v6190, %v6035
    %v6192 = vadd.f32 %v6191, %v6037
    %v6193 = vadd.f32 %v6192, %v6039
    %v6194 = vadd.f32 %v6193, %v6041
    %v6195 = vadd.f32 %v6194, %v6043
    %v6196 = vadd.f32 %v6195, %v6045
    %v6197 = vadd.f32 %v6196, %v6047
    %v6198 = vadd.f32 %v6197, %v6049
    %v6199 = vadd.f32 %v6198, %v6051
    %v6200 = vadd.f32 %v6199, %v6053
    %v6201 = vadd.f32 %v6200, %v6055
    %v6202 = vadd.f32 %v6201, %v6057
    %v6203 = vadd.f32 %v6202, %v6059
    %v6204 = vadd.f32 %v6203, %v6061
    %v6205 = vadd.f32 %v6204, %v6063
    %v6206 = vadd.f32 %v6205, %v6065
    %v6207 = vadd.f32 %v6206, %v6067
    %v6208 = vadd.f32 %v6207, %v6069
    %v6209 = vadd.f32 %v6208, %v6071
    %v6210 = vadd.f32 %v6209, %v6073
    %v6211 = vadd.f32 %v6210, %v6075
    %v6212 = vadd.f32 %v6211, %v6077
    %v6213 = vadd.f32 %v6212, %v6079
    %v6214 = vadd.f32 %v6213, %v6081
    %v6215 = vadd.f32 %v6214, %v6083
    %v6216 = vrot.slane %v6215, 4
    %v6217 = vadd.f32 %v6215, %v6216
    %v6218 = vrot.slane %v6217, 2
    %v6219 = vadd.f32 %v6217, %v6218
    %v6220 = vrot.slane %v6219, 1
    %v6221 = vadd.f32 %v6219, %v6220
    %v6222 = vmul.f32 %v6152, 0.001953125
    %v6223 = vmul.f32 %v6221, 0.001953125
    %v6224 = vmul.f32 %v5954, %v5954
    %v6225 = vmul.f32 %v5955, %v5955
    %v6226 = vsub.f32 %v6222, %v6224
    %v6227 = vsub.f32 %v6223, %v6225
    %v6228 = vld [vmem:[%s8] sm:$0x3]
    %v6229 = vadd.f32 %v6226, 1e-05
    %v6230 = vadd.f32 %v6227, 1e-05
    %v6231 = vrsqrt.pop %v6229
    %v6232 = vrsqrt.pop %v6230
    %v6235 = vcombine.low %v6231, %v6232
    %v6237 = vunpack.c.l.s4 1966171168
    %v6238 = vunpack.c.0.s8 %v6237
    %v6239 = vlaneseq
    %v6240 = vshrl.u32 %v6239, 7
    %v6241 = vsub.s32 %v6238, %v6240
    %v6242 = vrot.slane %v6235, %v6241
    %v6244 = vunpack.c.l.s4 1966171168
    %v6245 = vunpack.c.0.s8 %v6244
    %v6246 = vlaneseq
    %v6247 = vshrl.u32 %v6246, 7
    %v6248 = vsub.s32 %v6245, %v6247
    %v6249 = vrot.slane %v6242, %v6248
    %v6251 = vmul.f32 %v6228, %v6249
    %v6252 = vsub.f32 %v5498, %v5954
    %v6253 = vsub.f32 %v5500, %v5955
    %v6254 = vsub.f32 %v5502, %v5954
    %v6255 = vsub.f32 %v5504, %v5955
    %v6256 = vsub.f32 %v5508, %v5954
    %v6257 = vsub.f32 %v5510, %v5955
    %v6258 = vsub.f32 %v5512, %v5954
    %v6259 = vsub.f32 %v5514, %v5955
    %v6260 = vsub.f32 %v5518, %v5954
    %v6261 = vsub.f32 %v5520, %v5955
    %v6262 = vsub.f32 %v5522, %v5954
    %v6263 = vsub.f32 %v5524, %v5955
    %v6264 = vsub.f32 %v5528, %v5954
    %v6265 = vsub.f32 %v5530, %v5955
    %v6266 = vsub.f32 %v5532, %v5954
    %v6267 = vsub.f32 %v5534, %v5955
    %v6268 = vsub.f32 %v5538, %v5954
    %v6269 = vsub.f32 %v5540, %v5955
    %v6270 = vsub.f32 %v5542, %v5954
    %v6271 = vsub.f32 %v5544, %v5955
    %v6272 = vsub.f32 %v5548, %v5954
    %v6273 = vsub.f32 %v5550, %v5955
    %v6274 = vsub.f32 %v5552, %v5954
    %v6275 = vsub.f32 %v5554, %v5955
    %v6276 = vsub.f32 %v5558, %v5954
    %v6277 = vsub.f32 %v5560, %v5955
    %v6278 = vsub.f32 %v5562, %v5954
    %v6279 = vsub.f32 %v5564, %v5955
    %v6280 = vsub.f32 %v5568, %v5954
    %v6281 = vsub.f32 %v5570, %v5955
    %v6282 = vsub.f32 %v5572, %v5954
    %v6283 = vsub.f32 %v5574, %v5955
    %v6284 = vsub.f32 %v5578, %v5954
    %v6285 = vsub.f32 %v5580, %v5955
    %v6286 = vsub.f32 %v5582, %v5954
    %v6287 = vsub.f32 %v5584, %v5955
    %v6288 = vsub.f32 %v5588, %v5954
    %v6289 = vsub.f32 %v5590, %v5955
    %v6290 = vsub.f32 %v5592, %v5954
    %v6291 = vsub.f32 %v5594, %v5955
    %v6292 = vsub.f32 %v5598, %v5954
    %v6293 = vsub.f32 %v5600, %v5955
    %v6294 = vsub.f32 %v5602, %v5954
    %v6295 = vsub.f32 %v5604, %v5955
    %v6296 = vsub.f32 %v5608, %v5954
    %v6297 = vsub.f32 %v5610, %v5955
    %v6298 = vsub.f32 %v5612, %v5954
    %v6299 = vsub.f32 %v5614, %v5955
    %v6300 = vsub.f32 %v5618, %v5954
    %v6301 = vsub.f32 %v5620, %v5955
    %v6302 = vsub.f32 %v5622, %v5954
    %v6303 = vsub.f32 %v5624, %v5955
    %v6304 = vsub.f32 %v5628, %v5954
    %v6305 = vsub.f32 %v5630, %v5955
    %v6306 = vsub.f32 %v5632, %v5954
    %v6307 = vsub.f32 %v5634, %v5955
    %v6308 = vsub.f32 %v5638, %v5954
    %v6309 = vsub.f32 %v5640, %v5955
    %v6310 = vsub.f32 %v5642, %v5954
    %v6311 = vsub.f32 %v5644, %v5955
    %v6312 = vsub.f32 %v5648, %v5954
    %v6313 = vsub.f32 %v5650, %v5955
    %v6314 = vsub.f32 %v5652, %v5954
    %v6315 = vsub.f32 %v5654, %v5955
    %v6316 = vsub.f32 %v5658, %v5954
    %v6317 = vsub.f32 %v5660, %v5955
    %v6318 = vsub.f32 %v5662, %v5954
    %v6319 = vsub.f32 %v5664, %v5955
    %v6320 = vsub.f32 %v5668, %v5954
    %v6321 = vsub.f32 %v5670, %v5955
    %v6322 = vsub.f32 %v5672, %v5954
    %v6323 = vsub.f32 %v5674, %v5955
    %v6324 = vsub.f32 %v5678, %v5954
    %v6325 = vsub.f32 %v5680, %v5955
    %v6326 = vsub.f32 %v5682, %v5954
    %v6327 = vsub.f32 %v5684, %v5955
    %v6328 = vsub.f32 %v5688, %v5954
    %v6329 = vsub.f32 %v5690, %v5955
    %v6330 = vsub.f32 %v5692, %v5954
    %v6331 = vsub.f32 %v5694, %v5955
    %v6332 = vsub.f32 %v5698, %v5954
    %v6333 = vsub.f32 %v5700, %v5955
    %v6334 = vsub.f32 %v5702, %v5954
    %v6335 = vsub.f32 %v5704, %v5955
    %v6336 = vsub.f32 %v5708, %v5954
    %v6337 = vsub.f32 %v5710, %v5955
    %v6338 = vsub.f32 %v5712, %v5954
    %v6339 = vsub.f32 %v5714, %v5955
    %v6340 = vsub.f32 %v5718, %v5954
    %v6341 = vsub.f32 %v5720, %v5955
    %v6342 = vsub.f32 %v5722, %v5954
    %v6343 = vsub.f32 %v5724, %v5955
    %v6344 = vsub.f32 %v5728, %v5954
    %v6345 = vsub.f32 %v5730, %v5955
    %v6346 = vsub.f32 %v5732, %v5954
    %v6347 = vsub.f32 %v5734, %v5955
    %v6348 = vsub.f32 %v5738, %v5954
    %v6349 = vsub.f32 %v5740, %v5955
    %v6350 = vsub.f32 %v5742, %v5954
    %v6351 = vsub.f32 %v5744, %v5955
    %v6352 = vsub.f32 %v5748, %v5954
    %v6353 = vsub.f32 %v5750, %v5955
    %v6354 = vsub.f32 %v5752, %v5954
    %v6355 = vsub.f32 %v5754, %v5955
    %v6356 = vsub.f32 %v5758, %v5954
    %v6357 = vsub.f32 %v5760, %v5955
    %v6358 = vsub.f32 %v5762, %v5954
    %v6359 = vsub.f32 %v5764, %v5955
    %v6360 = vsub.f32 %v5768, %v5954
    %v6361 = vsub.f32 %v5770, %v5955
    %v6362 = vsub.f32 %v5772, %v5954
    %v6363 = vsub.f32 %v5774, %v5955
    %v6364 = vsub.f32 %v5778, %v5954
    %v6365 = vsub.f32 %v5780, %v5955
    %v6366 = vsub.f32 %v5782, %v5954
    %v6367 = vsub.f32 %v5784, %v5955
    %v6368 = vsub.f32 %v5788, %v5954
    %v6369 = vsub.f32 %v5790, %v5955
    %v6370 = vsub.f32 %v5792, %v5954
    %v6371 = vsub.f32 %v5794, %v5955
    %v6372 = vsub.f32 %v5798, %v5954
    %v6373 = vsub.f32 %v5800, %v5955
    %v6374 = vsub.f32 %v5802, %v5954
    %v6375 = vsub.f32 %v5804, %v5955
    %v6376 = vsub.f32 %v5808, %v5954
    %v6377 = vsub.f32 %v5810, %v5955
    %v6378 = vsub.f32 %v5812, %v5954
    %v6379 = vsub.f32 %v5814, %v5955
    %v6381 = vlaneseq
    %v6382 = vshrl.u32 %v6381, 7
    %v6383 = vsub.s32 0, %v6382
    %v6384 = vrot.slane %v6251, %v6383
    %v6385 = vlaneseq
    %v6386 = vshrl.u32 %v6385, 7
    %v6387 = vsub.s32 1, %v6386
    %v6388 = vrot.slane %v6251, %v6387
    %v6391 = vmul.f32 %v6252, %v6384
    %v6392 = vmul.f32 %v6253, %v6388
    %v6393 = vmul.f32 %v6254, %v6384
    %v6394 = vmul.f32 %v6255, %v6388
    %v6395 = vmul.f32 %v6256, %v6384
    %v6396 = vmul.f32 %v6257, %v6388
    %v6397 = vmul.f32 %v6258, %v6384
    %v6398 = vmul.f32 %v6259, %v6388
    %v6399 = vmul.f32 %v6260, %v6384
    %v6400 = vmul.f32 %v6261, %v6388
    %v6401 = vmul.f32 %v6262, %v6384
    %v6402 = vmul.f32 %v6263, %v6388
    %v6403 = vmul.f32 %v6264, %v6384
    %v6404 = vmul.f32 %v6265, %v6388
    %v6405 = vmul.f32 %v6266, %v6384
    %v6406 = vmul.f32 %v6267, %v6388
    %v6407 = vmul.f32 %v6268, %v6384
    %v6408 = vmul.f32 %v6269, %v6388
    %v6409 = vmul.f32 %v6270, %v6384
    %v6410 = vmul.f32 %v6271, %v6388
    %v6411 = vmul.f32 %v6272, %v6384
    %v6412 = vmul.f32 %v6273, %v6388
    %v6413 = vmul.f32 %v6274, %v6384
    %v6414 = vmul.f32 %v6275, %v6388
    %v6415 = vmul.f32 %v6276, %v6384
    %v6416 = vmul.f32 %v6277, %v6388
    %v6417 = vmul.f32 %v6278, %v6384
    %v6418 = vmul.f32 %v6279, %v6388
    %v6419 = vmul.f32 %v6280, %v6384
    %v6420 = vmul.f32 %v6281, %v6388
    %v6421 = vmul.f32 %v6282, %v6384
    %v6422 = vmul.f32 %v6283, %v6388
    %v6423 = vmul.f32 %v6284, %v6384
    %v6424 = vmul.f32 %v6285, %v6388
    %v6425 = vmul.f32 %v6286, %v6384
    %v6426 = vmul.f32 %v6287, %v6388
    %v6427 = vmul.f32 %v6288, %v6384
    %v6428 = vmul.f32 %v6289, %v6388
    %v6429 = vmul.f32 %v6290, %v6384
    %v6430 = vmul.f32 %v6291, %v6388
    %v6431 = vmul.f32 %v6292, %v6384
    %v6432 = vmul.f32 %v6293, %v6388
    %v6433 = vmul.f32 %v6294, %v6384
    %v6434 = vmul.f32 %v6295, %v6388
    %v6435 = vmul.f32 %v6296, %v6384
    %v6436 = vmul.f32 %v6297, %v6388
    %v6437 = vmul.f32 %v6298, %v6384
    %v6438 = vmul.f32 %v6299, %v6388
    %v6439 = vmul.f32 %v6300, %v6384
    %v6440 = vmul.f32 %v6301, %v6388
    %v6441 = vmul.f32 %v6302, %v6384
    %v6442 = vmul.f32 %v6303, %v6388
    %v6443 = vmul.f32 %v6304, %v6384
    %v6444 = vmul.f32 %v6305, %v6388
    %v6445 = vmul.f32 %v6306, %v6384
    %v6446 = vmul.f32 %v6307, %v6388
    %v6447 = vmul.f32 %v6308, %v6384
    %v6448 = vmul.f32 %v6309, %v6388
    %v6449 = vmul.f32 %v6310, %v6384
    %v6450 = vmul.f32 %v6311, %v6388
    %v6451 = vmul.f32 %v6312, %v6384
    %v6452 = vmul.f32 %v6313, %v6388
    %v6453 = vmul.f32 %v6314, %v6384
    %v6454 = vmul.f32 %v6315, %v6388
    %v6455 = vmul.f32 %v6316, %v6384
    %v6456 = vmul.f32 %v6317, %v6388
    %v6457 = vmul.f32 %v6318, %v6384
    %v6458 = vmul.f32 %v6319, %v6388
    %v6459 = vmul.f32 %v6320, %v6384
    %v6460 = vmul.f32 %v6321, %v6388
    %v6461 = vmul.f32 %v6322, %v6384
    %v6462 = vmul.f32 %v6323, %v6388
    %v6463 = vmul.f32 %v6324, %v6384
    %v6464 = vmul.f32 %v6325, %v6388
    %v6465 = vmul.f32 %v6326, %v6384
    %v6466 = vmul.f32 %v6327, %v6388
    %v6467 = vmul.f32 %v6328, %v6384
    %v6468 = vmul.f32 %v6329, %v6388
    %v6469 = vmul.f32 %v6330, %v6384
    %v6470 = vmul.f32 %v6331, %v6388
    %v6471 = vmul.f32 %v6332, %v6384
    %v6472 = vmul.f32 %v6333, %v6388
    %v6473 = vmul.f32 %v6334, %v6384
    %v6474 = vmul.f32 %v6335, %v6388
    %v6475 = vmul.f32 %v6336, %v6384
    %v6476 = vmul.f32 %v6337, %v6388
    %v6477 = vmul.f32 %v6338, %v6384
    %v6478 = vmul.f32 %v6339, %v6388
    %v6479 = vmul.f32 %v6340, %v6384
    %v6480 = vmul.f32 %v6341, %v6388
    %v6481 = vmul.f32 %v6342, %v6384
    %v6482 = vmul.f32 %v6343, %v6388
    %v6483 = vmul.f32 %v6344, %v6384
    %v6484 = vmul.f32 %v6345, %v6388
    %v6485 = vmul.f32 %v6346, %v6384
    %v6486 = vmul.f32 %v6347, %v6388
    %v6487 = vmul.f32 %v6348, %v6384
    %v6488 = vmul.f32 %v6349, %v6388
    %v6489 = vmul.f32 %v6350, %v6384
    %v6490 = vmul.f32 %v6351, %v6388
    %v6491 = vmul.f32 %v6352, %v6384
    %v6492 = vmul.f32 %v6353, %v6388
    %v6493 = vmul.f32 %v6354, %v6384
    %v6494 = vmul.f32 %v6355, %v6388
    %v6495 = vmul.f32 %v6356, %v6384
    %v6496 = vmul.f32 %v6357, %v6388
    %v6497 = vmul.f32 %v6358, %v6384
    %v6498 = vmul.f32 %v6359, %v6388
    %v6499 = vmul.f32 %v6360, %v6384
    %v6500 = vmul.f32 %v6361, %v6388
    %v6501 = vmul.f32 %v6362, %v6384
    %v6502 = vmul.f32 %v6363, %v6388
    %v6503 = vmul.f32 %v6364, %v6384
    %v6504 = vmul.f32 %v6365, %v6388
    %v6505 = vmul.f32 %v6366, %v6384
    %v6506 = vmul.f32 %v6367, %v6388
    %v6507 = vmul.f32 %v6368, %v6384
    %v6508 = vmul.f32 %v6369, %v6388
    %v6509 = vmul.f32 %v6370, %v6384
    %v6510 = vmul.f32 %v6371, %v6388
    %v6511 = vmul.f32 %v6372, %v6384
    %v6512 = vmul.f32 %v6373, %v6388
    %v6513 = vmul.f32 %v6374, %v6384
    %v6514 = vmul.f32 %v6375, %v6388
    %v6515 = vmul.f32 %v6376, %v6384
    %v6516 = vmul.f32 %v6377, %v6388
    %v6517 = vmul.f32 %v6378, %v6384
    %v6518 = vmul.f32 %v6379, %v6388
    %v6519 = vld [vmem:[%s9] sm:$0x3]
    %v6521 = vlaneseq
    %v6522 = vshrl.u32 %v6521, 7
    %v6523 = vsub.s32 0, %v6522
    %v6524 = vrot.slane %v6519, %v6523
    %v6525 = vlaneseq
    %v6526 = vshrl.u32 %v6525, 7
    %v6527 = vsub.s32 1, %v6526
    %v6528 = vrot.slane %v6519, %v6527
    %v6531 = vadd.f32 %v6391, %v6524
    %v6532 = vadd.f32 %v6392, %v6528
    %v6533 = vadd.f32 %v6393, %v6524
    %v6534 = vadd.f32 %v6394, %v6528
    %v6535 = vadd.f32 %v6395, %v6524
    %v6536 = vadd.f32 %v6396, %v6528
    %v6537 = vadd.f32 %v6397, %v6524
    %v6538 = vadd.f32 %v6398, %v6528
    %v6539 = vadd.f32 %v6399, %v6524
    %v6540 = vadd.f32 %v6400, %v6528
    %v6541 = vadd.f32 %v6401, %v6524
    %v6542 = vadd.f32 %v6402, %v6528
    %v6543 = vadd.f32 %v6403, %v6524
    %v6544 = vadd.f32 %v6404, %v6528
    %v6545 = vadd.f32 %v6405, %v6524
    %v6546 = vadd.f32 %v6406, %v6528
    %v6547 = vadd.f32 %v6407, %v6524
    %v6548 = vadd.f32 %v6408, %v6528
    %v6549 = vadd.f32 %v6409, %v6524
    %v6550 = vadd.f32 %v6410, %v6528
    %v6551 = vadd.f32 %v6411, %v6524
    %v6552 = vadd.f32 %v6412, %v6528
    %v6553 = vadd.f32 %v6413, %v6524
    %v6554 = vadd.f32 %v6414, %v6528
    %v6555 = vadd.f32 %v6415, %v6524
    %v6556 = vadd.f32 %v6416, %v6528
    %v6557 = vadd.f32 %v6417, %v6524
    %v6558 = vadd.f32 %v6418, %v6528
    %v6559 = vadd.f32 %v6419, %v6524
    %v6560 = vadd.f32 %v6420, %v6528
    %v6561 = vadd.f32 %v6421, %v6524
    %v6562 = vadd.f32 %v6422, %v6528
    %v6563 = vadd.f32 %v6423, %v6524
    %v6564 = vadd.f32 %v6424, %v6528
    %v6565 = vadd.f32 %v6425, %v6524
    %v6566 = vadd.f32 %v6426, %v6528
    %v6567 = vadd.f32 %v6427, %v6524
    %v6568 = vadd.f32 %v6428, %v6528
    %v6569 = vadd.f32 %v6429, %v6524
    %v6570 = vadd.f32 %v6430, %v6528
    %v6571 = vadd.f32 %v6431, %v6524
    %v6572 = vadd.f32 %v6432, %v6528
    %v6573 = vadd.f32 %v6433, %v6524
    %v6574 = vadd.f32 %v6434, %v6528
    %v6575 = vadd.f32 %v6435, %v6524
    %v6576 = vadd.f32 %v6436, %v6528
    %v6577 = vadd.f32 %v6437, %v6524
    %v6578 = vadd.f32 %v6438, %v6528
    %v6579 = vadd.f32 %v6439, %v6524
    %v6580 = vadd.f32 %v6440, %v6528
    %v6581 = vadd.f32 %v6441, %v6524
    %v6582 = vadd.f32 %v6442, %v6528
    %v6583 = vadd.f32 %v6443, %v6524
    %v6584 = vadd.f32 %v6444, %v6528
    %v6585 = vadd.f32 %v6445, %v6524
    %v6586 = vadd.f32 %v6446, %v6528
    %v6587 = vadd.f32 %v6447, %v6524
    %v6588 = vadd.f32 %v6448, %v6528
    %v6589 = vadd.f32 %v6449, %v6524
    %v6590 = vadd.f32 %v6450, %v6528
    %v6591 = vadd.f32 %v6451, %v6524
    %v6592 = vadd.f32 %v6452, %v6528
    %v6593 = vadd.f32 %v6453, %v6524
    %v6594 = vadd.f32 %v6454, %v6528
    %v6595 = vadd.f32 %v6455, %v6524
    %v6596 = vadd.f32 %v6456, %v6528
    %v6597 = vadd.f32 %v6457, %v6524
    %v6598 = vadd.f32 %v6458, %v6528
    %v6599 = vadd.f32 %v6459, %v6524
    %v6600 = vadd.f32 %v6460, %v6528
    %v6601 = vadd.f32 %v6461, %v6524
    %v6602 = vadd.f32 %v6462, %v6528
    %v6603 = vadd.f32 %v6463, %v6524
    %v6604 = vadd.f32 %v6464, %v6528
    %v6605 = vadd.f32 %v6465, %v6524
    %v6606 = vadd.f32 %v6466, %v6528
    %v6607 = vadd.f32 %v6467, %v6524
    %v6608 = vadd.f32 %v6468, %v6528
    %v6609 = vadd.f32 %v6469, %v6524
    %v6610 = vadd.f32 %v6470, %v6528
    %v6611 = vadd.f32 %v6471, %v6524
    %v6612 = vadd.f32 %v6472, %v6528
    %v6613 = vadd.f32 %v6473, %v6524
    %v6614 = vadd.f32 %v6474, %v6528
    %v6615 = vadd.f32 %v6475, %v6524
    %v6616 = vadd.f32 %v6476, %v6528
    %v6617 = vadd.f32 %v6477, %v6524
    %v6618 = vadd.f32 %v6478, %v6528
    %v6619 = vadd.f32 %v6479, %v6524
    %v6620 = vadd.f32 %v6480, %v6528
    %v6621 = vadd.f32 %v6481, %v6524
    %v6622 = vadd.f32 %v6482, %v6528
    %v6623 = vadd.f32 %v6483, %v6524
    %v6624 = vadd.f32 %v6484, %v6528
    %v6625 = vadd.f32 %v6485, %v6524
    %v6626 = vadd.f32 %v6486, %v6528
    %v6627 = vadd.f32 %v6487, %v6524
    %v6628 = vadd.f32 %v6488, %v6528
    %v6629 = vadd.f32 %v6489, %v6524
    %v6630 = vadd.f32 %v6490, %v6528
    %v6631 = vadd.f32 %v6491, %v6524
    %v6632 = vadd.f32 %v6492, %v6528
    %v6633 = vadd.f32 %v6493, %v6524
    %v6634 = vadd.f32 %v6494, %v6528
    %v6635 = vadd.f32 %v6495, %v6524
    %v6636 = vadd.f32 %v6496, %v6528
    %v6637 = vadd.f32 %v6497, %v6524
    %v6638 = vadd.f32 %v6498, %v6528
    %v6639 = vadd.f32 %v6499, %v6524
    %v6640 = vadd.f32 %v6500, %v6528
    %v6641 = vadd.f32 %v6501, %v6524
    %v6642 = vadd.f32 %v6502, %v6528
    %v6643 = vadd.f32 %v6503, %v6524
    %v6644 = vadd.f32 %v6504, %v6528
    %v6645 = vadd.f32 %v6505, %v6524
    %v6646 = vadd.f32 %v6506, %v6528
    %v6647 = vadd.f32 %v6507, %v6524
    %v6648 = vadd.f32 %v6508, %v6528
    %v6649 = vadd.f32 %v6509, %v6524
    %v6650 = vadd.f32 %v6510, %v6528
    %v6651 = vadd.f32 %v6511, %v6524
    %v6652 = vadd.f32 %v6512, %v6528
    %v6653 = vadd.f32 %v6513, %v6524
    %v6654 = vadd.f32 %v6514, %v6528
    %v6655 = vadd.f32 %v6515, %v6524
    %v6656 = vadd.f32 %v6516, %v6528
    %v6657 = vadd.f32 %v6517, %v6524
    %v6658 = vadd.f32 %v6518, %v6528
    %v6659 = vadd.f32 %v6531, %v51
    %v6660 = vadd.f32 %v6532, %v52
    %v6661 = vadd.f32 %v6533, %v53
    %v6662 = vadd.f32 %v6534, %v54
    %v6663 = vadd.f32 %v6535, %v55
    %v6664 = vadd.f32 %v6536, %v56
    %v6665 = vadd.f32 %v6537, %v57
    %v6666 = vadd.f32 %v6538, %v58
    %v6667 = vadd.f32 %v6539, %v59
    %v6668 = vadd.f32 %v6540, %v60
    %v6669 = vadd.f32 %v6541, %v61
    %v6670 = vadd.f32 %v6542, %v62
    %v6671 = vadd.f32 %v6543, %v63
    %v6672 = vadd.f32 %v6544, %v64
    %v6673 = vadd.f32 %v6545, %v65
    %v6674 = vadd.f32 %v6546, %v66
    %v6675 = vadd.f32 %v6547, %v67
    %v6676 = vadd.f32 %v6548, %v68
    %v6677 = vadd.f32 %v6549, %v69
    %v6678 = vadd.f32 %v6550, %v70
    %v6679 = vadd.f32 %v6551, %v71
    %v6680 = vadd.f32 %v6552, %v72
    %v6681 = vadd.f32 %v6553, %v73
    %v6682 = vadd.f32 %v6554, %v74
    %v6683 = vadd.f32 %v6555, %v75
    %v6684 = vadd.f32 %v6556, %v76
    %v6685 = vadd.f32 %v6557, %v77
    %v6686 = vadd.f32 %v6558, %v78
    %v6687 = vadd.f32 %v6559, %v79
    %v6688 = vadd.f32 %v6560, %v80
    %v6689 = vadd.f32 %v6561, %v81
    %v6690 = vadd.f32 %v6562, %v82
    %v6691 = vadd.f32 %v6563, %v83
    %v6692 = vadd.f32 %v6564, %v84
    %v6693 = vadd.f32 %v6565, %v85
    %v6694 = vadd.f32 %v6566, %v86
    %v6695 = vadd.f32 %v6567, %v87
    %v6696 = vadd.f32 %v6568, %v88
    %v6697 = vadd.f32 %v6569, %v89
    %v6698 = vadd.f32 %v6570, %v90
    %v6699 = vadd.f32 %v6571, %v91
    %v6700 = vadd.f32 %v6572, %v92
    %v6701 = vadd.f32 %v6573, %v93
    %v6702 = vadd.f32 %v6574, %v94
    %v6703 = vadd.f32 %v6575, %v95
    %v6704 = vadd.f32 %v6576, %v96
    %v6705 = vadd.f32 %v6577, %v97
    %v6706 = vadd.f32 %v6578, %v98
    %v6707 = vadd.f32 %v6579, %v99
    %v6708 = vadd.f32 %v6580, %v100
    %v6709 = vadd.f32 %v6581, %v101
    %v6710 = vadd.f32 %v6582, %v102
    %v6711 = vadd.f32 %v6583, %v103
    %v6712 = vadd.f32 %v6584, %v104
    %v6713 = vadd.f32 %v6585, %v105
    %v6714 = vadd.f32 %v6586, %v106
    %v6715 = vadd.f32 %v6587, %v107
    %v6716 = vadd.f32 %v6588, %v108
    %v6717 = vadd.f32 %v6589, %v109
    %v6718 = vadd.f32 %v6590, %v110
    %v6719 = vadd.f32 %v6591, %v111
    %v6720 = vadd.f32 %v6592, %v112
    %v6721 = vadd.f32 %v6593, %v113
    %v6722 = vadd.f32 %v6594, %v114
    %v6723 = vadd.f32 %v6595, %v115
    %v6724 = vadd.f32 %v6596, %v116
    %v6725 = vadd.f32 %v6597, %v117
    %v6726 = vadd.f32 %v6598, %v118
    %v6727 = vadd.f32 %v6599, %v119
    %v6728 = vadd.f32 %v6600, %v120
    %v6729 = vadd.f32 %v6601, %v121
    %v6730 = vadd.f32 %v6602, %v122
    %v6731 = vadd.f32 %v6603, %v123
    %v6732 = vadd.f32 %v6604, %v124
    %v6733 = vadd.f32 %v6605, %v125
    %v6734 = vadd.f32 %v6606, %v126
    %v6735 = vadd.f32 %v6607, %v127
    %v6736 = vadd.f32 %v6608, %v128
    %v6737 = vadd.f32 %v6609, %v129
    %v6738 = vadd.f32 %v6610, %v130
    %v6739 = vadd.f32 %v6611, %v131
    %v6740 = vadd.f32 %v6612, %v132
    %v6741 = vadd.f32 %v6613, %v133
    %v6742 = vadd.f32 %v6614, %v134
    %v6743 = vadd.f32 %v6615, %v135
    %v6744 = vadd.f32 %v6616, %v136
    %v6745 = vadd.f32 %v6617, %v137
    %v6746 = vadd.f32 %v6618, %v138
    %v6747 = vadd.f32 %v6619, %v139
    %v6748 = vadd.f32 %v6620, %v140
    %v6749 = vadd.f32 %v6621, %v141
    %v6750 = vadd.f32 %v6622, %v142
    %v6751 = vadd.f32 %v6623, %v143
    %v6752 = vadd.f32 %v6624, %v144
    %v6753 = vadd.f32 %v6625, %v145
    %v6754 = vadd.f32 %v6626, %v146
    %v6755 = vadd.f32 %v6627, %v147
    %v6756 = vadd.f32 %v6628, %v148
    %v6757 = vadd.f32 %v6629, %v149
    %v6758 = vadd.f32 %v6630, %v150
    %v6759 = vadd.f32 %v6631, %v151
    %v6760 = vadd.f32 %v6632, %v152
    %v6761 = vadd.f32 %v6633, %v153
    %v6762 = vadd.f32 %v6634, %v154
    %v6763 = vadd.f32 %v6635, %v155
    %v6764 = vadd.f32 %v6636, %v156
    %v6765 = vadd.f32 %v6637, %v157
    %v6766 = vadd.f32 %v6638, %v158
    %v6767 = vadd.f32 %v6639, %v159
    %v6768 = vadd.f32 %v6640, %v160
    %v6769 = vadd.f32 %v6641, %v161
    %v6770 = vadd.f32 %v6642, %v162
    %v6771 = vadd.f32 %v6643, %v163
    %v6772 = vadd.f32 %v6644, %v164
    %v6773 = vadd.f32 %v6645, %v165
    %v6774 = vadd.f32 %v6646, %v166
    %v6775 = vadd.f32 %v6647, %v167
    %v6776 = vadd.f32 %v6648, %v168
    %v6777 = vadd.f32 %v6649, %v169
    %v6778 = vadd.f32 %v6650, %v170
    %v6779 = vadd.f32 %v6651, %v171
    %v6780 = vadd.f32 %v6652, %v172
    %v6781 = vadd.f32 %v6653, %v173
    %v6782 = vadd.f32 %v6654, %v174
    %v6783 = vadd.f32 %v6655, %v175
    %v6784 = vadd.f32 %v6656, %v176
    %v6785 = vadd.f32 %v6657, %v177
    %v6786 = vadd.f32 %v6658, %v178
    %v6787 = vmax.f32 %v6659, 0.0
    %v6788 = vmax.f32 %v6660, 0.0
    %v6789 = vmax.f32 %v6661, 0.0
    %v6790 = vmax.f32 %v6662, 0.0
    %v6791 = vmax.f32 %v6663, 0.0
    %v6792 = vmax.f32 %v6664, 0.0
    %v6793 = vmax.f32 %v6665, 0.0
    %v6794 = vmax.f32 %v6666, 0.0
    %v6795 = vmax.f32 %v6667, 0.0
    %v6796 = vmax.f32 %v6668, 0.0
    %v6797 = vmax.f32 %v6669, 0.0
    %v6798 = vmax.f32 %v6670, 0.0
    %v6799 = vmax.f32 %v6671, 0.0
    %v6800 = vmax.f32 %v6672, 0.0
    %v6801 = vmax.f32 %v6673, 0.0
    %v6802 = vmax.f32 %v6674, 0.0
    %v6803 = vmax.f32 %v6675, 0.0
    %v6804 = vmax.f32 %v6676, 0.0
    %v6805 = vmax.f32 %v6677, 0.0
    %v6806 = vmax.f32 %v6678, 0.0
    %v6807 = vmax.f32 %v6679, 0.0
    %v6808 = vmax.f32 %v6680, 0.0
    %v6809 = vmax.f32 %v6681, 0.0
    %v6810 = vmax.f32 %v6682, 0.0
    %v6811 = vmax.f32 %v6683, 0.0
    %v6812 = vmax.f32 %v6684, 0.0
    %v6813 = vmax.f32 %v6685, 0.0
    %v6814 = vmax.f32 %v6686, 0.0
    %v6815 = vmax.f32 %v6687, 0.0
    %v6816 = vmax.f32 %v6688, 0.0
    %v6817 = vmax.f32 %v6689, 0.0
    %v6818 = vmax.f32 %v6690, 0.0
    %v6819 = vmax.f32 %v6691, 0.0
    %v6820 = vmax.f32 %v6692, 0.0
    %v6821 = vmax.f32 %v6693, 0.0
    %v6822 = vmax.f32 %v6694, 0.0
    %v6823 = vmax.f32 %v6695, 0.0
    %v6824 = vmax.f32 %v6696, 0.0
    %v6825 = vmax.f32 %v6697, 0.0
    %v6826 = vmax.f32 %v6698, 0.0
    %v6827 = vmax.f32 %v6699, 0.0
    %v6828 = vmax.f32 %v6700, 0.0
    %v6829 = vmax.f32 %v6701, 0.0
    %v6830 = vmax.f32 %v6702, 0.0
    %v6831 = vmax.f32 %v6703, 0.0
    %v6832 = vmax.f32 %v6704, 0.0
    %v6833 = vmax.f32 %v6705, 0.0
    %v6834 = vmax.f32 %v6706, 0.0
    %v6835 = vmax.f32 %v6707, 0.0
    %v6836 = vmax.f32 %v6708, 0.0
    %v6837 = vmax.f32 %v6709, 0.0
    %v6838 = vmax.f32 %v6710, 0.0
    %v6839 = vmax.f32 %v6711, 0.0
    %v6840 = vmax.f32 %v6712, 0.0
    %v6841 = vmax.f32 %v6713, 0.0
    %v6842 = vmax.f32 %v6714, 0.0
    %v6843 = vmax.f32 %v6715, 0.0
    %v6844 = vmax.f32 %v6716, 0.0
    %v6845 = vmax.f32 %v6717, 0.0
    %v6846 = vmax.f32 %v6718, 0.0
    %v6847 = vmax.f32 %v6719, 0.0
    %v6848 = vmax.f32 %v6720, 0.0
    %v6849 = vmax.f32 %v6721, 0.0
    %v6850 = vmax.f32 %v6722, 0.0
    %v6851 = vmax.f32 %v6723, 0.0
    %v6852 = vmax.f32 %v6724, 0.0
    %v6853 = vmax.f32 %v6725, 0.0
    %v6854 = vmax.f32 %v6726, 0.0
    %v6855 = vmax.f32 %v6727, 0.0
    %v6856 = vmax.f32 %v6728, 0.0
    %v6857 = vmax.f32 %v6729, 0.0
    %v6858 = vmax.f32 %v6730, 0.0
    %v6859 = vmax.f32 %v6731, 0.0
    %v6860 = vmax.f32 %v6732, 0.0
    %v6861 = vmax.f32 %v6733, 0.0
    %v6862 = vmax.f32 %v6734, 0.0
    %v6863 = vmax.f32 %v6735, 0.0
    %v6864 = vmax.f32 %v6736, 0.0
    %v6865 = vmax.f32 %v6737, 0.0
    %v6866 = vmax.f32 %v6738, 0.0
    %v6867 = vmax.f32 %v6739, 0.0
    %v6868 = vmax.f32 %v6740, 0.0
    %v6869 = vmax.f32 %v6741, 0.0
    %v6870 = vmax.f32 %v6742, 0.0
    %v6871 = vmax.f32 %v6743, 0.0
    %v6872 = vmax.f32 %v6744, 0.0
    %v6873 = vmax.f32 %v6745, 0.0
    %v6874 = vmax.f32 %v6746, 0.0
    %v6875 = vmax.f32 %v6747, 0.0
    %v6876 = vmax.f32 %v6748, 0.0
    %v6877 = vmax.f32 %v6749, 0.0
    %v6878 = vmax.f32 %v6750, 0.0
    %v6879 = vmax.f32 %v6751, 0.0
    %v6880 = vmax.f32 %v6752, 0.0
    %v6881 = vmax.f32 %v6753, 0.0
    %v6882 = vmax.f32 %v6754, 0.0
    %v6883 = vmax.f32 %v6755, 0.0
    %v6884 = vmax.f32 %v6756, 0.0
    %v6885 = vmax.f32 %v6757, 0.0
    %v6886 = vmax.f32 %v6758, 0.0
    %v6887 = vmax.f32 %v6759, 0.0
    %v6888 = vmax.f32 %v6760, 0.0
    %v6889 = vmax.f32 %v6761, 0.0
    %v6890 = vmax.f32 %v6762, 0.0
    %v6891 = vmax.f32 %v6763, 0.0
    %v6892 = vmax.f32 %v6764, 0.0
    %v6893 = vmax.f32 %v6765, 0.0
    %v6894 = vmax.f32 %v6766, 0.0
    %v6895 = vmax.f32 %v6767, 0.0
    %v6896 = vmax.f32 %v6768, 0.0
    %v6897 = vmax.f32 %v6769, 0.0
    %v6898 = vmax.f32 %v6770, 0.0
    %v6899 = vmax.f32 %v6771, 0.0
    %v6900 = vmax.f32 %v6772, 0.0
    %v6901 = vmax.f32 %v6773, 0.0
    %v6902 = vmax.f32 %v6774, 0.0
    %v6903 = vmax.f32 %v6775, 0.0
    %v6904 = vmax.f32 %v6776, 0.0
    %v6905 = vmax.f32 %v6777, 0.0
    %v6906 = vmax.f32 %v6778, 0.0
    %v6907 = vmax.f32 %v6779, 0.0
    %v6908 = vmax.f32 %v6780, 0.0
    %v6909 = vmax.f32 %v6781, 0.0
    %v6910 = vmax.f32 %v6782, 0.0
    %v6911 = vmax.f32 %v6783, 0.0
    %v6912 = vmax.f32 %v6784, 0.0
    %v6913 = vmax.f32 %v6785, 0.0
    %v6914 = vmax.f32 %v6786, 0.0
    %6915 = vst [vmem:[#allocation6] sm:$0xff] %v6787
    %6916 = vst [vmem:[#allocation6 + $0x8] sm:$0xff] %v6788
    %6917 = vst [vmem:[#allocation6 + $0x10] sm:$0xff] %v6789
    %6918 = vst [vmem:[#allocation6 + $0x18] sm:$0xff] %v6790
    %6919 = vst [vmem:[#allocation6 + $0x20] sm:$0xff] %v6791
    %6920 = vst [vmem:[#allocation6 + $0x28] sm:$0xff] %v6792
    %6921 = vst [vmem:[#allocation6 + $0x30] sm:$0xff] %v6793
    %6922 = vst [vmem:[#allocation6 + $0x38] sm:$0xff] %v6794
    %6923 = vst [vmem:[#allocation6 + $0x40] sm:$0xff] %v6795
    %6924 = vst [vmem:[#allocation6 + $0x48] sm:$0xff] %v6796
    %6925 = vst [vmem:[#allocation6 + $0x50] sm:$0xff] %v6797
    %6926 = vst [vmem:[#allocation6 + $0x58] sm:$0xff] %v6798
    %6927 = vst [vmem:[#allocation6 + $0x60] sm:$0xff] %v6799
    %6928 = vst [vmem:[#allocation6 + $0x68] sm:$0xff] %v6800
    %6929 = vst [vmem:[#allocation6 + $0x70] sm:$0xff] %v6801
    %6930 = vst [vmem:[#allocation6 + $0x78] sm:$0xff] %v6802
    %6931 = vst [vmem:[#allocation6 + $0x80] sm:$0xff] %v6803
    %6932 = vst [vmem:[#allocation6 + $0x88] sm:$0xff] %v6804
    %6933 = vst [vmem:[#allocation6 + $0x90] sm:$0xff] %v6805
    %6934 = vst [vmem:[#allocation6 + $0x98] sm:$0xff] %v6806
    %6935 = vst [vmem:[#allocation6 + $0xa0] sm:$0xff] %v6807
    %6936 = vst [vmem:[#allocation6 + $0xa8] sm:$0xff] %v6808
    %6937 = vst [vmem:[#allocation6 + $0xb0] sm:$0xff] %v6809
    %6938 = vst [vmem:[#allocation6 + $0xb8] sm:$0xff] %v6810
    %6939 = vst [vmem:[#allocation6 + $0xc0] sm:$0xff] %v6811
    %6940 = vst [vmem:[#allocation6 + $0xc8] sm:$0xff] %v6812
    %6941 = vst [vmem:[#allocation6 + $0xd0] sm:$0xff] %v6813
    %6942 = vst [vmem:[#allocation6 + $0xd8] sm:$0xff] %v6814
    %6943 = vst [vmem:[#allocation6 + $0xe0] sm:$0xff] %v6815
    %6944 = vst [vmem:[#allocation6 + $0xe8] sm:$0xff] %v6816
    %6945 = vst [vmem:[#allocation6 + $0xf0] sm:$0xff] %v6817
    %6946 = vst [vmem:[#allocation6 + $0xf8] sm:$0xff] %v6818
    %6947 = vst [vmem:[#allocation6 + $0x100] sm:$0xff] %v6819
    %6948 = vst [vmem:[#allocation6 + $0x108] sm:$0xff] %v6820
    %6949 = vst [vmem:[#allocation6 + $0x110] sm:$0xff] %v6821
    %6950 = vst [vmem:[#allocation6 + $0x118] sm:$0xff] %v6822
    %6951 = vst [vmem:[#allocation6 + $0x120] sm:$0xff] %v6823
    %6952 = vst [vmem:[#allocation6 + $0x128] sm:$0xff] %v6824
    %6953 = vst [vmem:[#allocation6 + $0x130] sm:$0xff] %v6825
    %6954 = vst [vmem:[#allocation6 + $0x138] sm:$0xff] %v6826
    %6955 = vst [vmem:[#allocation6 + $0x140] sm:$0xff] %v6827
    %6956 = vst [vmem:[#allocation6 + $0x148] sm:$0xff] %v6828
    %6957 = vst [vmem:[#allocation6 + $0x150] sm:$0xff] %v6829
    %6958 = vst [vmem:[#allocation6 + $0x158] sm:$0xff] %v6830
    %6959 = vst [vmem:[#allocation6 + $0x160] sm:$0xff] %v6831
    %6960 = vst [vmem:[#allocation6 + $0x168] sm:$0xff] %v6832
    %6961 = vst [vmem:[#allocation6 + $0x170] sm:$0xff] %v6833
    %6962 = vst [vmem:[#allocation6 + $0x178] sm:$0xff] %v6834
    %6963 = vst [vmem:[#allocation6 + $0x180] sm:$0xff] %v6835
    %6964 = vst [vmem:[#allocation6 + $0x188] sm:$0xff] %v6836
    %6965 = vst [vmem:[#allocation6 + $0x190] sm:$0xff] %v6837
    %6966 = vst [vmem:[#allocation6 + $0x198] sm:$0xff] %v6838
    %6967 = vst [vmem:[#allocation6 + $0x1a0] sm:$0xff] %v6839
    %6968 = vst [vmem:[#allocation6 + $0x1a8] sm:$0xff] %v6840
    %6969 = vst [vmem:[#allocation6 + $0x1b0] sm:$0xff] %v6841
    %6970 = vst [vmem:[#allocation6 + $0x1b8] sm:$0xff] %v6842
    %6971 = vst [vmem:[#allocation6 + $0x1c0] sm:$0xff] %v6843
    %6972 = vst [vmem:[#allocation6 + $0x1c8] sm:$0xff] %v6844
    %6973 = vst [vmem:[#allocation6 + $0x1d0] sm:$0xff] %v6845
    %6974 = vst [vmem:[#allocation6 + $0x1d8] sm:$0xff] %v6846
    %6975 = vst [vmem:[#allocation6 + $0x1e0] sm:$0xff] %v6847
    %6976 = vst [vmem:[#allocation6 + $0x1e8] sm:$0xff] %v6848
    %6977 = vst [vmem:[#allocation6 + $0x1f0] sm:$0xff] %v6849
    %6978 = vst [vmem:[#allocation6 + $0x1f8] sm:$0xff] %v6850
    %6979 = vst [vmem:[#allocation6 + $0x200] sm:$0xff] %v6851
    %6980 = vst [vmem:[#allocation6 + $0x208] sm:$0xff] %v6852
    %6981 = vst [vmem:[#allocation6 + $0x210] sm:$0xff] %v6853
    %6982 = vst [vmem:[#allocation6 + $0x218] sm:$0xff] %v6854
    %6983 = vst [vmem:[#allocation6 + $0x220] sm:$0xff] %v6855
    %6984 = vst [vmem:[#allocation6 + $0x228] sm:$0xff] %v6856
    %6985 = vst [vmem:[#allocation6 + $0x230] sm:$0xff] %v6857
    %6986 = vst [vmem:[#allocation6 + $0x238] sm:$0xff] %v6858
    %6987 = vst [vmem:[#allocation6 + $0x240] sm:$0xff] %v6859
    %6988 = vst [vmem:[#allocation6 + $0x248] sm:$0xff] %v6860
    %6989 = vst [vmem:[#allocation6 + $0x250] sm:$0xff] %v6861
    %6990 = vst [vmem:[#allocation6 + $0x258] sm:$0xff] %v6862
    %6991 = vst [vmem:[#allocation6 + $0x260] sm:$0xff] %v6863
    %6992 = vst [vmem:[#allocation6 + $0x268] sm:$0xff] %v6864
    %6993 = vst [vmem:[#allocation6 + $0x270] sm:$0xff] %v6865
    %6994 = vst [vmem:[#allocation6 + $0x278] sm:$0xff] %v6866
    %6995 = vst [vmem:[#allocation6 + $0x280] sm:$0xff] %v6867
    %6996 = vst [vmem:[#allocation6 + $0x288] sm:$0xff] %v6868
    %6997 = vst [vmem:[#allocation6 + $0x290] sm:$0xff] %v6869
    %6998 = vst [vmem:[#allocation6 + $0x298] sm:$0xff] %v6870
    %6999 = vst [vmem:[#allocation6 + $0x2a0] sm:$0xff] %v6871
    %7000 = vst [vmem:[#allocation6 + $0x2a8] sm:$0xff] %v6872
    %7001 = vst [vmem:[#allocation6 + $0x2b0] sm:$0xff] %v6873
    %7002 = vst [vmem:[#allocation6 + $0x2b8] sm:$0xff] %v6874
    %7003 = vst [vmem:[#allocation6 + $0x2c0] sm:$0xff] %v6875
    %7004 = vst [vmem:[#allocation6 + $0x2c8] sm:$0xff] %v6876
    %7005 = vst [vmem:[#allocation6 + $0x2d0] sm:$0xff] %v6877
    %7006 = vst [vmem:[#allocation6 + $0x2d8] sm:$0xff] %v6878
    %7007 = vst [vmem:[#allocation6 + $0x2e0] sm:$0xff] %v6879
    %7008 = vst [vmem:[#allocation6 + $0x2e8] sm:$0xff] %v6880
    %7009 = vst [vmem:[#allocation6 + $0x2f0] sm:$0xff] %v6881
    %7010 = vst [vmem:[#allocation6 + $0x2f8] sm:$0xff] %v6882
    %7011 = vst [vmem:[#allocation6 + $0x300] sm:$0xff] %v6883
    %7012 = vst [vmem:[#allocation6 + $0x308] sm:$0xff] %v6884
    %7013 = vst [vmem:[#allocation6 + $0x310] sm:$0xff] %v6885
    %7014 = vst [vmem:[#allocation6 + $0x318] sm:$0xff] %v6886
    %7015 = vst [vmem:[#allocation6 + $0x320] sm:$0xff] %v6887
    %7016 = vst [vmem:[#allocation6 + $0x328] sm:$0xff] %v6888
    %7017 = vst [vmem:[#allocation6 + $0x330] sm:$0xff] %v6889
    %7018 = vst [vmem:[#allocation6 + $0x338] sm:$0xff] %v6890
    %7019 = vst [vmem:[#allocation6 + $0x340] sm:$0xff] %v6891
    %7020 = vst [vmem:[#allocation6 + $0x348] sm:$0xff] %v6892
    %7021 = vst [vmem:[#allocation6 + $0x350] sm:$0xff] %v6893
    %7022 = vst [vmem:[#allocation6 + $0x358] sm:$0xff] %v6894
    %7023 = vst [vmem:[#allocation6 + $0x360] sm:$0xff] %v6895
    %7024 = vst [vmem:[#allocation6 + $0x368] sm:$0xff] %v6896
    %7025 = vst [vmem:[#allocation6 + $0x370] sm:$0xff] %v6897
    %7026 = vst [vmem:[#allocation6 + $0x378] sm:$0xff] %v6898
    %7027 = vst [vmem:[#allocation6 + $0x380] sm:$0xff] %v6899
    %7028 = vst [vmem:[#allocation6 + $0x388] sm:$0xff] %v6900
    %7029 = vst [vmem:[#allocation6 + $0x390] sm:$0xff] %v6901
    %7030 = vst [vmem:[#allocation6 + $0x398] sm:$0xff] %v6902
    %7031 = vst [vmem:[#allocation6 + $0x3a0] sm:$0xff] %v6903
    %7032 = vst [vmem:[#allocation6 + $0x3a8] sm:$0xff] %v6904
    %7033 = vst [vmem:[#allocation6 + $0x3b0] sm:$0xff] %v6905
    %7034 = vst [vmem:[#allocation6 + $0x3b8] sm:$0xff] %v6906
    %7035 = vst [vmem:[#allocation6 + $0x3c0] sm:$0xff] %v6907
    %7036 = vst [vmem:[#allocation6 + $0x3c8] sm:$0xff] %v6908
    %7037 = vst [vmem:[#allocation6 + $0x3d0] sm:$0xff] %v6909
    %7038 = vst [vmem:[#allocation6 + $0x3d8] sm:$0xff] %v6910
    %7039 = vst [vmem:[#allocation6 + $0x3e0] sm:$0xff] %v6911
    %7040 = vst [vmem:[#allocation6 + $0x3e8] sm:$0xff] %v6912
    %7041 = vst [vmem:[#allocation6 + $0x3f0] sm:$0xff] %v6913
    %7042 = vst [vmem:[#allocation6 + $0x3f8] sm:$0xff] %v6914
    // Predicated region
    $region46: #{tpu_custom_call.1} parent=1 // pred_check
      _
    $region47: #{tpu_custom_call.1} parent=1 // pred_check_branch
      %7044 = sbr.rel (0) target = $region49
    $region48: #{tpu_custom_call.1} parent=1 // pred_region
      %s7046 = ssub.s32 16384, 16384
      %7047 = vsyncadd [#allocation5], %s7046
      %s7048 = sshll.u32 [#allocation6], 4
      %s7049 = int_to_ptr.vmem [resolvable:$true] %s7048
      %7054 = dma.vmem_to_hbm [thread:$0]  %s7049, 16384, %s10, [#allocation5], 256, 256, 16
    $region49: #{tpu_custom_call.1} parent=1 // pred_fallthru
      _
    // Predicated region
    $region50: #{tpu_custom_call.1} parent=1 // pred_check
      _
    $region51: #{tpu_custom_call.1} parent=1 // pred_check_branch
      %7056 = sbr.rel (0) target = $region53
    $region52: #{tpu_custom_call.1} parent=1 // pred_region
      %7057 = dma.done [#allocation5], 16384
    $region53: #{tpu_custom_call.1} parent=1 // pred_fallthru
      _
    %7058 = vsyncpa [#allocation4], 1
    %7059 = vsyncpa [#allocation5], 1

</llo_original>
